<compile_context>
chip_gen: v7x
topology: tpu7x:2x2x1
jax: 0.10.0
libtpu: 0.0.40
codegen_flags: <defaults>
</compile_context>

<pallas_src>
import math
import functools

import jax
import jax.numpy as jnp
from jax.experimental import pallas as pl
from jax.experimental.pallas import tpu as pltpu

NEG_INF = jnp.float32(-1e30)  # additive mask stand-in for float('-inf')


# ---------------------------------------------------------------------------
# BlockSpec helpers
# ---------------------------------------------------------------------------

def _const_spec(shape):
    """Full-array block, same block every grid step."""
    zeros = (0,) * len(shape)

    def imap(l):
        return zeros

    return pl.BlockSpec(shape, imap)


def _stacked_spec(shape):
    """Weight stacked on a leading layer axis; layer dim squeezed out in-kernel."""
    pad = (0,) * len(shape)

    def imap(l):
        return (l,) + pad

    return pl.BlockSpec((None,) + shape, imap)


# ---------------------------------------------------------------------------
# In-kernel building blocks (operate on loaded jnp values; all 2-D math)
# ---------------------------------------------------------------------------

def _layer_norm(x, g, b, eps=1e-5):
    mean = jnp.mean(x, axis=-1, keepdims=True)
    var = jnp.mean(jnp.square(x - mean), axis=-1, keepdims=True)
    return (x - mean) * jax.lax.rsqrt(var + eps) * g + b


def _mha(xq, xkv, wq, bq, wk, bk, wv, bv, wo, bo, amask, hmask_ref, nhead, scale):
    """Multi-head attention on flattened (rows = batch*seq) activations.

    Batch separation / causality come from the additive `amask`; heads are selected with
    per-head one-hot column masks (hmask_ref[h] is (1, E)), so only 2-D matmuls are used.
    """
    q = jnp.dot(xq, wq, preferred_element_type=jnp.float32) + bq
    k = jnp.dot(xkv, wk, preferred_element_type=jnp.float32) + bk
    v = jnp.dot(xkv, wv, preferred_element_type=jnp.float32) + bv

    ctx = jnp.zeros_like(q)
    for h in range(nhead):
        mh = hmask_ref[h]  # (1, E) one-hot over head h's columns
        s = jax.lax.dot_general(q * mh, k, (((1,), (1,)), ((), ())),
                                preferred_element_type=jnp.float32) * scale
        s = s + amask
        s = s - jnp.max(s, axis=-1, keepdims=True)
        p = jnp.exp(s)
        p = p * pl.reciprocal(jnp.sum(p, axis=-1, keepdims=True), approx=True)
        ctx = ctx + jnp.dot(p, v * mh, preferred_element_type=jnp.float32)

    return jnp.dot(ctx, wo, preferred_element_type=jnp.float32) + bo


# ---------------------------------------------------------------------------
# Kernel 1: TokenEmbedding  (Linear -> ReLU -> Linear fused)
# ---------------------------------------------------------------------------

def _tok_emb_kernel(x_ref, w1_ref, b1_ref, w2_ref, b2_ref, o_ref):
    h = jnp.dot(x_ref[...], w1_ref[...], preferred_element_type=jnp.float32) + b1_ref[...]
    h = jnp.maximum(h, 0.0)
    y = jnp.dot(h, w2_ref[...], preferred_element_type=jnp.float32) + b2_ref[...]
    o_ref[...] = y.astype(o_ref.dtype)


def token_embedding(x2, tp):
    M, IN = x2.shape
    HID = tp["w1"].shape[1]
    E = tp["w2"].shape[1]
    cost = pl.CostEstimate(
        flops=int(2 * M * IN * HID + 2 * M * HID * E),
        transcendentals=0,
        bytes_accessed=int(4 * (M * IN + IN * HID + HID + HID * E + E + M * E)),
    )
    return pl.pallas_call(
        _tok_emb_kernel,
        out_shape=jax.ShapeDtypeStruct((M, E), jnp.float32),
        grid=(1,),
        in_specs=[
            _const_spec((M, IN)),
            _const_spec((IN, HID)),
            _const_spec((1, HID)),
            _const_spec((HID, E)),
            _const_spec((1, E)),
        ],
        out_specs=_const_spec((M, E)),
        compiler_params=pltpu.CompilerParams(dimension_semantics=("arbitrary",)),
        cost_estimate=cost,
    )(x2, tp["w1"], tp["b1"], tp["w2"], tp["b2"])


# ---------------------------------------------------------------------------
# Kernel 2: encoder stack (grid over layers; final encoder norm fused on last step)
# ---------------------------------------------------------------------------

def _encoder_stack_kernel(x_ref, amask_ref, hmask_ref,
                          wq_ref, bq_ref, wk_ref, bk_ref, wv_ref, bv_ref, wo_ref, bo_ref,
                          ln1_g_ref, ln1_b_ref,
                          ff_w1_ref, ff_b1_ref, ff_w2_ref, ff_b2_ref,
                          ln2_g_ref, ln2_b_ref,
                          fn_g_ref, fn_b_ref,
                          out_ref, *, num_layers, nhead, head_dim):
    layer = pl.program_id(0)

    @pl.when(layer == 0)
    def _seed_state():
        out_ref[...] = x_ref[...]

    x = out_ref[...].astype(jnp.float32)
    scale = 1.0 / math.sqrt(head_dim)

    attn = _mha(x, x,
                wq_ref[...], bq_ref[...], wk_ref[...], bk_ref[...],
                wv_ref[...], bv_ref[...], wo_ref[...], bo_ref[...],
                amask_ref[...], hmask_ref, nhead, scale)
    x = _layer_norm(x + attn, ln1_g_ref[...], ln1_b_ref[...])

    hid = jnp.maximum(
        jnp.dot(x, ff_w1_ref[...], preferred_element_type=jnp.float32) + ff_b1_ref[...], 0.0)
    ff = jnp.dot(hid, ff_w2_ref[...], preferred_element_type=jnp.float32) + ff_b2_ref[...]
    x = _layer_norm(x + ff, ln2_g_ref[...], ln2_b_ref[...])

    @pl.when(layer < num_layers - 1)
    def _store_state():
        out_ref[...] = x.astype(out_ref.dtype)

    @pl.when(layer == num_layers - 1)
    def _finalize():
        out_ref[...] = _layer_norm(x, fn_g_ref[...], fn_b_ref[...]).astype(out_ref.dtype)


def run_encoder_stack(x2, amask, hmask, ep, fn_g, fn_b, *, nhead, head_dim):
    NS, E = x2.shape
    FF = ep["ff_w1"].shape[-1]
    num_layers = ep["wq"].shape[0]

    stacked = (
        ("wq", (E, E)), ("bq", (1, E)), ("wk", (E, E)), ("bk", (1, E)),
        ("wv", (E, E)), ("bv", (1, E)), ("wo", (E, E)), ("bo", (1, E)),
        ("ln1_g", (1, E)), ("ln1_b", (1, E)),
        ("ff_w1", (E, FF)), ("ff_b1", (1, FF)), ("ff_w2", (FF, E)), ("ff_b2", (1, E)),
        ("ln2_g", (1, E)), ("ln2_b", (1, E)),
    )
    in_specs = [_const_spec((NS, E)), _const_spec((NS, NS)), _const_spec((nhead, 1, E))]
    ops = [x2, amask, hmask]
    for name, shape in stacked:
        in_specs.append(_stacked_spec(shape))
        ops.append(ep[name])
    in_specs += [_const_spec((1, E)), _const_spec((1, E))]
    ops += [fn_g, fn_b]

    flops = num_layers * (8 * NS * E * E + 4 * nhead * NS * NS * E + 4 * NS * E * FF)
    cost = pl.CostEstimate(
        flops=int(flops),
        transcendentals=int(num_layers * nhead * NS * NS),
        bytes_accessed=int(4 * (sum(int(a.size) for a in ops) + NS * E)),
    )

    kernel = functools.partial(_encoder_stack_kernel, num_layers=num_layers,
                               nhead=nhead, head_dim=head_dim)
    return pl.pallas_call(
        kernel,
        out_shape=jax.ShapeDtypeStruct((NS, E), jnp.float32),
        grid=(num_layers,),
        in_specs=in_specs,
        out_specs=_const_spec((NS, E)),
        compiler_params=pltpu.CompilerParams(dimension_semantics=("arbitrary",)),
        cost_estimate=cost,
    )(*ops)


# ---------------------------------------------------------------------------
# Kernel 3: decoder stack (grid over layers; final norm + generator fused on last step)
# ---------------------------------------------------------------------------

def _decoder_stack_kernel(tgt_ref, mem_ref, smask_ref, xmask_ref, hmask_ref,
                          swq_ref, sbq_ref, swk_ref, sbk_ref, swv_ref, sbv_ref, swo_ref, sbo_ref,
                          ln1_g_ref, ln1_b_ref,
                          cwq_ref, cbq_ref, cwk_ref, cbk_ref, cwv_ref, cbv_ref, cwo_ref, cbo_ref,
                          ln2_g_ref, ln2_b_ref,
                          ff_w1_ref, ff_b1_ref, ff_w2_ref, ff_b2_ref,
                          ln3_g_ref, ln3_b_ref,
                          fn_g_ref, fn_b_ref, gen_w_ref, gen_b_ref,
                          out_ref, state_ref, *, num_layers, nhead, head_dim):
    layer = pl.program_id(0)

    @pl.when(layer == 0)
    def _seed_state():
        state_ref[...] = tgt_ref[...]

    y = state_ref[...].astype(jnp.float32)
    mem = mem_ref[...].astype(jnp.float32)
    scale = 1.0 / math.sqrt(head_dim)

    # masked self-attention
    a = _mha(y, y,
             swq_ref[...], sbq_ref[...], swk_ref[...], sbk_ref[...],
             swv_ref[...], sbv_ref[...], swo_ref[...], sbo_ref[...],
             smask_ref[...], hmask_ref, nhead, scale)
    y = _layer_norm(y + a, ln1_g_ref[...], ln1_b_ref[...])

    # cross-attention over encoder memory
    a = _mha(y, mem,
             cwq_ref[...], cbq_ref[...], cwk_ref[...], cbk_ref[...],
             cwv_ref[...], cbv_ref[...], cwo_ref[...], cbo_ref[...],
             xmask_ref[...], hmask_ref, nhead, scale)
    y = _layer_norm(y + a, ln2_g_ref[...], ln2_b_ref[...])

    # feed-forward
    hid = jnp.maximum(
        jnp.dot(y, ff_w1_ref[...], preferred_element_type=jnp.float32) + ff_b1_ref[...], 0.0)
    ff = jnp.dot(hid, ff_w2_ref[...], preferred_element_type=jnp.float32) + ff_b2_ref[...]
    y = _layer_norm(y + ff, ln3_g_ref[...], ln3_b_ref[...])

    state_ref[...] = y.astype(state_ref.dtype)

    @pl.when(layer == num_layers - 1)
    def _finalize():
        yf = _layer_norm(y, fn_g_ref[...], fn_b_ref[...])
        gen = jnp.dot(yf, gen_w_ref[...], preferred_element_type=jnp.float32) + gen_b_ref[...]
        out_ref[...] = gen.astype(out_ref.dtype)


def run_decoder_stack(tgt2, memory, smask, xmask, hmask, dp, fn_g, fn_b, gen_w, gen_b,
                      *, nhead, head_dim):
    NT, E = tgt2.shape
    NM = memory.shape[0]
    FF = dp["ff_w1"].shape[-1]
    T = gen_w.shape[-1]
    num_layers = dp["swq"].shape[0]

    stacked = (
        ("swq", (E, E)), ("sbq", (1, E)), ("swk", (E, E)), ("sbk", (1, E)),
        ("swv", (E, E)), ("sbv", (1, E)), ("swo", (E, E)), ("sbo", (1, E)),
        ("ln1_g", (1, E)), ("ln1_b", (1, E)),
        ("cwq", (E, E)), ("cbq", (1, E)), ("cwk", (E, E)), ("cbk", (1, E)),
        ("cwv", (E, E)), ("cbv", (1, E)), ("cwo", (E, E)), ("cbo", (1, E)),
        ("ln2_g", (1, E)), ("ln2_b", (1, E)),
        ("ff_w1", (E, FF)), ("ff_b1", (1, FF)), ("ff_w2", (FF, E)), ("ff_b2", (1, E)),
        ("ln3_g", (1, E)), ("ln3_b", (1, E)),
    )
    in_specs = [_const_spec((NT, E)), _const_spec((NM, E)),
                _const_spec((NT, NT)), _const_spec((NT, NM)),
                _const_spec((nhead, 1, E))]
    ops = [tgt2, memory, smask, xmask, hmask]
    for name, shape in stacked:
        in_specs.append(_stacked_spec(shape))
        ops.append(dp[name])
    in_specs += [_const_spec((1, E)), _const_spec((1, E)),
                 _const_spec((E, T)), _const_spec((1, T))]
    ops += [fn_g, fn_b, gen_w, gen_b]

    flops = num_layers * (16 * NT * E * E + 4 * nhead * NT * NT * E
                          + 4 * nhead * NT * NM * E + 4 * NT * E * FF) + 2 * NT * E * T
    cost = pl.CostEstimate(
        flops=int(flops),
        transcendentals=int(num_layers * nhead * NT * (NT + NM)),
        bytes_accessed=int(4 * (sum(int(a.size) for a in ops) + NT * T)),
    )

    kernel = functools.partial(_decoder_stack_kernel, num_layers=num_layers,
                               nhead=nhead, head_dim=head_dim)
    return pl.pallas_call(
        kernel,
        out_shape=jax.ShapeDtypeStruct((NT, T), jnp.float32),
        grid=(num_layers,),
        in_specs=in_specs,
        out_specs=_const_spec((NT, T)),
        scratch_shapes=[pltpu.VMEM((NT, E), jnp.float32)],
        compiler_params=pltpu.CompilerParams(dimension_semantics=("arbitrary",)),
        cost_estimate=cost,
    )(*ops)


# ---------------------------------------------------------------------------
# JAX glue (masks, concat, positional encoding) + full forward
# ---------------------------------------------------------------------------

def _head_one_hot(nhead, emb):
    head_of_col = jnp.arange(emb) // (emb // nhead)
    heads = jnp.arange(nhead)
    return (head_of_col[None, None, :] == heads[:, None, None]).astype(jnp.float32)  # (H,1,E)


def _block_diag_mask(n, s_q, s_k):
    rb = jnp.arange(n * s_q) // s_q
    cb = jnp.arange(n * s_k) // s_k
    return jnp.where(rb[:, None] == cb[None, :], 0.0, NEG_INF).astype(jnp.float32)


def _causal_block_mask(n, s):
    idx = jnp.arange(n * s)
    rb, rp = idx // s, idx % s
    ok = (rb[:, None] == rb[None, :]) & (rp[None, :] <= rp[:, None])
    return jnp.where(ok, 0.0, NEG_INF).astype(jnp.float32)


def seq2seq_transformer_forward(params, src, tgt, *, nhead):
    N, C, Hh, Ww = tgt.shape
    E = params["bof_emb"].shape[-1]
    Cs = src.shape[1]
    Ss, St = Cs + 1, C + 1
    Dh = E // nhead

    src_tok = token_embedding(src.reshape(N * Cs, src.shape[-1]),
                              params["src_tok"]).reshape(N, Cs, E)
    tgt_flat = tgt.reshape(N, C, Hh * Ww)
    tgt_tok = token_embedding(tgt_flat.reshape(N * C, Hh * Ww),
                              params["tgt_tok"]).reshape(N, C, E)

    bof = jnp.broadcast_to(params["bof_emb"], (N, 1, E))
    # positional-encoding dropout = identity in eval mode
    src_emb = jnp.concatenate([bof, src_tok], axis=1) + params["pos_emb"][:, :Ss]
    tgt_emb = jnp.concatenate([bof, tgt_tok], axis=1) + params["pos_emb"][:, :St]

    hmask = _head_one_hot(nhead, E)
    enc_mask = _block_diag_mask(N, Ss, Ss)              # src_mask is all-False -> batch sep only
    dec_self_mask = _causal_block_mask(N, St)           # causal + batch separation
    dec_cross_mask = _block_diag_mask(N, St, Ss)        # memory_mask is None -> batch sep only

    memory = run_encoder_stack(src_emb.reshape(N * Ss, E), enc_mask, hmask,
                               params["enc"], params["enc_norm_g"], params["enc_norm_b"],
                               nhead=nhead, head_dim=Dh)

    gen = run_decoder_stack(tgt_emb.reshape(N * St, E), memory,
                            dec_self_mask, dec_cross_mask, hmask,
                            params["dec"], params["dec_norm_g"], params["dec_norm_b"],
                            params["gen_w"], params["gen_b"],
                            nhead=nhead, head_dim=Dh)

    return gen.reshape(N, C + 1, Hh, Ww)


# ---------------------------------------------------------------------------
# Deterministic parameter init (shapes match the PyTorch __init__; layers stacked)
# ---------------------------------------------------------------------------

def _key_stream(seed):
    key = jax.random.PRNGKey(seed)
    while True:
        key, sub = jax.random.split(key)
        yield sub


def _stack_linear(ks, L, fan_in, fan_out):
    w = jax.random.normal(next(ks), (L, fan_in, fan_out), jnp.float32) * 0.02
    b = jnp.zeros((L, 1, fan_out), jnp.float32)
    return w, b


def _init_encoder_params(ks, L, E, FF):
    p = {}
    for n in ("wq", "wk", "wv", "wo"):
        p[n], p["b" + n[1]] = _stack_linear(ks, L, E, E)
    p["ff_w1"], p["ff_b1"] = _stack_linear(ks, L, E, FF)
    p["ff_w2"], p["ff_b2"] = _stack_linear(ks, L, FF, E)
    for n in ("ln1", "ln2"):
        p[n + "_g"] = jnp.ones((L, 1, E), jnp.float32)
        p[n + "_b"] = jnp.zeros((L, 1, E), jnp.float32)
    return p


def _init_decoder_params(ks, L, E, FF):
    p = {}
    for n in ("swq", "swk", "swv", "swo", "cwq", "cwk", "cwv", "cwo"):
        p[n], p[n[0] + "b" + n[2]] = _stack_linear(ks, L, E, E)
    p["ff_w1"], p["ff_b1"] = _stack_linear(ks, L, E, FF)
    p["ff_w2"], p["ff_b2"] = _stack_linear(ks, L, FF, E)
    for n in ("ln1", "ln2", "ln3"):
        p[n + "_g"] = jnp.ones((L, 1, E), jnp.float32)
        p[n + "_b"] = jnp.zeros((L, 1, E), jnp.float32)
    return p


def _init_token_embedding(ks, in_dim, E, hidden=2000, hidden_pad=2048):
    # hidden padded 2000 -> 2048 with zeros: numerically identical, lane-dense (multiple of 128).
    w1 = jax.random.normal(next(ks), (in_dim, hidden), jnp.float32) * 0.02
    w1 = jnp.pad(w1, ((0, 0), (0, hidden_pad - hidden)))
    b1 = jnp.zeros((1, hidden_pad), jnp.float32)
    w2 = jax.random.normal(next(ks), (hidden, E), jnp.float32) * 0.02
    w2 = jnp.pad(w2, ((0, hidden_pad - hidden), (0, 0)))
    b2 = jnp.zeros((1, E), jnp.float32)
    return {"w1": w1, "b1": b1, "w2": w2, "b2": b2}


def _positional_encoding_table(E, maxlen=20):
    den = jnp.exp(-jnp.arange(0, E, 2, dtype=jnp.float32) * math.log(10000.0) / E)
    pos = jnp.arange(0, maxlen, dtype=jnp.float32).reshape(maxlen, 1)
    pe = jnp.zeros((maxlen, E), jnp.float32)
    pe = pe.at[:, 0::2].set(jnp.sin(pos * den))
    pe = pe.at[:, 1::2].set(jnp.cos(pos * den))
    return pe[None]  # (1, maxlen, E)


def init_params(seed, *, num_enc, num_dec, E, src_len, tgt_len, FF):
    ks = _key_stream(seed)
    return {
        "bof_emb": jax.random.normal(next(ks), (1, 1, E), jnp.float32),
        "pos_emb": _positional_encoding_table(E),
        "src_tok": _init_token_embedding(ks, src_len, E),
        "tgt_tok": _init_token_embedding(ks, tgt_len, E),
        "enc": _init_encoder_params(ks, num_enc, E, FF),
        "dec": _init_decoder_params(ks, num_dec, E, FF),
        "enc_norm_g": jnp.ones((1, E), jnp.float32),
        "enc_norm_b": jnp.zeros((1, E), jnp.float32),
        "dec_norm_g": jnp.ones((1, E), jnp.float32),
        "dec_norm_b": jnp.zeros((1, E), jnp.float32),
        "gen_w": jax.random.normal(next(ks), (E, tgt_len), jnp.float32) * 0.02,
        "gen_b": jnp.zeros((1, tgt_len), jnp.float32),
    }


# ---------------------------------------------------------------------------
if __name__ == "__main__":
    EMB, NHEAD, FF = 32, 4, 64
    NUM_ENC, NUM_DEC = 2, 2
    SRC_LEN = 16
    TGT_SIZE = (4, 4)
    TGT_LEN = TGT_SIZE[0] * TGT_SIZE[1]
    N, C_SRC, C_TGT = 2, 3, 3

    params = init_params(0, num_enc=NUM_ENC, num_dec=NUM_DEC, E=EMB,
                         src_len=SRC_LEN, tgt_len=TGT_LEN, FF=FF)

    k1, k2 = jax.random.split(jax.random.PRNGKey(0))
    src = jax.random.normal(k1, (N, C_SRC, SRC_LEN), jnp.float32)                    # (N, S_src, src_len)
    tgt = jax.random.normal(k2, (N, C_TGT, TGT_SIZE[0], TGT_SIZE[1]), jnp.float32)   # NCHW

    fwd = jax.jit(functools.partial(seq2seq_transformer_forward, nhead=NHEAD))
    out = fwd(params, src, tgt)
    out = jax.block_until_ready(out)

    assert out.shape == (N, C_TGT + 1, TGT_SIZE[0], TGT_SIZE[1]), out.shape
    assert bool(jnp.all(jnp.isfinite(out)))
    print("KERNEL_OK")
</pallas_src>

<mosaic_0001>
module attributes {stable_mosaic.version = 11 : i64} {
  func.func @_tok_emb_kernel(%arg0: i32, %arg1: memref<6x16xf32, #tpu.memory_space<vmem>>, %arg2: memref<16x2048xf32, #tpu.memory_space<vmem>>, %arg3: memref<1x2048xf32, #tpu.memory_space<vmem>>, %arg4: memref<2048x32xf32, #tpu.memory_space<vmem>>, %arg5: memref<1x32xf32, #tpu.memory_space<vmem>>, %arg6: memref<6x32xf32, #tpu.memory_space<vmem>>) attributes {dimension_semantics = [#tpu.dimension_semantics<arbitrary>], iteration_bounds = array<i64: 1>, scalar_prefetch = 0 : i64, scratch_operands = 0 : i64, tpu.core_type = #tpu.core_type<tc>, window_params = [{pipeline_mode = #tpu.pipeline_mode<synchronous>, transform_indices = @transform_0, window_bounds = array<i64: 6, 16>}, {pipeline_mode = #tpu.pipeline_mode<synchronous>, transform_indices = @transform_1, window_bounds = array<i64: 16, 2048>}, {pipeline_mode = #tpu.pipeline_mode<synchronous>, transform_indices = @transform_2, window_bounds = array<i64: 1, 2048>}, {pipeline_mode = #tpu.pipeline_mode<synchronous>, transform_indices = @transform_3, window_bounds = array<i64: 2048, 32>}, {pipeline_mode = #tpu.pipeline_mode<synchronous>, transform_indices = @transform_4, window_bounds = array<i64: 1, 32>}, {pipeline_mode = #tpu.pipeline_mode<synchronous>, transform_indices = @transform_5, window_bounds = array<i64: 6, 32>}]} {
    %c0 = arith.constant 0 : index
    %c0_0 = arith.constant 0 : index
    %0 = vector.load %arg1[%c0, %c0_0] : memref<6x16xf32, #tpu.memory_space<vmem>>, vector<6x16xf32>
    %c0_1 = arith.constant 0 : index
    %c0_2 = arith.constant 0 : index
    %1 = vector.load %arg2[%c0_1, %c0_2] : memref<16x2048xf32, #tpu.memory_space<vmem>>, vector<16x2048xf32>
    %cst = arith.constant dense<0.000000e+00> : vector<6x2048xf32>
    %2 = tpu.matmul %0, %1, %cst {dimension_numbers = #tpu.dot_dimension_numbers<[1], [0], [0], [1], [0, 0, 1, 1], [], []>} : vector<6x16xf32>, vector<16x2048xf32>, vector<6x2048xf32> -> vector<6x2048xf32>
    %c0_3 = arith.constant 0 : index
    %c0_4 = arith.constant 0 : index
    %3 = vector.load %arg3[%c0_3, %c0_4] : memref<1x2048xf32, #tpu.memory_space<vmem>>, vector<1x2048xf32>
    %4 = vector.broadcast %3 : vector<1x2048xf32> to vector<6x2048xf32>
    %5 = arith.addf %2, %4 : vector<6x2048xf32>
    %cst_5 = arith.constant 0.000000e+00 : f32
    %6 = vector.broadcast %cst_5 : f32 to vector<6x2048xf32>
    %7 = arith.maximumf %5, %6 : vector<6x2048xf32>
    %c0_6 = arith.constant 0 : index
    %c0_7 = arith.constant 0 : index
    %8 = vector.load %arg4[%c0_6, %c0_7] : memref<2048x32xf32, #tpu.memory_space<vmem>>, vector<2048x32xf32>
    %cst_8 = arith.constant dense<0.000000e+00> : vector<6x32xf32>
    %9 = tpu.matmul %7, %8, %cst_8 {dimension_numbers = #tpu.dot_dimension_numbers<[1], [0], [0], [1], [0, 0, 1, 1], [], []>} : vector<6x2048xf32>, vector<2048x32xf32>, vector<6x32xf32> -> vector<6x32xf32>
    %c0_9 = arith.constant 0 : index
    %c0_10 = arith.constant 0 : index
    %10 = vector.load %arg5[%c0_9, %c0_10] : memref<1x32xf32, #tpu.memory_space<vmem>>, vector<1x32xf32>
    %11 = vector.broadcast %10 : vector<1x32xf32> to vector<6x32xf32>
    %12 = arith.addf %9, %11 : vector<6x32xf32>
    %c0_11 = arith.constant 0 : index
    %c0_12 = arith.constant 0 : index
    %13 = vector.load %arg6[%c0_11, %c0_12] : memref<6x32xf32, #tpu.memory_space<vmem>>, vector<6x32xf32>
    tpu.vector_store %arg6[%c0_11, %c0_12], %12 {strides = array<i32>} : memref<6x32xf32, #tpu.memory_space<vmem>>, vector<6x32xf32>,
    return
  }
  func.func @transform_0(%arg0: i32) -> (i32, i32) {
    %c0_i32 = arith.constant 0 : i32
    %c0_i32_0 = arith.constant 0 : i32
    %c0_i32_1 = arith.constant 0 : i32
    return %c0_i32, %c0_i32_0 : i32, i32
  }
  func.func @transform_1(%arg0: i32) -> (i32, i32) {
    %c0_i32 = arith.constant 0 : i32
    %c0_i32_0 = arith.constant 0 : i32
    %c0_i32_1 = arith.constant 0 : i32
    return %c0_i32, %c0_i32_0 : i32, i32
  }
  func.func @transform_2(%arg0: i32) -> (i32, i32) {
    %c0_i32 = arith.constant 0 : i32
    %c0_i32_0 = arith.constant 0 : i32
    %c0_i32_1 = arith.constant 0 : i32
    return %c0_i32, %c0_i32_0 : i32, i32
  }
  func.func @transform_3(%arg0: i32) -> (i32, i32) {
    %c0_i32 = arith.constant 0 : i32
    %c0_i32_0 = arith.constant 0 : i32
    %c0_i32_1 = arith.constant 0 : i32
    return %c0_i32, %c0_i32_0 : i32, i32
  }
  func.func @transform_4(%arg0: i32) -> (i32, i32) {
    %c0_i32 = arith.constant 0 : i32
    %c0_i32_0 = arith.constant 0 : i32
    %c0_i32_1 = arith.constant 0 : i32
    return %c0_i32, %c0_i32_0 : i32, i32
  }
  func.func @transform_5(%arg0: i32) -> (i32, i32) {
    %c0_i32 = arith.constant 0 : i32
    %c0_i32_0 = arith.constant 0 : i32
    %c0_i32_1 = arith.constant 0 : i32
    return %c0_i32, %c0_i32_0 : i32, i32
  }
}

module attributes {stable_mosaic.version = 11 : i64} {
  func.func @_decoder_stack_kernel(%arg0: i32, %arg1: memref<8x32xf32, #tpu.memory_space<vmem>>, %arg2: memref<8x32xf32, #tpu.memory_space<vmem>>, %arg3: memref<8x8xf32, #tpu.memory_space<vmem>>, %arg4: memref<8x8xf32, #tpu.memory_space<vmem>>, %arg5: memref<4x1x32xf32, #tpu.memory_space<vmem>>, %arg6: memref<1x32x32xf32, #tpu.memory_space<vmem>>, %arg7: memref<1x1x32xf32, #tpu.memory_space<vmem>>, %arg8: memref<1x32x32xf32, #tpu.memory_space<vmem>>, %arg9: memref<1x1x32xf32, #tpu.memory_space<vmem>>, %arg10: memref<1x32x32xf32, #tpu.memory_space<vmem>>, %arg11: memref<1x1x32xf32, #tpu.memory_space<vmem>>, %arg12: memref<1x32x32xf32, #tpu.memory_space<vmem>>, %arg13: memref<1x1x32xf32, #tpu.memory_space<vmem>>, %arg14: memref<1x1x32xf32, #tpu.memory_space<vmem>>, %arg15: memref<1x1x32xf32, #tpu.memory_space<vmem>>, %arg16: memref<1x32x32xf32, #tpu.memory_space<vmem>>, %arg17: memref<1x1x32xf32, #tpu.memory_space<vmem>>, %arg18: memref<1x32x32xf32, #tpu.memory_space<vmem>>, %arg19: memref<1x1x32xf32, #tpu.memory_space<vmem>>, %arg20: memref<1x32x32xf32, #tpu.memory_space<vmem>>, %arg21: memref<1x1x32xf32, #tpu.memory_space<vmem>>, %arg22: memref<1x32x32xf32, #tpu.memory_space<vmem>>, %arg23: memref<1x1x32xf32, #tpu.memory_space<vmem>>, %arg24: memref<1x1x32xf32, #tpu.memory_space<vmem>>, %arg25: memref<1x1x32xf32, #tpu.memory_space<vmem>>, %arg26: memref<1x32x64xf32, #tpu.memory_space<vmem>>, %arg27: memref<1x1x64xf32, #tpu.memory_space<vmem>>, %arg28: memref<1x64x32xf32, #tpu.memory_space<vmem>>, %arg29: memref<1x1x32xf32, #tpu.memory_space<vmem>>, %arg30: memref<1x1x32xf32, #tpu.memory_space<vmem>>, %arg31: memref<1x1x32xf32, #tpu.memory_space<vmem>>, %arg32: memref<1x32xf32, #tpu.memory_space<vmem>>, %arg33: memref<1x32xf32, #tpu.memory_space<vmem>>, %arg34: memref<32x16xf32, #tpu.memory_space<vmem>>, %arg35: memref<1x16xf32, #tpu.memory_space<vmem>>, %arg36: memref<8x16xf32, #tpu.memory_space<vmem>>, %arg37: memref<8x32xf32, #tpu.memory_space<vmem>>) attributes {dimension_semantics = [#tpu.dimension_semantics<arbitrary>], iteration_bounds = array<i64: 2>, scalar_prefetch = 0 : i64, scratch_operands = 1 : i64, tpu.core_type = #tpu.core_type<tc>, window_params = [{pipeline_mode = #tpu.pipeline_mode<synchronous>, transform_indices = @transform_0, window_bounds = array<i64: 8, 32>}, {pipeline_mode = #tpu.pipeline_mode<synchronous>, transform_indices = @transform_1, window_bounds = array<i64: 8, 32>}, {pipeline_mode = #tpu.pipeline_mode<synchronous>, transform_indices = @transform_2, window_bounds = array<i64: 8, 8>}, {pipeline_mode = #tpu.pipeline_mode<synchronous>, transform_indices = @transform_3, window_bounds = array<i64: 8, 8>}, {pipeline_mode = #tpu.pipeline_mode<synchronous>, transform_indices = @transform_4, window_bounds = array<i64: 4, 1, 32>}, {transform_indices = @transform_5, window_bounds = array<i64: 1, 32, 32>}, {transform_indices = @transform_6, window_bounds = array<i64: 1, 1, 32>}, {transform_indices = @transform_7, window_bounds = array<i64: 1, 32, 32>}, {transform_indices = @transform_8, window_bounds = array<i64: 1, 1, 32>}, {transform_indices = @transform_9, window_bounds = array<i64: 1, 32, 32>}, {transform_indices = @transform_10, window_bounds = array<i64: 1, 1, 32>}, {transform_indices = @transform_11, window_bounds = array<i64: 1, 32, 32>}, {transform_indices = @transform_12, window_bounds = array<i64: 1, 1, 32>}, {transform_indices = @transform_13, window_bounds = array<i64: 1, 1, 32>}, {transform_indices = @transform_14, window_bounds = array<i64: 1, 1, 32>}, {transform_indices = @transform_15, window_bounds = array<i64: 1, 32, 32>}, {transform_indices = @transform_16, window_bounds = array<i64: 1, 1, 32>}, {transform_indices = @transform_17, window_bounds = array<i64: 1, 32, 32>}, {transform_indices = @transform_18, window_bounds = array<i64: 1, 1, 32>}, {transform_indices = @transform_19, window_bounds = array<i64: 1, 32, 32>}, {transform_indices = @transform_20, window_bounds = array<i64: 1, 1, 32>}, {transform_indices = @transform_21, window_bounds = array<i64: 1, 32, 32>}, {transform_indices = @transform_22, window_bounds = array<i64: 1, 1, 32>}, {transform_indices = @transform_23, window_bounds = array<i64: 1, 1, 32>}, {transform_indices = @transform_24, window_bounds = array<i64: 1, 1, 32>}, {transform_indices = @transform_25, window_bounds = array<i64: 1, 32, 64>}, {transform_indices = @transform_26, window_bounds = array<i64: 1, 1, 64>}, {transform_indices = @transform_27, window_bounds = array<i64: 1, 64, 32>}, {transform_indices = @transform_28, window_bounds = array<i64: 1, 1, 32>}, {transform_indices = @transform_29, window_bounds = array<i64: 1, 1, 32>}, {transform_indices = @transform_30, window_bounds = array<i64: 1, 1, 32>}, {pipeline_mode = #tpu.pipeline_mode<synchronous>, transform_indices = @transform_31, window_bounds = array<i64: 1, 32>}, {pipeline_mode = #tpu.pipeline_mode<synchronous>, transform_indices = @transform_32, window_bounds = array<i64: 1, 32>}, {pipeline_mode = #tpu.pipeline_mode<synchronous>, transform_indices = @transform_33, window_bounds = array<i64: 32, 16>}, {pipeline_mode = #tpu.pipeline_mode<synchronous>, transform_indices = @transform_34, window_bounds = array<i64: 1, 16>}, {pipeline_mode = #tpu.pipeline_mode<synchronous>, transform_indices = @transform_35, window_bounds = array<i64: 8, 16>}]} {
    %c0_i32 = arith.constant 0 : i32
    %0 = arith.cmpi eq, %arg0, %c0_i32 : i32
    %1 = arith.extui %0 : i1 to i32
    %c0_i32_0 = arith.constant 0 : i32
    %2 = arith.cmpi ne, %1, %c0_i32_0 : i32
    scf.if %2 {
      %c0_177 = arith.constant 0 : index
      %c0_178 = arith.constant 0 : index
      %342 = vector.load %arg1[%c0_177, %c0_178] : memref<8x32xf32, #tpu.memory_space<vmem>>, vector<8x32xf32>
      %c0_179 = arith.constant 0 : index
      %c0_180 = arith.constant 0 : index
      %343 = vector.load %arg37[%c0_179, %c0_180] : memref<8x32xf32, #tpu.memory_space<vmem>>, vector<8x32xf32>
      tpu.vector_store %arg37[%c0_179, %c0_180], %342 {strides = array<i32>} : memref<8x32xf32, #tpu.memory_space<vmem>>, vector<8x32xf32>,
    } else {
    }
    %c0 = arith.constant 0 : index
    %c0_1 = arith.constant 0 : index
    %3 = vector.load %arg37[%c0, %c0_1] : memref<8x32xf32, #tpu.memory_space<vmem>>, vector<8x32xf32>
    %c0_2 = arith.constant 0 : index
    %c0_3 = arith.constant 0 : index
    %4 = vector.load %arg2[%c0_2, %c0_3] : memref<8x32xf32, #tpu.memory_space<vmem>>, vector<8x32xf32>
    %c0_4 = arith.constant 0 : index
    %c0_5 = arith.constant 0 : index
    %c0_6 = arith.constant 0 : index
    %5 = vector.load %arg6[%c0_4, %c0_5, %c0_6] : memref<1x32x32xf32, #tpu.memory_space<vmem>>, vector<1x32x32xf32>
    %6 = vector.shape_cast %5 : vector<1x32x32xf32> to vector<32x32xf32>
    %c0_7 = arith.constant 0 : index
    %c0_8 = arith.constant 0 : index
    %c0_9 = arith.constant 0 : index
    %7 = vector.load %arg7[%c0_7, %c0_8, %c0_9] : memref<1x1x32xf32, #tpu.memory_space<vmem>>, vector<1x1x32xf32>
    %8 = vector.shape_cast %7 : vector<1x1x32xf32> to vector<1x32xf32>
    %c0_10 = arith.constant 0 : index
    %c0_11 = arith.constant 0 : index
    %c0_12 = arith.constant 0 : index
    %9 = vector.load %arg8[%c0_10, %c0_11, %c0_12] : memref<1x32x32xf32, #tpu.memory_space<vmem>>, vector<1x32x32xf32>
    %10 = vector.shape_cast %9 : vector<1x32x32xf32> to vector<32x32xf32>
    %c0_13 = arith.constant 0 : index
    %c0_14 = arith.constant 0 : index
    %c0_15 = arith.constant 0 : index
    %11 = vector.load %arg9[%c0_13, %c0_14, %c0_15] : memref<1x1x32xf32, #tpu.memory_space<vmem>>, vector<1x1x32xf32>
    %12 = vector.shape_cast %11 : vector<1x1x32xf32> to vector<1x32xf32>
    %c0_16 = arith.constant 0 : index
    %c0_17 = arith.constant 0 : index
    %c0_18 = arith.constant 0 : index
    %13 = vector.load %arg10[%c0_16, %c0_17, %c0_18] : memref<1x32x32xf32, #tpu.memory_space<vmem>>, vector<1x32x32xf32>
    %14 = vector.shape_cast %13 : vector<1x32x32xf32> to vector<32x32xf32>
    %c0_19 = arith.constant 0 : index
    %c0_20 = arith.constant 0 : index
    %c0_21 = arith.constant 0 : index
    %15 = vector.load %arg11[%c0_19, %c0_20, %c0_21] : memref<1x1x32xf32, #tpu.memory_space<vmem>>, vector<1x1x32xf32>
    %16 = vector.shape_cast %15 : vector<1x1x32xf32> to vector<1x32xf32>
    %c0_22 = arith.constant 0 : index
    %c0_23 = arith.constant 0 : index
    %c0_24 = arith.constant 0 : index
    %17 = vector.load %arg12[%c0_22, %c0_23, %c0_24] : memref<1x32x32xf32, #tpu.memory_space<vmem>>, vector<1x32x32xf32>
    %18 = vector.shape_cast %17 : vector<1x32x32xf32> to vector<32x32xf32>
    %c0_25 = arith.constant 0 : index
    %c0_26 = arith.constant 0 : index
    %c0_27 = arith.constant 0 : index
    %19 = vector.load %arg13[%c0_25, %c0_26, %c0_27] : memref<1x1x32xf32, #tpu.memory_space<vmem>>, vector<1x1x32xf32>
    %20 = vector.shape_cast %19 : vector<1x1x32xf32> to vector<1x32xf32>
    %c0_28 = arith.constant 0 : index
    %c0_29 = arith.constant 0 : index
    %21 = vector.load %arg3[%c0_28, %c0_29] : memref<8x8xf32, #tpu.memory_space<vmem>>, vector<8x8xf32>
    %cst = arith.constant dense<0.000000e+00> : vector<8x32xf32>
    %22 = tpu.matmul %3, %6, %cst {dimension_numbers = #tpu.dot_dimension_numbers<[1], [0], [0], [1], [0, 0, 1, 1], [], []>} : vector<8x32xf32>, vector<32x32xf32>, vector<8x32xf32> -> vector<8x32xf32>
    %23 = vector.broadcast %8 : vector<1x32xf32> to vector<8x32xf32>
    %24 = arith.addf %22, %23 : vector<8x32xf32>
    %cst_30 = arith.constant dense<0.000000e+00> : vector<8x32xf32>
    %25 = tpu.matmul %3, %10, %cst_30 {dimension_numbers = #tpu.dot_dimension_numbers<[1], [0], [0], [1], [0, 0, 1, 1], [], []>} : vector<8x32xf32>, vector<32x32xf32>, vector<8x32xf32> -> vector<8x32xf32>
    %26 = vector.broadcast %12 : vector<1x32xf32> to vector<8x32xf32>
    %27 = arith.addf %25, %26 : vector<8x32xf32>
    %cst_31 = arith.constant dense<0.000000e+00> : vector<8x32xf32>
    %28 = tpu.matmul %3, %14, %cst_31 {dimension_numbers = #tpu.dot_dimension_numbers<[1], [0], [0], [1], [0, 0, 1, 1], [], []>} : vector<8x32xf32>, vector<32x32xf32>, vector<8x32xf32> -> vector<8x32xf32>
    %29 = vector.broadcast %16 : vector<1x32xf32> to vector<8x32xf32>
    %30 = arith.addf %28, %29 : vector<8x32xf32>
    %cst_32 = arith.constant 0.000000e+00 : f32
    %31 = vector.broadcast %cst_32 : f32 to vector<8x32xf32>
    %c0_33 = arith.constant 0 : index
    %c0_34 = arith.constant 0 : index
    %c0_35 = arith.constant 0 : index
    %32 = vector.load %arg5[%c0_33, %c0_34, %c0_35] : memref<4x1x32xf32, #tpu.memory_space<vmem>>, vector<1x1x32xf32>
    %33 = vector.shape_cast %32 : vector<1x1x32xf32> to vector<1x32xf32>
    %34 = vector.broadcast %33 : vector<1x32xf32> to vector<8x32xf32>
    %35 = arith.mulf %24, %34 : vector<8x32xf32>
    %cst_36 = arith.constant dense<0.000000e+00> : vector<8x8xf32>
    %36 = tpu.matmul %35, %27, %cst_36 {dimension_numbers = #tpu.dot_dimension_numbers<[1], [1], [0], [0], [0, 0, 1, 0], [], []>} : vector<8x32xf32>, vector<8x32xf32>, vector<8x8xf32> -> vector<8x8xf32>
    %cst_37 = arith.constant 0.353553385 : f32
    %37 = vector.broadcast %cst_37 : f32 to vector<8x8xf32>
    %38 = arith.mulf %36, %37 : vector<8x8xf32>
    %39 = arith.addf %38, %21 : vector<8x8xf32>
    %cst_38 = arith.constant dense<0xFF800000> : vector<8xf32>
    %40 = vector.multi_reduction <maximumf>, %39, %cst_38 [1] : vector<8x8xf32> to vector<8xf32>
    %41 = vector.shape_cast %40 : vector<8xf32> to vector<8x1xf32>
    %42 = vector.broadcast %41 : vector<8x1xf32> to vector<8x8xf32>
    %43 = arith.subf %39, %42 : vector<8x8xf32>
    %44 = math.exp %43 : vector<8x8xf32>
    %cst_39 = arith.constant dense<0.000000e+00> : vector<8xf32>
    %45 = vector.multi_reduction <add>, %44, %cst_39 [1] : vector<8x8xf32> to vector<8xf32>
    %46 = vector.shape_cast %45 : vector<8xf32> to vector<8x1xf32>
    %47 = tpu.reciprocal %46 {approx = true} : vector<8x1xf32> -> vector<8x1xf32>
    %48 = vector.broadcast %47 : vector<8x1xf32> to vector<8x8xf32>
    %49 = arith.mulf %44, %48 : vector<8x8xf32>
    %50 = vector.broadcast %33 : vector<1x32xf32> to vector<8x32xf32>
    %51 = arith.mulf %30, %50 : vector<8x32xf32>
    %cst_40 = arith.constant dense<0.000000e+00> : vector<8x32xf32>
    %52 = tpu.matmul %49, %51, %cst_40 {dimension_numbers = #tpu.dot_dimension_numbers<[1], [0], [0], [1], [0, 0, 1, 1], [], []>} : vector<8x8xf32>, vector<8x32xf32>, vector<8x32xf32> -> vector<8x32xf32>
    %53 = arith.addf %31, %52 : vector<8x32xf32>
    %c1 = arith.constant 1 : index
    %c0_41 = arith.constant 0 : index
    %c0_42 = arith.constant 0 : index
    %54 = vector.load %arg5[%c1, %c0_41, %c0_42] : memref<4x1x32xf32, #tpu.memory_space<vmem>>, vector<1x1x32xf32>
    %55 = vector.shape_cast %54 : vector<1x1x32xf32> to vector<1x32xf32>
    %56 = vector.broadcast %55 : vector<1x32xf32> to vector<8x32xf32>
    %57 = arith.mulf %24, %56 : vector<8x32xf32>
    %cst_43 = arith.constant dense<0.000000e+00> : vector<8x8xf32>
    %58 = tpu.matmul %57, %27, %cst_43 {dimension_numbers = #tpu.dot_dimension_numbers<[1], [1], [0], [0], [0, 0, 1, 0], [], []>} : vector<8x32xf32>, vector<8x32xf32>, vector<8x8xf32> -> vector<8x8xf32>
    %cst_44 = arith.constant 0.353553385 : f32
    %59 = vector.broadcast %cst_44 : f32 to vector<8x8xf32>
    %60 = arith.mulf %58, %59 : vector<8x8xf32>
    %61 = arith.addf %60, %21 : vector<8x8xf32>
    %cst_45 = arith.constant dense<0xFF800000> : vector<8xf32>
    %62 = vector.multi_reduction <maximumf>, %61, %cst_45 [1] : vector<8x8xf32> to vector<8xf32>
    %63 = vector.shape_cast %62 : vector<8xf32> to vector<8x1xf32>
    %64 = vector.broadcast %63 : vector<8x1xf32> to vector<8x8xf32>
    %65 = arith.subf %61, %64 : vector<8x8xf32>
    %66 = math.exp %65 : vector<8x8xf32>
    %cst_46 = arith.constant dense<0.000000e+00> : vector<8xf32>
    %67 = vector.multi_reduction <add>, %66, %cst_46 [1] : vector<8x8xf32> to vector<8xf32>
    %68 = vector.shape_cast %67 : vector<8xf32> to vector<8x1xf32>
    %69 = tpu.reciprocal %68 {approx = true} : vector<8x1xf32> -> vector<8x1xf32>
    %70 = vector.broadcast %69 : vector<8x1xf32> to vector<8x8xf32>
    %71 = arith.mulf %66, %70 : vector<8x8xf32>
    %72 = vector.broadcast %55 : vector<1x32xf32> to vector<8x32xf32>
    %73 = arith.mulf %30, %72 : vector<8x32xf32>
    %cst_47 = arith.constant dense<0.000000e+00> : vector<8x32xf32>
    %74 = tpu.matmul %71, %73, %cst_47 {dimension_numbers = #tpu.dot_dimension_numbers<[1], [0], [0], [1], [0, 0, 1, 1], [], []>} : vector<8x8xf32>, vector<8x32xf32>, vector<8x32xf32> -> vector<8x32xf32>
    %75 = arith.addf %53, %74 : vector<8x32xf32>
    %c2 = arith.constant 2 : index
    %c0_48 = arith.constant 0 : index
    %c0_49 = arith.constant 0 : index
    %76 = vector.load %arg5[%c2, %c0_48, %c0_49] : memref<4x1x32xf32, #tpu.memory_space<vmem>>, vector<1x1x32xf32>
    %77 = vector.shape_cast %76 : vector<1x1x32xf32> to vector<1x32xf32>
    %78 = vector.broadcast %77 : vector<1x32xf32> to vector<8x32xf32>
    %79 = arith.mulf %24, %78 : vector<8x32xf32>
    %cst_50 = arith.constant dense<0.000000e+00> : vector<8x8xf32>
    %80 = tpu.matmul %79, %27, %cst_50 {dimension_numbers = #tpu.dot_dimension_numbers<[1], [1], [0], [0], [0, 0, 1, 0], [], []>} : vector<8x32xf32>, vector<8x32xf32>, vector<8x8xf32> -> vector<8x8xf32>
    %cst_51 = arith.constant 0.353553385 : f32
    %81 = vector.broadcast %cst_51 : f32 to vector<8x8xf32>
    %82 = arith.mulf %80, %81 : vector<8x8xf32>
    %83 = arith.addf %82, %21 : vector<8x8xf32>
    %cst_52 = arith.constant dense<0xFF800000> : vector<8xf32>
    %84 = vector.multi_reduction <maximumf>, %83, %cst_52 [1] : vector<8x8xf32> to vector<8xf32>
    %85 = vector.shape_cast %84 : vector<8xf32> to vector<8x1xf32>
    %86 = vector.broadcast %85 : vector<8x1xf32> to vector<8x8xf32>
    %87 = arith.subf %83, %86 : vector<8x8xf32>
    %88 = math.exp %87 : vector<8x8xf32>
    %cst_53 = arith.constant dense<0.000000e+00> : vector<8xf32>
    %89 = vector.multi_reduction <add>, %88, %cst_53 [1] : vector<8x8xf32> to vector<8xf32>
    %90 = vector.shape_cast %89 : vector<8xf32> to vector<8x1xf32>
    %91 = tpu.reciprocal %90 {approx = true} : vector<8x1xf32> -> vector<8x1xf32>
    %92 = vector.broadcast %91 : vector<8x1xf32> to vector<8x8xf32>
    %93 = arith.mulf %88, %92 : vector<8x8xf32>
    %94 = vector.broadcast %77 : vector<1x32xf32> to vector<8x32xf32>
    %95 = arith.mulf %30, %94 : vector<8x32xf32>
    %cst_54 = arith.constant dense<0.000000e+00> : vector<8x32xf32>
    %96 = tpu.matmul %93, %95, %cst_54 {dimension_numbers = #tpu.dot_dimension_numbers<[1], [0], [0], [1], [0, 0, 1, 1], [], []>} : vector<8x8xf32>, vector<8x32xf32>, vector<8x32xf32> -> vector<8x32xf32>
    %97 = arith.addf %75, %96 : vector<8x32xf32>
    %c3 = arith.constant 3 : index
    %c0_55 = arith.constant 0 : index
    %c0_56 = arith.constant 0 : index
    %98 = vector.load %arg5[%c3, %c0_55, %c0_56] : memref<4x1x32xf32, #tpu.memory_space<vmem>>, vector<1x1x32xf32>
    %99 = vector.shape_cast %98 : vector<1x1x32xf32> to vector<1x32xf32>
    %100 = vector.broadcast %99 : vector<1x32xf32> to vector<8x32xf32>
    %101 = arith.mulf %24, %100 : vector<8x32xf32>
    %cst_57 = arith.constant dense<0.000000e+00> : vector<8x8xf32>
    %102 = tpu.matmul %101, %27, %cst_57 {dimension_numbers = #tpu.dot_dimension_numbers<[1], [1], [0], [0], [0, 0, 1, 0], [], []>} : vector<8x32xf32>, vector<8x32xf32>, vector<8x8xf32> -> vector<8x8xf32>
    %cst_58 = arith.constant 0.353553385 : f32
    %103 = vector.broadcast %cst_58 : f32 to vector<8x8xf32>
    %104 = arith.mulf %102, %103 : vector<8x8xf32>
    %105 = arith.addf %104, %21 : vector<8x8xf32>
    %cst_59 = arith.constant dense<0xFF800000> : vector<8xf32>
    %106 = vector.multi_reduction <maximumf>, %105, %cst_59 [1] : vector<8x8xf32> to vector<8xf32>
    %107 = vector.shape_cast %106 : vector<8xf32> to vector<8x1xf32>
    %108 = vector.broadcast %107 : vector<8x1xf32> to vector<8x8xf32>
    %109 = arith.subf %105, %108 : vector<8x8xf32>
    %110 = math.exp %109 : vector<8x8xf32>
    %cst_60 = arith.constant dense<0.000000e+00> : vector<8xf32>
    %111 = vector.multi_reduction <add>, %110, %cst_60 [1] : vector<8x8xf32> to vector<8xf32>
    %112 = vector.shape_cast %111 : vector<8xf32> to vector<8x1xf32>
    %113 = tpu.reciprocal %112 {approx = true} : vector<8x1xf32> -> vector<8x1xf32>
    %114 = vector.broadcast %113 : vector<8x1xf32> to vector<8x8xf32>
    %115 = arith.mulf %110, %114 : vector<8x8xf32>
    %116 = vector.broadcast %99 : vector<1x32xf32> to vector<8x32xf32>
    %117 = arith.mulf %30, %116 : vector<8x32xf32>
    %cst_61 = arith.constant dense<0.000000e+00> : vector<8x32xf32>
    %118 = tpu.matmul %115, %117, %cst_61 {dimension_numbers = #tpu.dot_dimension_numbers<[1], [0], [0], [1], [0, 0, 1, 1], [], []>} : vector<8x8xf32>, vector<8x32xf32>, vector<8x32xf32> -> vector<8x32xf32>
    %119 = arith.addf %97, %118 : vector<8x32xf32>
    %cst_62 = arith.constant dense<0.000000e+00> : vector<8x32xf32>
    %120 = tpu.matmul %119, %18, %cst_62 {dimension_numbers = #tpu.dot_dimension_numbers<[1], [0], [0], [1], [0, 0, 1, 1], [], []>} : vector<8x32xf32>, vector<32x32xf32>, vector<8x32xf32> -> vector<8x32xf32>
    %121 = vector.broadcast %20 : vector<1x32xf32> to vector<8x32xf32>
    %122 = arith.addf %120, %121 : vector<8x32xf32>
    %123 = arith.addf %3, %122 : vector<8x32xf32>
    %c0_63 = arith.constant 0 : index
    %c0_64 = arith.constant 0 : index
    %c0_65 = arith.constant 0 : index
    %124 = vector.load %arg14[%c0_63, %c0_64, %c0_65] : memref<1x1x32xf32, #tpu.memory_space<vmem>>, vector<1x1x32xf32>
    %125 = vector.shape_cast %124 : vector<1x1x32xf32> to vector<1x32xf32>
    %c0_66 = arith.constant 0 : index
    %c0_67 = arith.constant 0 : index
    %c0_68 = arith.constant 0 : index
    %126 = vector.load %arg15[%c0_66, %c0_67, %c0_68] : memref<1x1x32xf32, #tpu.memory_space<vmem>>, vector<1x1x32xf32>
    %127 = vector.shape_cast %126 : vector<1x1x32xf32> to vector<1x32xf32>
    %cst_69 = arith.constant dense<0.000000e+00> : vector<8xf32>
    %128 = vector.multi_reduction <add>, %123, %cst_69 [1] : vector<8x32xf32> to vector<8xf32>
    %129 = vector.shape_cast %128 : vector<8xf32> to vector<8x1xf32>
    %cst_70 = arith.constant 3.200000e+01 : f32
    %130 = vector.broadcast %cst_70 : f32 to vector<8x1xf32>
    %131 = arith.divf %129, %130 : vector<8x1xf32>
    %132 = vector.broadcast %131 : vector<8x1xf32> to vector<8x32xf32>
    %133 = arith.subf %123, %132 : vector<8x32xf32>
    %134 = arith.mulf %133, %133 : vector<8x32xf32>
    %cst_71 = arith.constant dense<0.000000e+00> : vector<8xf32>
    %135 = vector.multi_reduction <add>, %134, %cst_71 [1] : vector<8x32xf32> to vector<8xf32>
    %136 = vector.shape_cast %135 : vector<8xf32> to vector<8x1xf32>
    %cst_72 = arith.constant 3.200000e+01 : f32
    %137 = vector.broadcast %cst_72 : f32 to vector<8x1xf32>
    %138 = arith.divf %136, %137 : vector<8x1xf32>
    %139 = vector.broadcast %131 : vector<8x1xf32> to vector<8x32xf32>
    %140 = arith.subf %123, %139 : vector<8x32xf32>
    %cst_73 = arith.constant 9.99999974E-6 : f32
    %141 = vector.broadcast %cst_73 : f32 to vector<8x1xf32>
    %142 = arith.addf %138, %141 : vector<8x1xf32>
    %143 = math.rsqrt %142 : vector<8x1xf32>
    %144 = vector.broadcast %143 : vector<8x1xf32> to vector<8x32xf32>
    %145 = arith.mulf %140, %144 : vector<8x32xf32>
    %146 = vector.broadcast %125 : vector<1x32xf32> to vector<8x32xf32>
    %147 = arith.mulf %145, %146 : vector<8x32xf32>
    %148 = vector.broadcast %127 : vector<1x32xf32> to vector<8x32xf32>
    %149 = arith.addf %147, %148 : vector<8x32xf32>
    %c0_74 = arith.constant 0 : index
    %c0_75 = arith.constant 0 : index
    %c0_76 = arith.constant 0 : index
    %150 = vector.load %arg16[%c0_74, %c0_75, %c0_76] : memref<1x32x32xf32, #tpu.memory_space<vmem>>, vector<1x32x32xf32>
    %151 = vector.shape_cast %150 : vector<1x32x32xf32> to vector<32x32xf32>
    %c0_77 = arith.constant 0 : index
    %c0_78 = arith.constant 0 : index
    %c0_79 = arith.constant 0 : index
    %152 = vector.load %arg17[%c0_77, %c0_78, %c0_79] : memref<1x1x32xf32, #tpu.memory_space<vmem>>, vector<1x1x32xf32>
    %153 = vector.shape_cast %152 : vector<1x1x32xf32> to vector<1x32xf32>
    %c0_80 = arith.constant 0 : index
    %c0_81 = arith.constant 0 : index
    %c0_82 = arith.constant 0 : index
    %154 = vector.load %arg18[%c0_80, %c0_81, %c0_82] : memref<1x32x32xf32, #tpu.memory_space<vmem>>, vector<1x32x32xf32>
    %155 = vector.shape_cast %154 : vector<1x32x32xf32> to vector<32x32xf32>
    %c0_83 = arith.constant 0 : index
    %c0_84 = arith.constant 0 : index
    %c0_85 = arith.constant 0 : index
    %156 = vector.load %arg19[%c0_83, %c0_84, %c0_85] : memref<1x1x32xf32, #tpu.memory_space<vmem>>, vector<1x1x32xf32>
    %157 = vector.shape_cast %156 : vector<1x1x32xf32> to vector<1x32xf32>
    %c0_86 = arith.constant 0 : index
    %c0_87 = arith.constant 0 : index
    %c0_88 = arith.constant 0 : index
    %158 = vector.load %arg20[%c0_86, %c0_87, %c0_88] : memref<1x32x32xf32, #tpu.memory_space<vmem>>, vector<1x32x32xf32>
    %159 = vector.shape_cast %158 : vector<1x32x32xf32> to vector<32x32xf32>
    %c0_89 = arith.constant 0 : index
    %c0_90 = arith.constant 0 : index
    %c0_91 = arith.constant 0 : index
    %160 = vector.load %arg21[%c0_89, %c0_90, %c0_91] : memref<1x1x32xf32, #tpu.memory_space<vmem>>, vector<1x1x32xf32>
    %161 = vector.shape_cast %160 : vector<1x1x32xf32> to vector<1x32xf32>
    %c0_92 = arith.constant 0 : index
    %c0_93 = arith.constant 0 : index
    %c0_94 = arith.constant 0 : index
    %162 = vector.load %arg22[%c0_92, %c0_93, %c0_94] : memref<1x32x32xf32, #tpu.memory_space<vmem>>, vector<1x32x32xf32>
    %163 = vector.shape_cast %162 : vector<1x32x32xf32> to vector<32x32xf32>
    %c0_95 = arith.constant 0 : index
    %c0_96 = arith.constant 0 : index
    %c0_97 = arith.constant 0 : index
    %164 = vector.load %arg23[%c0_95, %c0_96, %c0_97] : memref<1x1x32xf32, #tpu.memory_space<vmem>>, vector<1x1x32xf32>
    %165 = vector.shape_cast %164 : vector<1x1x32xf32> to vector<1x32xf32>
    %c0_98 = arith.constant 0 : index
    %c0_99 = arith.constant 0 : index
    %166 = vector.load %arg4[%c0_98, %c0_99] : memref<8x8xf32, #tpu.memory_space<vmem>>, vector<8x8xf32>
    %cst_100 = arith.constant dense<0.000000e+00> : vector<8x32xf32>
    %167 = tpu.matmul %149, %151, %cst_100 {dimension_numbers = #tpu.dot_dimension_numbers<[1], [0], [0], [1], [0, 0, 1, 1], [], []>} : vector<8x32xf32>, vector<32x32xf32>, vector<8x32xf32> -> vector<8x32xf32>
    %168 = vector.broadcast %153 : vector<1x32xf32> to vector<8x32xf32>
    %169 = arith.addf %167, %168 : vector<8x32xf32>
    %cst_101 = arith.constant dense<0.000000e+00> : vector<8x32xf32>
    %170 = tpu.matmul %4, %155, %cst_101 {dimension_numbers = #tpu.dot_dimension_numbers<[1], [0], [0], [1], [0, 0, 1, 1], [], []>} : vector<8x32xf32>, vector<32x32xf32>, vector<8x32xf32> -> vector<8x32xf32>
    %171 = vector.broadcast %157 : vector<1x32xf32> to vector<8x32xf32>
    %172 = arith.addf %170, %171 : vector<8x32xf32>
    %cst_102 = arith.constant dense<0.000000e+00> : vector<8x32xf32>
    %173 = tpu.matmul %4, %159, %cst_102 {dimension_numbers = #tpu.dot_dimension_numbers<[1], [0], [0], [1], [0, 0, 1, 1], [], []>} : vector<8x32xf32>, vector<32x32xf32>, vector<8x32xf32> -> vector<8x32xf32>
    %174 = vector.broadcast %161 : vector<1x32xf32> to vector<8x32xf32>
    %175 = arith.addf %173, %174 : vector<8x32xf32>
    %cst_103 = arith.constant 0.000000e+00 : f32
    %176 = vector.broadcast %cst_103 : f32 to vector<8x32xf32>
    %c0_104 = arith.constant 0 : index
    %c0_105 = arith.constant 0 : index
    %c0_106 = arith.constant 0 : index
    %177 = vector.load %arg5[%c0_104, %c0_105, %c0_106] : memref<4x1x32xf32, #tpu.memory_space<vmem>>, vector<1x1x32xf32>
    %178 = vector.shape_cast %177 : vector<1x1x32xf32> to vector<1x32xf32>
    %179 = vector.broadcast %178 : vector<1x32xf32> to vector<8x32xf32>
    %180 = arith.mulf %169, %179 : vector<8x32xf32>
    %cst_107 = arith.constant dense<0.000000e+00> : vector<8x8xf32>
    %181 = tpu.matmul %180, %172, %cst_107 {dimension_numbers = #tpu.dot_dimension_numbers<[1], [1], [0], [0], [0, 0, 1, 0], [], []>} : vector<8x32xf32>, vector<8x32xf32>, vector<8x8xf32> -> vector<8x8xf32>
    %cst_108 = arith.constant 0.353553385 : f32
    %182 = vector.broadcast %cst_108 : f32 to vector<8x8xf32>
    %183 = arith.mulf %181, %182 : vector<8x8xf32>
    %184 = arith.addf %183, %166 : vector<8x8xf32>
    %cst_109 = arith.constant dense<0xFF800000> : vector<8xf32>
    %185 = vector.multi_reduction <maximumf>, %184, %cst_109 [1] : vector<8x8xf32> to vector<8xf32>
    %186 = vector.shape_cast %185 : vector<8xf32> to vector<8x1xf32>
    %187 = vector.broadcast %186 : vector<8x1xf32> to vector<8x8xf32>
    %188 = arith.subf %184, %187 : vector<8x8xf32>
    %189 = math.exp %188 : vector<8x8xf32>
    %cst_110 = arith.constant dense<0.000000e+00> : vector<8xf32>
    %190 = vector.multi_reduction <add>, %189, %cst_110 [1] : vector<8x8xf32> to vector<8xf32>
    %191 = vector.shape_cast %190 : vector<8xf32> to vector<8x1xf32>
    %192 = tpu.reciprocal %191 {approx = true} : vector<8x1xf32> -> vector<8x1xf32>
    %193 = vector.broadcast %192 : vector<8x1xf32> to vector<8x8xf32>
    %194 = arith.mulf %189, %193 : vector<8x8xf32>
    %195 = vector.broadcast %178 : vector<1x32xf32> to vector<8x32xf32>
    %196 = arith.mulf %175, %195 : vector<8x32xf32>
    %cst_111 = arith.constant dense<0.000000e+00> : vector<8x32xf32>
    %197 = tpu.matmul %194, %196, %cst_111 {dimension_numbers = #tpu.dot_dimension_numbers<[1], [0], [0], [1], [0, 0, 1, 1], [], []>} : vector<8x8xf32>, vector<8x32xf32>, vector<8x32xf32> -> vector<8x32xf32>
    %198 = arith.addf %176, %197 : vector<8x32xf32>
    %c1_112 = arith.constant 1 : index
    %c0_113 = arith.constant 0 : index
    %c0_114 = arith.constant 0 : index
    %199 = vector.load %arg5[%c1_112, %c0_113, %c0_114] : memref<4x1x32xf32, #tpu.memory_space<vmem>>, vector<1x1x32xf32>
    %200 = vector.shape_cast %199 : vector<1x1x32xf32> to vector<1x32xf32>
    %201 = vector.broadcast %200 : vector<1x32xf32> to vector<8x32xf32>
    %202 = arith.mulf %169, %201 : vector<8x32xf32>
    %cst_115 = arith.constant dense<0.000000e+00> : vector<8x8xf32>
    %203 = tpu.matmul %202, %172, %cst_115 {dimension_numbers = #tpu.dot_dimension_numbers<[1], [1], [0], [0], [0, 0, 1, 0], [], []>} : vector<8x32xf32>, vector<8x32xf32>, vector<8x8xf32> -> vector<8x8xf32>
    %cst_116 = arith.constant 0.353553385 : f32
    %204 = vector.broadcast %cst_116 : f32 to vector<8x8xf32>
    %205 = arith.mulf %203, %204 : vector<8x8xf32>
    %206 = arith.addf %205, %166 : vector<8x8xf32>
    %cst_117 = arith.constant dense<0xFF800000> : vector<8xf32>
    %207 = vector.multi_reduction <maximumf>, %206, %cst_117 [1] : vector<8x8xf32> to vector<8xf32>
    %208 = vector.shape_cast %207 : vector<8xf32> to vector<8x1xf32>
    %209 = vector.broadcast %208 : vector<8x1xf32> to vector<8x8xf32>
    %210 = arith.subf %206, %209 : vector<8x8xf32>
    %211 = math.exp %210 : vector<8x8xf32>
    %cst_118 = arith.constant dense<0.000000e+00> : vector<8xf32>
    %212 = vector.multi_reduction <add>, %211, %cst_118 [1] : vector<8x8xf32> to vector<8xf32>
    %213 = vector.shape_cast %212 : vector<8xf32> to vector<8x1xf32>
    %214 = tpu.reciprocal %213 {approx = true} : vector<8x1xf32> -> vector<8x1xf32>
    %215 = vector.broadcast %214 : vector<8x1xf32> to vector<8x8xf32>
    %216 = arith.mulf %211, %215 : vector<8x8xf32>
    %217 = vector.broadcast %200 : vector<1x32xf32> to vector<8x32xf32>
    %218 = arith.mulf %175, %217 : vector<8x32xf32>
    %cst_119 = arith.constant dense<0.000000e+00> : vector<8x32xf32>
    %219 = tpu.matmul %216, %218, %cst_119 {dimension_numbers = #tpu.dot_dimension_numbers<[1], [0], [0], [1], [0, 0, 1, 1], [], []>} : vector<8x8xf32>, vector<8x32xf32>, vector<8x32xf32> -> vector<8x32xf32>
    %220 = arith.addf %198, %219 : vector<8x32xf32>
    %c2_120 = arith.constant 2 : index
    %c0_121 = arith.constant 0 : index
    %c0_122 = arith.constant 0 : index
    %221 = vector.load %arg5[%c2_120, %c0_121, %c0_122] : memref<4x1x32xf32, #tpu.memory_space<vmem>>, vector<1x1x32xf32>
    %222 = vector.shape_cast %221 : vector<1x1x32xf32> to vector<1x32xf32>
    %223 = vector.broadcast %222 : vector<1x32xf32> to vector<8x32xf32>
    %224 = arith.mulf %169, %223 : vector<8x32xf32>
    %cst_123 = arith.constant dense<0.000000e+00> : vector<8x8xf32>
    %225 = tpu.matmul %224, %172, %cst_123 {dimension_numbers = #tpu.dot_dimension_numbers<[1], [1], [0], [0], [0, 0, 1, 0], [], []>} : vector<8x32xf32>, vector<8x32xf32>, vector<8x8xf32> -> vector<8x8xf32>
    %cst_124 = arith.constant 0.353553385 : f32
    %226 = vector.broadcast %cst_124 : f32 to vector<8x8xf32>
    %227 = arith.mulf %225, %226 : vector<8x8xf32>
    %228 = arith.addf %227, %166 : vector<8x8xf32>
    %cst_125 = arith.constant dense<0xFF800000> : vector<8xf32>
    %229 = vector.multi_reduction <maximumf>, %228, %cst_125 [1] : vector<8x8xf32> to vector<8xf32>
    %230 = vector.shape_cast %229 : vector<8xf32> to vector<8x1xf32>
    %231 = vector.broadcast %230 : vector<8x1xf32> to vector<8x8xf32>
    %232 = arith.subf %228, %231 : vector<8x8xf32>
    %233 = math.exp %232 : vector<8x8xf32>
    %cst_126 = arith.constant dense<0.000000e+00> : vector<8xf32>
    %234 = vector.multi_reduction <add>, %233, %cst_126 [1] : vector<8x8xf32> to vector<8xf32>
    %235 = vector.shape_cast %234 : vector<8xf32> to vector<8x1xf32>
    %236 = tpu.reciprocal %235 {approx = true} : vector<8x1xf32> -> vector<8x1xf32>
    %237 = vector.broadcast %236 : vector<8x1xf32> to vector<8x8xf32>
    %238 = arith.mulf %233, %237 : vector<8x8xf32>
    %239 = vector.broadcast %222 : vector<1x32xf32> to vector<8x32xf32>
    %240 = arith.mulf %175, %239 : vector<8x32xf32>
    %cst_127 = arith.constant dense<0.000000e+00> : vector<8x32xf32>
    %241 = tpu.matmul %238, %240, %cst_127 {dimension_numbers = #tpu.dot_dimension_numbers<[1], [0], [0], [1], [0, 0, 1, 1], [], []>} : vector<8x8xf32>, vector<8x32xf32>, vector<8x32xf32> -> vector<8x32xf32>
    %242 = arith.addf %220, %241 : vector<8x32xf32>
    %c3_128 = arith.constant 3 : index
    %c0_129 = arith.constant 0 : index
    %c0_130 = arith.constant 0 : index
    %243 = vector.load %arg5[%c3_128, %c0_129, %c0_130] : memref<4x1x32xf32, #tpu.memory_space<vmem>>, vector<1x1x32xf32>
    %244 = vector.shape_cast %243 : vector<1x1x32xf32> to vector<1x32xf32>
    %245 = vector.broadcast %244 : vector<1x32xf32> to vector<8x32xf32>
    %246 = arith.mulf %169, %245 : vector<8x32xf32>
    %cst_131 = arith.constant dense<0.000000e+00> : vector<8x8xf32>
    %247 = tpu.matmul %246, %172, %cst_131 {dimension_numbers = #tpu.dot_dimension_numbers<[1], [1], [0], [0], [0, 0, 1, 0], [], []>} : vector<8x32xf32>, vector<8x32xf32>, vector<8x8xf32> -> vector<8x8xf32>
    %cst_132 = arith.constant 0.353553385 : f32
    %248 = vector.broadcast %cst_132 : f32 to vector<8x8xf32>
    %249 = arith.mulf %247, %248 : vector<8x8xf32>
    %250 = arith.addf %249, %166 : vector<8x8xf32>
    %cst_133 = arith.constant dense<0xFF800000> : vector<8xf32>
    %251 = vector.multi_reduction <maximumf>, %250, %cst_133 [1] : vector<8x8xf32> to vector<8xf32>
    %252 = vector.shape_cast %251 : vector<8xf32> to vector<8x1xf32>
    %253 = vector.broadcast %252 : vector<8x1xf32> to vector<8x8xf32>
    %254 = arith.subf %250, %253 : vector<8x8xf32>
    %255 = math.exp %254 : vector<8x8xf32>
    %cst_134 = arith.constant dense<0.000000e+00> : vector<8xf32>
    %256 = vector.multi_reduction <add>, %255, %cst_134 [1] : vector<8x8xf32> to vector<8xf32>
    %257 = vector.shape_cast %256 : vector<8xf32> to vector<8x1xf32>
    %258 = tpu.reciprocal %257 {approx = true} : vector<8x1xf32> -> vector<8x1xf32>
    %259 = vector.broadcast %258 : vector<8x1xf32> to vector<8x8xf32>
    %260 = arith.mulf %255, %259 : vector<8x8xf32>
    %261 = vector.broadcast %244 : vector<1x32xf32> to vector<8x32xf32>
    %262 = arith.mulf %175, %261 : vector<8x32xf32>
    %cst_135 = arith.constant dense<0.000000e+00> : vector<8x32xf32>
    %263 = tpu.matmul %260, %262, %cst_135 {dimension_numbers = #tpu.dot_dimension_numbers<[1], [0], [0], [1], [0, 0, 1, 1], [], []>} : vector<8x8xf32>, vector<8x32xf32>, vector<8x32xf32> -> vector<8x32xf32>
    %264 = arith.addf %242, %263 : vector<8x32xf32>
    %cst_136 = arith.constant dense<0.000000e+00> : vector<8x32xf32>
    %265 = tpu.matmul %264, %163, %cst_136 {dimension_numbers = #tpu.dot_dimension_numbers<[1], [0], [0], [1], [0, 0, 1, 1], [], []>} : vector<8x32xf32>, vector<32x32xf32>, vector<8x32xf32> -> vector<8x32xf32>
    %266 = vector.broadcast %165 : vector<1x32xf32> to vector<8x32xf32>
    %267 = arith.addf %265, %266 : vector<8x32xf32>
    %268 = arith.addf %149, %267 : vector<8x32xf32>
    %c0_137 = arith.constant 0 : index
    %c0_138 = arith.constant 0 : index
    %c0_139 = arith.constant 0 : index
    %269 = vector.load %arg24[%c0_137, %c0_138, %c0_139] : memref<1x1x32xf32, #tpu.memory_space<vmem>>, vector<1x1x32xf32>
    %270 = vector.shape_cast %269 : vector<1x1x32xf32> to vector<1x32xf32>
    %c0_140 = arith.constant 0 : index
    %c0_141 = arith.constant 0 : index
    %c0_142 = arith.constant 0 : index
    %271 = vector.load %arg25[%c0_140, %c0_141, %c0_142] : memref<1x1x32xf32, #tpu.memory_space<vmem>>, vector<1x1x32xf32>
    %272 = vector.shape_cast %271 : vector<1x1x32xf32> to vector<1x32xf32>
    %cst_143 = arith.constant dense<0.000000e+00> : vector<8xf32>
    %273 = vector.multi_reduction <add>, %268, %cst_143 [1] : vector<8x32xf32> to vector<8xf32>
    %274 = vector.shape_cast %273 : vector<8xf32> to vector<8x1xf32>
    %cst_144 = arith.constant 3.200000e+01 : f32
    %275 = vector.broadcast %cst_144 : f32 to vector<8x1xf32>
    %276 = arith.divf %274, %275 : vector<8x1xf32>
    %277 = vector.broadcast %276 : vector<8x1xf32> to vector<8x32xf32>
    %278 = arith.subf %268, %277 : vector<8x32xf32>
    %279 = arith.mulf %278, %278 : vector<8x32xf32>
    %cst_145 = arith.constant dense<0.000000e+00> : vector<8xf32>
    %280 = vector.multi_reduction <add>, %279, %cst_145 [1] : vector<8x32xf32> to vector<8xf32>
    %281 = vector.shape_cast %280 : vector<8xf32> to vector<8x1xf32>
    %cst_146 = arith.constant 3.200000e+01 : f32
    %282 = vector.broadcast %cst_146 : f32 to vector<8x1xf32>
    %283 = arith.divf %281, %282 : vector<8x1xf32>
    %284 = vector.broadcast %276 : vector<8x1xf32> to vector<8x32xf32>
    %285 = arith.subf %268, %284 : vector<8x32xf32>
    %cst_147 = arith.constant 9.99999974E-6 : f32
    %286 = vector.broadcast %cst_147 : f32 to vector<8x1xf32>
    %287 = arith.addf %283, %286 : vector<8x1xf32>
    %288 = math.rsqrt %287 : vector<8x1xf32>
    %289 = vector.broadcast %288 : vector<8x1xf32> to vector<8x32xf32>
    %290 = arith.mulf %285, %289 : vector<8x32xf32>
    %291 = vector.broadcast %270 : vector<1x32xf32> to vector<8x32xf32>
    %292 = arith.mulf %290, %291 : vector<8x32xf32>
    %293 = vector.broadcast %272 : vector<1x32xf32> to vector<8x32xf32>
    %294 = arith.addf %292, %293 : vector<8x32xf32>
    %c0_148 = arith.constant 0 : index
    %c0_149 = arith.constant 0 : index
    %c0_150 = arith.constant 0 : index
    %295 = vector.load %arg26[%c0_148, %c0_149, %c0_150] : memref<1x32x64xf32, #tpu.memory_space<vmem>>, vector<1x32x64xf32>
    %296 = vector.shape_cast %295 : vector<1x32x64xf32> to vector<32x64xf32>
    %cst_151 = arith.constant dense<0.000000e+00> : vector<8x64xf32>
    %297 = tpu.matmul %294, %296, %cst_151 {dimension_numbers = #tpu.dot_dimension_numbers<[1], [0], [0], [1], [0, 0, 1, 1], [], []>} : vector<8x32xf32>, vector<32x64xf32>, vector<8x64xf32> -> vector<8x64xf32>
    %c0_152 = arith.constant 0 : index
    %c0_153 = arith.constant 0 : index
    %c0_154 = arith.constant 0 : index
    %298 = vector.load %arg27[%c0_152, %c0_153, %c0_154] : memref<1x1x64xf32, #tpu.memory_space<vmem>>, vector<1x1x64xf32>
    %299 = vector.shape_cast %298 : vector<1x1x64xf32> to vector<1x64xf32>
    %300 = vector.broadcast %299 : vector<1x64xf32> to vector<8x64xf32>
    %301 = arith.addf %297, %300 : vector<8x64xf32>
    %cst_155 = arith.constant 0.000000e+00 : f32
    %302 = vector.broadcast %cst_155 : f32 to vector<8x64xf32>
    %303 = arith.maximumf %301, %302 : vector<8x64xf32>
    %c0_156 = arith.constant 0 : index
    %c0_157 = arith.constant 0 : index
    %c0_158 = arith.constant 0 : index
    %304 = vector.load %arg28[%c0_156, %c0_157, %c0_158] : memref<1x64x32xf32, #tpu.memory_space<vmem>>, vector<1x64x32xf32>
    %305 = vector.shape_cast %304 : vector<1x64x32xf32> to vector<64x32xf32>
    %cst_159 = arith.constant dense<0.000000e+00> : vector<8x32xf32>
    %306 = tpu.matmul %303, %305, %cst_159 {dimension_numbers = #tpu.dot_dimension_numbers<[1], [0], [0], [1], [0, 0, 1, 1], [], []>} : vector<8x64xf32>, vector<64x32xf32>, vector<8x32xf32> -> vector<8x32xf32>
    %c0_160 = arith.constant 0 : index
    %c0_161 = arith.constant 0 : index
    %c0_162 = arith.constant 0 : index
    %307 = vector.load %arg29[%c0_160, %c0_161, %c0_162] : memref<1x1x32xf32, #tpu.memory_space<vmem>>, vector<1x1x32xf32>
    %308 = vector.shape_cast %307 : vector<1x1x32xf32> to vector<1x32xf32>
    %309 = vector.broadcast %308 : vector<1x32xf32> to vector<8x32xf32>
    %310 = arith.addf %306, %309 : vector<8x32xf32>
    %311 = arith.addf %294, %310 : vector<8x32xf32>
    %c0_163 = arith.constant 0 : index
    %c0_164 = arith.constant 0 : index
    %c0_165 = arith.constant 0 : index
    %312 = vector.load %arg30[%c0_163, %c0_164, %c0_165] : memref<1x1x32xf32, #tpu.memory_space<vmem>>, vector<1x1x32xf32>
    %313 = vector.shape_cast %312 : vector<1x1x32xf32> to vector<1x32xf32>
    %c0_166 = arith.constant 0 : index
    %c0_167 = arith.constant 0 : index
    %c0_168 = arith.constant 0 : index
    %314 = vector.load %arg31[%c0_166, %c0_167, %c0_168] : memref<1x1x32xf32, #tpu.memory_space<vmem>>, vector<1x1x32xf32>
    %315 = vector.shape_cast %314 : vector<1x1x32xf32> to vector<1x32xf32>
    %cst_169 = arith.constant dense<0.000000e+00> : vector<8xf32>
    %316 = vector.multi_reduction <add>, %311, %cst_169 [1] : vector<8x32xf32> to vector<8xf32>
    %317 = vector.shape_cast %316 : vector<8xf32> to vector<8x1xf32>
    %cst_170 = arith.constant 3.200000e+01 : f32
    %318 = vector.broadcast %cst_170 : f32 to vector<8x1xf32>
    %319 = arith.divf %317, %318 : vector<8x1xf32>
    %320 = vector.broadcast %319 : vector<8x1xf32> to vector<8x32xf32>
    %321 = arith.subf %311, %320 : vector<8x32xf32>
    %322 = arith.mulf %321, %321 : vector<8x32xf32>
    %cst_171 = arith.constant dense<0.000000e+00> : vector<8xf32>
    %323 = vector.multi_reduction <add>, %322, %cst_171 [1] : vector<8x32xf32> to vector<8xf32>
    %324 = vector.shape_cast %323 : vector<8xf32> to vector<8x1xf32>
    %cst_172 = arith.constant 3.200000e+01 : f32
    %325 = vector.broadcast %cst_172 : f32 to vector<8x1xf32>
    %326 = arith.divf %324, %325 : vector<8x1xf32>
    %327 = vector.broadcast %319 : vector<8x1xf32> to vector<8x32xf32>
    %328 = arith.subf %311, %327 : vector<8x32xf32>
    %cst_173 = arith.constant 9.99999974E-6 : f32
    %329 = vector.broadcast %cst_173 : f32 to vector<8x1xf32>
    %330 = arith.addf %326, %329 : vector<8x1xf32>
    %331 = math.rsqrt %330 : vector<8x1xf32>
    %332 = vector.broadcast %331 : vector<8x1xf32> to vector<8x32xf32>
    %333 = arith.mulf %328, %332 : vector<8x32xf32>
    %334 = vector.broadcast %313 : vector<1x32xf32> to vector<8x32xf32>
    %335 = arith.mulf %333, %334 : vector<8x32xf32>
    %336 = vector.broadcast %315 : vector<1x32xf32> to vector<8x32xf32>
    %337 = arith.addf %335, %336 : vector<8x32xf32>
    %c0_174 = arith.constant 0 : index
    %c0_175 = arith.constant 0 : index
    %338 = vector.load %arg37[%c0_174, %c0_175] : memref<8x32xf32, #tpu.memory_space<vmem>>, vector<8x32xf32>
    tpu.vector_store %arg37[%c0_174, %c0_175], %337 {strides = array<i32>} : memref<8x32xf32, #tpu.memory_space<vmem>>, vector<8x32xf32>,
    %c1_i32 = arith.constant 1 : i32
    %339 = arith.cmpi eq, %arg0, %c1_i32 : i32
    %340 = arith.extui %339 : i1 to i32
    %c0_i32_176 = arith.constant 0 : i32
    %341 = arith.cmpi ne, %340, %c0_i32_176 : i32
    scf.if %341 {
      %c0_177 = arith.constant 0 : index
      %c0_178 = arith.constant 0 : index
      %342 = vector.load %arg32[%c0_177, %c0_178] : memref<1x32xf32, #tpu.memory_space<vmem>>, vector<1x32xf32>
      %c0_179 = arith.constant 0 : index
      %c0_180 = arith.constant 0 : index
      %343 = vector.load %arg33[%c0_179, %c0_180] : memref<1x32xf32, #tpu.memory_space<vmem>>, vector<1x32xf32>
      %cst_181 = arith.constant dense<0.000000e+00> : vector<8xf32>
      %344 = vector.multi_reduction <add>, %337, %cst_181 [1] : vector<8x32xf32> to vector<8xf32>
      %345 = vector.shape_cast %344 : vector<8xf32> to vector<8x1xf32>
      %cst_182 = arith.constant 3.200000e+01 : f32
      %346 = vector.broadcast %cst_182 : f32 to vector<8x1xf32>
      %347 = arith.divf %345, %346 : vector<8x1xf32>
      %348 = vector.broadcast %347 : vector<8x1xf32> to vector<8x32xf32>
      %349 = arith.subf %337, %348 : vector<8x32xf32>
      %350 = arith.mulf %349, %349 : vector<8x32xf32>
      %cst_183 = arith.constant dense<0.000000e+00> : vector<8xf32>
      %351 = vector.multi_reduction <add>, %350, %cst_183 [1] : vector<8x32xf32> to vector<8xf32>
      %352 = vector.shape_cast %351 : vector<8xf32> to vector<8x1xf32>
      %cst_184 = arith.constant 3.200000e+01 : f32
      %353 = vector.broadcast %cst_184 : f32 to vector<8x1xf32>
      %354 = arith.divf %352, %353 : vector<8x1xf32>
      %355 = vector.broadcast %347 : vector<8x1xf32> to vector<8x32xf32>
      %356 = arith.subf %337, %355 : vector<8x32xf32>
      %cst_185 = arith.constant 9.99999974E-6 : f32
      %357 = vector.broadcast %cst_185 : f32 to vector<8x1xf32>
      %358 = arith.addf %354, %357 : vector<8x1xf32>
      %359 = math.rsqrt %358 : vector<8x1xf32>
      %360 = vector.broadcast %359 : vector<8x1xf32> to vector<8x32xf32>
      %361 = arith.mulf %356, %360 : vector<8x32xf32>
      %362 = vector.broadcast %342 : vector<1x32xf32> to vector<8x32xf32>
      %363 = arith.mulf %361, %362 : vector<8x32xf32>
      %364 = vector.broadcast %343 : vector<1x32xf32> to vector<8x32xf32>
      %365 = arith.addf %363, %364 : vector<8x32xf32>
      %c0_186 = arith.constant 0 : index
      %c0_187 = arith.constant 0 : index
      %366 = vector.load %arg34[%c0_186, %c0_187] : memref<32x16xf32, #tpu.memory_space<vmem>>, vector<32x16xf32>
      %cst_188 = arith.constant dense<0.000000e+00> : vector<8x16xf32>
      %367 = tpu.matmul %365, %366, %cst_188 {dimension_numbers = #tpu.dot_dimension_numbers<[1], [0], [0], [1], [0, 0, 1, 1], [], []>} : vector<8x32xf32>, vector<32x16xf32>, vector<8x16xf32> -> vector<8x16xf32>
      %c0_189 = arith.constant 0 : index
      %c0_190 = arith.constant 0 : index
      %368 = vector.load %arg35[%c0_189, %c0_190] : memref<1x16xf32, #tpu.memory_space<vmem>>, vector<1x16xf32>
      %369 = vector.broadcast %368 : vector<1x16xf32> to vector<8x16xf32>
      %370 = arith.addf %367, %369 : vector<8x16xf32>
      %c0_191 = arith.constant 0 : index
      %c0_192 = arith.constant 0 : index
      %371 = vector.load %arg36[%c0_191, %c0_192] : memref<8x16xf32, #tpu.memory_space<vmem>>, vector<8x16xf32>
      tpu.vector_store %arg36[%c0_191, %c0_192], %370 {strides = array<i32>} : memref<8x16xf32, #tpu.memory_space<vmem>>, vector<8x16xf32>,
    } else {
    }
    return
  }
  func.func @transform_0(%arg0: i32) -> (i32, i32) {
    %c0_i32 = arith.constant 0 : i32
    %c0_i32_0 = arith.constant 0 : i32
    %c0_i32_1 = arith.constant 0 : i32
    return %c0_i32, %c0_i32_0 : i32, i32
  }
  func.func @transform_1(%arg0: i32) -> (i32, i32) {
    %c0_i32 = arith.constant 0 : i32
    %c0_i32_0 = arith.constant 0 : i32
    %c0_i32_1 = arith.constant 0 : i32
    return %c0_i32, %c0_i32_0 : i32, i32
  }
  func.func @transform_2(%arg0: i32) -> (i32, i32) {
    %c0_i32 = arith.constant 0 : i32
    %c0_i32_0 = arith.constant 0 : i32
    %c0_i32_1 = arith.constant 0 : i32
    return %c0_i32, %c0_i32_0 : i32, i32
  }
  func.func @transform_3(%arg0: i32) -> (i32, i32) {
    %c0_i32 = arith.constant 0 : i32
    %c0_i32_0 = arith.constant 0 : i32
    %c0_i32_1 = arith.constant 0 : i32
    return %c0_i32, %c0_i32_0 : i32, i32
  }
  func.func @transform_4(%arg0: i32) -> (i32, i32, i32) {
    %c0_i32 = arith.constant 0 : i32
    %c0_i32_0 = arith.constant 0 : i32
    %c0_i32_1 = arith.constant 0 : i32
    %c0_i32_2 = arith.constant 0 : i32
    return %c0_i32, %c0_i32_0, %c0_i32_1 : i32, i32, i32
  }
  func.func @transform_5(%arg0: i32) -> (i32, i32, i32) {
    %c0_i32 = arith.constant 0 : i32
    %c0_i32_0 = arith.constant 0 : i32
    %c0_i32_1 = arith.constant 0 : i32
    return %arg0, %c0_i32, %c0_i32_0 : i32, i32, i32
  }
  func.func @transform_6(%arg0: i32) -> (i32, i32, i32) {
    %c0_i32 = arith.constant 0 : i32
    %c0_i32_0 = arith.constant 0 : i32
    %c0_i32_1 = arith.constant 0 : i32
    return %arg0, %c0_i32, %c0_i32_0 : i32, i32, i32
  }
  func.func @transform_7(%arg0: i32) -> (i32, i32, i32) {
    %c0_i32 = arith.constant 0 : i32
    %c0_i32_0 = arith.constant 0 : i32
    %c0_i32_1 = arith.constant 0 : i32
    return %arg0, %c0_i32, %c0_i32_0 : i32, i32, i32
  }
  func.func @transform_8(%arg0: i32) -> (i32, i32, i32) {
    %c0_i32 = arith.constant 0 : i32
    %c0_i32_0 = arith.constant 0 : i32
    %c0_i32_1 = arith.constant 0 : i32
    return %arg0, %c0_i32, %c0_i32_0 : i32, i32, i32
  }
  func.func @transform_9(%arg0: i32) -> (i32, i32, i32) {
    %c0_i32 = arith.constant 0 : i32
    %c0_i32_0 = arith.constant 0 : i32
    %c0_i32_1 = arith.constant 0 : i32
    return %arg0, %c0_i32, %c0_i32_0 : i32, i32, i32
  }
  func.func @transform_10(%arg0: i32) -> (i32, i32, i32) {
    %c0_i32 = arith.constant 0 : i32
    %c0_i32_0 = arith.constant 0 : i32
    %c0_i32_1 = arith.constant 0 : i32
    return %arg0, %c0_i32, %c0_i32_0 : i32, i32, i32
  }
  func.func @transform_11(%arg0: i32) -> (i32, i32, i32) {
    %c0_i32 = arith.constant 0 : i32
    %c0_i32_0 = arith.constant 0 : i32
    %c0_i32_1 = arith.constant 0 : i32
    return %arg0, %c0_i32, %c0_i32_0 : i32, i32, i32
  }
  func.func @transform_12(%arg0: i32) -> (i32, i32, i32) {
    %c0_i32 = arith.constant 0 : i32
    %c0_i32_0 = arith.constant 0 : i32
    %c0_i32_1 = arith.constant 0 : i32
    return %arg0, %c0_i32, %c0_i32_0 : i32, i32, i32
  }
  func.func @transform_13(%arg0: i32) -> (i32, i32, i32) {
    %c0_i32 = arith.constant 0 : i32
    %c0_i32_0 = arith.constant 0 : i32
    %c0_i32_1 = arith.constant 0 : i32
    return %arg0, %c0_i32, %c0_i32_0 : i32, i32, i32
  }
  func.func @transform_14(%arg0: i32) -> (i32, i32, i32) {
    %c0_i32 = arith.constant 0 : i32
    %c0_i32_0 = arith.constant 0 : i32
    %c0_i32_1 = arith.constant 0 : i32
    return %arg0, %c0_i32, %c0_i32_0 : i32, i32, i32
  }
  func.func @transform_15(%arg0: i32) -> (i32, i32, i32) {
    %c0_i32 = arith.constant 0 : i32
    %c0_i32_0 = arith.constant 0 : i32
    %c0_i32_1 = arith.constant 0 : i32
    return %arg0, %c0_i32, %c0_i32_0 : i32, i32, i32
  }
  func.func @transform_16(%arg0: i32) -> (i32, i32, i32) {
    %c0_i32 = arith.constant 0 : i32
    %c0_i32_0 = arith.constant 0 : i32
    %c0_i32_1 = arith.constant 0 : i32
    return %arg0, %c0_i32, %c0_i32_0 : i32, i32, i32
  }
  func.func @transform_17(%arg0: i32) -> (i32, i32, i32) {
    %c0_i32 = arith.constant 0 : i32
    %c0_i32_0 = arith.constant 0 : i32
    %c0_i32_1 = arith.constant 0 : i32
    return %arg0, %c0_i32, %c0_i32_0 : i32, i32, i32
  }
  func.func @transform_18(%arg0: i32) -> (i32, i32, i32) {
    %c0_i32 = arith.constant 0 : i32
    %c0_i32_0 = arith.constant 0 : i32
    %c0_i32_1 = arith.constant 0 : i32
    return %arg0, %c0_i32, %c0_i32_0 : i32, i32, i32
  }
  func.func @transform_19(%arg0: i32) -> (i32, i32, i32) {
    %c0_i32 = arith.constant 0 : i32
    %c0_i32_0 = arith.constant 0 : i32
    %c0_i32_1 = arith.constant 0 : i32
    return %arg0, %c0_i32, %c0_i32_0 : i32, i32, i32
  }
  func.func @transform_20(%arg0: i32) -> (i32, i32, i32) {
    %c0_i32 = arith.constant 0 : i32
    %c0_i32_0 = arith.constant 0 : i32
    %c0_i32_1 = arith.constant 0 : i32
    return %arg0, %c0_i32, %c0_i32_0 : i32, i32, i32
  }
  func.func @transform_21(%arg0: i32) -> (i32, i32, i32) {
    %c0_i32 = arith.constant 0 : i32
    %c0_i32_0 = arith.constant 0 : i32
    %c0_i32_1 = arith.constant 0 : i32
    return %arg0, %c0_i32, %c0_i32_0 : i32, i32, i32
  }
  func.func @transform_22(%arg0: i32) -> (i32, i32, i32) {
    %c0_i32 = arith.constant 0 : i32
    %c0_i32_0 = arith.constant 0 : i32
    %c0_i32_1 = arith.constant 0 : i32
    return %arg0, %c0_i32, %c0_i32_0 : i32, i32, i32
  }
  func.func @transform_23(%arg0: i32) -> (i32, i32, i32) {
    %c0_i32 = arith.constant 0 : i32
    %c0_i32_0 = arith.constant 0 : i32
    %c0_i32_1 = arith.constant 0 : i32
    return %arg0, %c0_i32, %c0_i32_0 : i32, i32, i32
  }
  func.func @transform_24(%arg0: i32) -> (i32, i32, i32) {
    %c0_i32 = arith.constant 0 : i32
    %c0_i32_0 = arith.constant 0 : i32
    %c0_i32_1 = arith.constant 0 : i32
    return %arg0, %c0_i32, %c0_i32_0 : i32, i32, i32
  }
  func.func @transform_25(%arg0: i32) -> (i32, i32, i32) {
    %c0_i32 = arith.constant 0 : i32
    %c0_i32_0 = arith.constant 0 : i32
    %c0_i32_1 = arith.constant 0 : i32
    return %arg0, %c0_i32, %c0_i32_0 : i32, i32, i32
  }
  func.func @transform_26(%arg0: i32) -> (i32, i32, i32) {
    %c0_i32 = arith.constant 0 : i32
    %c0_i32_0 = arith.constant 0 : i32
    %c0_i32_1 = arith.constant 0 : i32
    return %arg0, %c0_i32, %c0_i32_0 : i32, i32, i32
  }
  func.func @transform_27(%arg0: i32) -> (i32, i32, i32) {
    %c0_i32 = arith.constant 0 : i32
    %c0_i32_0 = arith.constant 0 : i32
    %c0_i32_1 = arith.constant 0 : i32
    return %arg0, %c0_i32, %c0_i32_0 : i32, i32, i32
  }
  func.func @transform_28(%arg0: i32) -> (i32, i32, i32) {
    %c0_i32 = arith.constant 0 : i32
    %c0_i32_0 = arith.constant 0 : i32
    %c0_i32_1 = arith.constant 0 : i32
    return %arg0, %c0_i32, %c0_i32_0 : i32, i32, i32
  }
  func.func @transform_29(%arg0: i32) -> (i32, i32, i32) {
    %c0_i32 = arith.constant 0 : i32
    %c0_i32_0 = arith.constant 0 : i32
    %c0_i32_1 = arith.constant 0 : i32
    return %arg0, %c0_i32, %c0_i32_0 : i32, i32, i32
  }
  func.func @transform_30(%arg0: i32) -> (i32, i32, i32) {
    %c0_i32 = arith.constant 0 : i32
    %c0_i32_0 = arith.constant 0 : i32
    %c0_i32_1 = arith.constant 0 : i32
    return %arg0, %c0_i32, %c0_i32_0 : i32, i32, i32
  }
  func.func @transform_31(%arg0: i32) -> (i32, i32) {
    %c0_i32 = arith.constant 0 : i32
    %c0_i32_0 = arith.constant 0 : i32
    %c0_i32_1 = arith.constant 0 : i32
    return %c0_i32, %c0_i32_0 : i32, i32
  }
  func.func @transform_32(%arg0: i32) -> (i32, i32) {
    %c0_i32 = arith.constant 0 : i32
    %c0_i32_0 = arith.constant 0 : i32
    %c0_i32_1 = arith.constant 0 : i32
    return %c0_i32, %c0_i32_0 : i32, i32
  }
  func.func @transform_33(%arg0: i32) -> (i32, i32) {
    %c0_i32 = arith.constant 0 : i32
    %c0_i32_0 = arith.constant 0 : i32
    %c0_i32_1 = arith.constant 0 : i32
    return %c0_i32, %c0_i32_0 : i32, i32
  }
  func.func @transform_34(%arg0: i32) -> (i32, i32) {
    %c0_i32 = arith.constant 0 : i32
    %c0_i32_0 = arith.constant 0 : i32
    %c0_i32_1 = arith.constant 0 : i32
    return %c0_i32, %c0_i32_0 : i32, i32
  }
  func.func @transform_35(%arg0: i32) -> (i32, i32) {
    %c0_i32 = arith.constant 0 : i32
    %c0_i32_0 = arith.constant 0 : i32
    %c0_i32_1 = arith.constant 0 : i32
    return %c0_i32, %c0_i32_0 : i32, i32
  }
}

module attributes {stable_mosaic.version = 11 : i64} {
  func.func @_encoder_stack_kernel(%arg0: i32, %arg1: memref<8x32xf32, #tpu.memory_space<vmem>>, %arg2: memref<8x8xf32, #tpu.memory_space<vmem>>, %arg3: memref<4x1x32xf32, #tpu.memory_space<vmem>>, %arg4: memref<1x32x32xf32, #tpu.memory_space<vmem>>, %arg5: memref<1x1x32xf32, #tpu.memory_space<vmem>>, %arg6: memref<1x32x32xf32, #tpu.memory_space<vmem>>, %arg7: memref<1x1x32xf32, #tpu.memory_space<vmem>>, %arg8: memref<1x32x32xf32, #tpu.memory_space<vmem>>, %arg9: memref<1x1x32xf32, #tpu.memory_space<vmem>>, %arg10: memref<1x32x32xf32, #tpu.memory_space<vmem>>, %arg11: memref<1x1x32xf32, #tpu.memory_space<vmem>>, %arg12: memref<1x1x32xf32, #tpu.memory_space<vmem>>, %arg13: memref<1x1x32xf32, #tpu.memory_space<vmem>>, %arg14: memref<1x32x64xf32, #tpu.memory_space<vmem>>, %arg15: memref<1x1x64xf32, #tpu.memory_space<vmem>>, %arg16: memref<1x64x32xf32, #tpu.memory_space<vmem>>, %arg17: memref<1x1x32xf32, #tpu.memory_space<vmem>>, %arg18: memref<1x1x32xf32, #tpu.memory_space<vmem>>, %arg19: memref<1x1x32xf32, #tpu.memory_space<vmem>>, %arg20: memref<1x32xf32, #tpu.memory_space<vmem>>, %arg21: memref<1x32xf32, #tpu.memory_space<vmem>>, %arg22: memref<8x32xf32, #tpu.memory_space<vmem>>) attributes {dimension_semantics = [#tpu.dimension_semantics<arbitrary>], iteration_bounds = array<i64: 2>, scalar_prefetch = 0 : i64, scratch_operands = 0 : i64, tpu.core_type = #tpu.core_type<tc>, window_params = [{pipeline_mode = #tpu.pipeline_mode<synchronous>, transform_indices = @transform_0, window_bounds = array<i64: 8, 32>}, {pipeline_mode = #tpu.pipeline_mode<synchronous>, transform_indices = @transform_1, window_bounds = array<i64: 8, 8>}, {pipeline_mode = #tpu.pipeline_mode<synchronous>, transform_indices = @transform_2, window_bounds = array<i64: 4, 1, 32>}, {transform_indices = @transform_3, window_bounds = array<i64: 1, 32, 32>}, {transform_indices = @transform_4, window_bounds = array<i64: 1, 1, 32>}, {transform_indices = @transform_5, window_bounds = array<i64: 1, 32, 32>}, {transform_indices = @transform_6, window_bounds = array<i64: 1, 1, 32>}, {transform_indices = @transform_7, window_bounds = array<i64: 1, 32, 32>}, {transform_indices = @transform_8, window_bounds = array<i64: 1, 1, 32>}, {transform_indices = @transform_9, window_bounds = array<i64: 1, 32, 32>}, {transform_indices = @transform_10, window_bounds = array<i64: 1, 1, 32>}, {transform_indices = @transform_11, window_bounds = array<i64: 1, 1, 32>}, {transform_indices = @transform_12, window_bounds = array<i64: 1, 1, 32>}, {transform_indices = @transform_13, window_bounds = array<i64: 1, 32, 64>}, {transform_indices = @transform_14, window_bounds = array<i64: 1, 1, 64>}, {transform_indices = @transform_15, window_bounds = array<i64: 1, 64, 32>}, {transform_indices = @transform_16, window_bounds = array<i64: 1, 1, 32>}, {transform_indices = @transform_17, window_bounds = array<i64: 1, 1, 32>}, {transform_indices = @transform_18, window_bounds = array<i64: 1, 1, 32>}, {pipeline_mode = #tpu.pipeline_mode<synchronous>, transform_indices = @transform_19, window_bounds = array<i64: 1, 32>}, {pipeline_mode = #tpu.pipeline_mode<synchronous>, transform_indices = @transform_20, window_bounds = array<i64: 1, 32>}, {pipeline_mode = #tpu.pipeline_mode<synchronous>, transform_indices = @transform_21, window_bounds = array<i64: 8, 32>}]} {
    %c0_i32 = arith.constant 0 : i32
    %0 = arith.cmpi eq, %arg0, %c0_i32 : i32
    %1 = arith.extui %0 : i1 to i32
    %c0_i32_0 = arith.constant 0 : i32
    %2 = arith.cmpi ne, %1, %c0_i32_0 : i32
    scf.if %2 {
      %c0_101 = arith.constant 0 : index
      %c0_102 = arith.constant 0 : index
      %198 = vector.load %arg1[%c0_101, %c0_102] : memref<8x32xf32, #tpu.memory_space<vmem>>, vector<8x32xf32>
      %c0_103 = arith.constant 0 : index
      %c0_104 = arith.constant 0 : index
      %199 = vector.load %arg22[%c0_103, %c0_104] : memref<8x32xf32, #tpu.memory_space<vmem>>, vector<8x32xf32>
      tpu.vector_store %arg22[%c0_103, %c0_104], %198 {strides = array<i32>} : memref<8x32xf32, #tpu.memory_space<vmem>>, vector<8x32xf32>,
    } else {
    }
    %c0 = arith.constant 0 : index
    %c0_1 = arith.constant 0 : index
    %3 = vector.load %arg22[%c0, %c0_1] : memref<8x32xf32, #tpu.memory_space<vmem>>, vector<8x32xf32>
    %c0_2 = arith.constant 0 : index
    %c0_3 = arith.constant 0 : index
    %c0_4 = arith.constant 0 : index
    %4 = vector.load %arg4[%c0_2, %c0_3, %c0_4] : memref<1x32x32xf32, #tpu.memory_space<vmem>>, vector<1x32x32xf32>
    %5 = vector.shape_cast %4 : vector<1x32x32xf32> to vector<32x32xf32>
    %c0_5 = arith.constant 0 : index
    %c0_6 = arith.constant 0 : index
    %c0_7 = arith.constant 0 : index
    %6 = vector.load %arg5[%c0_5, %c0_6, %c0_7] : memref<1x1x32xf32, #tpu.memory_space<vmem>>, vector<1x1x32xf32>
    %7 = vector.shape_cast %6 : vector<1x1x32xf32> to vector<1x32xf32>
    %c0_8 = arith.constant 0 : index
    %c0_9 = arith.constant 0 : index
    %c0_10 = arith.constant 0 : index
    %8 = vector.load %arg6[%c0_8, %c0_9, %c0_10] : memref<1x32x32xf32, #tpu.memory_space<vmem>>, vector<1x32x32xf32>
    %9 = vector.shape_cast %8 : vector<1x32x32xf32> to vector<32x32xf32>
    %c0_11 = arith.constant 0 : index
    %c0_12 = arith.constant 0 : index
    %c0_13 = arith.constant 0 : index
    %10 = vector.load %arg7[%c0_11, %c0_12, %c0_13] : memref<1x1x32xf32, #tpu.memory_space<vmem>>, vector<1x1x32xf32>
    %11 = vector.shape_cast %10 : vector<1x1x32xf32> to vector<1x32xf32>
    %c0_14 = arith.constant 0 : index
    %c0_15 = arith.constant 0 : index
    %c0_16 = arith.constant 0 : index
    %12 = vector.load %arg8[%c0_14, %c0_15, %c0_16] : memref<1x32x32xf32, #tpu.memory_space<vmem>>, vector<1x32x32xf32>
    %13 = vector.shape_cast %12 : vector<1x32x32xf32> to vector<32x32xf32>
    %c0_17 = arith.constant 0 : index
    %c0_18 = arith.constant 0 : index
    %c0_19 = arith.constant 0 : index
    %14 = vector.load %arg9[%c0_17, %c0_18, %c0_19] : memref<1x1x32xf32, #tpu.memory_space<vmem>>, vector<1x1x32xf32>
    %15 = vector.shape_cast %14 : vector<1x1x32xf32> to vector<1x32xf32>
    %c0_20 = arith.constant 0 : index
    %c0_21 = arith.constant 0 : index
    %c0_22 = arith.constant 0 : index
    %16 = vector.load %arg10[%c0_20, %c0_21, %c0_22] : memref<1x32x32xf32, #tpu.memory_space<vmem>>, vector<1x32x32xf32>
    %17 = vector.shape_cast %16 : vector<1x32x32xf32> to vector<32x32xf32>
    %c0_23 = arith.constant 0 : index
    %c0_24 = arith.constant 0 : index
    %c0_25 = arith.constant 0 : index
    %18 = vector.load %arg11[%c0_23, %c0_24, %c0_25] : memref<1x1x32xf32, #tpu.memory_space<vmem>>, vector<1x1x32xf32>
    %19 = vector.shape_cast %18 : vector<1x1x32xf32> to vector<1x32xf32>
    %c0_26 = arith.constant 0 : index
    %c0_27 = arith.constant 0 : index
    %20 = vector.load %arg2[%c0_26, %c0_27] : memref<8x8xf32, #tpu.memory_space<vmem>>, vector<8x8xf32>
    %cst = arith.constant dense<0.000000e+00> : vector<8x32xf32>
    %21 = tpu.matmul %3, %5, %cst {dimension_numbers = #tpu.dot_dimension_numbers<[1], [0], [0], [1], [0, 0, 1, 1], [], []>} : vector<8x32xf32>, vector<32x32xf32>, vector<8x32xf32> -> vector<8x32xf32>
    %22 = vector.broadcast %7 : vector<1x32xf32> to vector<8x32xf32>
    %23 = arith.addf %21, %22 : vector<8x32xf32>
    %cst_28 = arith.constant dense<0.000000e+00> : vector<8x32xf32>
    %24 = tpu.matmul %3, %9, %cst_28 {dimension_numbers = #tpu.dot_dimension_numbers<[1], [0], [0], [1], [0, 0, 1, 1], [], []>} : vector<8x32xf32>, vector<32x32xf32>, vector<8x32xf32> -> vector<8x32xf32>
    %25 = vector.broadcast %11 : vector<1x32xf32> to vector<8x32xf32>
    %26 = arith.addf %24, %25 : vector<8x32xf32>
    %cst_29 = arith.constant dense<0.000000e+00> : vector<8x32xf32>
    %27 = tpu.matmul %3, %13, %cst_29 {dimension_numbers = #tpu.dot_dimension_numbers<[1], [0], [0], [1], [0, 0, 1, 1], [], []>} : vector<8x32xf32>, vector<32x32xf32>, vector<8x32xf32> -> vector<8x32xf32>
    %28 = vector.broadcast %15 : vector<1x32xf32> to vector<8x32xf32>
    %29 = arith.addf %27, %28 : vector<8x32xf32>
    %cst_30 = arith.constant 0.000000e+00 : f32
    %30 = vector.broadcast %cst_30 : f32 to vector<8x32xf32>
    %c0_31 = arith.constant 0 : index
    %c0_32 = arith.constant 0 : index
    %c0_33 = arith.constant 0 : index
    %31 = vector.load %arg3[%c0_31, %c0_32, %c0_33] : memref<4x1x32xf32, #tpu.memory_space<vmem>>, vector<1x1x32xf32>
    %32 = vector.shape_cast %31 : vector<1x1x32xf32> to vector<1x32xf32>
    %33 = vector.broadcast %32 : vector<1x32xf32> to vector<8x32xf32>
    %34 = arith.mulf %23, %33 : vector<8x32xf32>
    %cst_34 = arith.constant dense<0.000000e+00> : vector<8x8xf32>
    %35 = tpu.matmul %34, %26, %cst_34 {dimension_numbers = #tpu.dot_dimension_numbers<[1], [1], [0], [0], [0, 0, 1, 0], [], []>} : vector<8x32xf32>, vector<8x32xf32>, vector<8x8xf32> -> vector<8x8xf32>
    %cst_35 = arith.constant 0.353553385 : f32
    %36 = vector.broadcast %cst_35 : f32 to vector<8x8xf32>
    %37 = arith.mulf %35, %36 : vector<8x8xf32>
    %38 = arith.addf %37, %20 : vector<8x8xf32>
    %cst_36 = arith.constant dense<0xFF800000> : vector<8xf32>
    %39 = vector.multi_reduction <maximumf>, %38, %cst_36 [1] : vector<8x8xf32> to vector<8xf32>
    %40 = vector.shape_cast %39 : vector<8xf32> to vector<8x1xf32>
    %41 = vector.broadcast %40 : vector<8x1xf32> to vector<8x8xf32>
    %42 = arith.subf %38, %41 : vector<8x8xf32>
    %43 = math.exp %42 : vector<8x8xf32>
    %cst_37 = arith.constant dense<0.000000e+00> : vector<8xf32>
    %44 = vector.multi_reduction <add>, %43, %cst_37 [1] : vector<8x8xf32> to vector<8xf32>
    %45 = vector.shape_cast %44 : vector<8xf32> to vector<8x1xf32>
    %46 = tpu.reciprocal %45 {approx = true} : vector<8x1xf32> -> vector<8x1xf32>
    %47 = vector.broadcast %46 : vector<8x1xf32> to vector<8x8xf32>
    %48 = arith.mulf %43, %47 : vector<8x8xf32>
    %49 = vector.broadcast %32 : vector<1x32xf32> to vector<8x32xf32>
    %50 = arith.mulf %29, %49 : vector<8x32xf32>
    %cst_38 = arith.constant dense<0.000000e+00> : vector<8x32xf32>
    %51 = tpu.matmul %48, %50, %cst_38 {dimension_numbers = #tpu.dot_dimension_numbers<[1], [0], [0], [1], [0, 0, 1, 1], [], []>} : vector<8x8xf32>, vector<8x32xf32>, vector<8x32xf32> -> vector<8x32xf32>
    %52 = arith.addf %30, %51 : vector<8x32xf32>
    %c1 = arith.constant 1 : index
    %c0_39 = arith.constant 0 : index
    %c0_40 = arith.constant 0 : index
    %53 = vector.load %arg3[%c1, %c0_39, %c0_40] : memref<4x1x32xf32, #tpu.memory_space<vmem>>, vector<1x1x32xf32>
    %54 = vector.shape_cast %53 : vector<1x1x32xf32> to vector<1x32xf32>
    %55 = vector.broadcast %54 : vector<1x32xf32> to vector<8x32xf32>
    %56 = arith.mulf %23, %55 : vector<8x32xf32>
    %cst_41 = arith.constant dense<0.000000e+00> : vector<8x8xf32>
    %57 = tpu.matmul %56, %26, %cst_41 {dimension_numbers = #tpu.dot_dimension_numbers<[1], [1], [0], [0], [0, 0, 1, 0], [], []>} : vector<8x32xf32>, vector<8x32xf32>, vector<8x8xf32> -> vector<8x8xf32>
    %cst_42 = arith.constant 0.353553385 : f32
    %58 = vector.broadcast %cst_42 : f32 to vector<8x8xf32>
    %59 = arith.mulf %57, %58 : vector<8x8xf32>
    %60 = arith.addf %59, %20 : vector<8x8xf32>
    %cst_43 = arith.constant dense<0xFF800000> : vector<8xf32>
    %61 = vector.multi_reduction <maximumf>, %60, %cst_43 [1] : vector<8x8xf32> to vector<8xf32>
    %62 = vector.shape_cast %61 : vector<8xf32> to vector<8x1xf32>
    %63 = vector.broadcast %62 : vector<8x1xf32> to vector<8x8xf32>
    %64 = arith.subf %60, %63 : vector<8x8xf32>
    %65 = math.exp %64 : vector<8x8xf32>
    %cst_44 = arith.constant dense<0.000000e+00> : vector<8xf32>
    %66 = vector.multi_reduction <add>, %65, %cst_44 [1] : vector<8x8xf32> to vector<8xf32>
    %67 = vector.shape_cast %66 : vector<8xf32> to vector<8x1xf32>
    %68 = tpu.reciprocal %67 {approx = true} : vector<8x1xf32> -> vector<8x1xf32>
    %69 = vector.broadcast %68 : vector<8x1xf32> to vector<8x8xf32>
    %70 = arith.mulf %65, %69 : vector<8x8xf32>
    %71 = vector.broadcast %54 : vector<1x32xf32> to vector<8x32xf32>
    %72 = arith.mulf %29, %71 : vector<8x32xf32>
    %cst_45 = arith.constant dense<0.000000e+00> : vector<8x32xf32>
    %73 = tpu.matmul %70, %72, %cst_45 {dimension_numbers = #tpu.dot_dimension_numbers<[1], [0], [0], [1], [0, 0, 1, 1], [], []>} : vector<8x8xf32>, vector<8x32xf32>, vector<8x32xf32> -> vector<8x32xf32>
    %74 = arith.addf %52, %73 : vector<8x32xf32>
    %c2 = arith.constant 2 : index
    %c0_46 = arith.constant 0 : index
    %c0_47 = arith.constant 0 : index
    %75 = vector.load %arg3[%c2, %c0_46, %c0_47] : memref<4x1x32xf32, #tpu.memory_space<vmem>>, vector<1x1x32xf32>
    %76 = vector.shape_cast %75 : vector<1x1x32xf32> to vector<1x32xf32>
    %77 = vector.broadcast %76 : vector<1x32xf32> to vector<8x32xf32>
    %78 = arith.mulf %23, %77 : vector<8x32xf32>
    %cst_48 = arith.constant dense<0.000000e+00> : vector<8x8xf32>
    %79 = tpu.matmul %78, %26, %cst_48 {dimension_numbers = #tpu.dot_dimension_numbers<[1], [1], [0], [0], [0, 0, 1, 0], [], []>} : vector<8x32xf32>, vector<8x32xf32>, vector<8x8xf32> -> vector<8x8xf32>
    %cst_49 = arith.constant 0.353553385 : f32
    %80 = vector.broadcast %cst_49 : f32 to vector<8x8xf32>
    %81 = arith.mulf %79, %80 : vector<8x8xf32>
    %82 = arith.addf %81, %20 : vector<8x8xf32>
    %cst_50 = arith.constant dense<0xFF800000> : vector<8xf32>
    %83 = vector.multi_reduction <maximumf>, %82, %cst_50 [1] : vector<8x8xf32> to vector<8xf32>
    %84 = vector.shape_cast %83 : vector<8xf32> to vector<8x1xf32>
    %85 = vector.broadcast %84 : vector<8x1xf32> to vector<8x8xf32>
    %86 = arith.subf %82, %85 : vector<8x8xf32>
    %87 = math.exp %86 : vector<8x8xf32>
    %cst_51 = arith.constant dense<0.000000e+00> : vector<8xf32>
    %88 = vector.multi_reduction <add>, %87, %cst_51 [1] : vector<8x8xf32> to vector<8xf32>
    %89 = vector.shape_cast %88 : vector<8xf32> to vector<8x1xf32>
    %90 = tpu.reciprocal %89 {approx = true} : vector<8x1xf32> -> vector<8x1xf32>
    %91 = vector.broadcast %90 : vector<8x1xf32> to vector<8x8xf32>
    %92 = arith.mulf %87, %91 : vector<8x8xf32>
    %93 = vector.broadcast %76 : vector<1x32xf32> to vector<8x32xf32>
    %94 = arith.mulf %29, %93 : vector<8x32xf32>
    %cst_52 = arith.constant dense<0.000000e+00> : vector<8x32xf32>
    %95 = tpu.matmul %92, %94, %cst_52 {dimension_numbers = #tpu.dot_dimension_numbers<[1], [0], [0], [1], [0, 0, 1, 1], [], []>} : vector<8x8xf32>, vector<8x32xf32>, vector<8x32xf32> -> vector<8x32xf32>
    %96 = arith.addf %74, %95 : vector<8x32xf32>
    %c3 = arith.constant 3 : index
    %c0_53 = arith.constant 0 : index
    %c0_54 = arith.constant 0 : index
    %97 = vector.load %arg3[%c3, %c0_53, %c0_54] : memref<4x1x32xf32, #tpu.memory_space<vmem>>, vector<1x1x32xf32>
    %98 = vector.shape_cast %97 : vector<1x1x32xf32> to vector<1x32xf32>
    %99 = vector.broadcast %98 : vector<1x32xf32> to vector<8x32xf32>
    %100 = arith.mulf %23, %99 : vector<8x32xf32>
    %cst_55 = arith.constant dense<0.000000e+00> : vector<8x8xf32>
    %101 = tpu.matmul %100, %26, %cst_55 {dimension_numbers = #tpu.dot_dimension_numbers<[1], [1], [0], [0], [0, 0, 1, 0], [], []>} : vector<8x32xf32>, vector<8x32xf32>, vector<8x8xf32> -> vector<8x8xf32>
    %cst_56 = arith.constant 0.353553385 : f32
    %102 = vector.broadcast %cst_56 : f32 to vector<8x8xf32>
    %103 = arith.mulf %101, %102 : vector<8x8xf32>
    %104 = arith.addf %103, %20 : vector<8x8xf32>
    %cst_57 = arith.constant dense<0xFF800000> : vector<8xf32>
    %105 = vector.multi_reduction <maximumf>, %104, %cst_57 [1] : vector<8x8xf32> to vector<8xf32>
    %106 = vector.shape_cast %105 : vector<8xf32> to vector<8x1xf32>
    %107 = vector.broadcast %106 : vector<8x1xf32> to vector<8x8xf32>
    %108 = arith.subf %104, %107 : vector<8x8xf32>
    %109 = math.exp %108 : vector<8x8xf32>
    %cst_58 = arith.constant dense<0.000000e+00> : vector<8xf32>
    %110 = vector.multi_reduction <add>, %109, %cst_58 [1] : vector<8x8xf32> to vector<8xf32>
    %111 = vector.shape_cast %110 : vector<8xf32> to vector<8x1xf32>
    %112 = tpu.reciprocal %111 {approx = true} : vector<8x1xf32> -> vector<8x1xf32>
    %113 = vector.broadcast %112 : vector<8x1xf32> to vector<8x8xf32>
    %114 = arith.mulf %109, %113 : vector<8x8xf32>
    %115 = vector.broadcast %98 : vector<1x32xf32> to vector<8x32xf32>
    %116 = arith.mulf %29, %115 : vector<8x32xf32>
    %cst_59 = arith.constant dense<0.000000e+00> : vector<8x32xf32>
    %117 = tpu.matmul %114, %116, %cst_59 {dimension_numbers = #tpu.dot_dimension_numbers<[1], [0], [0], [1], [0, 0, 1, 1], [], []>} : vector<8x8xf32>, vector<8x32xf32>, vector<8x32xf32> -> vector<8x32xf32>
    %118 = arith.addf %96, %117 : vector<8x32xf32>
    %cst_60 = arith.constant dense<0.000000e+00> : vector<8x32xf32>
    %119 = tpu.matmul %118, %17, %cst_60 {dimension_numbers = #tpu.dot_dimension_numbers<[1], [0], [0], [1], [0, 0, 1, 1], [], []>} : vector<8x32xf32>, vector<32x32xf32>, vector<8x32xf32> -> vector<8x32xf32>
    %120 = vector.broadcast %19 : vector<1x32xf32> to vector<8x32xf32>
    %121 = arith.addf %119, %120 : vector<8x32xf32>
    %122 = arith.addf %3, %121 : vector<8x32xf32>
    %c0_61 = arith.constant 0 : index
    %c0_62 = arith.constant 0 : index
    %c0_63 = arith.constant 0 : index
    %123 = vector.load %arg12[%c0_61, %c0_62, %c0_63] : memref<1x1x32xf32, #tpu.memory_space<vmem>>, vector<1x1x32xf32>
    %124 = vector.shape_cast %123 : vector<1x1x32xf32> to vector<1x32xf32>
    %c0_64 = arith.constant 0 : index
    %c0_65 = arith.constant 0 : index
    %c0_66 = arith.constant 0 : index
    %125 = vector.load %arg13[%c0_64, %c0_65, %c0_66] : memref<1x1x32xf32, #tpu.memory_space<vmem>>, vector<1x1x32xf32>
    %126 = vector.shape_cast %125 : vector<1x1x32xf32> to vector<1x32xf32>
    %cst_67 = arith.constant dense<0.000000e+00> : vector<8xf32>
    %127 = vector.multi_reduction <add>, %122, %cst_67 [1] : vector<8x32xf32> to vector<8xf32>
    %128 = vector.shape_cast %127 : vector<8xf32> to vector<8x1xf32>
    %cst_68 = arith.constant 3.200000e+01 : f32
    %129 = vector.broadcast %cst_68 : f32 to vector<8x1xf32>
    %130 = arith.divf %128, %129 : vector<8x1xf32>
    %131 = vector.broadcast %130 : vector<8x1xf32> to vector<8x32xf32>
    %132 = arith.subf %122, %131 : vector<8x32xf32>
    %133 = arith.mulf %132, %132 : vector<8x32xf32>
    %cst_69 = arith.constant dense<0.000000e+00> : vector<8xf32>
    %134 = vector.multi_reduction <add>, %133, %cst_69 [1] : vector<8x32xf32> to vector<8xf32>
    %135 = vector.shape_cast %134 : vector<8xf32> to vector<8x1xf32>
    %cst_70 = arith.constant 3.200000e+01 : f32
    %136 = vector.broadcast %cst_70 : f32 to vector<8x1xf32>
    %137 = arith.divf %135, %136 : vector<8x1xf32>
    %138 = vector.broadcast %130 : vector<8x1xf32> to vector<8x32xf32>
    %139 = arith.subf %122, %138 : vector<8x32xf32>
    %cst_71 = arith.constant 9.99999974E-6 : f32
    %140 = vector.broadcast %cst_71 : f32 to vector<8x1xf32>
    %141 = arith.addf %137, %140 : vector<8x1xf32>
    %142 = math.rsqrt %141 : vector<8x1xf32>
    %143 = vector.broadcast %142 : vector<8x1xf32> to vector<8x32xf32>
    %144 = arith.mulf %139, %143 : vector<8x32xf32>
    %145 = vector.broadcast %124 : vector<1x32xf32> to vector<8x32xf32>
    %146 = arith.mulf %144, %145 : vector<8x32xf32>
    %147 = vector.broadcast %126 : vector<1x32xf32> to vector<8x32xf32>
    %148 = arith.addf %146, %147 : vector<8x32xf32>
    %c0_72 = arith.constant 0 : index
    %c0_73 = arith.constant 0 : index
    %c0_74 = arith.constant 0 : index
    %149 = vector.load %arg14[%c0_72, %c0_73, %c0_74] : memref<1x32x64xf32, #tpu.memory_space<vmem>>, vector<1x32x64xf32>
    %150 = vector.shape_cast %149 : vector<1x32x64xf32> to vector<32x64xf32>
    %cst_75 = arith.constant dense<0.000000e+00> : vector<8x64xf32>
    %151 = tpu.matmul %148, %150, %cst_75 {dimension_numbers = #tpu.dot_dimension_numbers<[1], [0], [0], [1], [0, 0, 1, 1], [], []>} : vector<8x32xf32>, vector<32x64xf32>, vector<8x64xf32> -> vector<8x64xf32>
    %c0_76 = arith.constant 0 : index
    %c0_77 = arith.constant 0 : index
    %c0_78 = arith.constant 0 : index
    %152 = vector.load %arg15[%c0_76, %c0_77, %c0_78] : memref<1x1x64xf32, #tpu.memory_space<vmem>>, vector<1x1x64xf32>
    %153 = vector.shape_cast %152 : vector<1x1x64xf32> to vector<1x64xf32>
    %154 = vector.broadcast %153 : vector<1x64xf32> to vector<8x64xf32>
    %155 = arith.addf %151, %154 : vector<8x64xf32>
    %cst_79 = arith.constant 0.000000e+00 : f32
    %156 = vector.broadcast %cst_79 : f32 to vector<8x64xf32>
    %157 = arith.maximumf %155, %156 : vector<8x64xf32>
    %c0_80 = arith.constant 0 : index
    %c0_81 = arith.constant 0 : index
    %c0_82 = arith.constant 0 : index
    %158 = vector.load %arg16[%c0_80, %c0_81, %c0_82] : memref<1x64x32xf32, #tpu.memory_space<vmem>>, vector<1x64x32xf32>
    %159 = vector.shape_cast %158 : vector<1x64x32xf32> to vector<64x32xf32>
    %cst_83 = arith.constant dense<0.000000e+00> : vector<8x32xf32>
    %160 = tpu.matmul %157, %159, %cst_83 {dimension_numbers = #tpu.dot_dimension_numbers<[1], [0], [0], [1], [0, 0, 1, 1], [], []>} : vector<8x64xf32>, vector<64x32xf32>, vector<8x32xf32> -> vector<8x32xf32>
    %c0_84 = arith.constant 0 : index
    %c0_85 = arith.constant 0 : index
    %c0_86 = arith.constant 0 : index
    %161 = vector.load %arg17[%c0_84, %c0_85, %c0_86] : memref<1x1x32xf32, #tpu.memory_space<vmem>>, vector<1x1x32xf32>
    %162 = vector.shape_cast %161 : vector<1x1x32xf32> to vector<1x32xf32>
    %163 = vector.broadcast %162 : vector<1x32xf32> to vector<8x32xf32>
    %164 = arith.addf %160, %163 : vector<8x32xf32>
    %165 = arith.addf %148, %164 : vector<8x32xf32>
    %c0_87 = arith.constant 0 : index
    %c0_88 = arith.constant 0 : index
    %c0_89 = arith.constant 0 : index
    %166 = vector.load %arg18[%c0_87, %c0_88, %c0_89] : memref<1x1x32xf32, #tpu.memory_space<vmem>>, vector<1x1x32xf32>
    %167 = vector.shape_cast %166 : vector<1x1x32xf32> to vector<1x32xf32>
    %c0_90 = arith.constant 0 : index
    %c0_91 = arith.constant 0 : index
    %c0_92 = arith.constant 0 : index
    %168 = vector.load %arg19[%c0_90, %c0_91, %c0_92] : memref<1x1x32xf32, #tpu.memory_space<vmem>>, vector<1x1x32xf32>
    %169 = vector.shape_cast %168 : vector<1x1x32xf32> to vector<1x32xf32>
    %cst_93 = arith.constant dense<0.000000e+00> : vector<8xf32>
    %170 = vector.multi_reduction <add>, %165, %cst_93 [1] : vector<8x32xf32> to vector<8xf32>
    %171 = vector.shape_cast %170 : vector<8xf32> to vector<8x1xf32>
    %cst_94 = arith.constant 3.200000e+01 : f32
    %172 = vector.broadcast %cst_94 : f32 to vector<8x1xf32>
    %173 = arith.divf %171, %172 : vector<8x1xf32>
    %174 = vector.broadcast %173 : vector<8x1xf32> to vector<8x32xf32>
    %175 = arith.subf %165, %174 : vector<8x32xf32>
    %176 = arith.mulf %175, %175 : vector<8x32xf32>
    %cst_95 = arith.constant dense<0.000000e+00> : vector<8xf32>
    %177 = vector.multi_reduction <add>, %176, %cst_95 [1] : vector<8x32xf32> to vector<8xf32>
    %178 = vector.shape_cast %177 : vector<8xf32> to vector<8x1xf32>
    %cst_96 = arith.constant 3.200000e+01 : f32
    %179 = vector.broadcast %cst_96 : f32 to vector<8x1xf32>
    %180 = arith.divf %178, %179 : vector<8x1xf32>
    %181 = vector.broadcast %173 : vector<8x1xf32> to vector<8x32xf32>
    %182 = arith.subf %165, %181 : vector<8x32xf32>
    %cst_97 = arith.constant 9.99999974E-6 : f32
    %183 = vector.broadcast %cst_97 : f32 to vector<8x1xf32>
    %184 = arith.addf %180, %183 : vector<8x1xf32>
    %185 = math.rsqrt %184 : vector<8x1xf32>
    %186 = vector.broadcast %185 : vector<8x1xf32> to vector<8x32xf32>
    %187 = arith.mulf %182, %186 : vector<8x32xf32>
    %188 = vector.broadcast %167 : vector<1x32xf32> to vector<8x32xf32>
    %189 = arith.mulf %187, %188 : vector<8x32xf32>
    %190 = vector.broadcast %169 : vector<1x32xf32> to vector<8x32xf32>
    %191 = arith.addf %189, %190 : vector<8x32xf32>
    %c1_i32 = arith.constant 1 : i32
    %192 = arith.cmpi slt, %arg0, %c1_i32 : i32
    %193 = arith.extui %192 : i1 to i32
    %c0_i32_98 = arith.constant 0 : i32
    %194 = arith.cmpi ne, %193, %c0_i32_98 : i32
    scf.if %194 {
      %c0_101 = arith.constant 0 : index
      %c0_102 = arith.constant 0 : index
      %198 = vector.load %arg22[%c0_101, %c0_102] : memref<8x32xf32, #tpu.memory_space<vmem>>, vector<8x32xf32>
      tpu.vector_store %arg22[%c0_101, %c0_102], %191 {strides = array<i32>} : memref<8x32xf32, #tpu.memory_space<vmem>>, vector<8x32xf32>,
    } else {
    }
    %c1_i32_99 = arith.constant 1 : i32
    %195 = arith.cmpi eq, %arg0, %c1_i32_99 : i32
    %196 = arith.extui %195 : i1 to i32
    %c0_i32_100 = arith.constant 0 : i32
    %197 = arith.cmpi ne, %196, %c0_i32_100 : i32
    scf.if %197 {
      %c0_101 = arith.constant 0 : index
      %c0_102 = arith.constant 0 : index
      %198 = vector.load %arg20[%c0_101, %c0_102] : memref<1x32xf32, #tpu.memory_space<vmem>>, vector<1x32xf32>
      %c0_103 = arith.constant 0 : index
      %c0_104 = arith.constant 0 : index
      %199 = vector.load %arg21[%c0_103, %c0_104] : memref<1x32xf32, #tpu.memory_space<vmem>>, vector<1x32xf32>
      %cst_105 = arith.constant dense<0.000000e+00> : vector<8xf32>
      %200 = vector.multi_reduction <add>, %191, %cst_105 [1] : vector<8x32xf32> to vector<8xf32>
      %201 = vector.shape_cast %200 : vector<8xf32> to vector<8x1xf32>
      %cst_106 = arith.constant 3.200000e+01 : f32
      %202 = vector.broadcast %cst_106 : f32 to vector<8x1xf32>
      %203 = arith.divf %201, %202 : vector<8x1xf32>
      %204 = vector.broadcast %203 : vector<8x1xf32> to vector<8x32xf32>
      %205 = arith.subf %191, %204 : vector<8x32xf32>
      %206 = arith.mulf %205, %205 : vector<8x32xf32>
      %cst_107 = arith.constant dense<0.000000e+00> : vector<8xf32>
      %207 = vector.multi_reduction <add>, %206, %cst_107 [1] : vector<8x32xf32> to vector<8xf32>
      %208 = vector.shape_cast %207 : vector<8xf32> to vector<8x1xf32>
      %cst_108 = arith.constant 3.200000e+01 : f32
      %209 = vector.broadcast %cst_108 : f32 to vector<8x1xf32>
      %210 = arith.divf %208, %209 : vector<8x1xf32>
      %211 = vector.broadcast %203 : vector<8x1xf32> to vector<8x32xf32>
      %212 = arith.subf %191, %211 : vector<8x32xf32>
      %cst_109 = arith.constant 9.99999974E-6 : f32
      %213 = vector.broadcast %cst_109 : f32 to vector<8x1xf32>
      %214 = arith.addf %210, %213 : vector<8x1xf32>
      %215 = math.rsqrt %214 : vector<8x1xf32>
      %216 = vector.broadcast %215 : vector<8x1xf32> to vector<8x32xf32>
      %217 = arith.mulf %212, %216 : vector<8x32xf32>
      %218 = vector.broadcast %198 : vector<1x32xf32> to vector<8x32xf32>
      %219 = arith.mulf %217, %218 : vector<8x32xf32>
      %220 = vector.broadcast %199 : vector<1x32xf32> to vector<8x32xf32>
      %221 = arith.addf %219, %220 : vector<8x32xf32>
      %c0_110 = arith.constant 0 : index
      %c0_111 = arith.constant 0 : index
      %222 = vector.load %arg22[%c0_110, %c0_111] : memref<8x32xf32, #tpu.memory_space<vmem>>, vector<8x32xf32>
      tpu.vector_store %arg22[%c0_110, %c0_111], %221 {strides = array<i32>} : memref<8x32xf32, #tpu.memory_space<vmem>>, vector<8x32xf32>,
    } else {
    }
    return
  }
  func.func @transform_0(%arg0: i32) -> (i32, i32) {
    %c0_i32 = arith.constant 0 : i32
    %c0_i32_0 = arith.constant 0 : i32
    %c0_i32_1 = arith.constant 0 : i32
    return %c0_i32, %c0_i32_0 : i32, i32
  }
  func.func @transform_1(%arg0: i32) -> (i32, i32) {
    %c0_i32 = arith.constant 0 : i32
    %c0_i32_0 = arith.constant 0 : i32
    %c0_i32_1 = arith.constant 0 : i32
    return %c0_i32, %c0_i32_0 : i32, i32
  }
  func.func @transform_2(%arg0: i32) -> (i32, i32, i32) {
    %c0_i32 = arith.constant 0 : i32
    %c0_i32_0 = arith.constant 0 : i32
    %c0_i32_1 = arith.constant 0 : i32
    %c0_i32_2 = arith.constant 0 : i32
    return %c0_i32, %c0_i32_0, %c0_i32_1 : i32, i32, i32
  }
  func.func @transform_3(%arg0: i32) -> (i32, i32, i32) {
    %c0_i32 = arith.constant 0 : i32
    %c0_i32_0 = arith.constant 0 : i32
    %c0_i32_1 = arith.constant 0 : i32
    return %arg0, %c0_i32, %c0_i32_0 : i32, i32, i32
  }
  func.func @transform_4(%arg0: i32) -> (i32, i32, i32) {
    %c0_i32 = arith.constant 0 : i32
    %c0_i32_0 = arith.constant 0 : i32
    %c0_i32_1 = arith.constant 0 : i32
    return %arg0, %c0_i32, %c0_i32_0 : i32, i32, i32
  }
  func.func @transform_5(%arg0: i32) -> (i32, i32, i32) {
    %c0_i32 = arith.constant 0 : i32
    %c0_i32_0 = arith.constant 0 : i32
    %c0_i32_1 = arith.constant 0 : i32
    return %arg0, %c0_i32, %c0_i32_0 : i32, i32, i32
  }
  func.func @transform_6(%arg0: i32) -> (i32, i32, i32) {
    %c0_i32 = arith.constant 0 : i32
    %c0_i32_0 = arith.constant 0 : i32
    %c0_i32_1 = arith.constant 0 : i32
    return %arg0, %c0_i32, %c0_i32_0 : i32, i32, i32
  }
  func.func @transform_7(%arg0: i32) -> (i32, i32, i32) {
    %c0_i32 = arith.constant 0 : i32
    %c0_i32_0 = arith.constant 0 : i32
    %c0_i32_1 = arith.constant 0 : i32
    return %arg0, %c0_i32, %c0_i32_0 : i32, i32, i32
  }
  func.func @transform_8(%arg0: i32) -> (i32, i32, i32) {
    %c0_i32 = arith.constant 0 : i32
    %c0_i32_0 = arith.constant 0 : i32
    %c0_i32_1 = arith.constant 0 : i32
    return %arg0, %c0_i32, %c0_i32_0 : i32, i32, i32
  }
  func.func @transform_9(%arg0: i32) -> (i32, i32, i32) {
    %c0_i32 = arith.constant 0 : i32
    %c0_i32_0 = arith.constant 0 : i32
    %c0_i32_1 = arith.constant 0 : i32
    return %arg0, %c0_i32, %c0_i32_0 : i32, i32, i32
  }
  func.func @transform_10(%arg0: i32) -> (i32, i32, i32) {
    %c0_i32 = arith.constant 0 : i32
    %c0_i32_0 = arith.constant 0 : i32
    %c0_i32_1 = arith.constant 0 : i32
    return %arg0, %c0_i32, %c0_i32_0 : i32, i32, i32
  }
  func.func @transform_11(%arg0: i32) -> (i32, i32, i32) {
    %c0_i32 = arith.constant 0 : i32
    %c0_i32_0 = arith.constant 0 : i32
    %c0_i32_1 = arith.constant 0 : i32
    return %arg0, %c0_i32, %c0_i32_0 : i32, i32, i32
  }
  func.func @transform_12(%arg0: i32) -> (i32, i32, i32) {
    %c0_i32 = arith.constant 0 : i32
    %c0_i32_0 = arith.constant 0 : i32
    %c0_i32_1 = arith.constant 0 : i32
    return %arg0, %c0_i32, %c0_i32_0 : i32, i32, i32
  }
  func.func @transform_13(%arg0: i32) -> (i32, i32, i32) {
    %c0_i32 = arith.constant 0 : i32
    %c0_i32_0 = arith.constant 0 : i32
    %c0_i32_1 = arith.constant 0 : i32
    return %arg0, %c0_i32, %c0_i32_0 : i32, i32, i32
  }
  func.func @transform_14(%arg0: i32) -> (i32, i32, i32) {
    %c0_i32 = arith.constant 0 : i32
    %c0_i32_0 = arith.constant 0 : i32
    %c0_i32_1 = arith.constant 0 : i32
    return %arg0, %c0_i32, %c0_i32_0 : i32, i32, i32
  }
  func.func @transform_15(%arg0: i32) -> (i32, i32, i32) {
    %c0_i32 = arith.constant 0 : i32
    %c0_i32_0 = arith.constant 0 : i32
    %c0_i32_1 = arith.constant 0 : i32
    return %arg0, %c0_i32, %c0_i32_0 : i32, i32, i32
  }
  func.func @transform_16(%arg0: i32) -> (i32, i32, i32) {
    %c0_i32 = arith.constant 0 : i32
    %c0_i32_0 = arith.constant 0 : i32
    %c0_i32_1 = arith.constant 0 : i32
    return %arg0, %c0_i32, %c0_i32_0 : i32, i32, i32
  }
  func.func @transform_17(%arg0: i32) -> (i32, i32, i32) {
    %c0_i32 = arith.constant 0 : i32
    %c0_i32_0 = arith.constant 0 : i32
    %c0_i32_1 = arith.constant 0 : i32
    return %arg0, %c0_i32, %c0_i32_0 : i32, i32, i32
  }
  func.func @transform_18(%arg0: i32) -> (i32, i32, i32) {
    %c0_i32 = arith.constant 0 : i32
    %c0_i32_0 = arith.constant 0 : i32
    %c0_i32_1 = arith.constant 0 : i32
    return %arg0, %c0_i32, %c0_i32_0 : i32, i32, i32
  }
  func.func @transform_19(%arg0: i32) -> (i32, i32) {
    %c0_i32 = arith.constant 0 : i32
    %c0_i32_0 = arith.constant 0 : i32
    %c0_i32_1 = arith.constant 0 : i32
    return %c0_i32, %c0_i32_0 : i32, i32
  }
  func.func @transform_20(%arg0: i32) -> (i32, i32) {
    %c0_i32 = arith.constant 0 : i32
    %c0_i32_0 = arith.constant 0 : i32
    %c0_i32_1 = arith.constant 0 : i32
    return %c0_i32, %c0_i32_0 : i32, i32
  }
  func.func @transform_21(%arg0: i32) -> (i32, i32) {
    %c0_i32 = arith.constant 0 : i32
    %c0_i32_0 = arith.constant 0 : i32
    %c0_i32_1 = arith.constant 0 : i32
    return %c0_i32, %c0_i32_0 : i32, i32
  }
}

</mosaic_0001>

<llo_original>
// kernel: seq2seq_transformer_forward.4
$region0: #{seq2seq_transformer_forward.4}
  #allocation0 [shape = 'u32[]', space=smem, size = 0x4, offset = 0x4, fixed_abs, tag = 'smem constant byte address 0x4 - core index']
  #allocation1 [shape = 'u32[144,128]{1,0:T(1,128)}', space=vmem, size = 0x12000, scoped, tag = 'internal scratch']
  %s0 = inlined_call_operand.vmem [shape: f32[6,16], index: 0, kind: input, shape index: {}]
  %s1 = inlined_call_operand.vmem [shape: f32[16,2048], index: 1, kind: input, shape index: {}]
  %s2 = inlined_call_operand.vmem [shape: f32[1,2048], index: 2, kind: input, shape index: {}]
  %s3 = inlined_call_operand.vmem [shape: f32[2048,32], index: 3, kind: input, shape index: {}]
  %s4 = inlined_call_operand.vmem [shape: f32[1,32], index: 4, kind: input, shape index: {}]
  %s5 = inlined_call_operand.vmem [shape: f32[6,32], index: 5, kind: output, shape index: {}]
  %s6 = sld [smem:[#allocation0]]
  $region30: #{seq2seq_transformer_forward.4} parent=0
    _
  %s8 = ssub.s32 1, %s6
  %s9 = scalar_select 0, %s8, %s6
  // Predicated region
  $region2: #{seq2seq_transformer_forward.4} parent=0 // pred_check
    _
  $region3: #{seq2seq_transformer_forward.4} parent=0 // pred_check_branch
    %11 = sbr.rel (0) target = $region5
  $region4: #{seq2seq_transformer_forward.4} parent=0 // pred_region
    _
  $region5: #{seq2seq_transformer_forward.4} parent=0 // pred_fallthru
    _
  // Predicated region
  $region6: #{seq2seq_transformer_forward.4} parent=0 // pred_check
    _
  $region7: #{seq2seq_transformer_forward.4} parent=0 // pred_check_branch
    %13 = sbr.rel (0) target = $region9
  $region8: #{seq2seq_transformer_forward.4} parent=0 // pred_region
    _
  $region9: #{seq2seq_transformer_forward.4} parent=0 // pred_fallthru
    _
  // Predicated region
  $region10: #{seq2seq_transformer_forward.4} parent=0 // pred_check
    _
  $region11: #{seq2seq_transformer_forward.4} parent=0 // pred_check_branch
    %15 = sbr.rel (0) target = $region13
  $region12: #{seq2seq_transformer_forward.4} parent=0 // pred_region
    _
  $region13: #{seq2seq_transformer_forward.4} parent=0 // pred_fallthru
    _
  // Predicated region
  $region14: #{seq2seq_transformer_forward.4} parent=0 // pred_check
    _
  $region15: #{seq2seq_transformer_forward.4} parent=0 // pred_check_branch
    %17 = sbr.rel (0) target = $region17
  $region16: #{seq2seq_transformer_forward.4} parent=0 // pred_region
    _
  $region17: #{seq2seq_transformer_forward.4} parent=0 // pred_fallthru
    _
  // Predicated region
  $region18: #{seq2seq_transformer_forward.4} parent=0 // pred_check
    _
  $region19: #{seq2seq_transformer_forward.4} parent=0 // pred_check_branch
    %19 = sbr.rel (0) target = $region21
  $region20: #{seq2seq_transformer_forward.4} parent=0 // pred_region
    _
  $region21: #{seq2seq_transformer_forward.4} parent=0 // pred_fallthru
    _
  %v20 = vld [vmem:[%s0] sm:$0x3f]
  %v21 = vld [vmem:[%s1] sm:$0xff]
  %v22 = vld [vmem:[%s1 + $0x8] sm:$0xff]
  %v23 = vld [vmem:[%s1 + $0x10] sm:$0xff]
  %v24 = vld [vmem:[%s1 + $0x18] sm:$0xff]
  %v25 = vld [vmem:[%s1 + $0x20] sm:$0xff]
  %v26 = vld [vmem:[%s1 + $0x28] sm:$0xff]
  %v27 = vld [vmem:[%s1 + $0x30] sm:$0xff]
  %v28 = vld [vmem:[%s1 + $0x38] sm:$0xff]
  %v29 = vld [vmem:[%s1 + $0x40] sm:$0xff]
  %v30 = vld [vmem:[%s1 + $0x48] sm:$0xff]
  %v31 = vld [vmem:[%s1 + $0x50] sm:$0xff]
  %v32 = vld [vmem:[%s1 + $0x58] sm:$0xff]
  %v33 = vld [vmem:[%s1 + $0x60] sm:$0xff]
  %v34 = vld [vmem:[%s1 + $0x68] sm:$0xff]
  %v35 = vld [vmem:[%s1 + $0x70] sm:$0xff]
  %v36 = vld [vmem:[%s1 + $0x78] sm:$0xff]
  %v37 = vld [vmem:[%s1 + $0x80] sm:$0xff]
  %v38 = vld [vmem:[%s1 + $0x88] sm:$0xff]
  %v39 = vld [vmem:[%s1 + $0x90] sm:$0xff]
  %v40 = vld [vmem:[%s1 + $0x98] sm:$0xff]
  %v41 = vld [vmem:[%s1 + $0xa0] sm:$0xff]
  %v42 = vld [vmem:[%s1 + $0xa8] sm:$0xff]
  %v43 = vld [vmem:[%s1 + $0xb0] sm:$0xff]
  %v44 = vld [vmem:[%s1 + $0xb8] sm:$0xff]
  %v45 = vld [vmem:[%s1 + $0xc0] sm:$0xff]
  %v46 = vld [vmem:[%s1 + $0xc8] sm:$0xff]
  %v47 = vld [vmem:[%s1 + $0xd0] sm:$0xff]
  %v48 = vld [vmem:[%s1 + $0xd8] sm:$0xff]
  %v49 = vld [vmem:[%s1 + $0xe0] sm:$0xff]
  %v50 = vld [vmem:[%s1 + $0xe8] sm:$0xff]
  %v51 = vld [vmem:[%s1 + $0xf0] sm:$0xff]
  %v52 = vld [vmem:[%s1 + $0xf8] sm:$0xff]
  %v53 = vld [vmem:[%s2] sm:$0xff]
  %v54 = vld [vmem:[%s2 + $0x8] sm:$0xff]
  %v57 = vlaneseq
  %v58 = vshrl.u32 %v57, 7
  %v59 = vsub.s32 0, %v58
  %v60 = vrot.slane %v53, %v59
  %v61 = vlaneseq
  %v62 = vshrl.u32 %v61, 7
  %v63 = vsub.s32 1, %v62
  %v64 = vrot.slane %v53, %v63
  %v65 = vlaneseq
  %v66 = vshrl.u32 %v65, 7
  %v67 = vsub.s32 2, %v66
  %v68 = vrot.slane %v53, %v67
  %v69 = vlaneseq
  %v70 = vshrl.u32 %v69, 7
  %v71 = vsub.s32 3, %v70
  %v72 = vrot.slane %v53, %v71
  %v73 = vlaneseq
  %v74 = vshrl.u32 %v73, 7
  %v75 = vsub.s32 4, %v74
  %v76 = vrot.slane %v53, %v75
  %v77 = vlaneseq
  %v78 = vshrl.u32 %v77, 7
  %v79 = vsub.s32 5, %v78
  %v80 = vrot.slane %v53, %v79
  %v81 = vlaneseq
  %v82 = vshrl.u32 %v81, 7
  %v83 = vsub.s32 6, %v82
  %v84 = vrot.slane %v53, %v83
  %v85 = vlaneseq
  %v86 = vshrl.u32 %v85, 7
  %v87 = vsub.s32 7, %v86
  %v88 = vrot.slane %v53, %v87
  %v89 = vlaneseq
  %v90 = vshrl.u32 %v89, 7
  %v91 = vsub.s32 0, %v90
  %v92 = vrot.slane %v54, %v91
  %v93 = vlaneseq
  %v94 = vshrl.u32 %v93, 7
  %v95 = vsub.s32 1, %v94
  %v96 = vrot.slane %v54, %v95
  %v97 = vlaneseq
  %v98 = vshrl.u32 %v97, 7
  %v99 = vsub.s32 2, %v98
  %v100 = vrot.slane %v54, %v99
  %v101 = vlaneseq
  %v102 = vshrl.u32 %v101, 7
  %v103 = vsub.s32 3, %v102
  %v104 = vrot.slane %v54, %v103
  %v105 = vlaneseq
  %v106 = vshrl.u32 %v105, 7
  %v107 = vsub.s32 4, %v106
  %v108 = vrot.slane %v54, %v107
  %v109 = vlaneseq
  %v110 = vshrl.u32 %v109, 7
  %v111 = vsub.s32 5, %v110
  %v112 = vrot.slane %v54, %v111
  %v113 = vlaneseq
  %v114 = vshrl.u32 %v113, 7
  %v115 = vsub.s32 6, %v114
  %v116 = vrot.slane %v54, %v115
  %v117 = vlaneseq
  %v118 = vshrl.u32 %v117, 7
  %v119 = vsub.s32 7, %v118
  %v120 = vrot.slane %v54, %v119
  %vm137 = vcmask 130048
  %v139 = vsel %vm137, %v20, 0
  %141 = vmatprep.subr.mxu0 %v22
  %142 = vmatpush1.msra.mxu0 %v21
  %143 = vmatprep.subr.mxu0 %v38
  %144 = vmatpush1.msra.mxu0 %v37
  %145 = vmatprep.subr.mxu0 0.0
  %146 = vmatpush1.msra.mxu0 0.0
  %147 = vmatprep.subr.mxu0 0.0
  %148 = vmatpush1.msra.mxu0 0.0
  %149 = vmatprep.subr.mxu0 0.0
  %150 = vmatpush1.msra.mxu0 0.0
  %151 = vmatprep.subr.mxu0 0.0
  %152 = vmatpush1.msra.mxu0 0.0
  %153 = vmatprep.subr.mxu0 0.0
  %154 = vmatpush1.msra.mxu0 0.0
  %155 = vmatprep.subr.mxu0 0.0
  %156 = vmatpush1.msra.mxu0 0.0
  %157 = vmatprep.subr.mxu0 0.0
  %158 = vmatpush1.msra.mxu0 0.0
  %159 = vmatprep.subr.mxu0 0.0
  %160 = vmatpush1.msra.mxu0 0.0
  %161 = vmatprep.subr.mxu0 0.0
  %162 = vmatpush1.msra.mxu0 0.0
  %163 = vmatprep.subr.mxu0 0.0
  %164 = vmatpush1.msra.mxu0 0.0
  %165 = vmatprep.subr.mxu0 0.0
  %166 = vmatpush1.msra.mxu0 0.0
  %167 = vmatprep.subr.mxu0 0.0
  %168 = vmatpush1.msra.mxu0 0.0
  %169 = vmatprep.subr.mxu0 0.0
  %170 = vmatpush1.msra.mxu0 0.0
  %171 = vmatprep.subr.mxu0 0.0
  %172 = vmatpush1.msra.mxu0 0.0
  %173 = vmatprep.subr.mxu0 0.0
  %174 = vmatpush1.msra.mxu0 0.0
  %175 = vmatprep.subr.mxu0 0.0
  %176 = vmatpush1.msra.mxu0 0.0
  %177 = vmatprep.subr.mxu0 0.0
  %178 = vmatpush1.msra.mxu0 0.0
  %179 = vmatprep.subr.mxu0 0.0
  %180 = vmatpush1.msra.mxu0 0.0
  %181 = vmatprep.subr.mxu0 0.0
  %182 = vmatpush1.msra.mxu0 0.0
  %183 = vmatprep.subr.mxu0 0.0
  %184 = vmatpush1.msra.mxu0 0.0
  %185 = vmatprep.subr.mxu0 0.0
  %186 = vmatpush1.msra.mxu0 0.0
  %187 = vmatprep.subr.mxu0 0.0
  %188 = vmatpush1.msra.mxu0 0.0
  %189 = vmatprep.subr.mxu0 0.0
  %190 = vmatpush1.msra.mxu0 0.0
  %191 = vmatprep.subr.mxu0 0.0
  %192 = vmatpush1.msra.mxu0 0.0
  %193 = vmatprep.subr.mxu0 0.0
  %194 = vmatpush1.msra.mxu0 0.0
  %195 = vmatprep.subr.mxu0 0.0
  %196 = vmatpush1.msra.mxu0 0.0
  %197 = vmatprep.subr.mxu0 0.0
  %198 = vmatpush1.msra.mxu0 0.0
  %199 = vmatprep.subr.mxu0 0.0
  %200 = vmatpush1.msra.mxu0 0.0
  %201 = vmatprep.subr.mxu0 0.0
  %202 = vmatpush1.msra.mxu0 0.0
  %203 = vmatprep.subr.mxu0 0.0
  %204 = vmatpush1.msra.mxu0 0.0
  %205 = vmatprep.mubr.f32.mxu0 0.0
  %206 = vmatmul.mubr.f32.gmra.mrb[0].mxu0 %v139
  %v207 = vpop.f32.mrb[0].mxu0
  %v208 = vadd.f32 %v60, %v207
  %v209 = vpop.f32.mrb[0].mxu0
  %v210 = vadd.f32 %v64, %v209
  %211 = vdwg.mxu0
  %212 = vmatprep.subr.mxu0 %v24
  %213 = vmatpush1.msra.mxu0 %v23
  %214 = vmatprep.subr.mxu0 %v40
  %215 = vmatpush1.msra.mxu0 %v39
  %216 = vmatprep.subr.mxu0 0.0
  %217 = vmatpush1.msra.mxu0 0.0
  %218 = vmatprep.subr.mxu0 0.0
  %219 = vmatpush1.msra.mxu0 0.0
  %220 = vmatprep.subr.mxu0 0.0
  %221 = vmatpush1.msra.mxu0 0.0
  %222 = vmatprep.subr.mxu0 0.0
  %223 = vmatpush1.msra.mxu0 0.0
  %224 = vmatprep.subr.mxu0 0.0
  %225 = vmatpush1.msra.mxu0 0.0
  %226 = vmatprep.subr.mxu0 0.0
  %227 = vmatpush1.msra.mxu0 0.0
  %228 = vmatprep.subr.mxu0 0.0
  %229 = vmatpush1.msra.mxu0 0.0
  %230 = vmatprep.subr.mxu0 0.0
  %231 = vmatpush1.msra.mxu0 0.0
  %232 = vmatprep.subr.mxu0 0.0
  %233 = vmatpush1.msra.mxu0 0.0
  %234 = vmatprep.subr.mxu0 0.0
  %235 = vmatpush1.msra.mxu0 0.0
  %236 = vmatprep.subr.mxu0 0.0
  %237 = vmatpush1.msra.mxu0 0.0
  %238 = vmatprep.subr.mxu0 0.0
  %239 = vmatpush1.msra.mxu0 0.0
  %240 = vmatprep.subr.mxu0 0.0
  %241 = vmatpush1.msra.mxu0 0.0
  %242 = vmatprep.subr.mxu0 0.0
  %243 = vmatpush1.msra.mxu0 0.0
  %244 = vmatprep.subr.mxu0 0.0
  %245 = vmatpush1.msra.mxu0 0.0
  %246 = vmatprep.subr.mxu0 0.0
  %247 = vmatpush1.msra.mxu0 0.0
  %248 = vmatprep.subr.mxu0 0.0
  %249 = vmatpush1.msra.mxu0 0.0
  %250 = vmatprep.subr.mxu0 0.0
  %251 = vmatpush1.msra.mxu0 0.0
  %252 = vmatprep.subr.mxu0 0.0
  %253 = vmatpush1.msra.mxu0 0.0
  %254 = vmatprep.subr.mxu0 0.0
  %255 = vmatpush1.msra.mxu0 0.0
  %256 = vmatprep.subr.mxu0 0.0
  %257 = vmatpush1.msra.mxu0 0.0
  %258 = vmatprep.subr.mxu0 0.0
  %259 = vmatpush1.msra.mxu0 0.0
  %260 = vmatprep.subr.mxu0 0.0
  %261 = vmatpush1.msra.mxu0 0.0
  %262 = vmatprep.subr.mxu0 0.0
  %263 = vmatpush1.msra.mxu0 0.0
  %264 = vmatprep.subr.mxu0 0.0
  %265 = vmatpush1.msra.mxu0 0.0
  %266 = vmatprep.subr.mxu0 0.0
  %267 = vmatpush1.msra.mxu0 0.0
  %268 = vmatprep.subr.mxu0 0.0
  %269 = vmatpush1.msra.mxu0 0.0
  %270 = vmatprep.subr.mxu0 0.0
  %271 = vmatpush1.msra.mxu0 0.0
  %272 = vmatprep.subr.mxu0 0.0
  %273 = vmatpush1.msra.mxu0 0.0
  %274 = vmatprep.subr.mxu0 0.0
  %275 = vmatpush1.msra.mxu0 0.0
  %276 = vmatprep.mubr.f32.mxu0 0.0
  %277 = vmatmul.mubr.f32.gmra.mrb[0].mxu0 %v139
  %v278 = vpop.f32.mrb[0].mxu0
  %v279 = vadd.f32 %v68, %v278
  %v280 = vpop.f32.mrb[0].mxu0
  %v281 = vadd.f32 %v72, %v280
  %282 = vdwg.mxu0
  %283 = vmatprep.subr.mxu0 %v26
  %284 = vmatpush1.msra.mxu0 %v25
  %285 = vmatprep.subr.mxu0 %v42
  %286 = vmatpush1.msra.mxu0 %v41
  %287 = vmatprep.subr.mxu0 0.0
  %288 = vmatpush1.msra.mxu0 0.0
  %289 = vmatprep.subr.mxu0 0.0
  %290 = vmatpush1.msra.mxu0 0.0
  %291 = vmatprep.subr.mxu0 0.0
  %292 = vmatpush1.msra.mxu0 0.0
  %293 = vmatprep.subr.mxu0 0.0
  %294 = vmatpush1.msra.mxu0 0.0
  %295 = vmatprep.subr.mxu0 0.0
  %296 = vmatpush1.msra.mxu0 0.0
  %297 = vmatprep.subr.mxu0 0.0
  %298 = vmatpush1.msra.mxu0 0.0
  %299 = vmatprep.subr.mxu0 0.0
  %300 = vmatpush1.msra.mxu0 0.0
  %301 = vmatprep.subr.mxu0 0.0
  %302 = vmatpush1.msra.mxu0 0.0
  %303 = vmatprep.subr.mxu0 0.0
  %304 = vmatpush1.msra.mxu0 0.0
  %305 = vmatprep.subr.mxu0 0.0
  %306 = vmatpush1.msra.mxu0 0.0
  %307 = vmatprep.subr.mxu0 0.0
  %308 = vmatpush1.msra.mxu0 0.0
  %309 = vmatprep.subr.mxu0 0.0
  %310 = vmatpush1.msra.mxu0 0.0
  %311 = vmatprep.subr.mxu0 0.0
  %312 = vmatpush1.msra.mxu0 0.0
  %313 = vmatprep.subr.mxu0 0.0
  %314 = vmatpush1.msra.mxu0 0.0
  %315 = vmatprep.subr.mxu0 0.0
  %316 = vmatpush1.msra.mxu0 0.0
  %317 = vmatprep.subr.mxu0 0.0
  %318 = vmatpush1.msra.mxu0 0.0
  %319 = vmatprep.subr.mxu0 0.0
  %320 = vmatpush1.msra.mxu0 0.0
  %321 = vmatprep.subr.mxu0 0.0
  %322 = vmatpush1.msra.mxu0 0.0
  %323 = vmatprep.subr.mxu0 0.0
  %324 = vmatpush1.msra.mxu0 0.0
  %325 = vmatprep.subr.mxu0 0.0
  %326 = vmatpush1.msra.mxu0 0.0
  %327 = vmatprep.subr.mxu0 0.0
  %328 = vmatpush1.msra.mxu0 0.0
  %329 = vmatprep.subr.mxu0 0.0
  %330 = vmatpush1.msra.mxu0 0.0
  %331 = vmatprep.subr.mxu0 0.0
  %332 = vmatpush1.msra.mxu0 0.0
  %333 = vmatprep.subr.mxu0 0.0
  %334 = vmatpush1.msra.mxu0 0.0
  %335 = vmatprep.subr.mxu0 0.0
  %336 = vmatpush1.msra.mxu0 0.0
  %337 = vmatprep.subr.mxu0 0.0
  %338 = vmatpush1.msra.mxu0 0.0
  %339 = vmatprep.subr.mxu0 0.0
  %340 = vmatpush1.msra.mxu0 0.0
  %341 = vmatprep.subr.mxu0 0.0
  %342 = vmatpush1.msra.mxu0 0.0
  %343 = vmatprep.subr.mxu0 0.0
  %344 = vmatpush1.msra.mxu0 0.0
  %345 = vmatprep.subr.mxu0 0.0
  %346 = vmatpush1.msra.mxu0 0.0
  %347 = vmatprep.mubr.f32.mxu0 0.0
  %348 = vmatmul.mubr.f32.gmra.mrb[0].mxu0 %v139
  %v349 = vpop.f32.mrb[0].mxu0
  %v350 = vadd.f32 %v76, %v349
  %v351 = vpop.f32.mrb[0].mxu0
  %v352 = vadd.f32 %v80, %v351
  %353 = vdwg.mxu0
  %354 = vmatprep.subr.mxu0 %v28
  %355 = vmatpush1.msra.mxu0 %v27
  %356 = vmatprep.subr.mxu0 %v44
  %357 = vmatpush1.msra.mxu0 %v43
  %358 = vmatprep.subr.mxu0 0.0
  %359 = vmatpush1.msra.mxu0 0.0
  %360 = vmatprep.subr.mxu0 0.0
  %361 = vmatpush1.msra.mxu0 0.0
  %362 = vmatprep.subr.mxu0 0.0
  %363 = vmatpush1.msra.mxu0 0.0
  %364 = vmatprep.subr.mxu0 0.0
  %365 = vmatpush1.msra.mxu0 0.0
  %366 = vmatprep.subr.mxu0 0.0
  %367 = vmatpush1.msra.mxu0 0.0
  %368 = vmatprep.subr.mxu0 0.0
  %369 = vmatpush1.msra.mxu0 0.0
  %370 = vmatprep.subr.mxu0 0.0
  %371 = vmatpush1.msra.mxu0 0.0
  %372 = vmatprep.subr.mxu0 0.0
  %373 = vmatpush1.msra.mxu0 0.0
  %374 = vmatprep.subr.mxu0 0.0
  %375 = vmatpush1.msra.mxu0 0.0
  %376 = vmatprep.subr.mxu0 0.0
  %377 = vmatpush1.msra.mxu0 0.0
  %378 = vmatprep.subr.mxu0 0.0
  %379 = vmatpush1.msra.mxu0 0.0
  %380 = vmatprep.subr.mxu0 0.0
  %381 = vmatpush1.msra.mxu0 0.0
  %382 = vmatprep.subr.mxu0 0.0
  %383 = vmatpush1.msra.mxu0 0.0
  %384 = vmatprep.subr.mxu0 0.0
  %385 = vmatpush1.msra.mxu0 0.0
  %386 = vmatprep.subr.mxu0 0.0
  %387 = vmatpush1.msra.mxu0 0.0
  %388 = vmatprep.subr.mxu0 0.0
  %389 = vmatpush1.msra.mxu0 0.0
  %390 = vmatprep.subr.mxu0 0.0
  %391 = vmatpush1.msra.mxu0 0.0
  %392 = vmatprep.subr.mxu0 0.0
  %393 = vmatpush1.msra.mxu0 0.0
  %394 = vmatprep.subr.mxu0 0.0
  %395 = vmatpush1.msra.mxu0 0.0
  %396 = vmatprep.subr.mxu0 0.0
  %397 = vmatpush1.msra.mxu0 0.0
  %398 = vmatprep.subr.mxu0 0.0
  %399 = vmatpush1.msra.mxu0 0.0
  %400 = vmatprep.subr.mxu0 0.0
  %401 = vmatpush1.msra.mxu0 0.0
  %402 = vmatprep.subr.mxu0 0.0
  %403 = vmatpush1.msra.mxu0 0.0
  %404 = vmatprep.subr.mxu0 0.0
  %405 = vmatpush1.msra.mxu0 0.0
  %406 = vmatprep.subr.mxu0 0.0
  %407 = vmatpush1.msra.mxu0 0.0
  %408 = vmatprep.subr.mxu0 0.0
  %409 = vmatpush1.msra.mxu0 0.0
  %410 = vmatprep.subr.mxu0 0.0
  %411 = vmatpush1.msra.mxu0 0.0
  %412 = vmatprep.subr.mxu0 0.0
  %413 = vmatpush1.msra.mxu0 0.0
  %414 = vmatprep.subr.mxu0 0.0
  %415 = vmatpush1.msra.mxu0 0.0
  %416 = vmatprep.subr.mxu0 0.0
  %417 = vmatpush1.msra.mxu0 0.0
  %418 = vmatprep.mubr.f32.mxu0 0.0
  %419 = vmatmul.mubr.f32.gmra.mrb[0].mxu0 %v139
  %v420 = vpop.f32.mrb[0].mxu0
  %v421 = vadd.f32 %v84, %v420
  %v422 = vpop.f32.mrb[0].mxu0
  %v423 = vadd.f32 %v88, %v422
  %424 = vdwg.mxu0
  %425 = vmatprep.subr.mxu0 %v30
  %426 = vmatpush1.msra.mxu0 %v29
  %427 = vmatprep.subr.mxu0 %v46
  %428 = vmatpush1.msra.mxu0 %v45
  %429 = vmatprep.subr.mxu0 0.0
  %430 = vmatpush1.msra.mxu0 0.0
  %431 = vmatprep.subr.mxu0 0.0
  %432 = vmatpush1.msra.mxu0 0.0
  %433 = vmatprep.subr.mxu0 0.0
  %434 = vmatpush1.msra.mxu0 0.0
  %435 = vmatprep.subr.mxu0 0.0
  %436 = vmatpush1.msra.mxu0 0.0
  %437 = vmatprep.subr.mxu0 0.0
  %438 = vmatpush1.msra.mxu0 0.0
  %439 = vmatprep.subr.mxu0 0.0
  %440 = vmatpush1.msra.mxu0 0.0
  %441 = vmatprep.subr.mxu0 0.0
  %442 = vmatpush1.msra.mxu0 0.0
  %443 = vmatprep.subr.mxu0 0.0
  %444 = vmatpush1.msra.mxu0 0.0
  %445 = vmatprep.subr.mxu0 0.0
  %446 = vmatpush1.msra.mxu0 0.0
  %447 = vmatprep.subr.mxu0 0.0
  %448 = vmatpush1.msra.mxu0 0.0
  %449 = vmatprep.subr.mxu0 0.0
  %450 = vmatpush1.msra.mxu0 0.0
  %451 = vmatprep.subr.mxu0 0.0
  %452 = vmatpush1.msra.mxu0 0.0
  %453 = vmatprep.subr.mxu0 0.0
  %454 = vmatpush1.msra.mxu0 0.0
  %455 = vmatprep.subr.mxu0 0.0
  %456 = vmatpush1.msra.mxu0 0.0
  %457 = vmatprep.subr.mxu0 0.0
  %458 = vmatpush1.msra.mxu0 0.0
  %459 = vmatprep.subr.mxu0 0.0
  %460 = vmatpush1.msra.mxu0 0.0
  %461 = vmatprep.subr.mxu0 0.0
  %462 = vmatpush1.msra.mxu0 0.0
  %463 = vmatprep.subr.mxu0 0.0
  %464 = vmatpush1.msra.mxu0 0.0
  %465 = vmatprep.subr.mxu0 0.0
  %466 = vmatpush1.msra.mxu0 0.0
  %467 = vmatprep.subr.mxu0 0.0
  %468 = vmatpush1.msra.mxu0 0.0
  %469 = vmatprep.subr.mxu0 0.0
  %470 = vmatpush1.msra.mxu0 0.0
  %471 = vmatprep.subr.mxu0 0.0
  %472 = vmatpush1.msra.mxu0 0.0
  %473 = vmatprep.subr.mxu0 0.0
  %474 = vmatpush1.msra.mxu0 0.0
  %475 = vmatprep.subr.mxu0 0.0
  %476 = vmatpush1.msra.mxu0 0.0
  %477 = vmatprep.subr.mxu0 0.0
  %478 = vmatpush1.msra.mxu0 0.0
  %479 = vmatprep.subr.mxu0 0.0
  %480 = vmatpush1.msra.mxu0 0.0
  %481 = vmatprep.subr.mxu0 0.0
  %482 = vmatpush1.msra.mxu0 0.0
  %483 = vmatprep.subr.mxu0 0.0
  %484 = vmatpush1.msra.mxu0 0.0
  %485 = vmatprep.subr.mxu0 0.0
  %486 = vmatpush1.msra.mxu0 0.0
  %487 = vmatprep.subr.mxu0 0.0
  %488 = vmatpush1.msra.mxu0 0.0
  %489 = vmatprep.mubr.f32.mxu0 0.0
  %490 = vmatmul.mubr.f32.gmra.mrb[0].mxu0 %v139
  %v491 = vpop.f32.mrb[0].mxu0
  %v492 = vadd.f32 %v92, %v491
  %v493 = vpop.f32.mrb[0].mxu0
  %v494 = vadd.f32 %v96, %v493
  %495 = vdwg.mxu0
  %496 = vmatprep.subr.mxu0 %v32
  %497 = vmatpush1.msra.mxu0 %v31
  %498 = vmatprep.subr.mxu0 %v48
  %499 = vmatpush1.msra.mxu0 %v47
  %500 = vmatprep.subr.mxu0 0.0
  %501 = vmatpush1.msra.mxu0 0.0
  %502 = vmatprep.subr.mxu0 0.0
  %503 = vmatpush1.msra.mxu0 0.0
  %504 = vmatprep.subr.mxu0 0.0
  %505 = vmatpush1.msra.mxu0 0.0
  %506 = vmatprep.subr.mxu0 0.0
  %507 = vmatpush1.msra.mxu0 0.0
  %508 = vmatprep.subr.mxu0 0.0
  %509 = vmatpush1.msra.mxu0 0.0
  %510 = vmatprep.subr.mxu0 0.0
  %511 = vmatpush1.msra.mxu0 0.0
  %512 = vmatprep.subr.mxu0 0.0
  %513 = vmatpush1.msra.mxu0 0.0
  %514 = vmatprep.subr.mxu0 0.0
  %515 = vmatpush1.msra.mxu0 0.0
  %516 = vmatprep.subr.mxu0 0.0
  %517 = vmatpush1.msra.mxu0 0.0
  %518 = vmatprep.subr.mxu0 0.0
  %519 = vmatpush1.msra.mxu0 0.0
  %520 = vmatprep.subr.mxu0 0.0
  %521 = vmatpush1.msra.mxu0 0.0
  %522 = vmatprep.subr.mxu0 0.0
  %523 = vmatpush1.msra.mxu0 0.0
  %524 = vmatprep.subr.mxu0 0.0
  %525 = vmatpush1.msra.mxu0 0.0
  %526 = vmatprep.subr.mxu0 0.0
  %527 = vmatpush1.msra.mxu0 0.0
  %528 = vmatprep.subr.mxu0 0.0
  %529 = vmatpush1.msra.mxu0 0.0
  %530 = vmatprep.subr.mxu0 0.0
  %531 = vmatpush1.msra.mxu0 0.0
  %532 = vmatprep.subr.mxu0 0.0
  %533 = vmatpush1.msra.mxu0 0.0
  %534 = vmatprep.subr.mxu0 0.0
  %535 = vmatpush1.msra.mxu0 0.0
  %536 = vmatprep.subr.mxu0 0.0
  %537 = vmatpush1.msra.mxu0 0.0
  %538 = vmatprep.subr.mxu0 0.0
  %539 = vmatpush1.msra.mxu0 0.0
  %540 = vmatprep.subr.mxu0 0.0
  %541 = vmatpush1.msra.mxu0 0.0
  %542 = vmatprep.subr.mxu0 0.0
  %543 = vmatpush1.msra.mxu0 0.0
  %544 = vmatprep.subr.mxu0 0.0
  %545 = vmatpush1.msra.mxu0 0.0
  %546 = vmatprep.subr.mxu0 0.0
  %547 = vmatpush1.msra.mxu0 0.0
  %548 = vmatprep.subr.mxu0 0.0
  %549 = vmatpush1.msra.mxu0 0.0
  %550 = vmatprep.subr.mxu0 0.0
  %551 = vmatpush1.msra.mxu0 0.0
  %552 = vmatprep.subr.mxu0 0.0
  %553 = vmatpush1.msra.mxu0 0.0
  %554 = vmatprep.subr.mxu0 0.0
  %555 = vmatpush1.msra.mxu0 0.0
  %556 = vmatprep.subr.mxu0 0.0
  %557 = vmatpush1.msra.mxu0 0.0
  %558 = vmatprep.subr.mxu0 0.0
  %559 = vmatpush1.msra.mxu0 0.0
  %560 = vmatprep.mubr.f32.mxu0 0.0
  %561 = vmatmul.mubr.f32.gmra.mrb[0].mxu0 %v139
  %v562 = vpop.f32.mrb[0].mxu0
  %v563 = vadd.f32 %v100, %v562
  %v564 = vpop.f32.mrb[0].mxu0
  %v565 = vadd.f32 %v104, %v564
  %566 = vdwg.mxu0
  %567 = vmatprep.subr.mxu0 %v34
  %568 = vmatpush1.msra.mxu0 %v33
  %569 = vmatprep.subr.mxu0 %v50
  %570 = vmatpush1.msra.mxu0 %v49
  %571 = vmatprep.subr.mxu0 0.0
  %572 = vmatpush1.msra.mxu0 0.0
  %573 = vmatprep.subr.mxu0 0.0
  %574 = vmatpush1.msra.mxu0 0.0
  %575 = vmatprep.subr.mxu0 0.0
  %576 = vmatpush1.msra.mxu0 0.0
  %577 = vmatprep.subr.mxu0 0.0
  %578 = vmatpush1.msra.mxu0 0.0
  %579 = vmatprep.subr.mxu0 0.0
  %580 = vmatpush1.msra.mxu0 0.0
  %581 = vmatprep.subr.mxu0 0.0
  %582 = vmatpush1.msra.mxu0 0.0
  %583 = vmatprep.subr.mxu0 0.0
  %584 = vmatpush1.msra.mxu0 0.0
  %585 = vmatprep.subr.mxu0 0.0
  %586 = vmatpush1.msra.mxu0 0.0
  %587 = vmatprep.subr.mxu0 0.0
  %588 = vmatpush1.msra.mxu0 0.0
  %589 = vmatprep.subr.mxu0 0.0
  %590 = vmatpush1.msra.mxu0 0.0
  %591 = vmatprep.subr.mxu0 0.0
  %592 = vmatpush1.msra.mxu0 0.0
  %593 = vmatprep.subr.mxu0 0.0
  %594 = vmatpush1.msra.mxu0 0.0
  %595 = vmatprep.subr.mxu0 0.0
  %596 = vmatpush1.msra.mxu0 0.0
  %597 = vmatprep.subr.mxu0 0.0
  %598 = vmatpush1.msra.mxu0 0.0
  %599 = vmatprep.subr.mxu0 0.0
  %600 = vmatpush1.msra.mxu0 0.0
  %601 = vmatprep.subr.mxu0 0.0
  %602 = vmatpush1.msra.mxu0 0.0
  %603 = vmatprep.subr.mxu0 0.0
  %604 = vmatpush1.msra.mxu0 0.0
  %605 = vmatprep.subr.mxu0 0.0
  %606 = vmatpush1.msra.mxu0 0.0
  %607 = vmatprep.subr.mxu0 0.0
  %608 = vmatpush1.msra.mxu0 0.0
  %609 = vmatprep.subr.mxu0 0.0
  %610 = vmatpush1.msra.mxu0 0.0
  %611 = vmatprep.subr.mxu0 0.0
  %612 = vmatpush1.msra.mxu0 0.0
  %613 = vmatprep.subr.mxu0 0.0
  %614 = vmatpush1.msra.mxu0 0.0
  %615 = vmatprep.subr.mxu0 0.0
  %616 = vmatpush1.msra.mxu0 0.0
  %617 = vmatprep.subr.mxu0 0.0
  %618 = vmatpush1.msra.mxu0 0.0
  %619 = vmatprep.subr.mxu0 0.0
  %620 = vmatpush1.msra.mxu0 0.0
  %621 = vmatprep.subr.mxu0 0.0
  %622 = vmatpush1.msra.mxu0 0.0
  %623 = vmatprep.subr.mxu0 0.0
  %624 = vmatpush1.msra.mxu0 0.0
  %625 = vmatprep.subr.mxu0 0.0
  %626 = vmatpush1.msra.mxu0 0.0
  %627 = vmatprep.subr.mxu0 0.0
  %628 = vmatpush1.msra.mxu0 0.0
  %629 = vmatprep.subr.mxu0 0.0
  %630 = vmatpush1.msra.mxu0 0.0
  %631 = vmatprep.mubr.f32.mxu0 0.0
  %632 = vmatmul.mubr.f32.gmra.mrb[0].mxu0 %v139
  %v633 = vpop.f32.mrb[0].mxu0
  %v634 = vadd.f32 %v108, %v633
  %v635 = vpop.f32.mrb[0].mxu0
  %v636 = vadd.f32 %v112, %v635
  %637 = vdwg.mxu0
  %638 = vmatprep.subr.mxu0 %v36
  %639 = vmatpush1.msra.mxu0 %v35
  %640 = vmatprep.subr.mxu0 %v52
  %641 = vmatpush1.msra.mxu0 %v51
  %642 = vmatprep.subr.mxu0 0.0
  %643 = vmatpush1.msra.mxu0 0.0
  %644 = vmatprep.subr.mxu0 0.0
  %645 = vmatpush1.msra.mxu0 0.0
  %646 = vmatprep.subr.mxu0 0.0
  %647 = vmatpush1.msra.mxu0 0.0
  %648 = vmatprep.subr.mxu0 0.0
  %649 = vmatpush1.msra.mxu0 0.0
  %650 = vmatprep.subr.mxu0 0.0
  %651 = vmatpush1.msra.mxu0 0.0
  %652 = vmatprep.subr.mxu0 0.0
  %653 = vmatpush1.msra.mxu0 0.0
  %654 = vmatprep.subr.mxu0 0.0
  %655 = vmatpush1.msra.mxu0 0.0
  %656 = vmatprep.subr.mxu0 0.0
  %657 = vmatpush1.msra.mxu0 0.0
  %658 = vmatprep.subr.mxu0 0.0
  %659 = vmatpush1.msra.mxu0 0.0
  %660 = vmatprep.subr.mxu0 0.0
  %661 = vmatpush1.msra.mxu0 0.0
  %662 = vmatprep.subr.mxu0 0.0
  %663 = vmatpush1.msra.mxu0 0.0
  %664 = vmatprep.subr.mxu0 0.0
  %665 = vmatpush1.msra.mxu0 0.0
  %666 = vmatprep.subr.mxu0 0.0
  %667 = vmatpush1.msra.mxu0 0.0
  %668 = vmatprep.subr.mxu0 0.0
  %669 = vmatpush1.msra.mxu0 0.0
  %670 = vmatprep.subr.mxu0 0.0
  %671 = vmatpush1.msra.mxu0 0.0
  %672 = vmatprep.subr.mxu0 0.0
  %673 = vmatpush1.msra.mxu0 0.0
  %674 = vmatprep.subr.mxu0 0.0
  %675 = vmatpush1.msra.mxu0 0.0
  %676 = vmatprep.subr.mxu0 0.0
  %677 = vmatpush1.msra.mxu0 0.0
  %678 = vmatprep.subr.mxu0 0.0
  %679 = vmatpush1.msra.mxu0 0.0
  %680 = vmatprep.subr.mxu0 0.0
  %681 = vmatpush1.msra.mxu0 0.0
  %682 = vmatprep.subr.mxu0 0.0
  %683 = vmatpush1.msra.mxu0 0.0
  %684 = vmatprep.subr.mxu0 0.0
  %685 = vmatpush1.msra.mxu0 0.0
  %686 = vmatprep.subr.mxu0 0.0
  %687 = vmatpush1.msra.mxu0 0.0
  %688 = vmatprep.subr.mxu0 0.0
  %689 = vmatpush1.msra.mxu0 0.0
  %690 = vmatprep.subr.mxu0 0.0
  %691 = vmatpush1.msra.mxu0 0.0
  %692 = vmatprep.subr.mxu0 0.0
  %693 = vmatpush1.msra.mxu0 0.0
  %694 = vmatprep.subr.mxu0 0.0
  %695 = vmatpush1.msra.mxu0 0.0
  %696 = vmatprep.subr.mxu0 0.0
  %697 = vmatpush1.msra.mxu0 0.0
  %698 = vmatprep.subr.mxu0 0.0
  %699 = vmatpush1.msra.mxu0 0.0
  %700 = vmatprep.subr.mxu0 0.0
  %701 = vmatpush1.msra.mxu0 0.0
  %702 = vmatprep.mubr.f32.mxu0 0.0
  %703 = vmatmul.mubr.f32.gmra.mrb[0].mxu0 %v139
  %v704 = vpop.f32.mrb[0].mxu0
  %v705 = vadd.f32 %v116, %v704
  %v706 = vpop.f32.mrb[0].mxu0
  %v707 = vadd.f32 %v120, %v706
  %708 = vdwg.mxu0
  %v709 = vmax.f32 %v208, 0.0
  %v710 = vmax.f32 %v210, 0.0
  %v711 = vmax.f32 %v279, 0.0
  %v712 = vmax.f32 %v281, 0.0
  %v713 = vmax.f32 %v350, 0.0
  %v714 = vmax.f32 %v352, 0.0
  %v715 = vmax.f32 %v421, 0.0
  %v716 = vmax.f32 %v423, 0.0
  %v717 = vmax.f32 %v492, 0.0
  %v718 = vmax.f32 %v494, 0.0
  %v719 = vmax.f32 %v563, 0.0
  %v720 = vmax.f32 %v565, 0.0
  %v721 = vmax.f32 %v634, 0.0
  %v722 = vmax.f32 %v636, 0.0
  %v723 = vmax.f32 %v705, 0.0
  %v724 = vmax.f32 %v707, 0.0
  %v725 = vld [vmem:[%s3] sm:$0xff]
  %v726 = vld [vmem:[%s3 + $0x8] sm:$0xff]
  %v727 = vld [vmem:[%s3 + $0x10] sm:$0xff]
  %v728 = vld [vmem:[%s3 + $0x18] sm:$0xff]
  %v729 = vld [vmem:[%s3 + $0x20] sm:$0xff]
  %v730 = vld [vmem:[%s3 + $0x28] sm:$0xff]
  %v731 = vld [vmem:[%s3 + $0x30] sm:$0xff]
  %v732 = vld [vmem:[%s3 + $0x38] sm:$0xff]
  %v733 = vld [vmem:[%s3 + $0x40] sm:$0xff]
  %v734 = vld [vmem:[%s3 + $0x48] sm:$0xff]
  %v735 = vld [vmem:[%s3 + $0x50] sm:$0xff]
  %v736 = vld [vmem:[%s3 + $0x58] sm:$0xff]
  %v737 = vld [vmem:[%s3 + $0x60] sm:$0xff]
  %v738 = vld [vmem:[%s3 + $0x68] sm:$0xff]
  %v739 = vld [vmem:[%s3 + $0x70] sm:$0xff]
  %v740 = vld [vmem:[%s3 + $0x78] sm:$0xff]
  %v741 = vld [vmem:[%s3 + $0x80] sm:$0xff]
  %v742 = vld [vmem:[%s3 + $0x88] sm:$0xff]
  %v743 = vld [vmem:[%s3 + $0x90] sm:$0xff]
  %v744 = vld [vmem:[%s3 + $0x98] sm:$0xff]
  %v745 = vld [vmem:[%s3 + $0xa0] sm:$0xff]
  %v746 = vld [vmem:[%s3 + $0xa8] sm:$0xff]
  %v747 = vld [vmem:[%s3 + $0xb0] sm:$0xff]
  %v748 = vld [vmem:[%s3 + $0xb8] sm:$0xff]
  %v749 = vld [vmem:[%s3 + $0xc0] sm:$0xff]
  %v750 = vld [vmem:[%s3 + $0xc8] sm:$0xff]
  %v751 = vld [vmem:[%s3 + $0xd0] sm:$0xff]
  %v752 = vld [vmem:[%s3 + $0xd8] sm:$0xff]
  %v753 = vld [vmem:[%s3 + $0xe0] sm:$0xff]
  %v754 = vld [vmem:[%s3 + $0xe8] sm:$0xff]
  %v755 = vld [vmem:[%s3 + $0xf0] sm:$0xff]
  %v756 = vld [vmem:[%s3 + $0xf8] sm:$0xff]
  %v757 = vld [vmem:[%s3 + $0x100] sm:$0xff]
  %v758 = vld [vmem:[%s3 + $0x108] sm:$0xff]
  %v759 = vld [vmem:[%s3 + $0x110] sm:$0xff]
  %v760 = vld [vmem:[%s3 + $0x118] sm:$0xff]
  %v761 = vld [vmem:[%s3 + $0x120] sm:$0xff]
  %v762 = vld [vmem:[%s3 + $0x128] sm:$0xff]
  %v763 = vld [vmem:[%s3 + $0x130] sm:$0xff]
  %v764 = vld [vmem:[%s3 + $0x138] sm:$0xff]
  %v765 = vld [vmem:[%s3 + $0x140] sm:$0xff]
  %v766 = vld [vmem:[%s3 + $0x148] sm:$0xff]
  %v767 = vld [vmem:[%s3 + $0x150] sm:$0xff]
  %v768 = vld [vmem:[%s3 + $0x158] sm:$0xff]
  %v769 = vld [vmem:[%s3 + $0x160] sm:$0xff]
  %v770 = vld [vmem:[%s3 + $0x168] sm:$0xff]
  %v771 = vld [vmem:[%s3 + $0x170] sm:$0xff]
  %v772 = vld [vmem:[%s3 + $0x178] sm:$0xff]
  %v773 = vld [vmem:[%s3 + $0x180] sm:$0xff]
  %v774 = vld [vmem:[%s3 + $0x188] sm:$0xff]
  %v775 = vld [vmem:[%s3 + $0x190] sm:$0xff]
  %v776 = vld [vmem:[%s3 + $0x198] sm:$0xff]
  %v777 = vld [vmem:[%s3 + $0x1a0] sm:$0xff]
  %v778 = vld [vmem:[%s3 + $0x1a8] sm:$0xff]
  %v779 = vld [vmem:[%s3 + $0x1b0] sm:$0xff]
  %v780 = vld [vmem:[%s3 + $0x1b8] sm:$0xff]
  %v781 = vld [vmem:[%s3 + $0x1c0] sm:$0xff]
  %v782 = vld [vmem:[%s3 + $0x1c8] sm:$0xff]
  %v783 = vld [vmem:[%s3 + $0x1d0] sm:$0xff]
  %v784 = vld [vmem:[%s3 + $0x1d8] sm:$0xff]
  %v785 = vld [vmem:[%s3 + $0x1e0] sm:$0xff]
  %v786 = vld [vmem:[%s3 + $0x1e8] sm:$0xff]
  %v787 = vld [vmem:[%s3 + $0x1f0] sm:$0xff]
  %v788 = vld [vmem:[%s3 + $0x1f8] sm:$0xff]
  %v789 = vld [vmem:[%s3 + $0x200] sm:$0xff]
  %v790 = vld [vmem:[%s3 + $0x208] sm:$0xff]
  %v791 = vld [vmem:[%s3 + $0x210] sm:$0xff]
  %v792 = vld [vmem:[%s3 + $0x218] sm:$0xff]
  %v793 = vld [vmem:[%s3 + $0x220] sm:$0xff]
  %v794 = vld [vmem:[%s3 + $0x228] sm:$0xff]
  %v795 = vld [vmem:[%s3 + $0x230] sm:$0xff]
  %v796 = vld [vmem:[%s3 + $0x238] sm:$0xff]
  %v797 = vld [vmem:[%s3 + $0x240] sm:$0xff]
  %v798 = vld [vmem:[%s3 + $0x248] sm:$0xff]
  %v799 = vld [vmem:[%s3 + $0x250] sm:$0xff]
  %v800 = vld [vmem:[%s3 + $0x258] sm:$0xff]
  %v801 = vld [vmem:[%s3 + $0x260] sm:$0xff]
  %v802 = vld [vmem:[%s3 + $0x268] sm:$0xff]
  %v803 = vld [vmem:[%s3 + $0x270] sm:$0xff]
  %v804 = vld [vmem:[%s3 + $0x278] sm:$0xff]
  %v805 = vld [vmem:[%s3 + $0x280] sm:$0xff]
  %v806 = vld [vmem:[%s3 + $0x288] sm:$0xff]
  %v807 = vld [vmem:[%s3 + $0x290] sm:$0xff]
  %v808 = vld [vmem:[%s3 + $0x298] sm:$0xff]
  %v809 = vld [vmem:[%s3 + $0x2a0] sm:$0xff]
  %v810 = vld [vmem:[%s3 + $0x2a8] sm:$0xff]
  %v811 = vld [vmem:[%s3 + $0x2b0] sm:$0xff]
  %v812 = vld [vmem:[%s3 + $0x2b8] sm:$0xff]
  %v813 = vld [vmem:[%s3 + $0x2c0] sm:$0xff]
  %v814 = vld [vmem:[%s3 + $0x2c8] sm:$0xff]
  %v815 = vld [vmem:[%s3 + $0x2d0] sm:$0xff]
  %v816 = vld [vmem:[%s3 + $0x2d8] sm:$0xff]
  %v817 = vld [vmem:[%s3 + $0x2e0] sm:$0xff]
  %v818 = vld [vmem:[%s3 + $0x2e8] sm:$0xff]
  %v819 = vld [vmem:[%s3 + $0x2f0] sm:$0xff]
  %v820 = vld [vmem:[%s3 + $0x2f8] sm:$0xff]
  %v821 = vld [vmem:[%s3 + $0x300] sm:$0xff]
  %v822 = vld [vmem:[%s3 + $0x308] sm:$0xff]
  %v823 = vld [vmem:[%s3 + $0x310] sm:$0xff]
  %v824 = vld [vmem:[%s3 + $0x318] sm:$0xff]
  %v825 = vld [vmem:[%s3 + $0x320] sm:$0xff]
  %v826 = vld [vmem:[%s3 + $0x328] sm:$0xff]
  %v827 = vld [vmem:[%s3 + $0x330] sm:$0xff]
  %v828 = vld [vmem:[%s3 + $0x338] sm:$0xff]
  %v829 = vld [vmem:[%s3 + $0x340] sm:$0xff]
  %v830 = vld [vmem:[%s3 + $0x348] sm:$0xff]
  %v831 = vld [vmem:[%s3 + $0x350] sm:$0xff]
  %v832 = vld [vmem:[%s3 + $0x358] sm:$0xff]
  %v833 = vld [vmem:[%s3 + $0x360] sm:$0xff]
  %v834 = vld [vmem:[%s3 + $0x368] sm:$0xff]
  %v835 = vld [vmem:[%s3 + $0x370] sm:$0xff]
  %v836 = vld [vmem:[%s3 + $0x378] sm:$0xff]
  %v837 = vld [vmem:[%s3 + $0x380] sm:$0xff]
  %v838 = vld [vmem:[%s3 + $0x388] sm:$0xff]
  %v839 = vld [vmem:[%s3 + $0x390] sm:$0xff]
  %v840 = vld [vmem:[%s3 + $0x398] sm:$0xff]
  %v841 = vld [vmem:[%s3 + $0x3a0] sm:$0xff]
  %v842 = vld [vmem:[%s3 + $0x3a8] sm:$0xff]
  %v843 = vld [vmem:[%s3 + $0x3b0] sm:$0xff]
  %v844 = vld [vmem:[%s3 + $0x3b8] sm:$0xff]
  %v845 = vld [vmem:[%s3 + $0x3c0] sm:$0xff]
  %v846 = vld [vmem:[%s3 + $0x3c8] sm:$0xff]
  %v847 = vld [vmem:[%s3 + $0x3d0] sm:$0xff]
  %v848 = vld [vmem:[%s3 + $0x3d8] sm:$0xff]
  %v849 = vld [vmem:[%s3 + $0x3e0] sm:$0xff]
  %v850 = vld [vmem:[%s3 + $0x3e8] sm:$0xff]
  %v851 = vld [vmem:[%s3 + $0x3f0] sm:$0xff]
  %v852 = vld [vmem:[%s3 + $0x3f8] sm:$0xff]
  %v853 = vld [vmem:[%s3 + $0x400] sm:$0xff]
  %v854 = vld [vmem:[%s3 + $0x408] sm:$0xff]
  %v855 = vld [vmem:[%s3 + $0x410] sm:$0xff]
  %v856 = vld [vmem:[%s3 + $0x418] sm:$0xff]
  %v857 = vld [vmem:[%s3 + $0x420] sm:$0xff]
  %v858 = vld [vmem:[%s3 + $0x428] sm:$0xff]
  %v859 = vld [vmem:[%s3 + $0x430] sm:$0xff]
  %v860 = vld [vmem:[%s3 + $0x438] sm:$0xff]
  %v861 = vld [vmem:[%s3 + $0x440] sm:$0xff]
  %v862 = vld [vmem:[%s3 + $0x448] sm:$0xff]
  %v863 = vld [vmem:[%s3 + $0x450] sm:$0xff]
  %v864 = vld [vmem:[%s3 + $0x458] sm:$0xff]
  %v865 = vld [vmem:[%s3 + $0x460] sm:$0xff]
  %v866 = vld [vmem:[%s3 + $0x468] sm:$0xff]
  %v867 = vld [vmem:[%s3 + $0x470] sm:$0xff]
  %v868 = vld [vmem:[%s3 + $0x478] sm:$0xff]
  %v869 = vld [vmem:[%s3 + $0x480] sm:$0xff]
  %v870 = vld [vmem:[%s3 + $0x488] sm:$0xff]
  %v871 = vld [vmem:[%s3 + $0x490] sm:$0xff]
  %v872 = vld [vmem:[%s3 + $0x498] sm:$0xff]
  %v873 = vld [vmem:[%s3 + $0x4a0] sm:$0xff]
  %v874 = vld [vmem:[%s3 + $0x4a8] sm:$0xff]
  %v875 = vld [vmem:[%s3 + $0x4b0] sm:$0xff]
  %v876 = vld [vmem:[%s3 + $0x4b8] sm:$0xff]
  %v877 = vld [vmem:[%s3 + $0x4c0] sm:$0xff]
  %v878 = vld [vmem:[%s3 + $0x4c8] sm:$0xff]
  %v879 = vld [vmem:[%s3 + $0x4d0] sm:$0xff]
  %v880 = vld [vmem:[%s3 + $0x4d8] sm:$0xff]
  %v881 = vld [vmem:[%s3 + $0x4e0] sm:$0xff]
  %v882 = vld [vmem:[%s3 + $0x4e8] sm:$0xff]
  %v883 = vld [vmem:[%s3 + $0x4f0] sm:$0xff]
  %v884 = vld [vmem:[%s3 + $0x4f8] sm:$0xff]
  %v885 = vld [vmem:[%s3 + $0x500] sm:$0xff]
  %v886 = vld [vmem:[%s3 + $0x508] sm:$0xff]
  %v887 = vld [vmem:[%s3 + $0x510] sm:$0xff]
  %v888 = vld [vmem:[%s3 + $0x518] sm:$0xff]
  %v889 = vld [vmem:[%s3 + $0x520] sm:$0xff]
  %v890 = vld [vmem:[%s3 + $0x528] sm:$0xff]
  %v891 = vld [vmem:[%s3 + $0x530] sm:$0xff]
  %v892 = vld [vmem:[%s3 + $0x538] sm:$0xff]
  %v893 = vld [vmem:[%s3 + $0x540] sm:$0xff]
  %v894 = vld [vmem:[%s3 + $0x548] sm:$0xff]
  %v895 = vld [vmem:[%s3 + $0x550] sm:$0xff]
  %v896 = vld [vmem:[%s3 + $0x558] sm:$0xff]
  %v897 = vld [vmem:[%s3 + $0x560] sm:$0xff]
  %v898 = vld [vmem:[%s3 + $0x568] sm:$0xff]
  %v899 = vld [vmem:[%s3 + $0x570] sm:$0xff]
  %v900 = vld [vmem:[%s3 + $0x578] sm:$0xff]
  %v901 = vld [vmem:[%s3 + $0x580] sm:$0xff]
  %v902 = vld [vmem:[%s3 + $0x588] sm:$0xff]
  %v903 = vld [vmem:[%s3 + $0x590] sm:$0xff]
  %v904 = vld [vmem:[%s3 + $0x598] sm:$0xff]
  %v905 = vld [vmem:[%s3 + $0x5a0] sm:$0xff]
  %v906 = vld [vmem:[%s3 + $0x5a8] sm:$0xff]
  %v907 = vld [vmem:[%s3 + $0x5b0] sm:$0xff]
  %v908 = vld [vmem:[%s3 + $0x5b8] sm:$0xff]
  %v909 = vld [vmem:[%s3 + $0x5c0] sm:$0xff]
  %v910 = vld [vmem:[%s3 + $0x5c8] sm:$0xff]
  %v911 = vld [vmem:[%s3 + $0x5d0] sm:$0xff]
  %v912 = vld [vmem:[%s3 + $0x5d8] sm:$0xff]
  %v913 = vld [vmem:[%s3 + $0x5e0] sm:$0xff]
  %v914 = vld [vmem:[%s3 + $0x5e8] sm:$0xff]
  %v915 = vld [vmem:[%s3 + $0x5f0] sm:$0xff]
  %v916 = vld [vmem:[%s3 + $0x5f8] sm:$0xff]
  %v917 = vld [vmem:[%s3 + $0x600] sm:$0xff]
  %v918 = vld [vmem:[%s3 + $0x608] sm:$0xff]
  %v919 = vld [vmem:[%s3 + $0x610] sm:$0xff]
  %v920 = vld [vmem:[%s3 + $0x618] sm:$0xff]
  %v921 = vld [vmem:[%s3 + $0x620] sm:$0xff]
  %v922 = vld [vmem:[%s3 + $0x628] sm:$0xff]
  %v923 = vld [vmem:[%s3 + $0x630] sm:$0xff]
  %v924 = vld [vmem:[%s3 + $0x638] sm:$0xff]
  %v925 = vld [vmem:[%s3 + $0x640] sm:$0xff]
  %v926 = vld [vmem:[%s3 + $0x648] sm:$0xff]
  %v927 = vld [vmem:[%s3 + $0x650] sm:$0xff]
  %v928 = vld [vmem:[%s3 + $0x658] sm:$0xff]
  %v929 = vld [vmem:[%s3 + $0x660] sm:$0xff]
  %v930 = vld [vmem:[%s3 + $0x668] sm:$0xff]
  %v931 = vld [vmem:[%s3 + $0x670] sm:$0xff]
  %v932 = vld [vmem:[%s3 + $0x678] sm:$0xff]
  %v933 = vld [vmem:[%s3 + $0x680] sm:$0xff]
  %v934 = vld [vmem:[%s3 + $0x688] sm:$0xff]
  %v935 = vld [vmem:[%s3 + $0x690] sm:$0xff]
  %v936 = vld [vmem:[%s3 + $0x698] sm:$0xff]
  %v937 = vld [vmem:[%s3 + $0x6a0] sm:$0xff]
  %v938 = vld [vmem:[%s3 + $0x6a8] sm:$0xff]
  %v939 = vld [vmem:[%s3 + $0x6b0] sm:$0xff]
  %v940 = vld [vmem:[%s3 + $0x6b8] sm:$0xff]
  %v941 = vld [vmem:[%s3 + $0x6c0] sm:$0xff]
  %v942 = vld [vmem:[%s3 + $0x6c8] sm:$0xff]
  %v943 = vld [vmem:[%s3 + $0x6d0] sm:$0xff]
  %v944 = vld [vmem:[%s3 + $0x6d8] sm:$0xff]
  %v945 = vld [vmem:[%s3 + $0x6e0] sm:$0xff]
  %v946 = vld [vmem:[%s3 + $0x6e8] sm:$0xff]
  %v947 = vld [vmem:[%s3 + $0x6f0] sm:$0xff]
  %v948 = vld [vmem:[%s3 + $0x6f8] sm:$0xff]
  %v949 = vld [vmem:[%s3 + $0x700] sm:$0xff]
  %v950 = vld [vmem:[%s3 + $0x708] sm:$0xff]
  %v951 = vld [vmem:[%s3 + $0x710] sm:$0xff]
  %v952 = vld [vmem:[%s3 + $0x718] sm:$0xff]
  %v953 = vld [vmem:[%s3 + $0x720] sm:$0xff]
  %v954 = vld [vmem:[%s3 + $0x728] sm:$0xff]
  %v955 = vld [vmem:[%s3 + $0x730] sm:$0xff]
  %v956 = vld [vmem:[%s3 + $0x738] sm:$0xff]
  %v957 = vld [vmem:[%s3 + $0x740] sm:$0xff]
  %v958 = vld [vmem:[%s3 + $0x748] sm:$0xff]
  %v959 = vld [vmem:[%s3 + $0x750] sm:$0xff]
  %v960 = vld [vmem:[%s3 + $0x758] sm:$0xff]
  %v961 = vld [vmem:[%s3 + $0x760] sm:$0xff]
  %v962 = vld [vmem:[%s3 + $0x768] sm:$0xff]
  %v963 = vld [vmem:[%s3 + $0x770] sm:$0xff]
  %v964 = vld [vmem:[%s3 + $0x778] sm:$0xff]
  %v965 = vld [vmem:[%s3 + $0x780] sm:$0xff]
  %v966 = vld [vmem:[%s3 + $0x788] sm:$0xff]
  %v967 = vld [vmem:[%s3 + $0x790] sm:$0xff]
  %v968 = vld [vmem:[%s3 + $0x798] sm:$0xff]
  %v969 = vld [vmem:[%s3 + $0x7a0] sm:$0xff]
  %v970 = vld [vmem:[%s3 + $0x7a8] sm:$0xff]
  %v971 = vld [vmem:[%s3 + $0x7b0] sm:$0xff]
  %v972 = vld [vmem:[%s3 + $0x7b8] sm:$0xff]
  %v973 = vld [vmem:[%s3 + $0x7c0] sm:$0xff]
  %v974 = vld [vmem:[%s3 + $0x7c8] sm:$0xff]
  %v975 = vld [vmem:[%s3 + $0x7d0] sm:$0xff]
  %v976 = vld [vmem:[%s3 + $0x7d8] sm:$0xff]
  %v977 = vld [vmem:[%s3 + $0x7e0] sm:$0xff]
  %v978 = vld [vmem:[%s3 + $0x7e8] sm:$0xff]
  %v979 = vld [vmem:[%s3 + $0x7f0] sm:$0xff]
  %v980 = vld [vmem:[%s3 + $0x7f8] sm:$0xff]
  %v981 = vld [vmem:[%s4] sm:$0x1]
  %v983 = vlaneseq
  %v984 = vshrl.u32 %v983, 7
  %v985 = vsub.s32 0, %v984
  %v986 = vrot.slane %v981, %v985
  %988 = vmatprep.subr.mxu0 0.0
  %989 = vmatpush1.msra.mxu0 %v725
  %990 = vmatprep.subr.mxu0 0.0
  %991 = vmatpush1.msra.mxu0 %v726
  %992 = vmatprep.subr.mxu0 0.0
  %993 = vmatpush1.msra.mxu0 %v727
  %994 = vmatprep.subr.mxu0 0.0
  %995 = vmatpush1.msra.mxu0 %v728
  %996 = vmatprep.subr.mxu0 0.0
  %997 = vmatpush1.msra.mxu0 %v729
  %998 = vmatprep.subr.mxu0 0.0
  %999 = vmatpush1.msra.mxu0 %v730
  %1000 = vmatprep.subr.mxu0 0.0
  %1001 = vmatpush1.msra.mxu0 %v731
  %1002 = vmatprep.subr.mxu0 0.0
  %1003 = vmatpush1.msra.mxu0 %v732
  %1004 = vmatprep.subr.mxu0 0.0
  %1005 = vmatpush1.msra.mxu0 %v733
  %1006 = vmatprep.subr.mxu0 0.0
  %1007 = vmatpush1.msra.mxu0 %v734
  %1008 = vmatprep.subr.mxu0 0.0
  %1009 = vmatpush1.msra.mxu0 %v735
  %1010 = vmatprep.subr.mxu0 0.0
  %1011 = vmatpush1.msra.mxu0 %v736
  %1012 = vmatprep.subr.mxu0 0.0
  %1013 = vmatpush1.msra.mxu0 %v737
  %1014 = vmatprep.subr.mxu0 0.0
  %1015 = vmatpush1.msra.mxu0 %v738
  %1016 = vmatprep.subr.mxu0 0.0
  %1017 = vmatpush1.msra.mxu0 %v739
  %1018 = vmatprep.subr.mxu0 0.0
  %1019 = vmatpush1.msra.mxu0 %v740
  %1020 = vmatprep.subr.mxu0 0.0
  %1021 = vmatpush1.msra.mxu0 %v741
  %1022 = vmatprep.subr.mxu0 0.0
  %1023 = vmatpush1.msra.mxu0 %v742
  %1024 = vmatprep.subr.mxu0 0.0
  %1025 = vmatpush1.msra.mxu0 %v743
  %1026 = vmatprep.subr.mxu0 0.0
  %1027 = vmatpush1.msra.mxu0 %v744
  %1028 = vmatprep.subr.mxu0 0.0
  %1029 = vmatpush1.msra.mxu0 %v745
  %1030 = vmatprep.subr.mxu0 0.0
  %1031 = vmatpush1.msra.mxu0 %v746
  %1032 = vmatprep.subr.mxu0 0.0
  %1033 = vmatpush1.msra.mxu0 %v747
  %1034 = vmatprep.subr.mxu0 0.0
  %1035 = vmatpush1.msra.mxu0 %v748
  %1036 = vmatprep.subr.mxu0 0.0
  %1037 = vmatpush1.msra.mxu0 %v749
  %1038 = vmatprep.subr.mxu0 0.0
  %1039 = vmatpush1.msra.mxu0 %v750
  %1040 = vmatprep.subr.mxu0 0.0
  %1041 = vmatpush1.msra.mxu0 %v751
  %1042 = vmatprep.subr.mxu0 0.0
  %1043 = vmatpush1.msra.mxu0 %v752
  %1044 = vmatprep.subr.mxu0 0.0
  %1045 = vmatpush1.msra.mxu0 %v753
  %1046 = vmatprep.subr.mxu0 0.0
  %1047 = vmatpush1.msra.mxu0 %v754
  %1048 = vmatprep.subr.mxu0 0.0
  %1049 = vmatpush1.msra.mxu0 %v755
  %1050 = vmatprep.subr.mxu0 0.0
  %1051 = vmatpush1.msra.mxu0 %v756
  %1052 = vmatprep.mubr.f32.mxu0 %v710
  %1053 = vmatmul.mubr.f32.gmra.mrb[0].mxu0 %v709
  %v1054 = vpop.f32.mrb[0].mxu0
  %v1055 = vadd.f32 %v986, %v1054
  %v1056 = vpop.f32.mrb[0].mxu0
  %1057 = vdwg.mxu0
  %1058 = vmatprep.subr.mxu0 0.0
  %1059 = vmatpush1.msra.mxu0 %v757
  %1060 = vmatprep.subr.mxu0 0.0
  %1061 = vmatpush1.msra.mxu0 %v758
  %1062 = vmatprep.subr.mxu0 0.0
  %1063 = vmatpush1.msra.mxu0 %v759
  %1064 = vmatprep.subr.mxu0 0.0
  %1065 = vmatpush1.msra.mxu0 %v760
  %1066 = vmatprep.subr.mxu0 0.0
  %1067 = vmatpush1.msra.mxu0 %v761
  %1068 = vmatprep.subr.mxu0 0.0
  %1069 = vmatpush1.msra.mxu0 %v762
  %1070 = vmatprep.subr.mxu0 0.0
  %1071 = vmatpush1.msra.mxu0 %v763
  %1072 = vmatprep.subr.mxu0 0.0
  %1073 = vmatpush1.msra.mxu0 %v764
  %1074 = vmatprep.subr.mxu0 0.0
  %1075 = vmatpush1.msra.mxu0 %v765
  %1076 = vmatprep.subr.mxu0 0.0
  %1077 = vmatpush1.msra.mxu0 %v766
  %1078 = vmatprep.subr.mxu0 0.0
  %1079 = vmatpush1.msra.mxu0 %v767
  %1080 = vmatprep.subr.mxu0 0.0
  %1081 = vmatpush1.msra.mxu0 %v768
  %1082 = vmatprep.subr.mxu0 0.0
  %1083 = vmatpush1.msra.mxu0 %v769
  %1084 = vmatprep.subr.mxu0 0.0
  %1085 = vmatpush1.msra.mxu0 %v770
  %1086 = vmatprep.subr.mxu0 0.0
  %1087 = vmatpush1.msra.mxu0 %v771
  %1088 = vmatprep.subr.mxu0 0.0
  %1089 = vmatpush1.msra.mxu0 %v772
  %1090 = vmatprep.subr.mxu0 0.0
  %1091 = vmatpush1.msra.mxu0 %v773
  %1092 = vmatprep.subr.mxu0 0.0
  %1093 = vmatpush1.msra.mxu0 %v774
  %1094 = vmatprep.subr.mxu0 0.0
  %1095 = vmatpush1.msra.mxu0 %v775
  %1096 = vmatprep.subr.mxu0 0.0
  %1097 = vmatpush1.msra.mxu0 %v776
  %1098 = vmatprep.subr.mxu0 0.0
  %1099 = vmatpush1.msra.mxu0 %v777
  %1100 = vmatprep.subr.mxu0 0.0
  %1101 = vmatpush1.msra.mxu0 %v778
  %1102 = vmatprep.subr.mxu0 0.0
  %1103 = vmatpush1.msra.mxu0 %v779
  %1104 = vmatprep.subr.mxu0 0.0
  %1105 = vmatpush1.msra.mxu0 %v780
  %1106 = vmatprep.subr.mxu0 0.0
  %1107 = vmatpush1.msra.mxu0 %v781
  %1108 = vmatprep.subr.mxu0 0.0
  %1109 = vmatpush1.msra.mxu0 %v782
  %1110 = vmatprep.subr.mxu0 0.0
  %1111 = vmatpush1.msra.mxu0 %v783
  %1112 = vmatprep.subr.mxu0 0.0
  %1113 = vmatpush1.msra.mxu0 %v784
  %1114 = vmatprep.subr.mxu0 0.0
  %1115 = vmatpush1.msra.mxu0 %v785
  %1116 = vmatprep.subr.mxu0 0.0
  %1117 = vmatpush1.msra.mxu0 %v786
  %1118 = vmatprep.subr.mxu0 0.0
  %1119 = vmatpush1.msra.mxu0 %v787
  %1120 = vmatprep.subr.mxu0 0.0
  %1121 = vmatpush1.msra.mxu0 %v788
  %1122 = vmatprep.mubr.f32.mxu0 %v712
  %1123 = vmatmul.mubr.f32.gmra.mrb[0].mxu0 %v711
  %v1124 = vpop.f32.mrb[0].mxu0
  %v1125 = vadd.f32 %v1055, %v1124
  %v1126 = vpop.f32.mrb[0].mxu0
  %1127 = vdwg.mxu0
  %1128 = vmatprep.subr.mxu0 0.0
  %1129 = vmatpush1.msra.mxu0 %v789
  %1130 = vmatprep.subr.mxu0 0.0
  %1131 = vmatpush1.msra.mxu0 %v790
  %1132 = vmatprep.subr.mxu0 0.0
  %1133 = vmatpush1.msra.mxu0 %v791
  %1134 = vmatprep.subr.mxu0 0.0
  %1135 = vmatpush1.msra.mxu0 %v792
  %1136 = vmatprep.subr.mxu0 0.0
  %1137 = vmatpush1.msra.mxu0 %v793
  %1138 = vmatprep.subr.mxu0 0.0
  %1139 = vmatpush1.msra.mxu0 %v794
  %1140 = vmatprep.subr.mxu0 0.0
  %1141 = vmatpush1.msra.mxu0 %v795
  %1142 = vmatprep.subr.mxu0 0.0
  %1143 = vmatpush1.msra.mxu0 %v796
  %1144 = vmatprep.subr.mxu0 0.0
  %1145 = vmatpush1.msra.mxu0 %v797
  %1146 = vmatprep.subr.mxu0 0.0
  %1147 = vmatpush1.msra.mxu0 %v798
  %1148 = vmatprep.subr.mxu0 0.0
  %1149 = vmatpush1.msra.mxu0 %v799
  %1150 = vmatprep.subr.mxu0 0.0
  %1151 = vmatpush1.msra.mxu0 %v800
  %1152 = vmatprep.subr.mxu0 0.0
  %1153 = vmatpush1.msra.mxu0 %v801
  %1154 = vmatprep.subr.mxu0 0.0
  %1155 = vmatpush1.msra.mxu0 %v802
  %1156 = vmatprep.subr.mxu0 0.0
  %1157 = vmatpush1.msra.mxu0 %v803
  %1158 = vmatprep.subr.mxu0 0.0
  %1159 = vmatpush1.msra.mxu0 %v804
  %1160 = vmatprep.subr.mxu0 0.0
  %1161 = vmatpush1.msra.mxu0 %v805
  %1162 = vmatprep.subr.mxu0 0.0
  %1163 = vmatpush1.msra.mxu0 %v806
  %1164 = vmatprep.subr.mxu0 0.0
  %1165 = vmatpush1.msra.mxu0 %v807
  %1166 = vmatprep.subr.mxu0 0.0
  %1167 = vmatpush1.msra.mxu0 %v808
  %1168 = vmatprep.subr.mxu0 0.0
  %1169 = vmatpush1.msra.mxu0 %v809
  %1170 = vmatprep.subr.mxu0 0.0
  %1171 = vmatpush1.msra.mxu0 %v810
  %1172 = vmatprep.subr.mxu0 0.0
  %1173 = vmatpush1.msra.mxu0 %v811
  %1174 = vmatprep.subr.mxu0 0.0
  %1175 = vmatpush1.msra.mxu0 %v812
  %1176 = vmatprep.subr.mxu0 0.0
  %1177 = vmatpush1.msra.mxu0 %v813
  %1178 = vmatprep.subr.mxu0 0.0
  %1179 = vmatpush1.msra.mxu0 %v814
  %1180 = vmatprep.subr.mxu0 0.0
  %1181 = vmatpush1.msra.mxu0 %v815
  %1182 = vmatprep.subr.mxu0 0.0
  %1183 = vmatpush1.msra.mxu0 %v816
  %1184 = vmatprep.subr.mxu0 0.0
  %1185 = vmatpush1.msra.mxu0 %v817
  %1186 = vmatprep.subr.mxu0 0.0
  %1187 = vmatpush1.msra.mxu0 %v818
  %1188 = vmatprep.subr.mxu0 0.0
  %1189 = vmatpush1.msra.mxu0 %v819
  %1190 = vmatprep.subr.mxu0 0.0
  %1191 = vmatpush1.msra.mxu0 %v820
  %1192 = vmatprep.mubr.f32.mxu0 %v714
  %1193 = vmatmul.mubr.f32.gmra.mrb[0].mxu0 %v713
  %v1194 = vpop.f32.mrb[0].mxu0
  %v1195 = vadd.f32 %v1125, %v1194
  %v1196 = vpop.f32.mrb[0].mxu0
  %1197 = vdwg.mxu0
  %1198 = vmatprep.subr.mxu0 0.0
  %1199 = vmatpush1.msra.mxu0 %v821
  %1200 = vmatprep.subr.mxu0 0.0
  %1201 = vmatpush1.msra.mxu0 %v822
  %1202 = vmatprep.subr.mxu0 0.0
  %1203 = vmatpush1.msra.mxu0 %v823
  %1204 = vmatprep.subr.mxu0 0.0
  %1205 = vmatpush1.msra.mxu0 %v824
  %1206 = vmatprep.subr.mxu0 0.0
  %1207 = vmatpush1.msra.mxu0 %v825
  %1208 = vmatprep.subr.mxu0 0.0
  %1209 = vmatpush1.msra.mxu0 %v826
  %1210 = vmatprep.subr.mxu0 0.0
  %1211 = vmatpush1.msra.mxu0 %v827
  %1212 = vmatprep.subr.mxu0 0.0
  %1213 = vmatpush1.msra.mxu0 %v828
  %1214 = vmatprep.subr.mxu0 0.0
  %1215 = vmatpush1.msra.mxu0 %v829
  %1216 = vmatprep.subr.mxu0 0.0
  %1217 = vmatpush1.msra.mxu0 %v830
  %1218 = vmatprep.subr.mxu0 0.0
  %1219 = vmatpush1.msra.mxu0 %v831
  %1220 = vmatprep.subr.mxu0 0.0
  %1221 = vmatpush1.msra.mxu0 %v832
  %1222 = vmatprep.subr.mxu0 0.0
  %1223 = vmatpush1.msra.mxu0 %v833
  %1224 = vmatprep.subr.mxu0 0.0
  %1225 = vmatpush1.msra.mxu0 %v834
  %1226 = vmatprep.subr.mxu0 0.0
  %1227 = vmatpush1.msra.mxu0 %v835
  %1228 = vmatprep.subr.mxu0 0.0
  %1229 = vmatpush1.msra.mxu0 %v836
  %1230 = vmatprep.subr.mxu0 0.0
  %1231 = vmatpush1.msra.mxu0 %v837
  %1232 = vmatprep.subr.mxu0 0.0
  %1233 = vmatpush1.msra.mxu0 %v838
  %1234 = vmatprep.subr.mxu0 0.0
  %1235 = vmatpush1.msra.mxu0 %v839
  %1236 = vmatprep.subr.mxu0 0.0
  %1237 = vmatpush1.msra.mxu0 %v840
  %1238 = vmatprep.subr.mxu0 0.0
  %1239 = vmatpush1.msra.mxu0 %v841
  %1240 = vmatprep.subr.mxu0 0.0
  %1241 = vmatpush1.msra.mxu0 %v842
  %1242 = vmatprep.subr.mxu0 0.0
  %1243 = vmatpush1.msra.mxu0 %v843
  %1244 = vmatprep.subr.mxu0 0.0
  %1245 = vmatpush1.msra.mxu0 %v844
  %1246 = vmatprep.subr.mxu0 0.0
  %1247 = vmatpush1.msra.mxu0 %v845
  %1248 = vmatprep.subr.mxu0 0.0
  %1249 = vmatpush1.msra.mxu0 %v846
  %1250 = vmatprep.subr.mxu0 0.0
  %1251 = vmatpush1.msra.mxu0 %v847
  %1252 = vmatprep.subr.mxu0 0.0
  %1253 = vmatpush1.msra.mxu0 %v848
  %1254 = vmatprep.subr.mxu0 0.0
  %1255 = vmatpush1.msra.mxu0 %v849
  %1256 = vmatprep.subr.mxu0 0.0
  %1257 = vmatpush1.msra.mxu0 %v850
  %1258 = vmatprep.subr.mxu0 0.0
  %1259 = vmatpush1.msra.mxu0 %v851
  %1260 = vmatprep.subr.mxu0 0.0
  %1261 = vmatpush1.msra.mxu0 %v852
  %1262 = vmatprep.mubr.f32.mxu0 %v716
  %1263 = vmatmul.mubr.f32.gmra.mrb[0].mxu0 %v715
  %v1264 = vpop.f32.mrb[0].mxu0
  %v1265 = vadd.f32 %v1195, %v1264
  %v1266 = vpop.f32.mrb[0].mxu0
  %1267 = vdwg.mxu0
  %1268 = vmatprep.subr.mxu0 0.0
  %1269 = vmatpush1.msra.mxu0 %v853
  %1270 = vmatprep.subr.mxu0 0.0
  %1271 = vmatpush1.msra.mxu0 %v854
  %1272 = vmatprep.subr.mxu0 0.0
  %1273 = vmatpush1.msra.mxu0 %v855
  %1274 = vmatprep.subr.mxu0 0.0
  %1275 = vmatpush1.msra.mxu0 %v856
  %1276 = vmatprep.subr.mxu0 0.0
  %1277 = vmatpush1.msra.mxu0 %v857
  %1278 = vmatprep.subr.mxu0 0.0
  %1279 = vmatpush1.msra.mxu0 %v858
  %1280 = vmatprep.subr.mxu0 0.0
  %1281 = vmatpush1.msra.mxu0 %v859
  %1282 = vmatprep.subr.mxu0 0.0
  %1283 = vmatpush1.msra.mxu0 %v860
  %1284 = vmatprep.subr.mxu0 0.0
  %1285 = vmatpush1.msra.mxu0 %v861
  %1286 = vmatprep.subr.mxu0 0.0
  %1287 = vmatpush1.msra.mxu0 %v862
  %1288 = vmatprep.subr.mxu0 0.0
  %1289 = vmatpush1.msra.mxu0 %v863
  %1290 = vmatprep.subr.mxu0 0.0
  %1291 = vmatpush1.msra.mxu0 %v864
  %1292 = vmatprep.subr.mxu0 0.0
  %1293 = vmatpush1.msra.mxu0 %v865
  %1294 = vmatprep.subr.mxu0 0.0
  %1295 = vmatpush1.msra.mxu0 %v866
  %1296 = vmatprep.subr.mxu0 0.0
  %1297 = vmatpush1.msra.mxu0 %v867
  %1298 = vmatprep.subr.mxu0 0.0
  %1299 = vmatpush1.msra.mxu0 %v868
  %1300 = vmatprep.subr.mxu0 0.0
  %1301 = vmatpush1.msra.mxu0 %v869
  %1302 = vmatprep.subr.mxu0 0.0
  %1303 = vmatpush1.msra.mxu0 %v870
  %1304 = vmatprep.subr.mxu0 0.0
  %1305 = vmatpush1.msra.mxu0 %v871
  %1306 = vmatprep.subr.mxu0 0.0
  %1307 = vmatpush1.msra.mxu0 %v872
  %1308 = vmatprep.subr.mxu0 0.0
  %1309 = vmatpush1.msra.mxu0 %v873
  %1310 = vmatprep.subr.mxu0 0.0
  %1311 = vmatpush1.msra.mxu0 %v874
  %1312 = vmatprep.subr.mxu0 0.0
  %1313 = vmatpush1.msra.mxu0 %v875
  %1314 = vmatprep.subr.mxu0 0.0
  %1315 = vmatpush1.msra.mxu0 %v876
  %1316 = vmatprep.subr.mxu0 0.0
  %1317 = vmatpush1.msra.mxu0 %v877
  %1318 = vmatprep.subr.mxu0 0.0
  %1319 = vmatpush1.msra.mxu0 %v878
  %1320 = vmatprep.subr.mxu0 0.0
  %1321 = vmatpush1.msra.mxu0 %v879
  %1322 = vmatprep.subr.mxu0 0.0
  %1323 = vmatpush1.msra.mxu0 %v880
  %1324 = vmatprep.subr.mxu0 0.0
  %1325 = vmatpush1.msra.mxu0 %v881
  %1326 = vmatprep.subr.mxu0 0.0
  %1327 = vmatpush1.msra.mxu0 %v882
  %1328 = vmatprep.subr.mxu0 0.0
  %1329 = vmatpush1.msra.mxu0 %v883
  %1330 = vmatprep.subr.mxu0 0.0
  %1331 = vmatpush1.msra.mxu0 %v884
  %1332 = vmatprep.mubr.f32.mxu0 %v718
  %1333 = vmatmul.mubr.f32.gmra.mrb[0].mxu0 %v717
  %v1334 = vpop.f32.mrb[0].mxu0
  %v1335 = vadd.f32 %v1265, %v1334
  %v1336 = vpop.f32.mrb[0].mxu0
  %1337 = vdwg.mxu0
  %1338 = vmatprep.subr.mxu0 0.0
  %1339 = vmatpush1.msra.mxu0 %v885
  %1340 = vmatprep.subr.mxu0 0.0
  %1341 = vmatpush1.msra.mxu0 %v886
  %1342 = vmatprep.subr.mxu0 0.0
  %1343 = vmatpush1.msra.mxu0 %v887
  %1344 = vmatprep.subr.mxu0 0.0
  %1345 = vmatpush1.msra.mxu0 %v888
  %1346 = vmatprep.subr.mxu0 0.0
  %1347 = vmatpush1.msra.mxu0 %v889
  %1348 = vmatprep.subr.mxu0 0.0
  %1349 = vmatpush1.msra.mxu0 %v890
  %1350 = vmatprep.subr.mxu0 0.0
  %1351 = vmatpush1.msra.mxu0 %v891
  %1352 = vmatprep.subr.mxu0 0.0
  %1353 = vmatpush1.msra.mxu0 %v892
  %1354 = vmatprep.subr.mxu0 0.0
  %1355 = vmatpush1.msra.mxu0 %v893
  %1356 = vmatprep.subr.mxu0 0.0
  %1357 = vmatpush1.msra.mxu0 %v894
  %1358 = vmatprep.subr.mxu0 0.0
  %1359 = vmatpush1.msra.mxu0 %v895
  %1360 = vmatprep.subr.mxu0 0.0
  %1361 = vmatpush1.msra.mxu0 %v896
  %1362 = vmatprep.subr.mxu0 0.0
  %1363 = vmatpush1.msra.mxu0 %v897
  %1364 = vmatprep.subr.mxu0 0.0
  %1365 = vmatpush1.msra.mxu0 %v898
  %1366 = vmatprep.subr.mxu0 0.0
  %1367 = vmatpush1.msra.mxu0 %v899
  %1368 = vmatprep.subr.mxu0 0.0
  %1369 = vmatpush1.msra.mxu0 %v900
  %1370 = vmatprep.subr.mxu0 0.0
  %1371 = vmatpush1.msra.mxu0 %v901
  %1372 = vmatprep.subr.mxu0 0.0
  %1373 = vmatpush1.msra.mxu0 %v902
  %1374 = vmatprep.subr.mxu0 0.0
  %1375 = vmatpush1.msra.mxu0 %v903
  %1376 = vmatprep.subr.mxu0 0.0
  %1377 = vmatpush1.msra.mxu0 %v904
  %1378 = vmatprep.subr.mxu0 0.0
  %1379 = vmatpush1.msra.mxu0 %v905
  %1380 = vmatprep.subr.mxu0 0.0
  %1381 = vmatpush1.msra.mxu0 %v906
  %1382 = vmatprep.subr.mxu0 0.0
  %1383 = vmatpush1.msra.mxu0 %v907
  %1384 = vmatprep.subr.mxu0 0.0
  %1385 = vmatpush1.msra.mxu0 %v908
  %1386 = vmatprep.subr.mxu0 0.0
  %1387 = vmatpush1.msra.mxu0 %v909
  %1388 = vmatprep.subr.mxu0 0.0
  %1389 = vmatpush1.msra.mxu0 %v910
  %1390 = vmatprep.subr.mxu0 0.0
  %1391 = vmatpush1.msra.mxu0 %v911
  %1392 = vmatprep.subr.mxu0 0.0
  %1393 = vmatpush1.msra.mxu0 %v912
  %1394 = vmatprep.subr.mxu0 0.0
  %1395 = vmatpush1.msra.mxu0 %v913
  %1396 = vmatprep.subr.mxu0 0.0
  %1397 = vmatpush1.msra.mxu0 %v914
  %1398 = vmatprep.subr.mxu0 0.0
  %1399 = vmatpush1.msra.mxu0 %v915
  %1400 = vmatprep.subr.mxu0 0.0
  %1401 = vmatpush1.msra.mxu0 %v916
  %1402 = vmatprep.mubr.f32.mxu0 %v720
  %1403 = vmatmul.mubr.f32.gmra.mrb[0].mxu0 %v719
  %v1404 = vpop.f32.mrb[0].mxu0
  %v1405 = vadd.f32 %v1335, %v1404
  %v1406 = vpop.f32.mrb[0].mxu0
  %1407 = vdwg.mxu0
  %1408 = vmatprep.subr.mxu0 0.0
  %1409 = vmatpush1.msra.mxu0 %v917
  %1410 = vmatprep.subr.mxu0 0.0
  %1411 = vmatpush1.msra.mxu0 %v918
  %1412 = vmatprep.subr.mxu0 0.0
  %1413 = vmatpush1.msra.mxu0 %v919
  %1414 = vmatprep.subr.mxu0 0.0
  %1415 = vmatpush1.msra.mxu0 %v920
  %1416 = vmatprep.subr.mxu0 0.0
  %1417 = vmatpush1.msra.mxu0 %v921
  %1418 = vmatprep.subr.mxu0 0.0
  %1419 = vmatpush1.msra.mxu0 %v922
  %1420 = vmatprep.subr.mxu0 0.0
  %1421 = vmatpush1.msra.mxu0 %v923
  %1422 = vmatprep.subr.mxu0 0.0
  %1423 = vmatpush1.msra.mxu0 %v924
  %1424 = vmatprep.subr.mxu0 0.0
  %1425 = vmatpush1.msra.mxu0 %v925
  %1426 = vmatprep.subr.mxu0 0.0
  %1427 = vmatpush1.msra.mxu0 %v926
  %1428 = vmatprep.subr.mxu0 0.0
  %1429 = vmatpush1.msra.mxu0 %v927
  %1430 = vmatprep.subr.mxu0 0.0
  %1431 = vmatpush1.msra.mxu0 %v928
  %1432 = vmatprep.subr.mxu0 0.0
  %1433 = vmatpush1.msra.mxu0 %v929
  %1434 = vmatprep.subr.mxu0 0.0
  %1435 = vmatpush1.msra.mxu0 %v930
  %1436 = vmatprep.subr.mxu0 0.0
  %1437 = vmatpush1.msra.mxu0 %v931
  %1438 = vmatprep.subr.mxu0 0.0
  %1439 = vmatpush1.msra.mxu0 %v932
  %1440 = vmatprep.subr.mxu0 0.0
  %1441 = vmatpush1.msra.mxu0 %v933
  %1442 = vmatprep.subr.mxu0 0.0
  %1443 = vmatpush1.msra.mxu0 %v934
  %1444 = vmatprep.subr.mxu0 0.0
  %1445 = vmatpush1.msra.mxu0 %v935
  %1446 = vmatprep.subr.mxu0 0.0
  %1447 = vmatpush1.msra.mxu0 %v936
  %1448 = vmatprep.subr.mxu0 0.0
  %1449 = vmatpush1.msra.mxu0 %v937
  %1450 = vmatprep.subr.mxu0 0.0
  %1451 = vmatpush1.msra.mxu0 %v938
  %1452 = vmatprep.subr.mxu0 0.0
  %1453 = vmatpush1.msra.mxu0 %v939
  %1454 = vmatprep.subr.mxu0 0.0
  %1455 = vmatpush1.msra.mxu0 %v940
  %1456 = vmatprep.subr.mxu0 0.0
  %1457 = vmatpush1.msra.mxu0 %v941
  %1458 = vmatprep.subr.mxu0 0.0
  %1459 = vmatpush1.msra.mxu0 %v942
  %1460 = vmatprep.subr.mxu0 0.0
  %1461 = vmatpush1.msra.mxu0 %v943
  %1462 = vmatprep.subr.mxu0 0.0
  %1463 = vmatpush1.msra.mxu0 %v944
  %1464 = vmatprep.subr.mxu0 0.0
  %1465 = vmatpush1.msra.mxu0 %v945
  %1466 = vmatprep.subr.mxu0 0.0
  %1467 = vmatpush1.msra.mxu0 %v946
  %1468 = vmatprep.subr.mxu0 0.0
  %1469 = vmatpush1.msra.mxu0 %v947
  %1470 = vmatprep.subr.mxu0 0.0
  %1471 = vmatpush1.msra.mxu0 %v948
  %1472 = vmatprep.mubr.f32.mxu0 %v722
  %1473 = vmatmul.mubr.f32.gmra.mrb[0].mxu0 %v721
  %v1474 = vpop.f32.mrb[0].mxu0
  %v1475 = vadd.f32 %v1405, %v1474
  %v1476 = vpop.f32.mrb[0].mxu0
  %1477 = vdwg.mxu0
  %1478 = vmatprep.subr.mxu0 0.0
  %1479 = vmatpush1.msra.mxu0 %v949
  %1480 = vmatprep.subr.mxu0 0.0
  %1481 = vmatpush1.msra.mxu0 %v950
  %1482 = vmatprep.subr.mxu0 0.0
  %1483 = vmatpush1.msra.mxu0 %v951
  %1484 = vmatprep.subr.mxu0 0.0
  %1485 = vmatpush1.msra.mxu0 %v952
  %1486 = vmatprep.subr.mxu0 0.0
  %1487 = vmatpush1.msra.mxu0 %v953
  %1488 = vmatprep.subr.mxu0 0.0
  %1489 = vmatpush1.msra.mxu0 %v954
  %1490 = vmatprep.subr.mxu0 0.0
  %1491 = vmatpush1.msra.mxu0 %v955
  %1492 = vmatprep.subr.mxu0 0.0
  %1493 = vmatpush1.msra.mxu0 %v956
  %1494 = vmatprep.subr.mxu0 0.0
  %1495 = vmatpush1.msra.mxu0 %v957
  %1496 = vmatprep.subr.mxu0 0.0
  %1497 = vmatpush1.msra.mxu0 %v958
  %1498 = vmatprep.subr.mxu0 0.0
  %1499 = vmatpush1.msra.mxu0 %v959
  %1500 = vmatprep.subr.mxu0 0.0
  %1501 = vmatpush1.msra.mxu0 %v960
  %1502 = vmatprep.subr.mxu0 0.0
  %1503 = vmatpush1.msra.mxu0 %v961
  %1504 = vmatprep.subr.mxu0 0.0
  %1505 = vmatpush1.msra.mxu0 %v962
  %1506 = vmatprep.subr.mxu0 0.0
  %1507 = vmatpush1.msra.mxu0 %v963
  %1508 = vmatprep.subr.mxu0 0.0
  %1509 = vmatpush1.msra.mxu0 %v964
  %1510 = vmatprep.subr.mxu0 0.0
  %1511 = vmatpush1.msra.mxu0 %v965
  %1512 = vmatprep.subr.mxu0 0.0
  %1513 = vmatpush1.msra.mxu0 %v966
  %1514 = vmatprep.subr.mxu0 0.0
  %1515 = vmatpush1.msra.mxu0 %v967
  %1516 = vmatprep.subr.mxu0 0.0
  %1517 = vmatpush1.msra.mxu0 %v968
  %1518 = vmatprep.subr.mxu0 0.0
  %1519 = vmatpush1.msra.mxu0 %v969
  %1520 = vmatprep.subr.mxu0 0.0
  %1521 = vmatpush1.msra.mxu0 %v970
  %1522 = vmatprep.subr.mxu0 0.0
  %1523 = vmatpush1.msra.mxu0 %v971
  %1524 = vmatprep.subr.mxu0 0.0
  %1525 = vmatpush1.msra.mxu0 %v972
  %1526 = vmatprep.subr.mxu0 0.0
  %1527 = vmatpush1.msra.mxu0 %v973
  %1528 = vmatprep.subr.mxu0 0.0
  %1529 = vmatpush1.msra.mxu0 %v974
  %1530 = vmatprep.subr.mxu0 0.0
  %1531 = vmatpush1.msra.mxu0 %v975
  %1532 = vmatprep.subr.mxu0 0.0
  %1533 = vmatpush1.msra.mxu0 %v976
  %1534 = vmatprep.subr.mxu0 0.0
  %1535 = vmatpush1.msra.mxu0 %v977
  %1536 = vmatprep.subr.mxu0 0.0
  %1537 = vmatpush1.msra.mxu0 %v978
  %1538 = vmatprep.subr.mxu0 0.0
  %1539 = vmatpush1.msra.mxu0 %v979
  %1540 = vmatprep.subr.mxu0 0.0
  %1541 = vmatpush1.msra.mxu0 %v980
  %1542 = vmatprep.mubr.f32.mxu0 %v724
  %1543 = vmatmul.mubr.f32.gmra.mrb[0].mxu0 %v723
  %v1544 = vpop.f32.mrb[0].mxu0
  %v1545 = vadd.f32 %v1475, %v1544
  %v1546 = vpop.f32.mrb[0].mxu0
  %1547 = vdwg.mxu0
  %vm1548 = vcmask 259072
  %1549 = vst.msk [vmem:[%s5] sm:$0x3f] %vm1548, %v1545
  // Predicated region
  $region22: #{seq2seq_transformer_forward.4} parent=0 // pred_check
    _
  $region23: #{seq2seq_transformer_forward.4} parent=0 // pred_check_branch
    %1551 = sbr.rel (0) target = $region25
  $region24: #{seq2seq_transformer_forward.4} parent=0 // pred_region
    _
  $region25: #{seq2seq_transformer_forward.4} parent=0 // pred_fallthru
    _
  // Predicated region
  $region26: #{seq2seq_transformer_forward.4} parent=0 // pred_check
    _
  $region27: #{seq2seq_transformer_forward.4} parent=0 // pred_check_branch
    %1553 = sbr.rel (0) target = $region29
  $region28: #{seq2seq_transformer_forward.4} parent=0 // pred_region
    _
  $region29: #{seq2seq_transformer_forward.4} parent=0 // pred_fallthru
    _

// kernel: seq2seq_transformer_forward.7
$region0: #{seq2seq_transformer_forward.7}
  #allocation0 [shape = 'u32[]', space=smem, size = 0x4, offset = 0x4, fixed_abs, tag = 'smem constant byte address 0x4 - core index']
  #allocation1 [shape = 'u32[144,128]{1,0:T(1,128)}', space=vmem, size = 0x12000, scoped, tag = 'internal scratch']
  #allocation2 [shape = 'f32[8,32]{1,0:T(8,128)}', space=vmem, size = 0x1000, scoped, tag = 'scratch operand']
  %s0 = inlined_call_operand.smem [shape: u32[36], index: -1, kind: input, shape index: {}]
  %s1 = sld [smem:[%s0]]
  %s2 = scalar_lea.smem %s0, 1
  %s3 = sld [smem:[%s2]]
  %s4 = scalar_lea.smem %s0, 2
  %s5 = sld [smem:[%s4]]
  %s6 = scalar_lea.smem %s0, 3
  %s7 = sld [smem:[%s6]]
  %s8 = scalar_lea.smem %s0, 4
  %s9 = sld [smem:[%s8]]
  %s10 = scalar_lea.smem %s0, 5
  %s11 = sld [smem:[%s10]]
  %s12 = scalar_lea.smem %s0, 6
  %s13 = sld [smem:[%s12]]
  %s14 = scalar_lea.smem %s0, 7
  %s15 = sld [smem:[%s14]]
  %s16 = scalar_lea.smem %s0, 8
  %s17 = sld [smem:[%s16]]
  %s18 = scalar_lea.smem %s0, 9
  %s19 = sld [smem:[%s18]]
  %s20 = scalar_lea.smem %s0, 10
  %s21 = sld [smem:[%s20]]
  %s22 = scalar_lea.smem %s0, 11
  %s23 = sld [smem:[%s22]]
  %s24 = scalar_lea.smem %s0, 12
  %s25 = sld [smem:[%s24]]
  %s26 = scalar_lea.smem %s0, 13
  %s27 = sld [smem:[%s26]]
  %s28 = scalar_lea.smem %s0, 14
  %s29 = sld [smem:[%s28]]
  %s30 = scalar_lea.smem %s0, 15
  %s31 = sld [smem:[%s30]]
  %s32 = scalar_lea.smem %s0, 16
  %s33 = sld [smem:[%s32]]
  %s34 = scalar_lea.smem %s0, 17
  %s35 = sld [smem:[%s34]]
  %s36 = scalar_lea.smem %s0, 18
  %s37 = sld [smem:[%s36]]
  %s38 = scalar_lea.smem %s0, 19
  %s39 = sld [smem:[%s38]]
  %s40 = scalar_lea.smem %s0, 20
  %s41 = sld [smem:[%s40]]
  %s42 = scalar_lea.smem %s0, 21
  %s43 = sld [smem:[%s42]]
  %s44 = scalar_lea.smem %s0, 22
  %s45 = sld [smem:[%s44]]
  %s46 = scalar_lea.smem %s0, 23
  %s47 = sld [smem:[%s46]]
  %s48 = scalar_lea.smem %s0, 24
  %s49 = sld [smem:[%s48]]
  %s50 = scalar_lea.smem %s0, 25
  %s51 = sld [smem:[%s50]]
  %s52 = scalar_lea.smem %s0, 26
  %s53 = sld [smem:[%s52]]
  %s54 = scalar_lea.smem %s0, 27
  %s55 = sld [smem:[%s54]]
  %s56 = scalar_lea.smem %s0, 28
  %s57 = sld [smem:[%s56]]
  %s58 = scalar_lea.smem %s0, 29
  %s59 = sld [smem:[%s58]]
  %s60 = scalar_lea.smem %s0, 30
  %s61 = sld [smem:[%s60]]
  %s62 = scalar_lea.smem %s0, 31
  %s63 = sld [smem:[%s62]]
  %s64 = scalar_lea.smem %s0, 32
  %s65 = sld [smem:[%s64]]
  %s66 = scalar_lea.smem %s0, 33
  %s67 = sld [smem:[%s66]]
  %s68 = scalar_lea.smem %s0, 34
  %s69 = sld [smem:[%s68]]
  %s70 = scalar_lea.smem %s0, 35
  %s71 = sld [smem:[%s70]]
  %s72 = sld [smem:[#allocation0]]
  $region181: #{seq2seq_transformer_forward.7} parent=0
    _
  %s74 = ssub.s32 1, %s72
  %s75 = scalar_select 0, %s74, %s72
  loop: start=0, step=1, limit=4
  $region2: #{seq2seq_transformer_forward.7} parent=0 // loop_pre_header
    _
  $region3: #{seq2seq_transformer_forward.7} parent=0 // loop_header
    %s77 = sphi 0, %s81
    %p78 = scmp.ge.s32.totalorder %s77, 4
    %s85 = sphi 0, %s85
    %s87 = sphi 0, %s85
    %s88 = sphi 0, %s87
    %s102 = sphi 0, %s88
    %s106 = sphi 0, %s106
    %s108 = sphi 0, %s106
    %s109 = sphi 0, %s108
    %s123 = sphi 0, %s109
    %s127 = sphi 0, %s127
    %s129 = sphi 0, %s127
    %s130 = sphi 0, %s129
    %s144 = sphi 0, %s130
    %s148 = sphi 0, %s148
    %s150 = sphi 0, %s148
    %s151 = sphi 0, %s150
    %s165 = sphi 0, %s151
    %s169 = sphi 0, %s169
    %s171 = sphi 0, %s169
    %s172 = sphi 0, %s171
    %s186 = sphi 0, %s172
    %s192 = sphi 0, %s194
    %s195 = sphi 0, %s192
    %s196 = sphi 0, %s195
    %s212 = sphi 0, %s196
    %s218 = sphi 0, %s220
    %s221 = sphi 0, %s218
    %s222 = sphi 0, %s221
    %s238 = sphi 0, %s222
    %s244 = sphi 0, %s246
    %s247 = sphi 0, %s244
    %s248 = sphi 0, %s247
    %s264 = sphi 0, %s248
    %s270 = sphi 0, %s272
    %s273 = sphi 0, %s270
    %s274 = sphi 0, %s273
    %s290 = sphi 0, %s274
    %s296 = sphi 0, %s298
    %s299 = sphi 0, %s296
    %s300 = sphi 0, %s299
    %s316 = sphi 0, %s300
    %s322 = sphi 0, %s324
    %s325 = sphi 0, %s322
    %s326 = sphi 0, %s325
    %s342 = sphi 0, %s326
    %s348 = sphi 0, %s350
    %s351 = sphi 0, %s348
    %s352 = sphi 0, %s351
    %s368 = sphi 0, %s352
    %s374 = sphi 0, %s376
    %s377 = sphi 0, %s374
    %s378 = sphi 0, %s377
    %s394 = sphi 0, %s378
    %s400 = sphi 0, %s402
    %s403 = sphi 0, %s400
    %s404 = sphi 0, %s403
    %s420 = sphi 0, %s404
    %s426 = sphi 0, %s428
    %s429 = sphi 0, %s426
    %s430 = sphi 0, %s429
    %s446 = sphi 0, %s430
    %s452 = sphi 0, %s454
    %s455 = sphi 0, %s452
    %s456 = sphi 0, %s455
    %s472 = sphi 0, %s456
    %s478 = sphi 0, %s480
    %s481 = sphi 0, %s478
    %s482 = sphi 0, %s481
    %s498 = sphi 0, %s482
    %s504 = sphi 0, %s506
    %s507 = sphi 0, %s504
    %s508 = sphi 0, %s507
    %s524 = sphi 0, %s508
    %s530 = sphi 0, %s532
    %s533 = sphi 0, %s530
    %s534 = sphi 0, %s533
    %s550 = sphi 0, %s534
    %s556 = sphi 0, %s558
    %s559 = sphi 0, %s556
    %s560 = sphi 0, %s559
    %s576 = sphi 0, %s560
    %s582 = sphi 0, %s584
    %s585 = sphi 0, %s582
    %s586 = sphi 0, %s585
    %s602 = sphi 0, %s586
    %s608 = sphi 0, %s610
    %s611 = sphi 0, %s608
    %s612 = sphi 0, %s611
    %s628 = sphi 0, %s612
    %s634 = sphi 0, %s636
    %s637 = sphi 0, %s634
    %s638 = sphi 0, %s637
    %s654 = sphi 0, %s638
    %s660 = sphi 0, %s662
    %s663 = sphi 0, %s660
    %s664 = sphi 0, %s663
    %s680 = sphi 0, %s664
    %s686 = sphi 0, %s688
    %s689 = sphi 0, %s686
    %s690 = sphi 0, %s689
    %s706 = sphi 0, %s690
    %s712 = sphi 0, %s714
    %s715 = sphi 0, %s712
    %s716 = sphi 0, %s715
    %s732 = sphi 0, %s716
    %s738 = sphi 0, %s740
    %s741 = sphi 0, %s738
    %s742 = sphi 0, %s741
    %s758 = sphi 0, %s742
    %s764 = sphi 0, %s766
    %s767 = sphi 0, %s764
    %s768 = sphi 0, %s767
    %s784 = sphi 0, %s768
    %s790 = sphi 0, %s792
    %s793 = sphi 0, %s790
    %s794 = sphi 0, %s793
    %s810 = sphi 0, %s794
    %s816 = sphi 0, %s818
    %s819 = sphi 0, %s816
    %s820 = sphi 0, %s819
    %s836 = sphi 0, %s820
    %s842 = sphi 0, %s844
    %s845 = sphi 0, %s842
    %s846 = sphi 0, %s845
    %s862 = sphi 0, %s846
    %s866 = sphi 0, %s866
    %s868 = sphi 0, %s866
    %s869 = sphi 0, %s868
    %s883 = sphi 0, %s869
    %s887 = sphi 0, %s887
    %s889 = sphi 0, %s887
    %s890 = sphi 0, %s889
    %s904 = sphi 0, %s890
    %s908 = sphi 0, %s908
    %s910 = sphi 0, %s908
    %s911 = sphi 0, %s910
    %s925 = sphi 0, %s911
    %s929 = sphi 0, %s929
    %s931 = sphi 0, %s929
    %s932 = sphi 0, %s931
    %s946 = sphi 0, %s932
    %s950 = sphi 0, %s950
    %s952 = sphi 0, %s950
    %s953 = sphi 0, %s952
    %s967 = sphi 0, %s953
  $region4: #{seq2seq_transformer_forward.7} parent=0 // loop_header_branch
    %80 = sbr.rel (%p78) target = $region8
  $region5: #{seq2seq_transformer_forward.7} parent=0 // loop_body
    %s82 = ssub.s32 %s77, 1
    %s83 = ssub.s32 %s77, 2
    %s84 = sadd.s32 %s77, 1
    %s86 = sadd.s32 %s85, 1
    %p89 = scmp.eq.s32.totalorder %s77, 1
    %p90 = scmp.ne.s32.totalorder %s85, %s87
    %p91 = scmp.eq.s32.totalorder %s77, 0
    %p92 = por %p90, %p91
    %p93 = scmp.ne.s32.totalorder %s85, %s87
    %p94 = scmp.eq.s32.totalorder %s82, 1
    %p95 = por %p93, %p94
    %p96 = scmp.ne.s32.totalorder %s87, %s88
    %p97 = scmp.eq.s32.totalorder %s82, 0
    %p98 = por %p96, %p97
    %p99 = scmp.ne.s32.totalorder %s87, %s88
    %p100 = scmp.eq.s32.totalorder %s83, 1
    %p101 = por %p99, %p100
    %p103 = scmp.ne.s32.totalorder %s88, %s102
    %p104 = scmp.eq.s32.totalorder %s83, 0
    %p105 = por %p103, %p104
    %s107 = sadd.s32 %s106, 1
    %p110 = scmp.eq.s32.totalorder %s77, 1
    %p111 = scmp.ne.s32.totalorder %s106, %s108
    %p112 = scmp.eq.s32.totalorder %s77, 0
    %p113 = por %p111, %p112
    %p114 = scmp.ne.s32.totalorder %s106, %s108
    %p115 = scmp.eq.s32.totalorder %s82, 1
    %p116 = por %p114, %p115
    %p117 = scmp.ne.s32.totalorder %s108, %s109
    %p118 = scmp.eq.s32.totalorder %s82, 0
    %p119 = por %p117, %p118
    %p120 = scmp.ne.s32.totalorder %s108, %s109
    %p121 = scmp.eq.s32.totalorder %s83, 1
    %p122 = por %p120, %p121
    %p124 = scmp.ne.s32.totalorder %s109, %s123
    %p125 = scmp.eq.s32.totalorder %s83, 0
    %p126 = por %p124, %p125
    %s128 = sadd.s32 %s127, 1
    %p131 = scmp.eq.s32.totalorder %s77, 1
    %p132 = scmp.ne.s32.totalorder %s127, %s129
    %p133 = scmp.eq.s32.totalorder %s77, 0
    %p134 = por %p132, %p133
    %p135 = scmp.ne.s32.totalorder %s127, %s129
    %p136 = scmp.eq.s32.totalorder %s82, 1
    %p137 = por %p135, %p136
    %p138 = scmp.ne.s32.totalorder %s129, %s130
    %p139 = scmp.eq.s32.totalorder %s82, 0
    %p140 = por %p138, %p139
    %p141 = scmp.ne.s32.totalorder %s129, %s130
    %p142 = scmp.eq.s32.totalorder %s83, 1
    %p143 = por %p141, %p142
    %p145 = scmp.ne.s32.totalorder %s130, %s144
    %p146 = scmp.eq.s32.totalorder %s83, 0
    %p147 = por %p145, %p146
    %s149 = sadd.s32 %s148, 1
    %p152 = scmp.eq.s32.totalorder %s77, 1
    %p153 = scmp.ne.s32.totalorder %s148, %s150
    %p154 = scmp.eq.s32.totalorder %s77, 0
    %p155 = por %p153, %p154
    %p156 = scmp.ne.s32.totalorder %s148, %s150
    %p157 = scmp.eq.s32.totalorder %s82, 1
    %p158 = por %p156, %p157
    %p159 = scmp.ne.s32.totalorder %s150, %s151
    %p160 = scmp.eq.s32.totalorder %s82, 0
    %p161 = por %p159, %p160
    %p162 = scmp.ne.s32.totalorder %s150, %s151
    %p163 = scmp.eq.s32.totalorder %s83, 1
    %p164 = por %p162, %p163
    %p166 = scmp.ne.s32.totalorder %s151, %s165
    %p167 = scmp.eq.s32.totalorder %s83, 0
    %p168 = por %p166, %p167
    %s170 = sadd.s32 %s169, 1
    %p173 = scmp.eq.s32.totalorder %s77, 1
    %p174 = scmp.ne.s32.totalorder %s169, %s171
    %p175 = scmp.eq.s32.totalorder %s77, 0
    %p176 = por %p174, %p175
    %p177 = scmp.ne.s32.totalorder %s169, %s171
    %p178 = scmp.eq.s32.totalorder %s82, 1
    %p179 = por %p177, %p178
    %p180 = scmp.ne.s32.totalorder %s171, %s172
    %p181 = scmp.eq.s32.totalorder %s82, 0
    %p182 = por %p180, %p181
    %p183 = scmp.ne.s32.totalorder %s171, %s172
    %p184 = scmp.eq.s32.totalorder %s83, 1
    %p185 = por %p183, %p184
    %p187 = scmp.ne.s32.totalorder %s172, %s186
    %p188 = scmp.eq.s32.totalorder %s83, 0
    %p189 = por %p187, %p188
    %s190 = ssub.s32 %s77, %s84
    %p191 = scmp.eq.s32.totalorder %s190, 0
    %s193 = sadd.s32 %s192, 1
    %s194 = scalar_select %p191, %s192, %s193
    %p197 = pneg %p191
    %p198 = scmp.eq.s32.totalorder %s77, 1
    %p199 = por %p197, %p198
    %p200 = scmp.ne.s32.totalorder %s192, %s195
    %p201 = scmp.eq.s32.totalorder %s77, 0
    %p202 = por %p200, %p201
    %p203 = scmp.ne.s32.totalorder %s192, %s195
    %p204 = scmp.eq.s32.totalorder %s82, 1
    %p205 = por %p203, %p204
    %p206 = scmp.ne.s32.totalorder %s195, %s196
    %p207 = scmp.eq.s32.totalorder %s82, 0
    %p208 = por %p206, %p207
    %p209 = scmp.ne.s32.totalorder %s195, %s196
    %p210 = scmp.eq.s32.totalorder %s83, 1
    %p211 = por %p209, %p210
    %p213 = scmp.ne.s32.totalorder %s196, %s212
    %p214 = scmp.eq.s32.totalorder %s83, 0
    %p215 = por %p213, %p214
    %s216 = ssub.s32 %s77, %s84
    %p217 = scmp.eq.s32.totalorder %s216, 0
    %s219 = sadd.s32 %s218, 1
    %s220 = scalar_select %p217, %s218, %s219
    %p223 = pneg %p217
    %p224 = scmp.eq.s32.totalorder %s77, 1
    %p225 = por %p223, %p224
    %p226 = scmp.ne.s32.totalorder %s218, %s221
    %p227 = scmp.eq.s32.totalorder %s77, 0
    %p228 = por %p226, %p227
    %p229 = scmp.ne.s32.totalorder %s218, %s221
    %p230 = scmp.eq.s32.totalorder %s82, 1
    %p231 = por %p229, %p230
    %p232 = scmp.ne.s32.totalorder %s221, %s222
    %p233 = scmp.eq.s32.totalorder %s82, 0
    %p234 = por %p232, %p233
    %p235 = scmp.ne.s32.totalorder %s221, %s222
    %p236 = scmp.eq.s32.totalorder %s83, 1
    %p237 = por %p235, %p236
    %p239 = scmp.ne.s32.totalorder %s222, %s238
    %p240 = scmp.eq.s32.totalorder %s83, 0
    %p241 = por %p239, %p240
    %s242 = ssub.s32 %s77, %s84
    %p243 = scmp.eq.s32.totalorder %s242, 0
    %s245 = sadd.s32 %s244, 1
    %s246 = scalar_select %p243, %s244, %s245
    %p249 = pneg %p243
    %p250 = scmp.eq.s32.totalorder %s77, 1
    %p251 = por %p249, %p250
    %p252 = scmp.ne.s32.totalorder %s244, %s247
    %p253 = scmp.eq.s32.totalorder %s77, 0
    %p254 = por %p252, %p253
    %p255 = scmp.ne.s32.totalorder %s244, %s247
    %p256 = scmp.eq.s32.totalorder %s82, 1
    %p257 = por %p255, %p256
    %p258 = scmp.ne.s32.totalorder %s247, %s248
    %p259 = scmp.eq.s32.totalorder %s82, 0
    %p260 = por %p258, %p259
    %p261 = scmp.ne.s32.totalorder %s247, %s248
    %p262 = scmp.eq.s32.totalorder %s83, 1
    %p263 = por %p261, %p262
    %p265 = scmp.ne.s32.totalorder %s248, %s264
    %p266 = scmp.eq.s32.totalorder %s83, 0
    %p267 = por %p265, %p266
    %s268 = ssub.s32 %s77, %s84
    %p269 = scmp.eq.s32.totalorder %s268, 0
    %s271 = sadd.s32 %s270, 1
    %s272 = scalar_select %p269, %s270, %s271
    %p275 = pneg %p269
    %p276 = scmp.eq.s32.totalorder %s77, 1
    %p277 = por %p275, %p276
    %p278 = scmp.ne.s32.totalorder %s270, %s273
    %p279 = scmp.eq.s32.totalorder %s77, 0
    %p280 = por %p278, %p279
    %p281 = scmp.ne.s32.totalorder %s270, %s273
    %p282 = scmp.eq.s32.totalorder %s82, 1
    %p283 = por %p281, %p282
    %p284 = scmp.ne.s32.totalorder %s273, %s274
    %p285 = scmp.eq.s32.totalorder %s82, 0
    %p286 = por %p284, %p285
    %p287 = scmp.ne.s32.totalorder %s273, %s274
    %p288 = scmp.eq.s32.totalorder %s83, 1
    %p289 = por %p287, %p288
    %p291 = scmp.ne.s32.totalorder %s274, %s290
    %p292 = scmp.eq.s32.totalorder %s83, 0
    %p293 = por %p291, %p292
    %s294 = ssub.s32 %s77, %s84
    %p295 = scmp.eq.s32.totalorder %s294, 0
    %s297 = sadd.s32 %s296, 1
    %s298 = scalar_select %p295, %s296, %s297
    %p301 = pneg %p295
    %p302 = scmp.eq.s32.totalorder %s77, 1
    %p303 = por %p301, %p302
    %p304 = scmp.ne.s32.totalorder %s296, %s299
    %p305 = scmp.eq.s32.totalorder %s77, 0
    %p306 = por %p304, %p305
    %p307 = scmp.ne.s32.totalorder %s296, %s299
    %p308 = scmp.eq.s32.totalorder %s82, 1
    %p309 = por %p307, %p308
    %p310 = scmp.ne.s32.totalorder %s299, %s300
    %p311 = scmp.eq.s32.totalorder %s82, 0
    %p312 = por %p310, %p311
    %p313 = scmp.ne.s32.totalorder %s299, %s300
    %p314 = scmp.eq.s32.totalorder %s83, 1
    %p315 = por %p313, %p314
    %p317 = scmp.ne.s32.totalorder %s300, %s316
    %p318 = scmp.eq.s32.totalorder %s83, 0
    %p319 = por %p317, %p318
    %s320 = ssub.s32 %s77, %s84
    %p321 = scmp.eq.s32.totalorder %s320, 0
    %s323 = sadd.s32 %s322, 1
    %s324 = scalar_select %p321, %s322, %s323
    %p327 = pneg %p321
    %p328 = scmp.eq.s32.totalorder %s77, 1
    %p329 = por %p327, %p328
    %p330 = scmp.ne.s32.totalorder %s322, %s325
    %p331 = scmp.eq.s32.totalorder %s77, 0
    %p332 = por %p330, %p331
    %p333 = scmp.ne.s32.totalorder %s322, %s325
    %p334 = scmp.eq.s32.totalorder %s82, 1
    %p335 = por %p333, %p334
    %p336 = scmp.ne.s32.totalorder %s325, %s326
    %p337 = scmp.eq.s32.totalorder %s82, 0
    %p338 = por %p336, %p337
    %p339 = scmp.ne.s32.totalorder %s325, %s326
    %p340 = scmp.eq.s32.totalorder %s83, 1
    %p341 = por %p339, %p340
    %p343 = scmp.ne.s32.totalorder %s326, %s342
    %p344 = scmp.eq.s32.totalorder %s83, 0
    %p345 = por %p343, %p344
    %s346 = ssub.s32 %s77, %s84
    %p347 = scmp.eq.s32.totalorder %s346, 0
    %s349 = sadd.s32 %s348, 1
    %s350 = scalar_select %p347, %s348, %s349
    %p353 = pneg %p347
    %p354 = scmp.eq.s32.totalorder %s77, 1
    %p355 = por %p353, %p354
    %p356 = scmp.ne.s32.totalorder %s348, %s351
    %p357 = scmp.eq.s32.totalorder %s77, 0
    %p358 = por %p356, %p357
    %p359 = scmp.ne.s32.totalorder %s348, %s351
    %p360 = scmp.eq.s32.totalorder %s82, 1
    %p361 = por %p359, %p360
    %p362 = scmp.ne.s32.totalorder %s351, %s352
    %p363 = scmp.eq.s32.totalorder %s82, 0
    %p364 = por %p362, %p363
    %p365 = scmp.ne.s32.totalorder %s351, %s352
    %p366 = scmp.eq.s32.totalorder %s83, 1
    %p367 = por %p365, %p366
    %p369 = scmp.ne.s32.totalorder %s352, %s368
    %p370 = scmp.eq.s32.totalorder %s83, 0
    %p371 = por %p369, %p370
    %s372 = ssub.s32 %s77, %s84
    %p373 = scmp.eq.s32.totalorder %s372, 0
    %s375 = sadd.s32 %s374, 1
    %s376 = scalar_select %p373, %s374, %s375
    %p379 = pneg %p373
    %p380 = scmp.eq.s32.totalorder %s77, 1
    %p381 = por %p379, %p380
    %p382 = scmp.ne.s32.totalorder %s374, %s377
    %p383 = scmp.eq.s32.totalorder %s77, 0
    %p384 = por %p382, %p383
    %p385 = scmp.ne.s32.totalorder %s374, %s377
    %p386 = scmp.eq.s32.totalorder %s82, 1
    %p387 = por %p385, %p386
    %p388 = scmp.ne.s32.totalorder %s377, %s378
    %p389 = scmp.eq.s32.totalorder %s82, 0
    %p390 = por %p388, %p389
    %p391 = scmp.ne.s32.totalorder %s377, %s378
    %p392 = scmp.eq.s32.totalorder %s83, 1
    %p393 = por %p391, %p392
    %p395 = scmp.ne.s32.totalorder %s378, %s394
    %p396 = scmp.eq.s32.totalorder %s83, 0
    %p397 = por %p395, %p396
    %s398 = ssub.s32 %s77, %s84
    %p399 = scmp.eq.s32.totalorder %s398, 0
    %s401 = sadd.s32 %s400, 1
    %s402 = scalar_select %p399, %s400, %s401
    %p405 = pneg %p399
    %p406 = scmp.eq.s32.totalorder %s77, 1
    %p407 = por %p405, %p406
    %p408 = scmp.ne.s32.totalorder %s400, %s403
    %p409 = scmp.eq.s32.totalorder %s77, 0
    %p410 = por %p408, %p409
    %p411 = scmp.ne.s32.totalorder %s400, %s403
    %p412 = scmp.eq.s32.totalorder %s82, 1
    %p413 = por %p411, %p412
    %p414 = scmp.ne.s32.totalorder %s403, %s404
    %p415 = scmp.eq.s32.totalorder %s82, 0
    %p416 = por %p414, %p415
    %p417 = scmp.ne.s32.totalorder %s403, %s404
    %p418 = scmp.eq.s32.totalorder %s83, 1
    %p419 = por %p417, %p418
    %p421 = scmp.ne.s32.totalorder %s404, %s420
    %p422 = scmp.eq.s32.totalorder %s83, 0
    %p423 = por %p421, %p422
    %s424 = ssub.s32 %s77, %s84
    %p425 = scmp.eq.s32.totalorder %s424, 0
    %s427 = sadd.s32 %s426, 1
    %s428 = scalar_select %p425, %s426, %s427
    %p431 = pneg %p425
    %p432 = scmp.eq.s32.totalorder %s77, 1
    %p433 = por %p431, %p432
    %p434 = scmp.ne.s32.totalorder %s426, %s429
    %p435 = scmp.eq.s32.totalorder %s77, 0
    %p436 = por %p434, %p435
    %p437 = scmp.ne.s32.totalorder %s426, %s429
    %p438 = scmp.eq.s32.totalorder %s82, 1
    %p439 = por %p437, %p438
    %p440 = scmp.ne.s32.totalorder %s429, %s430
    %p441 = scmp.eq.s32.totalorder %s82, 0
    %p442 = por %p440, %p441
    %p443 = scmp.ne.s32.totalorder %s429, %s430
    %p444 = scmp.eq.s32.totalorder %s83, 1
    %p445 = por %p443, %p444
    %p447 = scmp.ne.s32.totalorder %s430, %s446
    %p448 = scmp.eq.s32.totalorder %s83, 0
    %p449 = por %p447, %p448
    %s450 = ssub.s32 %s77, %s84
    %p451 = scmp.eq.s32.totalorder %s450, 0
    %s453 = sadd.s32 %s452, 1
    %s454 = scalar_select %p451, %s452, %s453
    %p457 = pneg %p451
    %p458 = scmp.eq.s32.totalorder %s77, 1
    %p459 = por %p457, %p458
    %p460 = scmp.ne.s32.totalorder %s452, %s455
    %p461 = scmp.eq.s32.totalorder %s77, 0
    %p462 = por %p460, %p461
    %p463 = scmp.ne.s32.totalorder %s452, %s455
    %p464 = scmp.eq.s32.totalorder %s82, 1
    %p465 = por %p463, %p464
    %p466 = scmp.ne.s32.totalorder %s455, %s456
    %p467 = scmp.eq.s32.totalorder %s82, 0
    %p468 = por %p466, %p467
    %p469 = scmp.ne.s32.totalorder %s455, %s456
    %p470 = scmp.eq.s32.totalorder %s83, 1
    %p471 = por %p469, %p470
    %p473 = scmp.ne.s32.totalorder %s456, %s472
    %p474 = scmp.eq.s32.totalorder %s83, 0
    %p475 = por %p473, %p474
    %s476 = ssub.s32 %s77, %s84
    %p477 = scmp.eq.s32.totalorder %s476, 0
    %s479 = sadd.s32 %s478, 1
    %s480 = scalar_select %p477, %s478, %s479
    %p483 = pneg %p477
    %p484 = scmp.eq.s32.totalorder %s77, 1
    %p485 = por %p483, %p484
    %p486 = scmp.ne.s32.totalorder %s478, %s481
    %p487 = scmp.eq.s32.totalorder %s77, 0
    %p488 = por %p486, %p487
    %p489 = scmp.ne.s32.totalorder %s478, %s481
    %p490 = scmp.eq.s32.totalorder %s82, 1
    %p491 = por %p489, %p490
    %p492 = scmp.ne.s32.totalorder %s481, %s482
    %p493 = scmp.eq.s32.totalorder %s82, 0
    %p494 = por %p492, %p493
    %p495 = scmp.ne.s32.totalorder %s481, %s482
    %p496 = scmp.eq.s32.totalorder %s83, 1
    %p497 = por %p495, %p496
    %p499 = scmp.ne.s32.totalorder %s482, %s498
    %p500 = scmp.eq.s32.totalorder %s83, 0
    %p501 = por %p499, %p500
    %s502 = ssub.s32 %s77, %s84
    %p503 = scmp.eq.s32.totalorder %s502, 0
    %s505 = sadd.s32 %s504, 1
    %s506 = scalar_select %p503, %s504, %s505
    %p509 = pneg %p503
    %p510 = scmp.eq.s32.totalorder %s77, 1
    %p511 = por %p509, %p510
    %p512 = scmp.ne.s32.totalorder %s504, %s507
    %p513 = scmp.eq.s32.totalorder %s77, 0
    %p514 = por %p512, %p513
    %p515 = scmp.ne.s32.totalorder %s504, %s507
    %p516 = scmp.eq.s32.totalorder %s82, 1
    %p517 = por %p515, %p516
    %p518 = scmp.ne.s32.totalorder %s507, %s508
    %p519 = scmp.eq.s32.totalorder %s82, 0
    %p520 = por %p518, %p519
    %p521 = scmp.ne.s32.totalorder %s507, %s508
    %p522 = scmp.eq.s32.totalorder %s83, 1
    %p523 = por %p521, %p522
    %p525 = scmp.ne.s32.totalorder %s508, %s524
    %p526 = scmp.eq.s32.totalorder %s83, 0
    %p527 = por %p525, %p526
    %s528 = ssub.s32 %s77, %s84
    %p529 = scmp.eq.s32.totalorder %s528, 0
    %s531 = sadd.s32 %s530, 1
    %s532 = scalar_select %p529, %s530, %s531
    %p535 = pneg %p529
    %p536 = scmp.eq.s32.totalorder %s77, 1
    %p537 = por %p535, %p536
    %p538 = scmp.ne.s32.totalorder %s530, %s533
    %p539 = scmp.eq.s32.totalorder %s77, 0
    %p540 = por %p538, %p539
    %p541 = scmp.ne.s32.totalorder %s530, %s533
    %p542 = scmp.eq.s32.totalorder %s82, 1
    %p543 = por %p541, %p542
    %p544 = scmp.ne.s32.totalorder %s533, %s534
    %p545 = scmp.eq.s32.totalorder %s82, 0
    %p546 = por %p544, %p545
    %p547 = scmp.ne.s32.totalorder %s533, %s534
    %p548 = scmp.eq.s32.totalorder %s83, 1
    %p549 = por %p547, %p548
    %p551 = scmp.ne.s32.totalorder %s534, %s550
    %p552 = scmp.eq.s32.totalorder %s83, 0
    %p553 = por %p551, %p552
    %s554 = ssub.s32 %s77, %s84
    %p555 = scmp.eq.s32.totalorder %s554, 0
    %s557 = sadd.s32 %s556, 1
    %s558 = scalar_select %p555, %s556, %s557
    %p561 = pneg %p555
    %p562 = scmp.eq.s32.totalorder %s77, 1
    %p563 = por %p561, %p562
    %p564 = scmp.ne.s32.totalorder %s556, %s559
    %p565 = scmp.eq.s32.totalorder %s77, 0
    %p566 = por %p564, %p565
    %p567 = scmp.ne.s32.totalorder %s556, %s559
    %p568 = scmp.eq.s32.totalorder %s82, 1
    %p569 = por %p567, %p568
    %p570 = scmp.ne.s32.totalorder %s559, %s560
    %p571 = scmp.eq.s32.totalorder %s82, 0
    %p572 = por %p570, %p571
    %p573 = scmp.ne.s32.totalorder %s559, %s560
    %p574 = scmp.eq.s32.totalorder %s83, 1
    %p575 = por %p573, %p574
    %p577 = scmp.ne.s32.totalorder %s560, %s576
    %p578 = scmp.eq.s32.totalorder %s83, 0
    %p579 = por %p577, %p578
    %s580 = ssub.s32 %s77, %s84
    %p581 = scmp.eq.s32.totalorder %s580, 0
    %s583 = sadd.s32 %s582, 1
    %s584 = scalar_select %p581, %s582, %s583
    %p587 = pneg %p581
    %p588 = scmp.eq.s32.totalorder %s77, 1
    %p589 = por %p587, %p588
    %p590 = scmp.ne.s32.totalorder %s582, %s585
    %p591 = scmp.eq.s32.totalorder %s77, 0
    %p592 = por %p590, %p591
    %p593 = scmp.ne.s32.totalorder %s582, %s585
    %p594 = scmp.eq.s32.totalorder %s82, 1
    %p595 = por %p593, %p594
    %p596 = scmp.ne.s32.totalorder %s585, %s586
    %p597 = scmp.eq.s32.totalorder %s82, 0
    %p598 = por %p596, %p597
    %p599 = scmp.ne.s32.totalorder %s585, %s586
    %p600 = scmp.eq.s32.totalorder %s83, 1
    %p601 = por %p599, %p600
    %p603 = scmp.ne.s32.totalorder %s586, %s602
    %p604 = scmp.eq.s32.totalorder %s83, 0
    %p605 = por %p603, %p604
    %s606 = ssub.s32 %s77, %s84
    %p607 = scmp.eq.s32.totalorder %s606, 0
    %s609 = sadd.s32 %s608, 1
    %s610 = scalar_select %p607, %s608, %s609
    %p613 = pneg %p607
    %p614 = scmp.eq.s32.totalorder %s77, 1
    %p615 = por %p613, %p614
    %p616 = scmp.ne.s32.totalorder %s608, %s611
    %p617 = scmp.eq.s32.totalorder %s77, 0
    %p618 = por %p616, %p617
    %p619 = scmp.ne.s32.totalorder %s608, %s611
    %p620 = scmp.eq.s32.totalorder %s82, 1
    %p621 = por %p619, %p620
    %p622 = scmp.ne.s32.totalorder %s611, %s612
    %p623 = scmp.eq.s32.totalorder %s82, 0
    %p624 = por %p622, %p623
    %p625 = scmp.ne.s32.totalorder %s611, %s612
    %p626 = scmp.eq.s32.totalorder %s83, 1
    %p627 = por %p625, %p626
    %p629 = scmp.ne.s32.totalorder %s612, %s628
    %p630 = scmp.eq.s32.totalorder %s83, 0
    %p631 = por %p629, %p630
    %s632 = ssub.s32 %s77, %s84
    %p633 = scmp.eq.s32.totalorder %s632, 0
    %s635 = sadd.s32 %s634, 1
    %s636 = scalar_select %p633, %s634, %s635
    %p639 = pneg %p633
    %p640 = scmp.eq.s32.totalorder %s77, 1
    %p641 = por %p639, %p640
    %p642 = scmp.ne.s32.totalorder %s634, %s637
    %p643 = scmp.eq.s32.totalorder %s77, 0
    %p644 = por %p642, %p643
    %p645 = scmp.ne.s32.totalorder %s634, %s637
    %p646 = scmp.eq.s32.totalorder %s82, 1
    %p647 = por %p645, %p646
    %p648 = scmp.ne.s32.totalorder %s637, %s638
    %p649 = scmp.eq.s32.totalorder %s82, 0
    %p650 = por %p648, %p649
    %p651 = scmp.ne.s32.totalorder %s637, %s638
    %p652 = scmp.eq.s32.totalorder %s83, 1
    %p653 = por %p651, %p652
    %p655 = scmp.ne.s32.totalorder %s638, %s654
    %p656 = scmp.eq.s32.totalorder %s83, 0
    %p657 = por %p655, %p656
    %s658 = ssub.s32 %s77, %s84
    %p659 = scmp.eq.s32.totalorder %s658, 0
    %s661 = sadd.s32 %s660, 1
    %s662 = scalar_select %p659, %s660, %s661
    %p665 = pneg %p659
    %p666 = scmp.eq.s32.totalorder %s77, 1
    %p667 = por %p665, %p666
    %p668 = scmp.ne.s32.totalorder %s660, %s663
    %p669 = scmp.eq.s32.totalorder %s77, 0
    %p670 = por %p668, %p669
    %p671 = scmp.ne.s32.totalorder %s660, %s663
    %p672 = scmp.eq.s32.totalorder %s82, 1
    %p673 = por %p671, %p672
    %p674 = scmp.ne.s32.totalorder %s663, %s664
    %p675 = scmp.eq.s32.totalorder %s82, 0
    %p676 = por %p674, %p675
    %p677 = scmp.ne.s32.totalorder %s663, %s664
    %p678 = scmp.eq.s32.totalorder %s83, 1
    %p679 = por %p677, %p678
    %p681 = scmp.ne.s32.totalorder %s664, %s680
    %p682 = scmp.eq.s32.totalorder %s83, 0
    %p683 = por %p681, %p682
    %s684 = ssub.s32 %s77, %s84
    %p685 = scmp.eq.s32.totalorder %s684, 0
    %s687 = sadd.s32 %s686, 1
    %s688 = scalar_select %p685, %s686, %s687
    %p691 = pneg %p685
    %p692 = scmp.eq.s32.totalorder %s77, 1
    %p693 = por %p691, %p692
    %p694 = scmp.ne.s32.totalorder %s686, %s689
    %p695 = scmp.eq.s32.totalorder %s77, 0
    %p696 = por %p694, %p695
    %p697 = scmp.ne.s32.totalorder %s686, %s689
    %p698 = scmp.eq.s32.totalorder %s82, 1
    %p699 = por %p697, %p698
    %p700 = scmp.ne.s32.totalorder %s689, %s690
    %p701 = scmp.eq.s32.totalorder %s82, 0
    %p702 = por %p700, %p701
    %p703 = scmp.ne.s32.totalorder %s689, %s690
    %p704 = scmp.eq.s32.totalorder %s83, 1
    %p705 = por %p703, %p704
    %p707 = scmp.ne.s32.totalorder %s690, %s706
    %p708 = scmp.eq.s32.totalorder %s83, 0
    %p709 = por %p707, %p708
    %s710 = ssub.s32 %s77, %s84
    %p711 = scmp.eq.s32.totalorder %s710, 0
    %s713 = sadd.s32 %s712, 1
    %s714 = scalar_select %p711, %s712, %s713
    %p717 = pneg %p711
    %p718 = scmp.eq.s32.totalorder %s77, 1
    %p719 = por %p717, %p718
    %p720 = scmp.ne.s32.totalorder %s712, %s715
    %p721 = scmp.eq.s32.totalorder %s77, 0
    %p722 = por %p720, %p721
    %p723 = scmp.ne.s32.totalorder %s712, %s715
    %p724 = scmp.eq.s32.totalorder %s82, 1
    %p725 = por %p723, %p724
    %p726 = scmp.ne.s32.totalorder %s715, %s716
    %p727 = scmp.eq.s32.totalorder %s82, 0
    %p728 = por %p726, %p727
    %p729 = scmp.ne.s32.totalorder %s715, %s716
    %p730 = scmp.eq.s32.totalorder %s83, 1
    %p731 = por %p729, %p730
    %p733 = scmp.ne.s32.totalorder %s716, %s732
    %p734 = scmp.eq.s32.totalorder %s83, 0
    %p735 = por %p733, %p734
    %s736 = ssub.s32 %s77, %s84
    %p737 = scmp.eq.s32.totalorder %s736, 0
    %s739 = sadd.s32 %s738, 1
    %s740 = scalar_select %p737, %s738, %s739
    %p743 = pneg %p737
    %p744 = scmp.eq.s32.totalorder %s77, 1
    %p745 = por %p743, %p744
    %p746 = scmp.ne.s32.totalorder %s738, %s741
    %p747 = scmp.eq.s32.totalorder %s77, 0
    %p748 = por %p746, %p747
    %p749 = scmp.ne.s32.totalorder %s738, %s741
    %p750 = scmp.eq.s32.totalorder %s82, 1
    %p751 = por %p749, %p750
    %p752 = scmp.ne.s32.totalorder %s741, %s742
    %p753 = scmp.eq.s32.totalorder %s82, 0
    %p754 = por %p752, %p753
    %p755 = scmp.ne.s32.totalorder %s741, %s742
    %p756 = scmp.eq.s32.totalorder %s83, 1
    %p757 = por %p755, %p756
    %p759 = scmp.ne.s32.totalorder %s742, %s758
    %p760 = scmp.eq.s32.totalorder %s83, 0
    %p761 = por %p759, %p760
    %s762 = ssub.s32 %s77, %s84
    %p763 = scmp.eq.s32.totalorder %s762, 0
    %s765 = sadd.s32 %s764, 1
    %s766 = scalar_select %p763, %s764, %s765
    %p769 = pneg %p763
    %p770 = scmp.eq.s32.totalorder %s77, 1
    %p771 = por %p769, %p770
    %p772 = scmp.ne.s32.totalorder %s764, %s767
    %p773 = scmp.eq.s32.totalorder %s77, 0
    %p774 = por %p772, %p773
    %p775 = scmp.ne.s32.totalorder %s764, %s767
    %p776 = scmp.eq.s32.totalorder %s82, 1
    %p777 = por %p775, %p776
    %p778 = scmp.ne.s32.totalorder %s767, %s768
    %p779 = scmp.eq.s32.totalorder %s82, 0
    %p780 = por %p778, %p779
    %p781 = scmp.ne.s32.totalorder %s767, %s768
    %p782 = scmp.eq.s32.totalorder %s83, 1
    %p783 = por %p781, %p782
    %p785 = scmp.ne.s32.totalorder %s768, %s784
    %p786 = scmp.eq.s32.totalorder %s83, 0
    %p787 = por %p785, %p786
    %s788 = ssub.s32 %s77, %s84
    %p789 = scmp.eq.s32.totalorder %s788, 0
    %s791 = sadd.s32 %s790, 1
    %s792 = scalar_select %p789, %s790, %s791
    %p795 = pneg %p789
    %p796 = scmp.eq.s32.totalorder %s77, 1
    %p797 = por %p795, %p796
    %p798 = scmp.ne.s32.totalorder %s790, %s793
    %p799 = scmp.eq.s32.totalorder %s77, 0
    %p800 = por %p798, %p799
    %p801 = scmp.ne.s32.totalorder %s790, %s793
    %p802 = scmp.eq.s32.totalorder %s82, 1
    %p803 = por %p801, %p802
    %p804 = scmp.ne.s32.totalorder %s793, %s794
    %p805 = scmp.eq.s32.totalorder %s82, 0
    %p806 = por %p804, %p805
    %p807 = scmp.ne.s32.totalorder %s793, %s794
    %p808 = scmp.eq.s32.totalorder %s83, 1
    %p809 = por %p807, %p808
    %p811 = scmp.ne.s32.totalorder %s794, %s810
    %p812 = scmp.eq.s32.totalorder %s83, 0
    %p813 = por %p811, %p812
    %s814 = ssub.s32 %s77, %s84
    %p815 = scmp.eq.s32.totalorder %s814, 0
    %s817 = sadd.s32 %s816, 1
    %s818 = scalar_select %p815, %s816, %s817
    %p821 = pneg %p815
    %p822 = scmp.eq.s32.totalorder %s77, 1
    %p823 = por %p821, %p822
    %p824 = scmp.ne.s32.totalorder %s816, %s819
    %p825 = scmp.eq.s32.totalorder %s77, 0
    %p826 = por %p824, %p825
    %p827 = scmp.ne.s32.totalorder %s816, %s819
    %p828 = scmp.eq.s32.totalorder %s82, 1
    %p829 = por %p827, %p828
    %p830 = scmp.ne.s32.totalorder %s819, %s820
    %p831 = scmp.eq.s32.totalorder %s82, 0
    %p832 = por %p830, %p831
    %p833 = scmp.ne.s32.totalorder %s819, %s820
    %p834 = scmp.eq.s32.totalorder %s83, 1
    %p835 = por %p833, %p834
    %p837 = scmp.ne.s32.totalorder %s820, %s836
    %p838 = scmp.eq.s32.totalorder %s83, 0
    %p839 = por %p837, %p838
    %s840 = ssub.s32 %s77, %s84
    %p841 = scmp.eq.s32.totalorder %s840, 0
    %s843 = sadd.s32 %s842, 1
    %s844 = scalar_select %p841, %s842, %s843
    %p847 = pneg %p841
    %p848 = scmp.eq.s32.totalorder %s77, 1
    %p849 = por %p847, %p848
    %p850 = scmp.ne.s32.totalorder %s842, %s845
    %p851 = scmp.eq.s32.totalorder %s77, 0
    %p852 = por %p850, %p851
    %p853 = scmp.ne.s32.totalorder %s842, %s845
    %p854 = scmp.eq.s32.totalorder %s82, 1
    %p855 = por %p853, %p854
    %p856 = scmp.ne.s32.totalorder %s845, %s846
    %p857 = scmp.eq.s32.totalorder %s82, 0
    %p858 = por %p856, %p857
    %p859 = scmp.ne.s32.totalorder %s845, %s846
    %p860 = scmp.eq.s32.totalorder %s83, 1
    %p861 = por %p859, %p860
    %p863 = scmp.ne.s32.totalorder %s846, %s862
    %p864 = scmp.eq.s32.totalorder %s83, 0
    %p865 = por %p863, %p864
    %s867 = sadd.s32 %s866, 1
    %p870 = scmp.eq.s32.totalorder %s77, 1
    %p871 = scmp.ne.s32.totalorder %s866, %s868
    %p872 = scmp.eq.s32.totalorder %s77, 0
    %p873 = por %p871, %p872
    %p874 = scmp.ne.s32.totalorder %s866, %s868
    %p875 = scmp.eq.s32.totalorder %s82, 1
    %p876 = por %p874, %p875
    %p877 = scmp.ne.s32.totalorder %s868, %s869
    %p878 = scmp.eq.s32.totalorder %s82, 0
    %p879 = por %p877, %p878
    %p880 = scmp.ne.s32.totalorder %s868, %s869
    %p881 = scmp.eq.s32.totalorder %s83, 1
    %p882 = por %p880, %p881
    %p884 = scmp.ne.s32.totalorder %s869, %s883
    %p885 = scmp.eq.s32.totalorder %s83, 0
    %p886 = por %p884, %p885
    %s888 = sadd.s32 %s887, 1
    %p891 = scmp.eq.s32.totalorder %s77, 1
    %p892 = scmp.ne.s32.totalorder %s887, %s889
    %p893 = scmp.eq.s32.totalorder %s77, 0
    %p894 = por %p892, %p893
    %p895 = scmp.ne.s32.totalorder %s887, %s889
    %p896 = scmp.eq.s32.totalorder %s82, 1
    %p897 = por %p895, %p896
    %p898 = scmp.ne.s32.totalorder %s889, %s890
    %p899 = scmp.eq.s32.totalorder %s82, 0
    %p900 = por %p898, %p899
    %p901 = scmp.ne.s32.totalorder %s889, %s890
    %p902 = scmp.eq.s32.totalorder %s83, 1
    %p903 = por %p901, %p902
    %p905 = scmp.ne.s32.totalorder %s890, %s904
    %p906 = scmp.eq.s32.totalorder %s83, 0
    %p907 = por %p905, %p906
    %s909 = sadd.s32 %s908, 1
    %p912 = scmp.eq.s32.totalorder %s77, 1
    %p913 = scmp.ne.s32.totalorder %s908, %s910
    %p914 = scmp.eq.s32.totalorder %s77, 0
    %p915 = por %p913, %p914
    %p916 = scmp.ne.s32.totalorder %s908, %s910
    %p917 = scmp.eq.s32.totalorder %s82, 1
    %p918 = por %p916, %p917
    %p919 = scmp.ne.s32.totalorder %s910, %s911
    %p920 = scmp.eq.s32.totalorder %s82, 0
    %p921 = por %p919, %p920
    %p922 = scmp.ne.s32.totalorder %s910, %s911
    %p923 = scmp.eq.s32.totalorder %s83, 1
    %p924 = por %p922, %p923
    %p926 = scmp.ne.s32.totalorder %s911, %s925
    %p927 = scmp.eq.s32.totalorder %s83, 0
    %p928 = por %p926, %p927
    %s930 = sadd.s32 %s929, 1
    %p933 = scmp.eq.s32.totalorder %s77, 1
    %p934 = scmp.ne.s32.totalorder %s929, %s931
    %p935 = scmp.eq.s32.totalorder %s77, 0
    %p936 = por %p934, %p935
    %p937 = scmp.ne.s32.totalorder %s929, %s931
    %p938 = scmp.eq.s32.totalorder %s82, 1
    %p939 = por %p937, %p938
    %p940 = scmp.ne.s32.totalorder %s931, %s932
    %p941 = scmp.eq.s32.totalorder %s82, 0
    %p942 = por %p940, %p941
    %p943 = scmp.ne.s32.totalorder %s931, %s932
    %p944 = scmp.eq.s32.totalorder %s83, 1
    %p945 = por %p943, %p944
    %p947 = scmp.ne.s32.totalorder %s932, %s946
    %p948 = scmp.eq.s32.totalorder %s83, 0
    %p949 = por %p947, %p948
    %s951 = sadd.s32 %s950, 1
    %p954 = scmp.eq.s32.totalorder %s77, 1
    %p955 = scmp.ne.s32.totalorder %s950, %s952
    %p956 = scmp.eq.s32.totalorder %s77, 0
    %p957 = por %p955, %p956
    %p958 = scmp.ne.s32.totalorder %s950, %s952
    %p959 = scmp.eq.s32.totalorder %s82, 1
    %p960 = por %p958, %p959
    %p961 = scmp.ne.s32.totalorder %s952, %s953
    %p962 = scmp.eq.s32.totalorder %s82, 0
    %p963 = por %p961, %p962
    %p964 = scmp.ne.s32.totalorder %s952, %s953
    %p965 = scmp.eq.s32.totalorder %s83, 1
    %p966 = por %p964, %p965
    %p968 = scmp.ne.s32.totalorder %s953, %s967
    %p969 = scmp.eq.s32.totalorder %s83, 0
    %p970 = por %p968, %p969
    %p971 = scmp.le.s32.totalorder 1, %s77
    %p972 = scmp.lt.s32.totalorder %s77, 3
    %p973 = pnand %p971, %p972
    %p974 = pneg %p973
    // Predicated region
    $region9: #{seq2seq_transformer_forward.7} parent=5 // pred_check
      _
    $region10: #{seq2seq_transformer_forward.7} parent=5 // pred_check_branch
      %976 = sbr.rel (%p973) target = $region12
    $region11: #{seq2seq_transformer_forward.7} parent=5 // pred_region
      %s977 = ssub.s32 %s77, 1
      // Predicated region
      $region13: #{seq2seq_transformer_forward.7} parent=11 // pred_check
        %p978 = pneg %p98
      $region14: #{seq2seq_transformer_forward.7} parent=11 // pred_check_branch
        %980 = sbr.rel (%p978) target = $region16
      $region15: #{seq2seq_transformer_forward.7} parent=11 // pred_region
        _
      $region16: #{seq2seq_transformer_forward.7} parent=11 // pred_fallthru
        _
      // Predicated region
      $region17: #{seq2seq_transformer_forward.7} parent=11 // pred_check
        %p981 = pneg %p119
      $region18: #{seq2seq_transformer_forward.7} parent=11 // pred_check_branch
        %983 = sbr.rel (%p981) target = $region20
      $region19: #{seq2seq_transformer_forward.7} parent=11 // pred_region
        _
      $region20: #{seq2seq_transformer_forward.7} parent=11 // pred_fallthru
        _
      // Predicated region
      $region21: #{seq2seq_transformer_forward.7} parent=11 // pred_check
        %p984 = pneg %p140
      $region22: #{seq2seq_transformer_forward.7} parent=11 // pred_check_branch
        %986 = sbr.rel (%p984) target = $region24
      $region23: #{seq2seq_transformer_forward.7} parent=11 // pred_region
        _
      $region24: #{seq2seq_transformer_forward.7} parent=11 // pred_fallthru
        _
      // Predicated region
      $region25: #{seq2seq_transformer_forward.7} parent=11 // pred_check
        %p987 = pneg %p161
      $region26: #{seq2seq_transformer_forward.7} parent=11 // pred_check_branch
        %989 = sbr.rel (%p987) target = $region28
      $region27: #{seq2seq_transformer_forward.7} parent=11 // pred_region
        _
      $region28: #{seq2seq_transformer_forward.7} parent=11 // pred_fallthru
        _
      // Predicated region
      $region29: #{seq2seq_transformer_forward.7} parent=11 // pred_check
        %p990 = pneg %p182
      $region30: #{seq2seq_transformer_forward.7} parent=11 // pred_check_branch
        %992 = sbr.rel (%p990) target = $region32
      $region31: #{seq2seq_transformer_forward.7} parent=11 // pred_region
        _
      $region32: #{seq2seq_transformer_forward.7} parent=11 // pred_fallthru
        _
      // Predicated region
      $region33: #{seq2seq_transformer_forward.7} parent=11 // pred_check
        %p993 = pneg %p879
      $region34: #{seq2seq_transformer_forward.7} parent=11 // pred_check_branch
        %995 = sbr.rel (%p993) target = $region36
      $region35: #{seq2seq_transformer_forward.7} parent=11 // pred_region
        _
      $region36: #{seq2seq_transformer_forward.7} parent=11 // pred_fallthru
        _
      // Predicated region
      $region37: #{seq2seq_transformer_forward.7} parent=11 // pred_check
        %p996 = pneg %p900
      $region38: #{seq2seq_transformer_forward.7} parent=11 // pred_check_branch
        %998 = sbr.rel (%p996) target = $region40
      $region39: #{seq2seq_transformer_forward.7} parent=11 // pred_region
        _
      $region40: #{seq2seq_transformer_forward.7} parent=11 // pred_fallthru
        _
      // Predicated region
      $region41: #{seq2seq_transformer_forward.7} parent=11 // pred_check
        %p999 = pneg %p921
      $region42: #{seq2seq_transformer_forward.7} parent=11 // pred_check_branch
        %1001 = sbr.rel (%p999) target = $region44
      $region43: #{seq2seq_transformer_forward.7} parent=11 // pred_region
        _
      $region44: #{seq2seq_transformer_forward.7} parent=11 // pred_fallthru
        _
      // Predicated region
      $region45: #{seq2seq_transformer_forward.7} parent=11 // pred_check
        %p1002 = pneg %p942
      $region46: #{seq2seq_transformer_forward.7} parent=11 // pred_check_branch
        %1004 = sbr.rel (%p1002) target = $region48
      $region47: #{seq2seq_transformer_forward.7} parent=11 // pred_region
        _
      $region48: #{seq2seq_transformer_forward.7} parent=11 // pred_fallthru
        _
    $region12: #{seq2seq_transformer_forward.7} parent=5 // pred_fallthru
      _
    %p1005 = scmp.lt.s32.totalorder %s77, 2
    // Predicated region
    $region49: #{seq2seq_transformer_forward.7} parent=5 // pred_check
      %p1006 = pneg %p1005
    $region50: #{seq2seq_transformer_forward.7} parent=5 // pred_check_branch
      %1008 = sbr.rel (%p1006) target = $region52
    $region51: #{seq2seq_transformer_forward.7} parent=5 // pred_region
      // Predicated region
      $region53: #{seq2seq_transformer_forward.7} parent=51 // pred_check
        %p1009 = pneg %p202
      $region54: #{seq2seq_transformer_forward.7} parent=51 // pred_check_branch
        %1011 = sbr.rel (%p1009) target = $region56
      $region55: #{seq2seq_transformer_forward.7} parent=51 // pred_region
        %p1012 = scmp.lt.s32.totalorder %s77, 1
        %s1013 = scalar_select %p1012, %s77, 1
        %s1014 = smul.addr %s1013, 4
        %s1015 = smul.addr %s1014, 8
        %s1016 = scalar_lea.vmem %s11, %s1015
      $region56: #{seq2seq_transformer_forward.7} parent=51 // pred_fallthru
        _
      // Predicated region
      $region57: #{seq2seq_transformer_forward.7} parent=51 // pred_check
        %p1017 = pneg %p228
      $region58: #{seq2seq_transformer_forward.7} parent=51 // pred_check_branch
        %1019 = sbr.rel (%p1017) target = $region60
      $region59: #{seq2seq_transformer_forward.7} parent=51 // pred_region
        %p1020 = scmp.lt.s32.totalorder %s77, 1
        %s1021 = scalar_select %p1020, %s77, 1
        %s1022 = scalar_lea.vmem %s13, %s1021
      $region60: #{seq2seq_transformer_forward.7} parent=51 // pred_fallthru
        _
      // Predicated region
      $region61: #{seq2seq_transformer_forward.7} parent=51 // pred_check
        %p1023 = pneg %p254
      $region62: #{seq2seq_transformer_forward.7} parent=51 // pred_check_branch
        %1025 = sbr.rel (%p1023) target = $region64
      $region63: #{seq2seq_transformer_forward.7} parent=51 // pred_region
        %p1026 = scmp.lt.s32.totalorder %s77, 1
        %s1027 = scalar_select %p1026, %s77, 1
        %s1028 = smul.addr %s1027, 4
        %s1029 = smul.addr %s1028, 8
        %s1030 = scalar_lea.vmem %s15, %s1029
      $region64: #{seq2seq_transformer_forward.7} parent=51 // pred_fallthru
        _
      // Predicated region
      $region65: #{seq2seq_transformer_forward.7} parent=51 // pred_check
        %p1031 = pneg %p280
      $region66: #{seq2seq_transformer_forward.7} parent=51 // pred_check_branch
        %1033 = sbr.rel (%p1031) target = $region68
      $region67: #{seq2seq_transformer_forward.7} parent=51 // pred_region
        %p1034 = scmp.lt.s32.totalorder %s77, 1
        %s1035 = scalar_select %p1034, %s77, 1
        %s1036 = scalar_lea.vmem %s17, %s1035
      $region68: #{seq2seq_transformer_forward.7} parent=51 // pred_fallthru
        _
      // Predicated region
      $region69: #{seq2seq_transformer_forward.7} parent=51 // pred_check
        %p1037 = pneg %p306
      $region70: #{seq2seq_transformer_forward.7} parent=51 // pred_check_branch
        %1039 = sbr.rel (%p1037) target = $region72
      $region71: #{seq2seq_transformer_forward.7} parent=51 // pred_region
        %p1040 = scmp.lt.s32.totalorder %s77, 1
        %s1041 = scalar_select %p1040, %s77, 1
        %s1042 = smul.addr %s1041, 4
        %s1043 = smul.addr %s1042, 8
        %s1044 = scalar_lea.vmem %s19, %s1043
      $region72: #{seq2seq_transformer_forward.7} parent=51 // pred_fallthru
        _
      // Predicated region
      $region73: #{seq2seq_transformer_forward.7} parent=51 // pred_check
        %p1045 = pneg %p332
      $region74: #{seq2seq_transformer_forward.7} parent=51 // pred_check_branch
        %1047 = sbr.rel (%p1045) target = $region76
      $region75: #{seq2seq_transformer_forward.7} parent=51 // pred_region
        %p1048 = scmp.lt.s32.totalorder %s77, 1
        %s1049 = scalar_select %p1048, %s77, 1
        %s1050 = scalar_lea.vmem %s21, %s1049
      $region76: #{seq2seq_transformer_forward.7} parent=51 // pred_fallthru
        _
      // Predicated region
      $region77: #{seq2seq_transformer_forward.7} parent=51 // pred_check
        %p1051 = pneg %p358
      $region78: #{seq2seq_transformer_forward.7} parent=51 // pred_check_branch
        %1053 = sbr.rel (%p1051) target = $region80
      $region79: #{seq2seq_transformer_forward.7} parent=51 // pred_region
        %p1054 = scmp.lt.s32.totalorder %s77, 1
        %s1055 = scalar_select %p1054, %s77, 1
        %s1056 = smul.addr %s1055, 4
        %s1057 = smul.addr %s1056, 8
        %s1058 = scalar_lea.vmem %s23, %s1057
      $region80: #{seq2seq_transformer_forward.7} parent=51 // pred_fallthru
        _
      // Predicated region
      $region81: #{seq2seq_transformer_forward.7} parent=51 // pred_check
        %p1059 = pneg %p384
      $region82: #{seq2seq_transformer_forward.7} parent=51 // pred_check_branch
        %1061 = sbr.rel (%p1059) target = $region84
      $region83: #{seq2seq_transformer_forward.7} parent=51 // pred_region
        %p1062 = scmp.lt.s32.totalorder %s77, 1
        %s1063 = scalar_select %p1062, %s77, 1
        %s1064 = scalar_lea.vmem %s25, %s1063
      $region84: #{seq2seq_transformer_forward.7} parent=51 // pred_fallthru
        _
      // Predicated region
      $region85: #{seq2seq_transformer_forward.7} parent=51 // pred_check
        %p1065 = pneg %p410
      $region86: #{seq2seq_transformer_forward.7} parent=51 // pred_check_branch
        %1067 = sbr.rel (%p1065) target = $region88
      $region87: #{seq2seq_transformer_forward.7} parent=51 // pred_region
        %p1068 = scmp.lt.s32.totalorder %s77, 1
        %s1069 = scalar_select %p1068, %s77, 1
        %s1070 = scalar_lea.vmem %s27, %s1069
      $region88: #{seq2seq_transformer_forward.7} parent=51 // pred_fallthru
        _
      // Predicated region
      $region89: #{seq2seq_transformer_forward.7} parent=51 // pred_check
        %p1071 = pneg %p436
      $region90: #{seq2seq_transformer_forward.7} parent=51 // pred_check_branch
        %1073 = sbr.rel (%p1071) target = $region92
      $region91: #{seq2seq_transformer_forward.7} parent=51 // pred_region
        %p1074 = scmp.lt.s32.totalorder %s77, 1
        %s1075 = scalar_select %p1074, %s77, 1
        %s1076 = scalar_lea.vmem %s29, %s1075
      $region92: #{seq2seq_transformer_forward.7} parent=51 // pred_fallthru
        _
      // Predicated region
      $region93: #{seq2seq_transformer_forward.7} parent=51 // pred_check
        %p1077 = pneg %p462
      $region94: #{seq2seq_transformer_forward.7} parent=51 // pred_check_branch
        %1079 = sbr.rel (%p1077) target = $region96
      $region95: #{seq2seq_transformer_forward.7} parent=51 // pred_region
        %p1080 = scmp.lt.s32.totalorder %s77, 1
        %s1081 = scalar_select %p1080, %s77, 1
        %s1082 = smul.addr %s1081, 4
        %s1083 = smul.addr %s1082, 8
        %s1084 = scalar_lea.vmem %s31, %s1083
      $region96: #{seq2seq_transformer_forward.7} parent=51 // pred_fallthru
        _
      // Predicated region
      $region97: #{seq2seq_transformer_forward.7} parent=51 // pred_check
        %p1085 = pneg %p488
      $region98: #{seq2seq_transformer_forward.7} parent=51 // pred_check_branch
        %1087 = sbr.rel (%p1085) target = $region100
      $region99: #{seq2seq_transformer_forward.7} parent=51 // pred_region
        %p1088 = scmp.lt.s32.totalorder %s77, 1
        %s1089 = scalar_select %p1088, %s77, 1
        %s1090 = scalar_lea.vmem %s33, %s1089
      $region100: #{seq2seq_transformer_forward.7} parent=51 // pred_fallthru
        _
      // Predicated region
      $region101: #{seq2seq_transformer_forward.7} parent=51 // pred_check
        %p1091 = pneg %p514
      $region102: #{seq2seq_transformer_forward.7} parent=51 // pred_check_branch
        %1093 = sbr.rel (%p1091) target = $region104
      $region103: #{seq2seq_transformer_forward.7} parent=51 // pred_region
        %p1094 = scmp.lt.s32.totalorder %s77, 1
        %s1095 = scalar_select %p1094, %s77, 1
        %s1096 = smul.addr %s1095, 4
        %s1097 = smul.addr %s1096, 8
        %s1098 = scalar_lea.vmem %s35, %s1097
      $region104: #{seq2seq_transformer_forward.7} parent=51 // pred_fallthru
        _
      // Predicated region
      $region105: #{seq2seq_transformer_forward.7} parent=51 // pred_check
        %p1099 = pneg %p540
      $region106: #{seq2seq_transformer_forward.7} parent=51 // pred_check_branch
        %1101 = sbr.rel (%p1099) target = $region108
      $region107: #{seq2seq_transformer_forward.7} parent=51 // pred_region
        %p1102 = scmp.lt.s32.totalorder %s77, 1
        %s1103 = scalar_select %p1102, %s77, 1
        %s1104 = scalar_lea.vmem %s37, %s1103
      $region108: #{seq2seq_transformer_forward.7} parent=51 // pred_fallthru
        _
      // Predicated region
      $region109: #{seq2seq_transformer_forward.7} parent=51 // pred_check
        %p1105 = pneg %p566
      $region110: #{seq2seq_transformer_forward.7} parent=51 // pred_check_branch
        %1107 = sbr.rel (%p1105) target = $region112
      $region111: #{seq2seq_transformer_forward.7} parent=51 // pred_region
        %p1108 = scmp.lt.s32.totalorder %s77, 1
        %s1109 = scalar_select %p1108, %s77, 1
        %s1110 = smul.addr %s1109, 4
        %s1111 = smul.addr %s1110, 8
        %s1112 = scalar_lea.vmem %s39, %s1111
      $region112: #{seq2seq_transformer_forward.7} parent=51 // pred_fallthru
        _
      // Predicated region
      $region113: #{seq2seq_transformer_forward.7} parent=51 // pred_check
        %p1113 = pneg %p592
      $region114: #{seq2seq_transformer_forward.7} parent=51 // pred_check_branch
        %1115 = sbr.rel (%p1113) target = $region116
      $region115: #{seq2seq_transformer_forward.7} parent=51 // pred_region
        %p1116 = scmp.lt.s32.totalorder %s77, 1
        %s1117 = scalar_select %p1116, %s77, 1
        %s1118 = scalar_lea.vmem %s41, %s1117
      $region116: #{seq2seq_transformer_forward.7} parent=51 // pred_fallthru
        _
      // Predicated region
      $region117: #{seq2seq_transformer_forward.7} parent=51 // pred_check
        %p1119 = pneg %p618
      $region118: #{seq2seq_transformer_forward.7} parent=51 // pred_check_branch
        %1121 = sbr.rel (%p1119) target = $region120
      $region119: #{seq2seq_transformer_forward.7} parent=51 // pred_region
        %p1122 = scmp.lt.s32.totalorder %s77, 1
        %s1123 = scalar_select %p1122, %s77, 1
        %s1124 = smul.addr %s1123, 4
        %s1125 = smul.addr %s1124, 8
        %s1126 = scalar_lea.vmem %s43, %s1125
      $region120: #{seq2seq_transformer_forward.7} parent=51 // pred_fallthru
        _
      // Predicated region
      $region121: #{seq2seq_transformer_forward.7} parent=51 // pred_check
        %p1127 = pneg %p644
      $region122: #{seq2seq_transformer_forward.7} parent=51 // pred_check_branch
        %1129 = sbr.rel (%p1127) target = $region124
      $region123: #{seq2seq_transformer_forward.7} parent=51 // pred_region
        %p1130 = scmp.lt.s32.totalorder %s77, 1
        %s1131 = scalar_select %p1130, %s77, 1
        %s1132 = scalar_lea.vmem %s45, %s1131
      $region124: #{seq2seq_transformer_forward.7} parent=51 // pred_fallthru
        _
      // Predicated region
      $region125: #{seq2seq_transformer_forward.7} parent=51 // pred_check
        %p1133 = pneg %p670
      $region126: #{seq2seq_transformer_forward.7} parent=51 // pred_check_branch
        %1135 = sbr.rel (%p1133) target = $region128
      $region127: #{seq2seq_transformer_forward.7} parent=51 // pred_region
        %p1136 = scmp.lt.s32.totalorder %s77, 1
        %s1137 = scalar_select %p1136, %s77, 1
        %s1138 = scalar_lea.vmem %s47, %s1137
      $region128: #{seq2seq_transformer_forward.7} parent=51 // pred_fallthru
        _
      // Predicated region
      $region129: #{seq2seq_transformer_forward.7} parent=51 // pred_check
        %p1139 = pneg %p696
      $region130: #{seq2seq_transformer_forward.7} parent=51 // pred_check_branch
        %1141 = sbr.rel (%p1139) target = $region132
      $region131: #{seq2seq_transformer_forward.7} parent=51 // pred_region
        %p1142 = scmp.lt.s32.totalorder %s77, 1
        %s1143 = scalar_select %p1142, %s77, 1
        %s1144 = scalar_lea.vmem %s49, %s1143
      $region132: #{seq2seq_transformer_forward.7} parent=51 // pred_fallthru
        _
      // Predicated region
      $region133: #{seq2seq_transformer_forward.7} parent=51 // pred_check
        %p1145 = pneg %p722
      $region134: #{seq2seq_transformer_forward.7} parent=51 // pred_check_branch
        %1147 = sbr.rel (%p1145) target = $region136
      $region135: #{seq2seq_transformer_forward.7} parent=51 // pred_region
        %p1148 = scmp.lt.s32.totalorder %s77, 1
        %s1149 = scalar_select %p1148, %s77, 1
        %s1150 = smul.addr %s1149, 4
        %s1151 = smul.addr %s1150, 8
        %s1152 = scalar_lea.vmem %s51, %s1151
      $region136: #{seq2seq_transformer_forward.7} parent=51 // pred_fallthru
        _
      // Predicated region
      $region137: #{seq2seq_transformer_forward.7} parent=51 // pred_check
        %p1153 = pneg %p748
      $region138: #{seq2seq_transformer_forward.7} parent=51 // pred_check_branch
        %1155 = sbr.rel (%p1153) target = $region140
      $region139: #{seq2seq_transformer_forward.7} parent=51 // pred_region
        %p1156 = scmp.lt.s32.totalorder %s77, 1
        %s1157 = scalar_select %p1156, %s77, 1
        %s1158 = scalar_lea.vmem %s53, %s1157
      $region140: #{seq2seq_transformer_forward.7} parent=51 // pred_fallthru
        _
      // Predicated region
      $region141: #{seq2seq_transformer_forward.7} parent=51 // pred_check
        %p1159 = pneg %p774
      $region142: #{seq2seq_transformer_forward.7} parent=51 // pred_check_branch
        %1161 = sbr.rel (%p1159) target = $region144
      $region143: #{seq2seq_transformer_forward.7} parent=51 // pred_region
        %p1162 = scmp.lt.s32.totalorder %s77, 1
        %s1163 = scalar_select %p1162, %s77, 1
        %s1164 = smul.addr %s1163, 8
        %s1165 = smul.addr %s1164, 8
        %s1166 = scalar_lea.vmem %s55, %s1165
      $region144: #{seq2seq_transformer_forward.7} parent=51 // pred_fallthru
        _
      // Predicated region
      $region145: #{seq2seq_transformer_forward.7} parent=51 // pred_check
        %p1167 = pneg %p800
      $region146: #{seq2seq_transformer_forward.7} parent=51 // pred_check_branch
        %1169 = sbr.rel (%p1167) target = $region148
      $region147: #{seq2seq_transformer_forward.7} parent=51 // pred_region
        %p1170 = scmp.lt.s32.totalorder %s77, 1
        %s1171 = scalar_select %p1170, %s77, 1
        %s1172 = scalar_lea.vmem %s57, %s1171
      $region148: #{seq2seq_transformer_forward.7} parent=51 // pred_fallthru
        _
      // Predicated region
      $region149: #{seq2seq_transformer_forward.7} parent=51 // pred_check
        %p1173 = pneg %p826
      $region150: #{seq2seq_transformer_forward.7} parent=51 // pred_check_branch
        %1175 = sbr.rel (%p1173) target = $region152
      $region151: #{seq2seq_transformer_forward.7} parent=51 // pred_region
        %p1176 = scmp.lt.s32.totalorder %s77, 1
        %s1177 = scalar_select %p1176, %s77, 1
        %s1178 = scalar_lea.vmem %s59, %s1177
      $region152: #{seq2seq_transformer_forward.7} parent=51 // pred_fallthru
        _
      // Predicated region
      $region153: #{seq2seq_transformer_forward.7} parent=51 // pred_check
        %p1179 = pneg %p852
      $region154: #{seq2seq_transformer_forward.7} parent=51 // pred_check_branch
        %1181 = sbr.rel (%p1179) target = $region156
      $region155: #{seq2seq_transformer_forward.7} parent=51 // pred_region
        %p1182 = scmp.lt.s32.totalorder %s77, 1
        %s1183 = scalar_select %p1182, %s77, 1
        %s1184 = scalar_lea.vmem %s61, %s1183
      $region156: #{seq2seq_transformer_forward.7} parent=51 // pred_fallthru
        _
    $region52: #{seq2seq_transformer_forward.7} parent=5 // pred_fallthru
      _
    %p1185 = scmp.le.s32.totalorder 1, %s77
    %p1186 = scmp.lt.s32.totalorder %s77, 3
    %p1187 = pnand %p1185, %p1186
    %p1188 = pneg %p1187
    // Predicated region
    $region157: #{seq2seq_transformer_forward.7} parent=5 // pred_check
      _
    $region158: #{seq2seq_transformer_forward.7} parent=5 // pred_check_branch
      %1190 = sbr.rel (%p1187) target = $region160
    $region159: #{seq2seq_transformer_forward.7} parent=5 // pred_region
      %s1191 = ssub.s32 %s77, 1
      %p1192 = pneg %p98
      %p1193 = pneg %p95
      %p1194 = pneg %p119
      %p1195 = pneg %p116
      %p1196 = pneg %p140
      %p1197 = pneg %p137
      %p1198 = pneg %p161
      %p1199 = pneg %p158
      %p1200 = pneg %p182
      %p1201 = pneg %p179
      %p1202 = scmp.lt.s32.totalorder %s82, 1
      %s1203 = scalar_select %p1202, %s82, 1
      %s1204 = smul.addr %s1203, 4
      %s1205 = smul.addr %s1204, 8
      %s1206 = scalar_lea.vmem %s11, %s1205
      %p1207 = pneg %p208
      %p1208 = pneg %p205
      %p1209 = scmp.lt.s32.totalorder %s82, 1
      %s1210 = scalar_select %p1209, %s82, 1
      %s1211 = scalar_lea.vmem %s13, %s1210
      %p1212 = pneg %p234
      %p1213 = pneg %p231
      %p1214 = scmp.lt.s32.totalorder %s82, 1
      %s1215 = scalar_select %p1214, %s82, 1
      %s1216 = smul.addr %s1215, 4
      %s1217 = smul.addr %s1216, 8
      %s1218 = scalar_lea.vmem %s15, %s1217
      %p1219 = pneg %p260
      %p1220 = pneg %p257
      %p1221 = scmp.lt.s32.totalorder %s82, 1
      %s1222 = scalar_select %p1221, %s82, 1
      %s1223 = scalar_lea.vmem %s17, %s1222
      %p1224 = pneg %p286
      %p1225 = pneg %p283
      %p1226 = scmp.lt.s32.totalorder %s82, 1
      %s1227 = scalar_select %p1226, %s82, 1
      %s1228 = smul.addr %s1227, 4
      %s1229 = smul.addr %s1228, 8
      %s1230 = scalar_lea.vmem %s19, %s1229
      %p1231 = pneg %p312
      %p1232 = pneg %p309
      %p1233 = scmp.lt.s32.totalorder %s82, 1
      %s1234 = scalar_select %p1233, %s82, 1
      %s1235 = scalar_lea.vmem %s21, %s1234
      %p1236 = pneg %p338
      %p1237 = pneg %p335
      %p1238 = scmp.lt.s32.totalorder %s82, 1
      %s1239 = scalar_select %p1238, %s82, 1
      %s1240 = smul.addr %s1239, 4
      %s1241 = smul.addr %s1240, 8
      %s1242 = scalar_lea.vmem %s23, %s1241
      %p1243 = pneg %p364
      %p1244 = pneg %p361
      %p1245 = scmp.lt.s32.totalorder %s82, 1
      %s1246 = scalar_select %p1245, %s82, 1
      %s1247 = scalar_lea.vmem %s25, %s1246
      %p1248 = pneg %p390
      %p1249 = pneg %p387
      %p1250 = scmp.lt.s32.totalorder %s82, 1
      %s1251 = scalar_select %p1250, %s82, 1
      %s1252 = scalar_lea.vmem %s27, %s1251
      %p1253 = pneg %p416
      %p1254 = pneg %p413
      %p1255 = scmp.lt.s32.totalorder %s82, 1
      %s1256 = scalar_select %p1255, %s82, 1
      %s1257 = scalar_lea.vmem %s29, %s1256
      %p1258 = pneg %p442
      %p1259 = pneg %p439
      %p1260 = scmp.lt.s32.totalorder %s82, 1
      %s1261 = scalar_select %p1260, %s82, 1
      %s1262 = smul.addr %s1261, 4
      %s1263 = smul.addr %s1262, 8
      %s1264 = scalar_lea.vmem %s31, %s1263
      %p1265 = pneg %p468
      %p1266 = pneg %p465
      %p1267 = scmp.lt.s32.totalorder %s82, 1
      %s1268 = scalar_select %p1267, %s82, 1
      %s1269 = scalar_lea.vmem %s33, %s1268
      %p1270 = pneg %p494
      %p1271 = pneg %p491
      %p1272 = scmp.lt.s32.totalorder %s82, 1
      %s1273 = scalar_select %p1272, %s82, 1
      %s1274 = smul.addr %s1273, 4
      %s1275 = smul.addr %s1274, 8
      %s1276 = scalar_lea.vmem %s35, %s1275
      %p1277 = pneg %p520
      %p1278 = pneg %p517
      %p1279 = scmp.lt.s32.totalorder %s82, 1
      %s1280 = scalar_select %p1279, %s82, 1
      %s1281 = scalar_lea.vmem %s37, %s1280
      %p1282 = pneg %p546
      %p1283 = pneg %p543
      %p1284 = scmp.lt.s32.totalorder %s82, 1
      %s1285 = scalar_select %p1284, %s82, 1
      %s1286 = smul.addr %s1285, 4
      %s1287 = smul.addr %s1286, 8
      %s1288 = scalar_lea.vmem %s39, %s1287
      %p1289 = pneg %p572
      %p1290 = pneg %p569
      %p1291 = scmp.lt.s32.totalorder %s82, 1
      %s1292 = scalar_select %p1291, %s82, 1
      %s1293 = scalar_lea.vmem %s41, %s1292
      %p1294 = pneg %p598
      %p1295 = pneg %p595
      %p1296 = scmp.lt.s32.totalorder %s82, 1
      %s1297 = scalar_select %p1296, %s82, 1
      %s1298 = smul.addr %s1297, 4
      %s1299 = smul.addr %s1298, 8
      %s1300 = scalar_lea.vmem %s43, %s1299
      %p1301 = pneg %p624
      %p1302 = pneg %p621
      %p1303 = scmp.lt.s32.totalorder %s82, 1
      %s1304 = scalar_select %p1303, %s82, 1
      %s1305 = scalar_lea.vmem %s45, %s1304
      %p1306 = pneg %p650
      %p1307 = pneg %p647
      %p1308 = scmp.lt.s32.totalorder %s82, 1
      %s1309 = scalar_select %p1308, %s82, 1
      %s1310 = scalar_lea.vmem %s47, %s1309
      %p1311 = pneg %p676
      %p1312 = pneg %p673
      %p1313 = scmp.lt.s32.totalorder %s82, 1
      %s1314 = scalar_select %p1313, %s82, 1
      %s1315 = scalar_lea.vmem %s49, %s1314
      %p1316 = pneg %p702
      %p1317 = pneg %p699
      %p1318 = scmp.lt.s32.totalorder %s82, 1
      %s1319 = scalar_select %p1318, %s82, 1
      %s1320 = smul.addr %s1319, 4
      %s1321 = smul.addr %s1320, 8
      %s1322 = scalar_lea.vmem %s51, %s1321
      %p1323 = pneg %p728
      %p1324 = pneg %p725
      %p1325 = scmp.lt.s32.totalorder %s82, 1
      %s1326 = scalar_select %p1325, %s82, 1
      %s1327 = scalar_lea.vmem %s53, %s1326
      %p1328 = pneg %p754
      %p1329 = pneg %p751
      %p1330 = scmp.lt.s32.totalorder %s82, 1
      %s1331 = scalar_select %p1330, %s82, 1
      %s1332 = smul.addr %s1331, 8
      %s1333 = smul.addr %s1332, 8
      %s1334 = scalar_lea.vmem %s55, %s1333
      %p1335 = pneg %p780
      %p1336 = pneg %p777
      %p1337 = scmp.lt.s32.totalorder %s82, 1
      %s1338 = scalar_select %p1337, %s82, 1
      %s1339 = scalar_lea.vmem %s57, %s1338
      %p1340 = pneg %p806
      %p1341 = pneg %p803
      %p1342 = scmp.lt.s32.totalorder %s82, 1
      %s1343 = scalar_select %p1342, %s82, 1
      %s1344 = scalar_lea.vmem %s59, %s1343
      %p1345 = pneg %p832
      %p1346 = pneg %p829
      %p1347 = scmp.lt.s32.totalorder %s82, 1
      %s1348 = scalar_select %p1347, %s82, 1
      %s1349 = scalar_lea.vmem %s61, %s1348
      %p1350 = pneg %p858
      %p1351 = pneg %p855
      %p1352 = pneg %p879
      %p1353 = pneg %p876
      %p1354 = pneg %p900
      %p1355 = pneg %p897
      %p1356 = pneg %p921
      %p1357 = pneg %p918
      %p1358 = pneg %p942
      %p1359 = pneg %p939
      %p1360 = pneg %p963
      %p1361 = pneg %p960
      %p1362 = scmp.lt.s32.totalorder %s82, 1
      %s1363 = scalar_select %p1362, %s82, 1
      %s1364 = smul.addr %s1363, 4
      %s1365 = smul.addr %s1364, 8
      %s1366 = scalar_lea.vmem %s11, %s1365
      %p1367 = scmp.lt.s32.totalorder %s82, 1
      %s1368 = scalar_select %p1367, %s82, 1
      %s1369 = scalar_lea.vmem %s13, %s1368
      %p1370 = scmp.lt.s32.totalorder %s82, 1
      %s1371 = scalar_select %p1370, %s82, 1
      %s1372 = smul.addr %s1371, 4
      %s1373 = smul.addr %s1372, 8
      %s1374 = scalar_lea.vmem %s15, %s1373
      %p1375 = scmp.lt.s32.totalorder %s82, 1
      %s1376 = scalar_select %p1375, %s82, 1
      %s1377 = scalar_lea.vmem %s17, %s1376
      %p1378 = scmp.lt.s32.totalorder %s82, 1
      %s1379 = scalar_select %p1378, %s82, 1
      %s1380 = smul.addr %s1379, 4
      %s1381 = smul.addr %s1380, 8
      %s1382 = scalar_lea.vmem %s19, %s1381
      %p1383 = scmp.lt.s32.totalorder %s82, 1
      %s1384 = scalar_select %p1383, %s82, 1
      %s1385 = scalar_lea.vmem %s21, %s1384
      %p1386 = scmp.lt.s32.totalorder %s82, 1
      %s1387 = scalar_select %p1386, %s82, 1
      %s1388 = smul.addr %s1387, 4
      %s1389 = smul.addr %s1388, 8
      %s1390 = scalar_lea.vmem %s23, %s1389
      %p1391 = scmp.lt.s32.totalorder %s82, 1
      %s1392 = scalar_select %p1391, %s82, 1
      %s1393 = scalar_lea.vmem %s25, %s1392
      %p1394 = scmp.lt.s32.totalorder %s82, 1
      %s1395 = scalar_select %p1394, %s82, 1
      %s1396 = scalar_lea.vmem %s27, %s1395
      %p1397 = scmp.lt.s32.totalorder %s82, 1
      %s1398 = scalar_select %p1397, %s82, 1
      %s1399 = scalar_lea.vmem %s29, %s1398
      %p1400 = scmp.lt.s32.totalorder %s82, 1
      %s1401 = scalar_select %p1400, %s82, 1
      %s1402 = smul.addr %s1401, 4
      %s1403 = smul.addr %s1402, 8
      %s1404 = scalar_lea.vmem %s31, %s1403
      %p1405 = scmp.lt.s32.totalorder %s82, 1
      %s1406 = scalar_select %p1405, %s82, 1
      %s1407 = scalar_lea.vmem %s33, %s1406
      %p1408 = scmp.lt.s32.totalorder %s82, 1
      %s1409 = scalar_select %p1408, %s82, 1
      %s1410 = smul.addr %s1409, 4
      %s1411 = smul.addr %s1410, 8
      %s1412 = scalar_lea.vmem %s35, %s1411
      %p1413 = scmp.lt.s32.totalorder %s82, 1
      %s1414 = scalar_select %p1413, %s82, 1
      %s1415 = scalar_lea.vmem %s37, %s1414
      %p1416 = scmp.lt.s32.totalorder %s82, 1
      %s1417 = scalar_select %p1416, %s82, 1
      %s1418 = smul.addr %s1417, 4
      %s1419 = smul.addr %s1418, 8
      %s1420 = scalar_lea.vmem %s39, %s1419
      %p1421 = scmp.lt.s32.totalorder %s82, 1
      %s1422 = scalar_select %p1421, %s82, 1
      %s1423 = scalar_lea.vmem %s41, %s1422
      %p1424 = scmp.lt.s32.totalorder %s82, 1
      %s1425 = scalar_select %p1424, %s82, 1
      %s1426 = smul.addr %s1425, 4
      %s1427 = smul.addr %s1426, 8
      %s1428 = scalar_lea.vmem %s43, %s1427
      %p1429 = scmp.lt.s32.totalorder %s82, 1
      %s1430 = scalar_select %p1429, %s82, 1
      %s1431 = scalar_lea.vmem %s45, %s1430
      %p1432 = scmp.lt.s32.totalorder %s82, 1
      %s1433 = scalar_select %p1432, %s82, 1
      %s1434 = scalar_lea.vmem %s47, %s1433
      %p1435 = scmp.lt.s32.totalorder %s82, 1
      %s1436 = scalar_select %p1435, %s82, 1
      %s1437 = scalar_lea.vmem %s49, %s1436
      %p1438 = scmp.lt.s32.totalorder %s82, 1
      %s1439 = scalar_select %p1438, %s82, 1
      %s1440 = smul.addr %s1439, 4
      %s1441 = smul.addr %s1440, 8
      %s1442 = scalar_lea.vmem %s51, %s1441
      %p1443 = scmp.lt.s32.totalorder %s82, 1
      %s1444 = scalar_select %p1443, %s82, 1
      %s1445 = scalar_lea.vmem %s53, %s1444
      %p1446 = scmp.lt.s32.totalorder %s82, 1
      %s1447 = scalar_select %p1446, %s82, 1
      %s1448 = smul.addr %s1447, 8
      %s1449 = smul.addr %s1448, 8
      %s1450 = scalar_lea.vmem %s55, %s1449
      %p1451 = scmp.lt.s32.totalorder %s82, 1
      %s1452 = scalar_select %p1451, %s82, 1
      %s1453 = scalar_lea.vmem %s57, %s1452
      %p1454 = scmp.lt.s32.totalorder %s82, 1
      %s1455 = scalar_select %p1454, %s82, 1
      %s1456 = scalar_lea.vmem %s59, %s1455
      %p1457 = scmp.lt.s32.totalorder %s82, 1
      %s1458 = scalar_select %p1457, %s82, 1
      %s1459 = scalar_lea.vmem %s61, %s1458
      %p1460 = scmp.eq.s32.totalorder %s82, 0
      // Predicated region
      $region161: #{seq2seq_transformer_forward.7} parent=159 // pred_check
        %p1461 = pneg %p1460
      $region162: #{seq2seq_transformer_forward.7} parent=159 // pred_check_branch
        %1463 = sbr.rel (%p1461) target = $region164
      $region163: #{seq2seq_transformer_forward.7} parent=159 // pred_region
        %v1464 = vld [vmem:[%s1] sm:$0xff]
        %vm1465 = vcmask 261120
        %1466 = vst.msk [vmem:[#allocation2] sm:$0xff] %vm1465, %v1464
      $region164: #{seq2seq_transformer_forward.7} parent=159 // pred_fallthru
        _
      %v1467 = vld [vmem:[#allocation2] sm:$0xff]
      %v1468 = vld [vmem:[%s3] sm:$0xff]
      %v1469 = vld [vmem:[%s1366] sm:$0xff]
      %v1470 = vld [vmem:[%s1366 + $0x8] sm:$0xff]
      %v1471 = vld [vmem:[%s1366 + $0x10] sm:$0xff]
      %v1472 = vld [vmem:[%s1366 + $0x18] sm:$0xff]
      %v1473 = vld [vmem:[%s1369] sm:$0x1]
      %v1474 = vld [vmem:[%s1374] sm:$0xff]
      %v1475 = vld [vmem:[%s1374 + $0x8] sm:$0xff]
      %v1476 = vld [vmem:[%s1374 + $0x10] sm:$0xff]
      %v1477 = vld [vmem:[%s1374 + $0x18] sm:$0xff]
      %v1478 = vld [vmem:[%s1377] sm:$0x1]
      %v1479 = vld [vmem:[%s1382] sm:$0xff]
      %v1480 = vld [vmem:[%s1382 + $0x8] sm:$0xff]
      %v1481 = vld [vmem:[%s1382 + $0x10] sm:$0xff]
      %v1482 = vld [vmem:[%s1382 + $0x18] sm:$0xff]
      %v1483 = vld [vmem:[%s1385] sm:$0x1]
      %v1484 = vld [vmem:[%s1390] sm:$0xff]
      %v1485 = vld [vmem:[%s1390 + $0x8] sm:$0xff]
      %v1486 = vld [vmem:[%s1390 + $0x10] sm:$0xff]
      %v1487 = vld [vmem:[%s1390 + $0x18] sm:$0xff]
      %v1488 = vld [vmem:[%s1393] sm:$0x1]
      %v1489 = vld [vmem:[%s5] sm:$0xff]
      %v1491 = vlaneseq
      %v1492 = vshrl.u32 %v1491, 7
      %v1493 = vsub.s32 0, %v1492
      %v1494 = vrot.slane %v1473, %v1493
      %vm1496 = vcmask 261120
      %v1498 = vsel %vm1496, %v1467, 0
      %1500 = vmatprep.subr.mxu0 0.0
      %1501 = vmatpush1.msra.mxu0 %v1469
      %1502 = vmatprep.subr.mxu0 0.0
      %1503 = vmatpush1.msra.mxu0 %v1470
      %1504 = vmatprep.subr.mxu0 0.0
      %1505 = vmatpush1.msra.mxu0 %v1471
      %1506 = vmatprep.subr.mxu0 0.0
      %1507 = vmatpush1.msra.mxu0 %v1472
      %1508 = vmatprep.subr.mxu0 0.0
      %1509 = vmatpush1.msra.mxu0 0.0
      %1510 = vmatprep.subr.mxu0 0.0
      %1511 = vmatpush1.msra.mxu0 0.0
      %1512 = vmatprep.subr.mxu0 0.0
      %1513 = vmatpush1.msra.mxu0 0.0
      %1514 = vmatprep.subr.mxu0 0.0
      %1515 = vmatpush1.msra.mxu0 0.0
      %1516 = vmatprep.subr.mxu0 0.0
      %1517 = vmatpush1.msra.mxu0 0.0
      %1518 = vmatprep.subr.mxu0 0.0
      %1519 = vmatpush1.msra.mxu0 0.0
      %1520 = vmatprep.subr.mxu0 0.0
      %1521 = vmatpush1.msra.mxu0 0.0
      %1522 = vmatprep.subr.mxu0 0.0
      %1523 = vmatpush1.msra.mxu0 0.0
      %1524 = vmatprep.subr.mxu0 0.0
      %1525 = vmatpush1.msra.mxu0 0.0
      %1526 = vmatprep.subr.mxu0 0.0
      %1527 = vmatpush1.msra.mxu0 0.0
      %1528 = vmatprep.subr.mxu0 0.0
      %1529 = vmatpush1.msra.mxu0 0.0
      %1530 = vmatprep.subr.mxu0 0.0
      %1531 = vmatpush1.msra.mxu0 0.0
      %1532 = vmatprep.subr.mxu0 0.0
      %1533 = vmatpush1.msra.mxu0 0.0
      %1534 = vmatprep.subr.mxu0 0.0
      %1535 = vmatpush1.msra.mxu0 0.0
      %1536 = vmatprep.subr.mxu0 0.0
      %1537 = vmatpush1.msra.mxu0 0.0
      %1538 = vmatprep.subr.mxu0 0.0
      %1539 = vmatpush1.msra.mxu0 0.0
      %1540 = vmatprep.subr.mxu0 0.0
      %1541 = vmatpush1.msra.mxu0 0.0
      %1542 = vmatprep.subr.mxu0 0.0
      %1543 = vmatpush1.msra.mxu0 0.0
      %1544 = vmatprep.subr.mxu0 0.0
      %1545 = vmatpush1.msra.mxu0 0.0
      %1546 = vmatprep.subr.mxu0 0.0
      %1547 = vmatpush1.msra.mxu0 0.0
      %1548 = vmatprep.subr.mxu0 0.0
      %1549 = vmatpush1.msra.mxu0 0.0
      %1550 = vmatprep.subr.mxu0 0.0
      %1551 = vmatpush1.msra.mxu0 0.0
      %1552 = vmatprep.subr.mxu0 0.0
      %1553 = vmatpush1.msra.mxu0 0.0
      %1554 = vmatprep.subr.mxu0 0.0
      %1555 = vmatpush1.msra.mxu0 0.0
      %1556 = vmatprep.subr.mxu0 0.0
      %1557 = vmatpush1.msra.mxu0 0.0
      %1558 = vmatprep.subr.mxu0 0.0
      %1559 = vmatpush1.msra.mxu0 0.0
      %1560 = vmatprep.subr.mxu0 0.0
      %1561 = vmatpush1.msra.mxu0 0.0
      %1562 = vmatprep.subr.mxu0 0.0
      %1563 = vmatpush1.msra.mxu0 0.0
      %1564 = vmatprep.mubr.f32.mxu0 0.0
      %1565 = vmatmul.mubr.f32.gmra.mrb[0].mxu0 %v1498
      %v1566 = vpop.f32.mrb[0].mxu0
      %v1567 = vadd.f32 %v1494, %v1566
      %v1568 = vpop.f32.mrb[0].mxu0
      %1569 = vdwg.mxu0
      %v1571 = vlaneseq
      %v1572 = vshrl.u32 %v1571, 7
      %v1573 = vsub.s32 0, %v1572
      %v1574 = vrot.slane %v1478, %v1573
      %1576 = vmatprep.subr.mxu0 0.0
      %1577 = vmatpush1.msra.mxu0 %v1474
      %1578 = vmatprep.subr.mxu0 0.0
      %1579 = vmatpush1.msra.mxu0 %v1475
      %1580 = vmatprep.subr.mxu0 0.0
      %1581 = vmatpush1.msra.mxu0 %v1476
      %1582 = vmatprep.subr.mxu0 0.0
      %1583 = vmatpush1.msra.mxu0 %v1477
      %1584 = vmatprep.subr.mxu0 0.0
      %1585 = vmatpush1.msra.mxu0 0.0
      %1586 = vmatprep.subr.mxu0 0.0
      %1587 = vmatpush1.msra.mxu0 0.0
      %1588 = vmatprep.subr.mxu0 0.0
      %1589 = vmatpush1.msra.mxu0 0.0
      %1590 = vmatprep.subr.mxu0 0.0
      %1591 = vmatpush1.msra.mxu0 0.0
      %1592 = vmatprep.subr.mxu0 0.0
      %1593 = vmatpush1.msra.mxu0 0.0
      %1594 = vmatprep.subr.mxu0 0.0
      %1595 = vmatpush1.msra.mxu0 0.0
      %1596 = vmatprep.subr.mxu0 0.0
      %1597 = vmatpush1.msra.mxu0 0.0
      %1598 = vmatprep.subr.mxu0 0.0
      %1599 = vmatpush1.msra.mxu0 0.0
      %1600 = vmatprep.subr.mxu0 0.0
      %1601 = vmatpush1.msra.mxu0 0.0
      %1602 = vmatprep.subr.mxu0 0.0
      %1603 = vmatpush1.msra.mxu0 0.0
      %1604 = vmatprep.subr.mxu0 0.0
      %1605 = vmatpush1.msra.mxu0 0.0
      %1606 = vmatprep.subr.mxu0 0.0
      %1607 = vmatpush1.msra.mxu0 0.0
      %1608 = vmatprep.subr.mxu0 0.0
      %1609 = vmatpush1.msra.mxu0 0.0
      %1610 = vmatprep.subr.mxu0 0.0
      %1611 = vmatpush1.msra.mxu0 0.0
      %1612 = vmatprep.subr.mxu0 0.0
      %1613 = vmatpush1.msra.mxu0 0.0
      %1614 = vmatprep.subr.mxu0 0.0
      %1615 = vmatpush1.msra.mxu0 0.0
      %1616 = vmatprep.subr.mxu0 0.0
      %1617 = vmatpush1.msra.mxu0 0.0
      %1618 = vmatprep.subr.mxu0 0.0
      %1619 = vmatpush1.msra.mxu0 0.0
      %1620 = vmatprep.subr.mxu0 0.0
      %1621 = vmatpush1.msra.mxu0 0.0
      %1622 = vmatprep.subr.mxu0 0.0
      %1623 = vmatpush1.msra.mxu0 0.0
      %1624 = vmatprep.subr.mxu0 0.0
      %1625 = vmatpush1.msra.mxu0 0.0
      %1626 = vmatprep.subr.mxu0 0.0
      %1627 = vmatpush1.msra.mxu0 0.0
      %1628 = vmatprep.subr.mxu0 0.0
      %1629 = vmatpush1.msra.mxu0 0.0
      %1630 = vmatprep.subr.mxu0 0.0
      %1631 = vmatpush1.msra.mxu0 0.0
      %1632 = vmatprep.subr.mxu0 0.0
      %1633 = vmatpush1.msra.mxu0 0.0
      %1634 = vmatprep.subr.mxu0 0.0
      %1635 = vmatpush1.msra.mxu0 0.0
      %1636 = vmatprep.subr.mxu0 0.0
      %1637 = vmatpush1.msra.mxu0 0.0
      %1638 = vmatprep.subr.mxu0 0.0
      %1639 = vmatpush1.msra.mxu0 0.0
      %1640 = vmatprep.mubr.f32.mxu0 0.0
      %1641 = vmatmul.mubr.f32.gmra.mrb[0].mxu0 %v1498
      %v1642 = vpop.f32.mrb[0].mxu0
      %v1643 = vadd.f32 %v1574, %v1642
      %v1644 = vpop.f32.mrb[0].mxu0
      %1645 = vdwg.mxu0
      %v1647 = vlaneseq
      %v1648 = vshrl.u32 %v1647, 7
      %v1649 = vsub.s32 0, %v1648
      %v1650 = vrot.slane %v1483, %v1649
      %1652 = vmatprep.subr.mxu0 0.0
      %1653 = vmatpush1.msra.mxu0 %v1479
      %1654 = vmatprep.subr.mxu0 0.0
      %1655 = vmatpush1.msra.mxu0 %v1480
      %1656 = vmatprep.subr.mxu0 0.0
      %1657 = vmatpush1.msra.mxu0 %v1481
      %1658 = vmatprep.subr.mxu0 0.0
      %1659 = vmatpush1.msra.mxu0 %v1482
      %1660 = vmatprep.subr.mxu0 0.0
      %1661 = vmatpush1.msra.mxu0 0.0
      %1662 = vmatprep.subr.mxu0 0.0
      %1663 = vmatpush1.msra.mxu0 0.0
      %1664 = vmatprep.subr.mxu0 0.0
      %1665 = vmatpush1.msra.mxu0 0.0
      %1666 = vmatprep.subr.mxu0 0.0
      %1667 = vmatpush1.msra.mxu0 0.0
      %1668 = vmatprep.subr.mxu0 0.0
      %1669 = vmatpush1.msra.mxu0 0.0
      %1670 = vmatprep.subr.mxu0 0.0
      %1671 = vmatpush1.msra.mxu0 0.0
      %1672 = vmatprep.subr.mxu0 0.0
      %1673 = vmatpush1.msra.mxu0 0.0
      %1674 = vmatprep.subr.mxu0 0.0
      %1675 = vmatpush1.msra.mxu0 0.0
      %1676 = vmatprep.subr.mxu0 0.0
      %1677 = vmatpush1.msra.mxu0 0.0
      %1678 = vmatprep.subr.mxu0 0.0
      %1679 = vmatpush1.msra.mxu0 0.0
      %1680 = vmatprep.subr.mxu0 0.0
      %1681 = vmatpush1.msra.mxu0 0.0
      %1682 = vmatprep.subr.mxu0 0.0
      %1683 = vmatpush1.msra.mxu0 0.0
      %1684 = vmatprep.subr.mxu0 0.0
      %1685 = vmatpush1.msra.mxu0 0.0
      %1686 = vmatprep.subr.mxu0 0.0
      %1687 = vmatpush1.msra.mxu0 0.0
      %1688 = vmatprep.subr.mxu0 0.0
      %1689 = vmatpush1.msra.mxu0 0.0
      %1690 = vmatprep.subr.mxu0 0.0
      %1691 = vmatpush1.msra.mxu0 0.0
      %1692 = vmatprep.subr.mxu0 0.0
      %1693 = vmatpush1.msra.mxu0 0.0
      %1694 = vmatprep.subr.mxu0 0.0
      %1695 = vmatpush1.msra.mxu0 0.0
      %1696 = vmatprep.subr.mxu0 0.0
      %1697 = vmatpush1.msra.mxu0 0.0
      %1698 = vmatprep.subr.mxu0 0.0
      %1699 = vmatpush1.msra.mxu0 0.0
      %1700 = vmatprep.subr.mxu0 0.0
      %1701 = vmatpush1.msra.mxu0 0.0
      %1702 = vmatprep.subr.mxu0 0.0
      %1703 = vmatpush1.msra.mxu0 0.0
      %1704 = vmatprep.subr.mxu0 0.0
      %1705 = vmatpush1.msra.mxu0 0.0
      %1706 = vmatprep.subr.mxu0 0.0
      %1707 = vmatpush1.msra.mxu0 0.0
      %1708 = vmatprep.subr.mxu0 0.0
      %1709 = vmatpush1.msra.mxu0 0.0
      %1710 = vmatprep.subr.mxu0 0.0
      %1711 = vmatpush1.msra.mxu0 0.0
      %1712 = vmatprep.subr.mxu0 0.0
      %1713 = vmatpush1.msra.mxu0 0.0
      %1714 = vmatprep.subr.mxu0 0.0
      %1715 = vmatpush1.msra.mxu0 0.0
      %1716 = vmatprep.mubr.f32.mxu0 0.0
      %1717 = vmatmul.mubr.f32.gmra.mrb[0].mxu0 %v1498
      %v1718 = vpop.f32.mrb[0].mxu0
      %v1719 = vadd.f32 %v1650, %v1718
      %v1720 = vpop.f32.mrb[0].mxu0
      %1721 = vdwg.mxu0
      %v1722 = vld [vmem:[%s9] sm:$0x1]
      %v1724 = vlaneseq
      %v1725 = vshrl.u32 %v1724, 7
      %v1726 = vsub.s32 0, %v1725
      %v1727 = vrot.slane %v1722, %v1726
      %v1729 = vmul.f32 %v1567, %v1727
      %v1731 = vsel %vm1496, %v1729, 0
      %v1734 = vsel %vm1496, %v1643, 0
      %1736 = vmatprep.subr.mxu0 0.0
      %1737 = vmatpush1.xpose.msra.mxu0 %v1734
      %1738 = vmatprep.subr.mxu0 0.0
      %1739 = vmatpush1.xpose.msra.mxu0 0.0
      %1740 = vmatprep.subr.mxu0 0.0
      %1741 = vmatpush1.xpose.msra.mxu0 0.0
      %1742 = vmatprep.subr.mxu0 0.0
      %1743 = vmatpush1.xpose.msra.mxu0 0.0
      %1744 = vmatprep.subr.mxu0 0.0
      %1745 = vmatpush1.xpose.msra.mxu0 0.0
      %1746 = vmatprep.subr.mxu0 0.0
      %1747 = vmatpush1.xpose.msra.mxu0 0.0
      %1748 = vmatprep.subr.mxu0 0.0
      %1749 = vmatpush1.xpose.msra.mxu0 0.0
      %1750 = vmatprep.subr.mxu0 0.0
      %1751 = vmatpush1.xpose.msra.mxu0 0.0
      %1752 = vmatprep.subr.mxu0 0.0
      %1753 = vmatpush1.xpose.msra.mxu0 0.0
      %1754 = vmatprep.subr.mxu0 0.0
      %1755 = vmatpush1.xpose.msra.mxu0 0.0
      %1756 = vmatprep.subr.mxu0 0.0
      %1757 = vmatpush1.xpose.msra.mxu0 0.0
      %1758 = vmatprep.subr.mxu0 0.0
      %1759 = vmatpush1.xpose.msra.mxu0 0.0
      %1760 = vmatprep.subr.mxu0 0.0
      %1761 = vmatpush1.xpose.msra.mxu0 0.0
      %1762 = vmatprep.subr.mxu0 0.0
      %1763 = vmatpush1.xpose.msra.mxu0 0.0
      %1764 = vmatprep.subr.mxu0 0.0
      %1765 = vmatpush1.xpose.msra.mxu0 0.0
      %1766 = vmatprep.subr.mxu0 0.0
      %1767 = vmatpush1.xpose.msra.mxu0 0.0
      %1768 = vmatprep.subr.mxu0 0.0
      %1769 = vmatpush1.xpose.msra.mxu0 0.0
      %1770 = vmatprep.subr.mxu0 0.0
      %1771 = vmatpush1.xpose.msra.mxu0 0.0
      %1772 = vmatprep.subr.mxu0 0.0
      %1773 = vmatpush1.xpose.msra.mxu0 0.0
      %1774 = vmatprep.subr.mxu0 0.0
      %1775 = vmatpush1.xpose.msra.mxu0 0.0
      %1776 = vmatprep.subr.mxu0 0.0
      %1777 = vmatpush1.xpose.msra.mxu0 0.0
      %1778 = vmatprep.subr.mxu0 0.0
      %1779 = vmatpush1.xpose.msra.mxu0 0.0
      %1780 = vmatprep.subr.mxu0 0.0
      %1781 = vmatpush1.xpose.msra.mxu0 0.0
      %1782 = vmatprep.subr.mxu0 0.0
      %1783 = vmatpush1.xpose.msra.mxu0 0.0
      %1784 = vmatprep.subr.mxu0 0.0
      %1785 = vmatpush1.xpose.msra.mxu0 0.0
      %1786 = vmatprep.subr.mxu0 0.0
      %1787 = vmatpush1.xpose.msra.mxu0 0.0
      %1788 = vmatprep.subr.mxu0 0.0
      %1789 = vmatpush1.xpose.msra.mxu0 0.0
      %1790 = vmatprep.subr.mxu0 0.0
      %1791 = vmatpush1.xpose.msra.mxu0 0.0
      %1792 = vmatprep.subr.mxu0 0.0
      %1793 = vmatpush1.xpose.msra.mxu0 0.0
      %1794 = vmatprep.subr.mxu0 0.0
      %1795 = vmatpush1.xpose.msra.mxu0 0.0
      %1796 = vmatprep.subr.mxu0 0.0
      %1797 = vmatpush1.xpose.msra.mxu0 0.0
      %1798 = vmatprep.subr.mxu0 0.0
      %1799 = vmatpush1.xpose.msra.mxu0 0.0
      %1800 = vmatprep.mubr.f32.mxu0 0.0
      %1801 = vmatmul.mubr.f32.gmra.mrb[0].mxu0 %v1731
      %v1802 = vpop.f32.mrb[0].mxu0
      %v1803 = vadd.f32 0.0, %v1802
      %v1804 = vpop.f32.mrb[0].mxu0
      %1805 = vdwg.mxu0
      %v1806 = vmul.f32 %v1803, 0.35355338
      %v1807 = vadd.f32 %v1806, %v1489
      %vm1808 = vcmask 64512
      %v1809 = vsel %vm1808, %v1807, -inf
      %1810 = vmax.xlane.f32.xlu0 %v1809
      %v1811 = vpop.xlane.xlu0 %1810
      %v1812 = vsub.f32 %v1807, %v1811
      %v1813 = vmul.f32 %v1812, 1.442695
      %v1814 = vpow.pop %v1813
      %v1815 = vsel %vm1808, %v1814, 0.0
      %1816 = vadd.xlane.f32.xlu0 %v1815
      %v1817 = vpop.xlane.xlu0 %1816
      %v1818 = vrcp.pop %v1817
      %v1819 = vmul.f32 %v1814, %v1818
      %v1820 = vmul.f32 %v1719, %v1727
      %s1821 = scalar_lea.vmem %s9, 1
      %v1822 = vld [vmem:[%s1821] sm:$0x1]
      %v1824 = vlaneseq
      %v1825 = vshrl.u32 %v1824, 7
      %v1826 = vsub.s32 0, %v1825
      %v1827 = vrot.slane %v1822, %v1826
      %v1829 = vmul.f32 %v1567, %v1827
      %v1831 = vsel %vm1496, %v1829, 0
      %1833 = vmatprep.subr.mxu0 0.0
      %1834 = vmatpush1.xpose.msra.mxu0 %v1734
      %1835 = vmatprep.subr.mxu0 0.0
      %1836 = vmatpush1.xpose.msra.mxu0 0.0
      %1837 = vmatprep.subr.mxu0 0.0
      %1838 = vmatpush1.xpose.msra.mxu0 0.0
      %1839 = vmatprep.subr.mxu0 0.0
      %1840 = vmatpush1.xpose.msra.mxu0 0.0
      %1841 = vmatprep.subr.mxu0 0.0
      %1842 = vmatpush1.xpose.msra.mxu0 0.0
      %1843 = vmatprep.subr.mxu0 0.0
      %1844 = vmatpush1.xpose.msra.mxu0 0.0
      %1845 = vmatprep.subr.mxu0 0.0
      %1846 = vmatpush1.xpose.msra.mxu0 0.0
      %1847 = vmatprep.subr.mxu0 0.0
      %1848 = vmatpush1.xpose.msra.mxu0 0.0
      %1849 = vmatprep.subr.mxu0 0.0
      %1850 = vmatpush1.xpose.msra.mxu0 0.0
      %1851 = vmatprep.subr.mxu0 0.0
      %1852 = vmatpush1.xpose.msra.mxu0 0.0
      %1853 = vmatprep.subr.mxu0 0.0
      %1854 = vmatpush1.xpose.msra.mxu0 0.0
      %1855 = vmatprep.subr.mxu0 0.0
      %1856 = vmatpush1.xpose.msra.mxu0 0.0
      %1857 = vmatprep.subr.mxu0 0.0
      %1858 = vmatpush1.xpose.msra.mxu0 0.0
      %1859 = vmatprep.subr.mxu0 0.0
      %1860 = vmatpush1.xpose.msra.mxu0 0.0
      %1861 = vmatprep.subr.mxu0 0.0
      %1862 = vmatpush1.xpose.msra.mxu0 0.0
      %1863 = vmatprep.subr.mxu0 0.0
      %1864 = vmatpush1.xpose.msra.mxu0 0.0
      %1865 = vmatprep.subr.mxu0 0.0
      %1866 = vmatpush1.xpose.msra.mxu0 0.0
      %1867 = vmatprep.subr.mxu0 0.0
      %1868 = vmatpush1.xpose.msra.mxu0 0.0
      %1869 = vmatprep.subr.mxu0 0.0
      %1870 = vmatpush1.xpose.msra.mxu0 0.0
      %1871 = vmatprep.subr.mxu0 0.0
      %1872 = vmatpush1.xpose.msra.mxu0 0.0
      %1873 = vmatprep.subr.mxu0 0.0
      %1874 = vmatpush1.xpose.msra.mxu0 0.0
      %1875 = vmatprep.subr.mxu0 0.0
      %1876 = vmatpush1.xpose.msra.mxu0 0.0
      %1877 = vmatprep.subr.mxu0 0.0
      %1878 = vmatpush1.xpose.msra.mxu0 0.0
      %1879 = vmatprep.subr.mxu0 0.0
      %1880 = vmatpush1.xpose.msra.mxu0 0.0
      %1881 = vmatprep.subr.mxu0 0.0
      %1882 = vmatpush1.xpose.msra.mxu0 0.0
      %1883 = vmatprep.subr.mxu0 0.0
      %1884 = vmatpush1.xpose.msra.mxu0 0.0
      %1885 = vmatprep.subr.mxu0 0.0
      %1886 = vmatpush1.xpose.msra.mxu0 0.0
      %1887 = vmatprep.subr.mxu0 0.0
      %1888 = vmatpush1.xpose.msra.mxu0 0.0
      %1889 = vmatprep.subr.mxu0 0.0
      %1890 = vmatpush1.xpose.msra.mxu0 0.0
      %1891 = vmatprep.subr.mxu0 0.0
      %1892 = vmatpush1.xpose.msra.mxu0 0.0
      %1893 = vmatprep.subr.mxu0 0.0
      %1894 = vmatpush1.xpose.msra.mxu0 0.0
      %1895 = vmatprep.subr.mxu0 0.0
      %1896 = vmatpush1.xpose.msra.mxu0 0.0
      %1897 = vmatprep.mubr.f32.mxu0 0.0
      %1898 = vmatmul.mubr.f32.gmra.mrb[0].mxu0 %v1831
      %v1899 = vpop.f32.mrb[0].mxu0
      %v1900 = vadd.f32 0.0, %v1899
      %v1901 = vpop.f32.mrb[0].mxu0
      %1902 = vdwg.mxu0
      %v1903 = vmul.f32 %v1900, 0.35355338
      %v1904 = vadd.f32 %v1903, %v1489
      %v1905 = vsel %vm1808, %v1904, -inf
      %1906 = vmax.xlane.f32.xlu0 %v1905
      %v1907 = vpop.xlane.xlu0 %1906
      %v1908 = vsub.f32 %v1904, %v1907
      %v1909 = vmul.f32 %v1908, 1.442695
      %v1910 = vpow.pop %v1909
      %v1911 = vsel %vm1808, %v1910, 0.0
      %1912 = vadd.xlane.f32.xlu0 %v1911
      %v1913 = vpop.xlane.xlu0 %1912
      %v1914 = vrcp.pop %v1913
      %v1915 = vmul.f32 %v1910, %v1914
      %v1916 = vmul.f32 %v1719, %v1827
      %v1918 = vsel %vm1808, %v1915, 0
      %1920 = vmatprep.subr.mxu0 0.0
      %1921 = vmatpush1.msra.mxu0 %v1916
      %1922 = vmatprep.subr.mxu0 0.0
      %1923 = vmatpush1.msra.mxu0 0.0
      %1924 = vmatprep.subr.mxu0 0.0
      %1925 = vmatpush1.msra.mxu0 0.0
      %1926 = vmatprep.subr.mxu0 0.0
      %1927 = vmatpush1.msra.mxu0 0.0
      %1928 = vmatprep.subr.mxu0 0.0
      %1929 = vmatpush1.msra.mxu0 0.0
      %1930 = vmatprep.subr.mxu0 0.0
      %1931 = vmatpush1.msra.mxu0 0.0
      %1932 = vmatprep.subr.mxu0 0.0
      %1933 = vmatpush1.msra.mxu0 0.0
      %1934 = vmatprep.subr.mxu0 0.0
      %1935 = vmatpush1.msra.mxu0 0.0
      %1936 = vmatprep.subr.mxu0 0.0
      %1937 = vmatpush1.msra.mxu0 0.0
      %1938 = vmatprep.subr.mxu0 0.0
      %1939 = vmatpush1.msra.mxu0 0.0
      %1940 = vmatprep.subr.mxu0 0.0
      %1941 = vmatpush1.msra.mxu0 0.0
      %1942 = vmatprep.subr.mxu0 0.0
      %1943 = vmatpush1.msra.mxu0 0.0
      %1944 = vmatprep.subr.mxu0 0.0
      %1945 = vmatpush1.msra.mxu0 0.0
      %1946 = vmatprep.subr.mxu0 0.0
      %1947 = vmatpush1.msra.mxu0 0.0
      %1948 = vmatprep.subr.mxu0 0.0
      %1949 = vmatpush1.msra.mxu0 0.0
      %1950 = vmatprep.subr.mxu0 0.0
      %1951 = vmatpush1.msra.mxu0 0.0
      %1952 = vmatprep.subr.mxu0 0.0
      %1953 = vmatpush1.msra.mxu0 0.0
      %1954 = vmatprep.subr.mxu0 0.0
      %1955 = vmatpush1.msra.mxu0 0.0
      %1956 = vmatprep.subr.mxu0 0.0
      %1957 = vmatpush1.msra.mxu0 0.0
      %1958 = vmatprep.subr.mxu0 0.0
      %1959 = vmatpush1.msra.mxu0 0.0
      %1960 = vmatprep.subr.mxu0 0.0
      %1961 = vmatpush1.msra.mxu0 0.0
      %1962 = vmatprep.subr.mxu0 0.0
      %1963 = vmatpush1.msra.mxu0 0.0
      %1964 = vmatprep.subr.mxu0 0.0
      %1965 = vmatpush1.msra.mxu0 0.0
      %1966 = vmatprep.subr.mxu0 0.0
      %1967 = vmatpush1.msra.mxu0 0.0
      %1968 = vmatprep.subr.mxu0 0.0
      %1969 = vmatpush1.msra.mxu0 0.0
      %1970 = vmatprep.subr.mxu0 0.0
      %1971 = vmatpush1.msra.mxu0 0.0
      %1972 = vmatprep.subr.mxu0 0.0
      %1973 = vmatpush1.msra.mxu0 0.0
      %1974 = vmatprep.subr.mxu0 0.0
      %1975 = vmatpush1.msra.mxu0 0.0
      %1976 = vmatprep.subr.mxu0 0.0
      %1977 = vmatpush1.msra.mxu0 0.0
      %1978 = vmatprep.subr.mxu0 0.0
      %1979 = vmatpush1.msra.mxu0 0.0
      %1980 = vmatprep.subr.mxu0 0.0
      %1981 = vmatpush1.msra.mxu0 0.0
      %1982 = vmatprep.subr.mxu0 0.0
      %1983 = vmatpush1.msra.mxu0 0.0
      %1984 = vmatprep.mubr.f32.mxu0 0.0
      %1985 = vmatmul.mubr.f32.gmra.mrb[0].mxu0 %v1918
      %v1986 = vpop.f32.mrb[0].mxu0
      %v1987 = vadd.f32 0.0, %v1986
      %v1988 = vpop.f32.mrb[0].mxu0
      %1989 = vdwg.mxu0
      %v1991 = vsel %vm1808, %v1819, 0
      %1993 = vmatprep.subr.mxu0 0.0
      %1994 = vmatpush1.msra.mxu0 %v1820
      %1995 = vmatprep.subr.mxu0 0.0
      %1996 = vmatpush1.msra.mxu0 0.0
      %1997 = vmatprep.subr.mxu0 0.0
      %1998 = vmatpush1.msra.mxu0 0.0
      %1999 = vmatprep.subr.mxu0 0.0
      %2000 = vmatpush1.msra.mxu0 0.0
      %2001 = vmatprep.subr.mxu0 0.0
      %2002 = vmatpush1.msra.mxu0 0.0
      %2003 = vmatprep.subr.mxu0 0.0
      %2004 = vmatpush1.msra.mxu0 0.0
      %2005 = vmatprep.subr.mxu0 0.0
      %2006 = vmatpush1.msra.mxu0 0.0
      %2007 = vmatprep.subr.mxu0 0.0
      %2008 = vmatpush1.msra.mxu0 0.0
      %2009 = vmatprep.subr.mxu0 0.0
      %2010 = vmatpush1.msra.mxu0 0.0
      %2011 = vmatprep.subr.mxu0 0.0
      %2012 = vmatpush1.msra.mxu0 0.0
      %2013 = vmatprep.subr.mxu0 0.0
      %2014 = vmatpush1.msra.mxu0 0.0
      %2015 = vmatprep.subr.mxu0 0.0
      %2016 = vmatpush1.msra.mxu0 0.0
      %2017 = vmatprep.subr.mxu0 0.0
      %2018 = vmatpush1.msra.mxu0 0.0
      %2019 = vmatprep.subr.mxu0 0.0
      %2020 = vmatpush1.msra.mxu0 0.0
      %2021 = vmatprep.subr.mxu0 0.0
      %2022 = vmatpush1.msra.mxu0 0.0
      %2023 = vmatprep.subr.mxu0 0.0
      %2024 = vmatpush1.msra.mxu0 0.0
      %2025 = vmatprep.subr.mxu0 0.0
      %2026 = vmatpush1.msra.mxu0 0.0
      %2027 = vmatprep.subr.mxu0 0.0
      %2028 = vmatpush1.msra.mxu0 0.0
      %2029 = vmatprep.subr.mxu0 0.0
      %2030 = vmatpush1.msra.mxu0 0.0
      %2031 = vmatprep.subr.mxu0 0.0
      %2032 = vmatpush1.msra.mxu0 0.0
      %2033 = vmatprep.subr.mxu0 0.0
      %2034 = vmatpush1.msra.mxu0 0.0
      %2035 = vmatprep.subr.mxu0 0.0
      %2036 = vmatpush1.msra.mxu0 0.0
      %2037 = vmatprep.subr.mxu0 0.0
      %2038 = vmatpush1.msra.mxu0 0.0
      %2039 = vmatprep.subr.mxu0 0.0
      %2040 = vmatpush1.msra.mxu0 0.0
      %2041 = vmatprep.subr.mxu0 0.0
      %2042 = vmatpush1.msra.mxu0 0.0
      %2043 = vmatprep.subr.mxu0 0.0
      %2044 = vmatpush1.msra.mxu0 0.0
      %2045 = vmatprep.subr.mxu0 0.0
      %2046 = vmatpush1.msra.mxu0 0.0
      %2047 = vmatprep.subr.mxu0 0.0
      %2048 = vmatpush1.msra.mxu0 0.0
      %2049 = vmatprep.subr.mxu0 0.0
      %2050 = vmatpush1.msra.mxu0 0.0
      %2051 = vmatprep.subr.mxu0 0.0
      %2052 = vmatpush1.msra.mxu0 0.0
      %2053 = vmatprep.subr.mxu0 0.0
      %2054 = vmatpush1.msra.mxu0 0.0
      %2055 = vmatprep.subr.mxu0 0.0
      %2056 = vmatpush1.msra.mxu0 0.0
      %2057 = vmatprep.mubr.f32.mxu0 0.0
      %2058 = vmatmul.mubr.f32.gmra.mrb[0].mxu0 %v1991
      %v2059 = vpop.f32.mrb[0].mxu0
      %v2060 = vadd.f32 %v1987, %v2059
      %v2061 = vpop.f32.mrb[0].mxu0
      %2062 = vdwg.mxu0
      %s2063 = scalar_lea.vmem %s9, 2
      %v2064 = vld [vmem:[%s2063] sm:$0x1]
      %v2066 = vlaneseq
      %v2067 = vshrl.u32 %v2066, 7
      %v2068 = vsub.s32 0, %v2067
      %v2069 = vrot.slane %v2064, %v2068
      %v2071 = vmul.f32 %v1567, %v2069
      %v2073 = vsel %vm1496, %v2071, 0
      %2075 = vmatprep.subr.mxu0 0.0
      %2076 = vmatpush1.xpose.msra.mxu0 %v1734
      %2077 = vmatprep.subr.mxu0 0.0
      %2078 = vmatpush1.xpose.msra.mxu0 0.0
      %2079 = vmatprep.subr.mxu0 0.0
      %2080 = vmatpush1.xpose.msra.mxu0 0.0
      %2081 = vmatprep.subr.mxu0 0.0
      %2082 = vmatpush1.xpose.msra.mxu0 0.0
      %2083 = vmatprep.subr.mxu0 0.0
      %2084 = vmatpush1.xpose.msra.mxu0 0.0
      %2085 = vmatprep.subr.mxu0 0.0
      %2086 = vmatpush1.xpose.msra.mxu0 0.0
      %2087 = vmatprep.subr.mxu0 0.0
      %2088 = vmatpush1.xpose.msra.mxu0 0.0
      %2089 = vmatprep.subr.mxu0 0.0
      %2090 = vmatpush1.xpose.msra.mxu0 0.0
      %2091 = vmatprep.subr.mxu0 0.0
      %2092 = vmatpush1.xpose.msra.mxu0 0.0
      %2093 = vmatprep.subr.mxu0 0.0
      %2094 = vmatpush1.xpose.msra.mxu0 0.0
      %2095 = vmatprep.subr.mxu0 0.0
      %2096 = vmatpush1.xpose.msra.mxu0 0.0
      %2097 = vmatprep.subr.mxu0 0.0
      %2098 = vmatpush1.xpose.msra.mxu0 0.0
      %2099 = vmatprep.subr.mxu0 0.0
      %2100 = vmatpush1.xpose.msra.mxu0 0.0
      %2101 = vmatprep.subr.mxu0 0.0
      %2102 = vmatpush1.xpose.msra.mxu0 0.0
      %2103 = vmatprep.subr.mxu0 0.0
      %2104 = vmatpush1.xpose.msra.mxu0 0.0
      %2105 = vmatprep.subr.mxu0 0.0
      %2106 = vmatpush1.xpose.msra.mxu0 0.0
      %2107 = vmatprep.subr.mxu0 0.0
      %2108 = vmatpush1.xpose.msra.mxu0 0.0
      %2109 = vmatprep.subr.mxu0 0.0
      %2110 = vmatpush1.xpose.msra.mxu0 0.0
      %2111 = vmatprep.subr.mxu0 0.0
      %2112 = vmatpush1.xpose.msra.mxu0 0.0
      %2113 = vmatprep.subr.mxu0 0.0
      %2114 = vmatpush1.xpose.msra.mxu0 0.0
      %2115 = vmatprep.subr.mxu0 0.0
      %2116 = vmatpush1.xpose.msra.mxu0 0.0
      %2117 = vmatprep.subr.mxu0 0.0
      %2118 = vmatpush1.xpose.msra.mxu0 0.0
      %2119 = vmatprep.subr.mxu0 0.0
      %2120 = vmatpush1.xpose.msra.mxu0 0.0
      %2121 = vmatprep.subr.mxu0 0.0
      %2122 = vmatpush1.xpose.msra.mxu0 0.0
      %2123 = vmatprep.subr.mxu0 0.0
      %2124 = vmatpush1.xpose.msra.mxu0 0.0
      %2125 = vmatprep.subr.mxu0 0.0
      %2126 = vmatpush1.xpose.msra.mxu0 0.0
      %2127 = vmatprep.subr.mxu0 0.0
      %2128 = vmatpush1.xpose.msra.mxu0 0.0
      %2129 = vmatprep.subr.mxu0 0.0
      %2130 = vmatpush1.xpose.msra.mxu0 0.0
      %2131 = vmatprep.subr.mxu0 0.0
      %2132 = vmatpush1.xpose.msra.mxu0 0.0
      %2133 = vmatprep.subr.mxu0 0.0
      %2134 = vmatpush1.xpose.msra.mxu0 0.0
      %2135 = vmatprep.subr.mxu0 0.0
      %2136 = vmatpush1.xpose.msra.mxu0 0.0
      %2137 = vmatprep.subr.mxu0 0.0
      %2138 = vmatpush1.xpose.msra.mxu0 0.0
      %2139 = vmatprep.mubr.f32.mxu0 0.0
      %2140 = vmatmul.mubr.f32.gmra.mrb[0].mxu0 %v2073
      %v2141 = vpop.f32.mrb[0].mxu0
      %v2142 = vadd.f32 0.0, %v2141
      %v2143 = vpop.f32.mrb[0].mxu0
      %2144 = vdwg.mxu0
      %v2145 = vmul.f32 %v2142, 0.35355338
      %v2146 = vadd.f32 %v2145, %v1489
      %v2147 = vsel %vm1808, %v2146, -inf
      %2148 = vmax.xlane.f32.xlu0 %v2147
      %v2149 = vpop.xlane.xlu0 %2148
      %v2150 = vsub.f32 %v2146, %v2149
      %v2151 = vmul.f32 %v2150, 1.442695
      %v2152 = vpow.pop %v2151
      %v2153 = vsel %vm1808, %v2152, 0.0
      %2154 = vadd.xlane.f32.xlu0 %v2153
      %v2155 = vpop.xlane.xlu0 %2154
      %v2156 = vrcp.pop %v2155
      %v2157 = vmul.f32 %v2152, %v2156
      %v2158 = vmul.f32 %v1719, %v2069
      %v2160 = vsel %vm1808, %v2157, 0
      %2162 = vmatprep.subr.mxu0 0.0
      %2163 = vmatpush1.msra.mxu0 %v2158
      %2164 = vmatprep.subr.mxu0 0.0
      %2165 = vmatpush1.msra.mxu0 0.0
      %2166 = vmatprep.subr.mxu0 0.0
      %2167 = vmatpush1.msra.mxu0 0.0
      %2168 = vmatprep.subr.mxu0 0.0
      %2169 = vmatpush1.msra.mxu0 0.0
      %2170 = vmatprep.subr.mxu0 0.0
      %2171 = vmatpush1.msra.mxu0 0.0
      %2172 = vmatprep.subr.mxu0 0.0
      %2173 = vmatpush1.msra.mxu0 0.0
      %2174 = vmatprep.subr.mxu0 0.0
      %2175 = vmatpush1.msra.mxu0 0.0
      %2176 = vmatprep.subr.mxu0 0.0
      %2177 = vmatpush1.msra.mxu0 0.0
      %2178 = vmatprep.subr.mxu0 0.0
      %2179 = vmatpush1.msra.mxu0 0.0
      %2180 = vmatprep.subr.mxu0 0.0
      %2181 = vmatpush1.msra.mxu0 0.0
      %2182 = vmatprep.subr.mxu0 0.0
      %2183 = vmatpush1.msra.mxu0 0.0
      %2184 = vmatprep.subr.mxu0 0.0
      %2185 = vmatpush1.msra.mxu0 0.0
      %2186 = vmatprep.subr.mxu0 0.0
      %2187 = vmatpush1.msra.mxu0 0.0
      %2188 = vmatprep.subr.mxu0 0.0
      %2189 = vmatpush1.msra.mxu0 0.0
      %2190 = vmatprep.subr.mxu0 0.0
      %2191 = vmatpush1.msra.mxu0 0.0
      %2192 = vmatprep.subr.mxu0 0.0
      %2193 = vmatpush1.msra.mxu0 0.0
      %2194 = vmatprep.subr.mxu0 0.0
      %2195 = vmatpush1.msra.mxu0 0.0
      %2196 = vmatprep.subr.mxu0 0.0
      %2197 = vmatpush1.msra.mxu0 0.0
      %2198 = vmatprep.subr.mxu0 0.0
      %2199 = vmatpush1.msra.mxu0 0.0
      %2200 = vmatprep.subr.mxu0 0.0
      %2201 = vmatpush1.msra.mxu0 0.0
      %2202 = vmatprep.subr.mxu0 0.0
      %2203 = vmatpush1.msra.mxu0 0.0
      %2204 = vmatprep.subr.mxu0 0.0
      %2205 = vmatpush1.msra.mxu0 0.0
      %2206 = vmatprep.subr.mxu0 0.0
      %2207 = vmatpush1.msra.mxu0 0.0
      %2208 = vmatprep.subr.mxu0 0.0
      %2209 = vmatpush1.msra.mxu0 0.0
      %2210 = vmatprep.subr.mxu0 0.0
      %2211 = vmatpush1.msra.mxu0 0.0
      %2212 = vmatprep.subr.mxu0 0.0
      %2213 = vmatpush1.msra.mxu0 0.0
      %2214 = vmatprep.subr.mxu0 0.0
      %2215 = vmatpush1.msra.mxu0 0.0
      %2216 = vmatprep.subr.mxu0 0.0
      %2217 = vmatpush1.msra.mxu0 0.0
      %2218 = vmatprep.subr.mxu0 0.0
      %2219 = vmatpush1.msra.mxu0 0.0
      %2220 = vmatprep.subr.mxu0 0.0
      %2221 = vmatpush1.msra.mxu0 0.0
      %2222 = vmatprep.subr.mxu0 0.0
      %2223 = vmatpush1.msra.mxu0 0.0
      %2224 = vmatprep.subr.mxu0 0.0
      %2225 = vmatpush1.msra.mxu0 0.0
      %2226 = vmatprep.mubr.f32.mxu0 0.0
      %2227 = vmatmul.mubr.f32.gmra.mrb[0].mxu0 %v2160
      %v2228 = vpop.f32.mrb[0].mxu0
      %v2229 = vadd.f32 0.0, %v2228
      %v2230 = vpop.f32.mrb[0].mxu0
      %2231 = vdwg.mxu0
      %v2232 = vadd.f32 %v2060, %v2229
      %s2233 = scalar_lea.vmem %s9, 3
      %v2234 = vld [vmem:[%s2233] sm:$0x1]
      %v2236 = vlaneseq
      %v2237 = vshrl.u32 %v2236, 7
      %v2238 = vsub.s32 0, %v2237
      %v2239 = vrot.slane %v2234, %v2238
      %v2241 = vmul.f32 %v1567, %v2239
      %v2243 = vsel %vm1496, %v2241, 0
      %2245 = vmatprep.subr.mxu0 0.0
      %2246 = vmatpush1.xpose.msra.mxu0 %v1734
      %2247 = vmatprep.subr.mxu0 0.0
      %2248 = vmatpush1.xpose.msra.mxu0 0.0
      %2249 = vmatprep.subr.mxu0 0.0
      %2250 = vmatpush1.xpose.msra.mxu0 0.0
      %2251 = vmatprep.subr.mxu0 0.0
      %2252 = vmatpush1.xpose.msra.mxu0 0.0
      %2253 = vmatprep.subr.mxu0 0.0
      %2254 = vmatpush1.xpose.msra.mxu0 0.0
      %2255 = vmatprep.subr.mxu0 0.0
      %2256 = vmatpush1.xpose.msra.mxu0 0.0
      %2257 = vmatprep.subr.mxu0 0.0
      %2258 = vmatpush1.xpose.msra.mxu0 0.0
      %2259 = vmatprep.subr.mxu0 0.0
      %2260 = vmatpush1.xpose.msra.mxu0 0.0
      %2261 = vmatprep.subr.mxu0 0.0
      %2262 = vmatpush1.xpose.msra.mxu0 0.0
      %2263 = vmatprep.subr.mxu0 0.0
      %2264 = vmatpush1.xpose.msra.mxu0 0.0
      %2265 = vmatprep.subr.mxu0 0.0
      %2266 = vmatpush1.xpose.msra.mxu0 0.0
      %2267 = vmatprep.subr.mxu0 0.0
      %2268 = vmatpush1.xpose.msra.mxu0 0.0
      %2269 = vmatprep.subr.mxu0 0.0
      %2270 = vmatpush1.xpose.msra.mxu0 0.0
      %2271 = vmatprep.subr.mxu0 0.0
      %2272 = vmatpush1.xpose.msra.mxu0 0.0
      %2273 = vmatprep.subr.mxu0 0.0
      %2274 = vmatpush1.xpose.msra.mxu0 0.0
      %2275 = vmatprep.subr.mxu0 0.0
      %2276 = vmatpush1.xpose.msra.mxu0 0.0
      %2277 = vmatprep.subr.mxu0 0.0
      %2278 = vmatpush1.xpose.msra.mxu0 0.0
      %2279 = vmatprep.subr.mxu0 0.0
      %2280 = vmatpush1.xpose.msra.mxu0 0.0
      %2281 = vmatprep.subr.mxu0 0.0
      %2282 = vmatpush1.xpose.msra.mxu0 0.0
      %2283 = vmatprep.subr.mxu0 0.0
      %2284 = vmatpush1.xpose.msra.mxu0 0.0
      %2285 = vmatprep.subr.mxu0 0.0
      %2286 = vmatpush1.xpose.msra.mxu0 0.0
      %2287 = vmatprep.subr.mxu0 0.0
      %2288 = vmatpush1.xpose.msra.mxu0 0.0
      %2289 = vmatprep.subr.mxu0 0.0
      %2290 = vmatpush1.xpose.msra.mxu0 0.0
      %2291 = vmatprep.subr.mxu0 0.0
      %2292 = vmatpush1.xpose.msra.mxu0 0.0
      %2293 = vmatprep.subr.mxu0 0.0
      %2294 = vmatpush1.xpose.msra.mxu0 0.0
      %2295 = vmatprep.subr.mxu0 0.0
      %2296 = vmatpush1.xpose.msra.mxu0 0.0
      %2297 = vmatprep.subr.mxu0 0.0
      %2298 = vmatpush1.xpose.msra.mxu0 0.0
      %2299 = vmatprep.subr.mxu0 0.0
      %2300 = vmatpush1.xpose.msra.mxu0 0.0
      %2301 = vmatprep.subr.mxu0 0.0
      %2302 = vmatpush1.xpose.msra.mxu0 0.0
      %2303 = vmatprep.subr.mxu0 0.0
      %2304 = vmatpush1.xpose.msra.mxu0 0.0
      %2305 = vmatprep.subr.mxu0 0.0
      %2306 = vmatpush1.xpose.msra.mxu0 0.0
      %2307 = vmatprep.subr.mxu0 0.0
      %2308 = vmatpush1.xpose.msra.mxu0 0.0
      %2309 = vmatprep.mubr.f32.mxu0 0.0
      %2310 = vmatmul.mubr.f32.gmra.mrb[0].mxu0 %v2243
      %v2311 = vpop.f32.mrb[0].mxu0
      %v2312 = vadd.f32 0.0, %v2311
      %v2313 = vpop.f32.mrb[0].mxu0
      %2314 = vdwg.mxu0
      %v2315 = vmul.f32 %v2312, 0.35355338
      %v2316 = vadd.f32 %v2315, %v1489
      %v2317 = vsel %vm1808, %v2316, -inf
      %2318 = vmax.xlane.f32.xlu0 %v2317
      %v2319 = vpop.xlane.xlu0 %2318
      %v2320 = vsub.f32 %v2316, %v2319
      %v2321 = vmul.f32 %v2320, 1.442695
      %v2322 = vpow.pop %v2321
      %v2323 = vsel %vm1808, %v2322, 0.0
      %2324 = vadd.xlane.f32.xlu0 %v2323
      %v2325 = vpop.xlane.xlu0 %2324
      %v2326 = vrcp.pop %v2325
      %v2327 = vmul.f32 %v2322, %v2326
      %v2328 = vmul.f32 %v1719, %v2239
      %v2330 = vsel %vm1808, %v2327, 0
      %2332 = vmatprep.subr.mxu0 0.0
      %2333 = vmatpush1.msra.mxu0 %v2328
      %2334 = vmatprep.subr.mxu0 0.0
      %2335 = vmatpush1.msra.mxu0 0.0
      %2336 = vmatprep.subr.mxu0 0.0
      %2337 = vmatpush1.msra.mxu0 0.0
      %2338 = vmatprep.subr.mxu0 0.0
      %2339 = vmatpush1.msra.mxu0 0.0
      %2340 = vmatprep.subr.mxu0 0.0
      %2341 = vmatpush1.msra.mxu0 0.0
      %2342 = vmatprep.subr.mxu0 0.0
      %2343 = vmatpush1.msra.mxu0 0.0
      %2344 = vmatprep.subr.mxu0 0.0
      %2345 = vmatpush1.msra.mxu0 0.0
      %2346 = vmatprep.subr.mxu0 0.0
      %2347 = vmatpush1.msra.mxu0 0.0
      %2348 = vmatprep.subr.mxu0 0.0
      %2349 = vmatpush1.msra.mxu0 0.0
      %2350 = vmatprep.subr.mxu0 0.0
      %2351 = vmatpush1.msra.mxu0 0.0
      %2352 = vmatprep.subr.mxu0 0.0
      %2353 = vmatpush1.msra.mxu0 0.0
      %2354 = vmatprep.subr.mxu0 0.0
      %2355 = vmatpush1.msra.mxu0 0.0
      %2356 = vmatprep.subr.mxu0 0.0
      %2357 = vmatpush1.msra.mxu0 0.0
      %2358 = vmatprep.subr.mxu0 0.0
      %2359 = vmatpush1.msra.mxu0 0.0
      %2360 = vmatprep.subr.mxu0 0.0
      %2361 = vmatpush1.msra.mxu0 0.0
      %2362 = vmatprep.subr.mxu0 0.0
      %2363 = vmatpush1.msra.mxu0 0.0
      %2364 = vmatprep.subr.mxu0 0.0
      %2365 = vmatpush1.msra.mxu0 0.0
      %2366 = vmatprep.subr.mxu0 0.0
      %2367 = vmatpush1.msra.mxu0 0.0
      %2368 = vmatprep.subr.mxu0 0.0
      %2369 = vmatpush1.msra.mxu0 0.0
      %2370 = vmatprep.subr.mxu0 0.0
      %2371 = vmatpush1.msra.mxu0 0.0
      %2372 = vmatprep.subr.mxu0 0.0
      %2373 = vmatpush1.msra.mxu0 0.0
      %2374 = vmatprep.subr.mxu0 0.0
      %2375 = vmatpush1.msra.mxu0 0.0
      %2376 = vmatprep.subr.mxu0 0.0
      %2377 = vmatpush1.msra.mxu0 0.0
      %2378 = vmatprep.subr.mxu0 0.0
      %2379 = vmatpush1.msra.mxu0 0.0
      %2380 = vmatprep.subr.mxu0 0.0
      %2381 = vmatpush1.msra.mxu0 0.0
      %2382 = vmatprep.subr.mxu0 0.0
      %2383 = vmatpush1.msra.mxu0 0.0
      %2384 = vmatprep.subr.mxu0 0.0
      %2385 = vmatpush1.msra.mxu0 0.0
      %2386 = vmatprep.subr.mxu0 0.0
      %2387 = vmatpush1.msra.mxu0 0.0
      %2388 = vmatprep.subr.mxu0 0.0
      %2389 = vmatpush1.msra.mxu0 0.0
      %2390 = vmatprep.subr.mxu0 0.0
      %2391 = vmatpush1.msra.mxu0 0.0
      %2392 = vmatprep.subr.mxu0 0.0
      %2393 = vmatpush1.msra.mxu0 0.0
      %2394 = vmatprep.subr.mxu0 0.0
      %2395 = vmatpush1.msra.mxu0 0.0
      %2396 = vmatprep.mubr.f32.mxu0 0.0
      %2397 = vmatmul.mubr.f32.gmra.mrb[0].mxu0 %v2330
      %v2398 = vpop.f32.mrb[0].mxu0
      %v2399 = vadd.f32 0.0, %v2398
      %v2400 = vpop.f32.mrb[0].mxu0
      %2401 = vdwg.mxu0
      %v2402 = vadd.f32 %v2232, %v2399
      %v2404 = vlaneseq
      %v2405 = vshrl.u32 %v2404, 7
      %v2406 = vsub.s32 0, %v2405
      %v2407 = vrot.slane %v1488, %v2406
      %v2410 = vsel %vm1496, %v2402, 0
      %2412 = vmatprep.subr.mxu0 0.0
      %2413 = vmatpush1.msra.mxu0 %v1484
      %2414 = vmatprep.subr.mxu0 0.0
      %2415 = vmatpush1.msra.mxu0 %v1485
      %2416 = vmatprep.subr.mxu0 0.0
      %2417 = vmatpush1.msra.mxu0 %v1486
      %2418 = vmatprep.subr.mxu0 0.0
      %2419 = vmatpush1.msra.mxu0 %v1487
      %2420 = vmatprep.subr.mxu0 0.0
      %2421 = vmatpush1.msra.mxu0 0.0
      %2422 = vmatprep.subr.mxu0 0.0
      %2423 = vmatpush1.msra.mxu0 0.0
      %2424 = vmatprep.subr.mxu0 0.0
      %2425 = vmatpush1.msra.mxu0 0.0
      %2426 = vmatprep.subr.mxu0 0.0
      %2427 = vmatpush1.msra.mxu0 0.0
      %2428 = vmatprep.subr.mxu0 0.0
      %2429 = vmatpush1.msra.mxu0 0.0
      %2430 = vmatprep.subr.mxu0 0.0
      %2431 = vmatpush1.msra.mxu0 0.0
      %2432 = vmatprep.subr.mxu0 0.0
      %2433 = vmatpush1.msra.mxu0 0.0
      %2434 = vmatprep.subr.mxu0 0.0
      %2435 = vmatpush1.msra.mxu0 0.0
      %2436 = vmatprep.subr.mxu0 0.0
      %2437 = vmatpush1.msra.mxu0 0.0
      %2438 = vmatprep.subr.mxu0 0.0
      %2439 = vmatpush1.msra.mxu0 0.0
      %2440 = vmatprep.subr.mxu0 0.0
      %2441 = vmatpush1.msra.mxu0 0.0
      %2442 = vmatprep.subr.mxu0 0.0
      %2443 = vmatpush1.msra.mxu0 0.0
      %2444 = vmatprep.subr.mxu0 0.0
      %2445 = vmatpush1.msra.mxu0 0.0
      %2446 = vmatprep.subr.mxu0 0.0
      %2447 = vmatpush1.msra.mxu0 0.0
      %2448 = vmatprep.subr.mxu0 0.0
      %2449 = vmatpush1.msra.mxu0 0.0
      %2450 = vmatprep.subr.mxu0 0.0
      %2451 = vmatpush1.msra.mxu0 0.0
      %2452 = vmatprep.subr.mxu0 0.0
      %2453 = vmatpush1.msra.mxu0 0.0
      %2454 = vmatprep.subr.mxu0 0.0
      %2455 = vmatpush1.msra.mxu0 0.0
      %2456 = vmatprep.subr.mxu0 0.0
      %2457 = vmatpush1.msra.mxu0 0.0
      %2458 = vmatprep.subr.mxu0 0.0
      %2459 = vmatpush1.msra.mxu0 0.0
      %2460 = vmatprep.subr.mxu0 0.0
      %2461 = vmatpush1.msra.mxu0 0.0
      %2462 = vmatprep.subr.mxu0 0.0
      %2463 = vmatpush1.msra.mxu0 0.0
      %2464 = vmatprep.subr.mxu0 0.0
      %2465 = vmatpush1.msra.mxu0 0.0
      %2466 = vmatprep.subr.mxu0 0.0
      %2467 = vmatpush1.msra.mxu0 0.0
      %2468 = vmatprep.subr.mxu0 0.0
      %2469 = vmatpush1.msra.mxu0 0.0
      %2470 = vmatprep.subr.mxu0 0.0
      %2471 = vmatpush1.msra.mxu0 0.0
      %2472 = vmatprep.subr.mxu0 0.0
      %2473 = vmatpush1.msra.mxu0 0.0
      %2474 = vmatprep.subr.mxu0 0.0
      %2475 = vmatpush1.msra.mxu0 0.0
      %2476 = vmatprep.mubr.f32.mxu0 0.0
      %2477 = vmatmul.mubr.f32.gmra.mrb[0].mxu0 %v2410
      %v2478 = vpop.f32.mrb[0].mxu0
      %v2479 = vadd.f32 %v2407, %v2478
      %v2480 = vpop.f32.mrb[0].mxu0
      %2481 = vdwg.mxu0
      %v2482 = vadd.f32 %v1467, %v2479
      %v2483 = vld [vmem:[%s1396] sm:$0x1]
      %v2484 = vld [vmem:[%s1399] sm:$0x1]
      %v2485 = vsel %vm1496, %v2482, 0.0
      %2486 = vadd.xlane.f32.xlu0 %v2485
      %v2487 = vpop.xlane.xlu0 %2486
      %v2488 = vrcp.pop 32.0
      %v2489 = vmul.f32 %v2487, %v2488
      %v2490 = vsub.f32 %v2482, %v2489
      %v2491 = vmul.f32 %v2490, %v2490
      %v2492 = vsel %vm1496, %v2491, 0.0
      %2493 = vadd.xlane.f32.xlu0 %v2492
      %v2494 = vpop.xlane.xlu0 %2493
      %v2495 = vmul.f32 %v2494, %v2488
      %v2496 = vadd.f32 %v2495, 1e-05
      %v2497 = vrsqrt.pop %v2496
      %v2498 = vmul.f32 %v2490, %v2497
      %v2500 = vlaneseq
      %v2501 = vshrl.u32 %v2500, 7
      %v2502 = vsub.s32 0, %v2501
      %v2503 = vrot.slane %v2483, %v2502
      %v2505 = vmul.f32 %v2498, %v2503
      %v2507 = vlaneseq
      %v2508 = vshrl.u32 %v2507, 7
      %v2509 = vsub.s32 0, %v2508
      %v2510 = vrot.slane %v2484, %v2509
      %v2512 = vadd.f32 %v2505, %v2510
      %v2513 = vld [vmem:[%s1404] sm:$0xff]
      %v2514 = vld [vmem:[%s1404 + $0x8] sm:$0xff]
      %v2515 = vld [vmem:[%s1404 + $0x10] sm:$0xff]
      %v2516 = vld [vmem:[%s1404 + $0x18] sm:$0xff]
      %v2517 = vld [vmem:[%s1407] sm:$0x1]
      %v2518 = vld [vmem:[%s1412] sm:$0xff]
      %v2519 = vld [vmem:[%s1412 + $0x8] sm:$0xff]
      %v2520 = vld [vmem:[%s1412 + $0x10] sm:$0xff]
      %v2521 = vld [vmem:[%s1412 + $0x18] sm:$0xff]
      %v2522 = vld [vmem:[%s1415] sm:$0x1]
      %v2523 = vld [vmem:[%s1420] sm:$0xff]
      %v2524 = vld [vmem:[%s1420 + $0x8] sm:$0xff]
      %v2525 = vld [vmem:[%s1420 + $0x10] sm:$0xff]
      %v2526 = vld [vmem:[%s1420 + $0x18] sm:$0xff]
      %v2527 = vld [vmem:[%s1423] sm:$0x1]
      %v2528 = vld [vmem:[%s1428] sm:$0xff]
      %v2529 = vld [vmem:[%s1428 + $0x8] sm:$0xff]
      %v2530 = vld [vmem:[%s1428 + $0x10] sm:$0xff]
      %v2531 = vld [vmem:[%s1428 + $0x18] sm:$0xff]
      %v2532 = vld [vmem:[%s1431] sm:$0x1]
      %v2533 = vld [vmem:[%s7] sm:$0xff]
      %v2535 = vlaneseq
      %v2536 = vshrl.u32 %v2535, 7
      %v2537 = vsub.s32 0, %v2536
      %v2538 = vrot.slane %v2517, %v2537
      %v2541 = vsel %vm1496, %v2512, 0
      %2543 = vmatprep.subr.mxu0 0.0
      %2544 = vmatpush1.msra.mxu0 %v2513
      %2545 = vmatprep.subr.mxu0 0.0
      %2546 = vmatpush1.msra.mxu0 %v2514
      %2547 = vmatprep.subr.mxu0 0.0
      %2548 = vmatpush1.msra.mxu0 %v2515
      %2549 = vmatprep.subr.mxu0 0.0
      %2550 = vmatpush1.msra.mxu0 %v2516
      %2551 = vmatprep.subr.mxu0 0.0
      %2552 = vmatpush1.msra.mxu0 0.0
      %2553 = vmatprep.subr.mxu0 0.0
      %2554 = vmatpush1.msra.mxu0 0.0
      %2555 = vmatprep.subr.mxu0 0.0
      %2556 = vmatpush1.msra.mxu0 0.0
      %2557 = vmatprep.subr.mxu0 0.0
      %2558 = vmatpush1.msra.mxu0 0.0
      %2559 = vmatprep.subr.mxu0 0.0
      %2560 = vmatpush1.msra.mxu0 0.0
      %2561 = vmatprep.subr.mxu0 0.0
      %2562 = vmatpush1.msra.mxu0 0.0
      %2563 = vmatprep.subr.mxu0 0.0
      %2564 = vmatpush1.msra.mxu0 0.0
      %2565 = vmatprep.subr.mxu0 0.0
      %2566 = vmatpush1.msra.mxu0 0.0
      %2567 = vmatprep.subr.mxu0 0.0
      %2568 = vmatpush1.msra.mxu0 0.0
      %2569 = vmatprep.subr.mxu0 0.0
      %2570 = vmatpush1.msra.mxu0 0.0
      %2571 = vmatprep.subr.mxu0 0.0
      %2572 = vmatpush1.msra.mxu0 0.0
      %2573 = vmatprep.subr.mxu0 0.0
      %2574 = vmatpush1.msra.mxu0 0.0
      %2575 = vmatprep.subr.mxu0 0.0
      %2576 = vmatpush1.msra.mxu0 0.0
      %2577 = vmatprep.subr.mxu0 0.0
      %2578 = vmatpush1.msra.mxu0 0.0
      %2579 = vmatprep.subr.mxu0 0.0
      %2580 = vmatpush1.msra.mxu0 0.0
      %2581 = vmatprep.subr.mxu0 0.0
      %2582 = vmatpush1.msra.mxu0 0.0
      %2583 = vmatprep.subr.mxu0 0.0
      %2584 = vmatpush1.msra.mxu0 0.0
      %2585 = vmatprep.subr.mxu0 0.0
      %2586 = vmatpush1.msra.mxu0 0.0
      %2587 = vmatprep.subr.mxu0 0.0
      %2588 = vmatpush1.msra.mxu0 0.0
      %2589 = vmatprep.subr.mxu0 0.0
      %2590 = vmatpush1.msra.mxu0 0.0
      %2591 = vmatprep.subr.mxu0 0.0
      %2592 = vmatpush1.msra.mxu0 0.0
      %2593 = vmatprep.subr.mxu0 0.0
      %2594 = vmatpush1.msra.mxu0 0.0
      %2595 = vmatprep.subr.mxu0 0.0
      %2596 = vmatpush1.msra.mxu0 0.0
      %2597 = vmatprep.subr.mxu0 0.0
      %2598 = vmatpush1.msra.mxu0 0.0
      %2599 = vmatprep.subr.mxu0 0.0
      %2600 = vmatpush1.msra.mxu0 0.0
      %2601 = vmatprep.subr.mxu0 0.0
      %2602 = vmatpush1.msra.mxu0 0.0
      %2603 = vmatprep.subr.mxu0 0.0
      %2604 = vmatpush1.msra.mxu0 0.0
      %2605 = vmatprep.subr.mxu0 0.0
      %2606 = vmatpush1.msra.mxu0 0.0
      %2607 = vmatprep.mubr.f32.mxu0 0.0
      %2608 = vmatmul.mubr.f32.gmra.mrb[0].mxu0 %v2541
      %v2609 = vpop.f32.mrb[0].mxu0
      %v2610 = vadd.f32 %v2538, %v2609
      %v2611 = vpop.f32.mrb[0].mxu0
      %2612 = vdwg.mxu0
      %v2614 = vlaneseq
      %v2615 = vshrl.u32 %v2614, 7
      %v2616 = vsub.s32 0, %v2615
      %v2617 = vrot.slane %v2522, %v2616
      %v2620 = vsel %vm1496, %v1468, 0
      %2622 = vmatprep.subr.mxu0 0.0
      %2623 = vmatpush1.msra.mxu0 %v2518
      %2624 = vmatprep.subr.mxu0 0.0
      %2625 = vmatpush1.msra.mxu0 %v2519
      %2626 = vmatprep.subr.mxu0 0.0
      %2627 = vmatpush1.msra.mxu0 %v2520
      %2628 = vmatprep.subr.mxu0 0.0
      %2629 = vmatpush1.msra.mxu0 %v2521
      %2630 = vmatprep.subr.mxu0 0.0
      %2631 = vmatpush1.msra.mxu0 0.0
      %2632 = vmatprep.subr.mxu0 0.0
      %2633 = vmatpush1.msra.mxu0 0.0
      %2634 = vmatprep.subr.mxu0 0.0
      %2635 = vmatpush1.msra.mxu0 0.0
      %2636 = vmatprep.subr.mxu0 0.0
      %2637 = vmatpush1.msra.mxu0 0.0
      %2638 = vmatprep.subr.mxu0 0.0
      %2639 = vmatpush1.msra.mxu0 0.0
      %2640 = vmatprep.subr.mxu0 0.0
      %2641 = vmatpush1.msra.mxu0 0.0
      %2642 = vmatprep.subr.mxu0 0.0
      %2643 = vmatpush1.msra.mxu0 0.0
      %2644 = vmatprep.subr.mxu0 0.0
      %2645 = vmatpush1.msra.mxu0 0.0
      %2646 = vmatprep.subr.mxu0 0.0
      %2647 = vmatpush1.msra.mxu0 0.0
      %2648 = vmatprep.subr.mxu0 0.0
      %2649 = vmatpush1.msra.mxu0 0.0
      %2650 = vmatprep.subr.mxu0 0.0
      %2651 = vmatpush1.msra.mxu0 0.0
      %2652 = vmatprep.subr.mxu0 0.0
      %2653 = vmatpush1.msra.mxu0 0.0
      %2654 = vmatprep.subr.mxu0 0.0
      %2655 = vmatpush1.msra.mxu0 0.0
      %2656 = vmatprep.subr.mxu0 0.0
      %2657 = vmatpush1.msra.mxu0 0.0
      %2658 = vmatprep.subr.mxu0 0.0
      %2659 = vmatpush1.msra.mxu0 0.0
      %2660 = vmatprep.subr.mxu0 0.0
      %2661 = vmatpush1.msra.mxu0 0.0
      %2662 = vmatprep.subr.mxu0 0.0
      %2663 = vmatpush1.msra.mxu0 0.0
      %2664 = vmatprep.subr.mxu0 0.0
      %2665 = vmatpush1.msra.mxu0 0.0
      %2666 = vmatprep.subr.mxu0 0.0
      %2667 = vmatpush1.msra.mxu0 0.0
      %2668 = vmatprep.subr.mxu0 0.0
      %2669 = vmatpush1.msra.mxu0 0.0
      %2670 = vmatprep.subr.mxu0 0.0
      %2671 = vmatpush1.msra.mxu0 0.0
      %2672 = vmatprep.subr.mxu0 0.0
      %2673 = vmatpush1.msra.mxu0 0.0
      %2674 = vmatprep.subr.mxu0 0.0
      %2675 = vmatpush1.msra.mxu0 0.0
      %2676 = vmatprep.subr.mxu0 0.0
      %2677 = vmatpush1.msra.mxu0 0.0
      %2678 = vmatprep.subr.mxu0 0.0
      %2679 = vmatpush1.msra.mxu0 0.0
      %2680 = vmatprep.subr.mxu0 0.0
      %2681 = vmatpush1.msra.mxu0 0.0
      %2682 = vmatprep.subr.mxu0 0.0
      %2683 = vmatpush1.msra.mxu0 0.0
      %2684 = vmatprep.subr.mxu0 0.0
      %2685 = vmatpush1.msra.mxu0 0.0
      %2686 = vmatprep.mubr.f32.mxu0 0.0
      %2687 = vmatmul.mubr.f32.gmra.mrb[0].mxu0 %v2620
      %v2688 = vpop.f32.mrb[0].mxu0
      %v2689 = vadd.f32 %v2617, %v2688
      %v2690 = vpop.f32.mrb[0].mxu0
      %2691 = vdwg.mxu0
      %v2693 = vlaneseq
      %v2694 = vshrl.u32 %v2693, 7
      %v2695 = vsub.s32 0, %v2694
      %v2696 = vrot.slane %v2527, %v2695
      %2698 = vmatprep.subr.mxu0 0.0
      %2699 = vmatpush1.msra.mxu0 %v2523
      %2700 = vmatprep.subr.mxu0 0.0
      %2701 = vmatpush1.msra.mxu0 %v2524
      %2702 = vmatprep.subr.mxu0 0.0
      %2703 = vmatpush1.msra.mxu0 %v2525
      %2704 = vmatprep.subr.mxu0 0.0
      %2705 = vmatpush1.msra.mxu0 %v2526
      %2706 = vmatprep.subr.mxu0 0.0
      %2707 = vmatpush1.msra.mxu0 0.0
      %2708 = vmatprep.subr.mxu0 0.0
      %2709 = vmatpush1.msra.mxu0 0.0
      %2710 = vmatprep.subr.mxu0 0.0
      %2711 = vmatpush1.msra.mxu0 0.0
      %2712 = vmatprep.subr.mxu0 0.0
      %2713 = vmatpush1.msra.mxu0 0.0
      %2714 = vmatprep.subr.mxu0 0.0
      %2715 = vmatpush1.msra.mxu0 0.0
      %2716 = vmatprep.subr.mxu0 0.0
      %2717 = vmatpush1.msra.mxu0 0.0
      %2718 = vmatprep.subr.mxu0 0.0
      %2719 = vmatpush1.msra.mxu0 0.0
      %2720 = vmatprep.subr.mxu0 0.0
      %2721 = vmatpush1.msra.mxu0 0.0
      %2722 = vmatprep.subr.mxu0 0.0
      %2723 = vmatpush1.msra.mxu0 0.0
      %2724 = vmatprep.subr.mxu0 0.0
      %2725 = vmatpush1.msra.mxu0 0.0
      %2726 = vmatprep.subr.mxu0 0.0
      %2727 = vmatpush1.msra.mxu0 0.0
      %2728 = vmatprep.subr.mxu0 0.0
      %2729 = vmatpush1.msra.mxu0 0.0
      %2730 = vmatprep.subr.mxu0 0.0
      %2731 = vmatpush1.msra.mxu0 0.0
      %2732 = vmatprep.subr.mxu0 0.0
      %2733 = vmatpush1.msra.mxu0 0.0
      %2734 = vmatprep.subr.mxu0 0.0
      %2735 = vmatpush1.msra.mxu0 0.0
      %2736 = vmatprep.subr.mxu0 0.0
      %2737 = vmatpush1.msra.mxu0 0.0
      %2738 = vmatprep.subr.mxu0 0.0
      %2739 = vmatpush1.msra.mxu0 0.0
      %2740 = vmatprep.subr.mxu0 0.0
      %2741 = vmatpush1.msra.mxu0 0.0
      %2742 = vmatprep.subr.mxu0 0.0
      %2743 = vmatpush1.msra.mxu0 0.0
      %2744 = vmatprep.subr.mxu0 0.0
      %2745 = vmatpush1.msra.mxu0 0.0
      %2746 = vmatprep.subr.mxu0 0.0
      %2747 = vmatpush1.msra.mxu0 0.0
      %2748 = vmatprep.subr.mxu0 0.0
      %2749 = vmatpush1.msra.mxu0 0.0
      %2750 = vmatprep.subr.mxu0 0.0
      %2751 = vmatpush1.msra.mxu0 0.0
      %2752 = vmatprep.subr.mxu0 0.0
      %2753 = vmatpush1.msra.mxu0 0.0
      %2754 = vmatprep.subr.mxu0 0.0
      %2755 = vmatpush1.msra.mxu0 0.0
      %2756 = vmatprep.subr.mxu0 0.0
      %2757 = vmatpush1.msra.mxu0 0.0
      %2758 = vmatprep.subr.mxu0 0.0
      %2759 = vmatpush1.msra.mxu0 0.0
      %2760 = vmatprep.subr.mxu0 0.0
      %2761 = vmatpush1.msra.mxu0 0.0
      %2762 = vmatprep.mubr.f32.mxu0 0.0
      %2763 = vmatmul.mubr.f32.gmra.mrb[0].mxu0 %v2620
      %v2764 = vpop.f32.mrb[0].mxu0
      %v2765 = vadd.f32 %v2696, %v2764
      %v2766 = vpop.f32.mrb[0].mxu0
      %2767 = vdwg.mxu0
      %v2768 = vmul.f32 %v2610, %v1727
      %v2770 = vsel %vm1496, %v2768, 0
      %v2773 = vsel %vm1496, %v2689, 0
      %2775 = vmatprep.subr.mxu0 0.0
      %2776 = vmatpush1.xpose.msra.mxu0 %v2773
      %2777 = vmatprep.subr.mxu0 0.0
      %2778 = vmatpush1.xpose.msra.mxu0 0.0
      %2779 = vmatprep.subr.mxu0 0.0
      %2780 = vmatpush1.xpose.msra.mxu0 0.0
      %2781 = vmatprep.subr.mxu0 0.0
      %2782 = vmatpush1.xpose.msra.mxu0 0.0
      %2783 = vmatprep.subr.mxu0 0.0
      %2784 = vmatpush1.xpose.msra.mxu0 0.0
      %2785 = vmatprep.subr.mxu0 0.0
      %2786 = vmatpush1.xpose.msra.mxu0 0.0
      %2787 = vmatprep.subr.mxu0 0.0
      %2788 = vmatpush1.xpose.msra.mxu0 0.0
      %2789 = vmatprep.subr.mxu0 0.0
      %2790 = vmatpush1.xpose.msra.mxu0 0.0
      %2791 = vmatprep.subr.mxu0 0.0
      %2792 = vmatpush1.xpose.msra.mxu0 0.0
      %2793 = vmatprep.subr.mxu0 0.0
      %2794 = vmatpush1.xpose.msra.mxu0 0.0
      %2795 = vmatprep.subr.mxu0 0.0
      %2796 = vmatpush1.xpose.msra.mxu0 0.0
      %2797 = vmatprep.subr.mxu0 0.0
      %2798 = vmatpush1.xpose.msra.mxu0 0.0
      %2799 = vmatprep.subr.mxu0 0.0
      %2800 = vmatpush1.xpose.msra.mxu0 0.0
      %2801 = vmatprep.subr.mxu0 0.0
      %2802 = vmatpush1.xpose.msra.mxu0 0.0
      %2803 = vmatprep.subr.mxu0 0.0
      %2804 = vmatpush1.xpose.msra.mxu0 0.0
      %2805 = vmatprep.subr.mxu0 0.0
      %2806 = vmatpush1.xpose.msra.mxu0 0.0
      %2807 = vmatprep.subr.mxu0 0.0
      %2808 = vmatpush1.xpose.msra.mxu0 0.0
      %2809 = vmatprep.subr.mxu0 0.0
      %2810 = vmatpush1.xpose.msra.mxu0 0.0
      %2811 = vmatprep.subr.mxu0 0.0
      %2812 = vmatpush1.xpose.msra.mxu0 0.0
      %2813 = vmatprep.subr.mxu0 0.0
      %2814 = vmatpush1.xpose.msra.mxu0 0.0
      %2815 = vmatprep.subr.mxu0 0.0
      %2816 = vmatpush1.xpose.msra.mxu0 0.0
      %2817 = vmatprep.subr.mxu0 0.0
      %2818 = vmatpush1.xpose.msra.mxu0 0.0
      %2819 = vmatprep.subr.mxu0 0.0
      %2820 = vmatpush1.xpose.msra.mxu0 0.0
      %2821 = vmatprep.subr.mxu0 0.0
      %2822 = vmatpush1.xpose.msra.mxu0 0.0
      %2823 = vmatprep.subr.mxu0 0.0
      %2824 = vmatpush1.xpose.msra.mxu0 0.0
      %2825 = vmatprep.subr.mxu0 0.0
      %2826 = vmatpush1.xpose.msra.mxu0 0.0
      %2827 = vmatprep.subr.mxu0 0.0
      %2828 = vmatpush1.xpose.msra.mxu0 0.0
      %2829 = vmatprep.subr.mxu0 0.0
      %2830 = vmatpush1.xpose.msra.mxu0 0.0
      %2831 = vmatprep.subr.mxu0 0.0
      %2832 = vmatpush1.xpose.msra.mxu0 0.0
      %2833 = vmatprep.subr.mxu0 0.0
      %2834 = vmatpush1.xpose.msra.mxu0 0.0
      %2835 = vmatprep.subr.mxu0 0.0
      %2836 = vmatpush1.xpose.msra.mxu0 0.0
      %2837 = vmatprep.subr.mxu0 0.0
      %2838 = vmatpush1.xpose.msra.mxu0 0.0
      %2839 = vmatprep.mubr.f32.mxu0 0.0
      %2840 = vmatmul.mubr.f32.gmra.mrb[0].mxu0 %v2770
      %v2841 = vpop.f32.mrb[0].mxu0
      %v2842 = vadd.f32 0.0, %v2841
      %v2843 = vpop.f32.mrb[0].mxu0
      %2844 = vdwg.mxu0
      %v2845 = vmul.f32 %v2842, 0.35355338
      %v2846 = vadd.f32 %v2845, %v2533
      %v2847 = vsel %vm1808, %v2846, -inf
      %2848 = vmax.xlane.f32.xlu0 %v2847
      %v2849 = vpop.xlane.xlu0 %2848
      %v2850 = vsub.f32 %v2846, %v2849
      %v2851 = vmul.f32 %v2850, 1.442695
      %v2852 = vpow.pop %v2851
      %v2853 = vsel %vm1808, %v2852, 0.0
      %2854 = vadd.xlane.f32.xlu0 %v2853
      %v2855 = vpop.xlane.xlu0 %2854
      %v2856 = vrcp.pop %v2855
      %v2857 = vmul.f32 %v2852, %v2856
      %v2858 = vmul.f32 %v2765, %v1727
      %v2859 = vmul.f32 %v2610, %v1827
      %v2861 = vsel %vm1496, %v2859, 0
      %2863 = vmatprep.subr.mxu0 0.0
      %2864 = vmatpush1.xpose.msra.mxu0 %v2773
      %2865 = vmatprep.subr.mxu0 0.0
      %2866 = vmatpush1.xpose.msra.mxu0 0.0
      %2867 = vmatprep.subr.mxu0 0.0
      %2868 = vmatpush1.xpose.msra.mxu0 0.0
      %2869 = vmatprep.subr.mxu0 0.0
      %2870 = vmatpush1.xpose.msra.mxu0 0.0
      %2871 = vmatprep.subr.mxu0 0.0
      %2872 = vmatpush1.xpose.msra.mxu0 0.0
      %2873 = vmatprep.subr.mxu0 0.0
      %2874 = vmatpush1.xpose.msra.mxu0 0.0
      %2875 = vmatprep.subr.mxu0 0.0
      %2876 = vmatpush1.xpose.msra.mxu0 0.0
      %2877 = vmatprep.subr.mxu0 0.0
      %2878 = vmatpush1.xpose.msra.mxu0 0.0
      %2879 = vmatprep.subr.mxu0 0.0
      %2880 = vmatpush1.xpose.msra.mxu0 0.0
      %2881 = vmatprep.subr.mxu0 0.0
      %2882 = vmatpush1.xpose.msra.mxu0 0.0
      %2883 = vmatprep.subr.mxu0 0.0
      %2884 = vmatpush1.xpose.msra.mxu0 0.0
      %2885 = vmatprep.subr.mxu0 0.0
      %2886 = vmatpush1.xpose.msra.mxu0 0.0
      %2887 = vmatprep.subr.mxu0 0.0
      %2888 = vmatpush1.xpose.msra.mxu0 0.0
      %2889 = vmatprep.subr.mxu0 0.0
      %2890 = vmatpush1.xpose.msra.mxu0 0.0
      %2891 = vmatprep.subr.mxu0 0.0
      %2892 = vmatpush1.xpose.msra.mxu0 0.0
      %2893 = vmatprep.subr.mxu0 0.0
      %2894 = vmatpush1.xpose.msra.mxu0 0.0
      %2895 = vmatprep.subr.mxu0 0.0
      %2896 = vmatpush1.xpose.msra.mxu0 0.0
      %2897 = vmatprep.subr.mxu0 0.0
      %2898 = vmatpush1.xpose.msra.mxu0 0.0
      %2899 = vmatprep.subr.mxu0 0.0
      %2900 = vmatpush1.xpose.msra.mxu0 0.0
      %2901 = vmatprep.subr.mxu0 0.0
      %2902 = vmatpush1.xpose.msra.mxu0 0.0
      %2903 = vmatprep.subr.mxu0 0.0
      %2904 = vmatpush1.xpose.msra.mxu0 0.0
      %2905 = vmatprep.subr.mxu0 0.0
      %2906 = vmatpush1.xpose.msra.mxu0 0.0
      %2907 = vmatprep.subr.mxu0 0.0
      %2908 = vmatpush1.xpose.msra.mxu0 0.0
      %2909 = vmatprep.subr.mxu0 0.0
      %2910 = vmatpush1.xpose.msra.mxu0 0.0
      %2911 = vmatprep.subr.mxu0 0.0
      %2912 = vmatpush1.xpose.msra.mxu0 0.0
      %2913 = vmatprep.subr.mxu0 0.0
      %2914 = vmatpush1.xpose.msra.mxu0 0.0
      %2915 = vmatprep.subr.mxu0 0.0
      %2916 = vmatpush1.xpose.msra.mxu0 0.0
      %2917 = vmatprep.subr.mxu0 0.0
      %2918 = vmatpush1.xpose.msra.mxu0 0.0
      %2919 = vmatprep.subr.mxu0 0.0
      %2920 = vmatpush1.xpose.msra.mxu0 0.0
      %2921 = vmatprep.subr.mxu0 0.0
      %2922 = vmatpush1.xpose.msra.mxu0 0.0
      %2923 = vmatprep.subr.mxu0 0.0
      %2924 = vmatpush1.xpose.msra.mxu0 0.0
      %2925 = vmatprep.subr.mxu0 0.0
      %2926 = vmatpush1.xpose.msra.mxu0 0.0
      %2927 = vmatprep.mubr.f32.mxu0 0.0
      %2928 = vmatmul.mubr.f32.gmra.mrb[0].mxu0 %v2861
      %v2929 = vpop.f32.mrb[0].mxu0
      %v2930 = vadd.f32 0.0, %v2929
      %v2931 = vpop.f32.mrb[0].mxu0
      %2932 = vdwg.mxu0
      %v2933 = vmul.f32 %v2930, 0.35355338
      %v2934 = vadd.f32 %v2933, %v2533
      %v2935 = vsel %vm1808, %v2934, -inf
      %2936 = vmax.xlane.f32.xlu0 %v2935
      %v2937 = vpop.xlane.xlu0 %2936
      %v2938 = vsub.f32 %v2934, %v2937
      %v2939 = vmul.f32 %v2938, 1.442695
      %v2940 = vpow.pop %v2939
      %v2941 = vsel %vm1808, %v2940, 0.0
      %2942 = vadd.xlane.f32.xlu0 %v2941
      %v2943 = vpop.xlane.xlu0 %2942
      %v2944 = vrcp.pop %v2943
      %v2945 = vmul.f32 %v2940, %v2944
      %v2946 = vmul.f32 %v2765, %v1827
      %v2948 = vsel %vm1808, %v2945, 0
      %2950 = vmatprep.subr.mxu0 0.0
      %2951 = vmatpush1.msra.mxu0 %v2946
      %2952 = vmatprep.subr.mxu0 0.0
      %2953 = vmatpush1.msra.mxu0 0.0
      %2954 = vmatprep.subr.mxu0 0.0
      %2955 = vmatpush1.msra.mxu0 0.0
      %2956 = vmatprep.subr.mxu0 0.0
      %2957 = vmatpush1.msra.mxu0 0.0
      %2958 = vmatprep.subr.mxu0 0.0
      %2959 = vmatpush1.msra.mxu0 0.0
      %2960 = vmatprep.subr.mxu0 0.0
      %2961 = vmatpush1.msra.mxu0 0.0
      %2962 = vmatprep.subr.mxu0 0.0
      %2963 = vmatpush1.msra.mxu0 0.0
      %2964 = vmatprep.subr.mxu0 0.0
      %2965 = vmatpush1.msra.mxu0 0.0
      %2966 = vmatprep.subr.mxu0 0.0
      %2967 = vmatpush1.msra.mxu0 0.0
      %2968 = vmatprep.subr.mxu0 0.0
      %2969 = vmatpush1.msra.mxu0 0.0
      %2970 = vmatprep.subr.mxu0 0.0
      %2971 = vmatpush1.msra.mxu0 0.0
      %2972 = vmatprep.subr.mxu0 0.0
      %2973 = vmatpush1.msra.mxu0 0.0
      %2974 = vmatprep.subr.mxu0 0.0
      %2975 = vmatpush1.msra.mxu0 0.0
      %2976 = vmatprep.subr.mxu0 0.0
      %2977 = vmatpush1.msra.mxu0 0.0
      %2978 = vmatprep.subr.mxu0 0.0
      %2979 = vmatpush1.msra.mxu0 0.0
      %2980 = vmatprep.subr.mxu0 0.0
      %2981 = vmatpush1.msra.mxu0 0.0
      %2982 = vmatprep.subr.mxu0 0.0
      %2983 = vmatpush1.msra.mxu0 0.0
      %2984 = vmatprep.subr.mxu0 0.0
      %2985 = vmatpush1.msra.mxu0 0.0
      %2986 = vmatprep.subr.mxu0 0.0
      %2987 = vmatpush1.msra.mxu0 0.0
      %2988 = vmatprep.subr.mxu0 0.0
      %2989 = vmatpush1.msra.mxu0 0.0
      %2990 = vmatprep.subr.mxu0 0.0
      %2991 = vmatpush1.msra.mxu0 0.0
      %2992 = vmatprep.subr.mxu0 0.0
      %2993 = vmatpush1.msra.mxu0 0.0
      %2994 = vmatprep.subr.mxu0 0.0
      %2995 = vmatpush1.msra.mxu0 0.0
      %2996 = vmatprep.subr.mxu0 0.0
      %2997 = vmatpush1.msra.mxu0 0.0
      %2998 = vmatprep.subr.mxu0 0.0
      %2999 = vmatpush1.msra.mxu0 0.0
      %3000 = vmatprep.subr.mxu0 0.0
      %3001 = vmatpush1.msra.mxu0 0.0
      %3002 = vmatprep.subr.mxu0 0.0
      %3003 = vmatpush1.msra.mxu0 0.0
      %3004 = vmatprep.subr.mxu0 0.0
      %3005 = vmatpush1.msra.mxu0 0.0
      %3006 = vmatprep.subr.mxu0 0.0
      %3007 = vmatpush1.msra.mxu0 0.0
      %3008 = vmatprep.subr.mxu0 0.0
      %3009 = vmatpush1.msra.mxu0 0.0
      %3010 = vmatprep.subr.mxu0 0.0
      %3011 = vmatpush1.msra.mxu0 0.0
      %3012 = vmatprep.subr.mxu0 0.0
      %3013 = vmatpush1.msra.mxu0 0.0
      %3014 = vmatprep.mubr.f32.mxu0 0.0
      %3015 = vmatmul.mubr.f32.gmra.mrb[0].mxu0 %v2948
      %v3016 = vpop.f32.mrb[0].mxu0
      %v3017 = vadd.f32 0.0, %v3016
      %v3018 = vpop.f32.mrb[0].mxu0
      %3019 = vdwg.mxu0
      %v3021 = vsel %vm1808, %v2857, 0
      %3023 = vmatprep.subr.mxu0 0.0
      %3024 = vmatpush1.msra.mxu0 %v2858
      %3025 = vmatprep.subr.mxu0 0.0
      %3026 = vmatpush1.msra.mxu0 0.0
      %3027 = vmatprep.subr.mxu0 0.0
      %3028 = vmatpush1.msra.mxu0 0.0
      %3029 = vmatprep.subr.mxu0 0.0
      %3030 = vmatpush1.msra.mxu0 0.0
      %3031 = vmatprep.subr.mxu0 0.0
      %3032 = vmatpush1.msra.mxu0 0.0
      %3033 = vmatprep.subr.mxu0 0.0
      %3034 = vmatpush1.msra.mxu0 0.0
      %3035 = vmatprep.subr.mxu0 0.0
      %3036 = vmatpush1.msra.mxu0 0.0
      %3037 = vmatprep.subr.mxu0 0.0
      %3038 = vmatpush1.msra.mxu0 0.0
      %3039 = vmatprep.subr.mxu0 0.0
      %3040 = vmatpush1.msra.mxu0 0.0
      %3041 = vmatprep.subr.mxu0 0.0
      %3042 = vmatpush1.msra.mxu0 0.0
      %3043 = vmatprep.subr.mxu0 0.0
      %3044 = vmatpush1.msra.mxu0 0.0
      %3045 = vmatprep.subr.mxu0 0.0
      %3046 = vmatpush1.msra.mxu0 0.0
      %3047 = vmatprep.subr.mxu0 0.0
      %3048 = vmatpush1.msra.mxu0 0.0
      %3049 = vmatprep.subr.mxu0 0.0
      %3050 = vmatpush1.msra.mxu0 0.0
      %3051 = vmatprep.subr.mxu0 0.0
      %3052 = vmatpush1.msra.mxu0 0.0
      %3053 = vmatprep.subr.mxu0 0.0
      %3054 = vmatpush1.msra.mxu0 0.0
      %3055 = vmatprep.subr.mxu0 0.0
      %3056 = vmatpush1.msra.mxu0 0.0
      %3057 = vmatprep.subr.mxu0 0.0
      %3058 = vmatpush1.msra.mxu0 0.0
      %3059 = vmatprep.subr.mxu0 0.0
      %3060 = vmatpush1.msra.mxu0 0.0
      %3061 = vmatprep.subr.mxu0 0.0
      %3062 = vmatpush1.msra.mxu0 0.0
      %3063 = vmatprep.subr.mxu0 0.0
      %3064 = vmatpush1.msra.mxu0 0.0
      %3065 = vmatprep.subr.mxu0 0.0
      %3066 = vmatpush1.msra.mxu0 0.0
      %3067 = vmatprep.subr.mxu0 0.0
      %3068 = vmatpush1.msra.mxu0 0.0
      %3069 = vmatprep.subr.mxu0 0.0
      %3070 = vmatpush1.msra.mxu0 0.0
      %3071 = vmatprep.subr.mxu0 0.0
      %3072 = vmatpush1.msra.mxu0 0.0
      %3073 = vmatprep.subr.mxu0 0.0
      %3074 = vmatpush1.msra.mxu0 0.0
      %3075 = vmatprep.subr.mxu0 0.0
      %3076 = vmatpush1.msra.mxu0 0.0
      %3077 = vmatprep.subr.mxu0 0.0
      %3078 = vmatpush1.msra.mxu0 0.0
      %3079 = vmatprep.subr.mxu0 0.0
      %3080 = vmatpush1.msra.mxu0 0.0
      %3081 = vmatprep.subr.mxu0 0.0
      %3082 = vmatpush1.msra.mxu0 0.0
      %3083 = vmatprep.subr.mxu0 0.0
      %3084 = vmatpush1.msra.mxu0 0.0
      %3085 = vmatprep.subr.mxu0 0.0
      %3086 = vmatpush1.msra.mxu0 0.0
      %3087 = vmatprep.mubr.f32.mxu0 0.0
      %3088 = vmatmul.mubr.f32.gmra.mrb[0].mxu0 %v3021
      %v3089 = vpop.f32.mrb[0].mxu0
      %v3090 = vadd.f32 %v3017, %v3089
      %v3091 = vpop.f32.mrb[0].mxu0
      %3092 = vdwg.mxu0
      %v3093 = vmul.f32 %v2610, %v2069
      %v3095 = vsel %vm1496, %v3093, 0
      %3097 = vmatprep.subr.mxu0 0.0
      %3098 = vmatpush1.xpose.msra.mxu0 %v2773
      %3099 = vmatprep.subr.mxu0 0.0
      %3100 = vmatpush1.xpose.msra.mxu0 0.0
      %3101 = vmatprep.subr.mxu0 0.0
      %3102 = vmatpush1.xpose.msra.mxu0 0.0
      %3103 = vmatprep.subr.mxu0 0.0
      %3104 = vmatpush1.xpose.msra.mxu0 0.0
      %3105 = vmatprep.subr.mxu0 0.0
      %3106 = vmatpush1.xpose.msra.mxu0 0.0
      %3107 = vmatprep.subr.mxu0 0.0
      %3108 = vmatpush1.xpose.msra.mxu0 0.0
      %3109 = vmatprep.subr.mxu0 0.0
      %3110 = vmatpush1.xpose.msra.mxu0 0.0
      %3111 = vmatprep.subr.mxu0 0.0
      %3112 = vmatpush1.xpose.msra.mxu0 0.0
      %3113 = vmatprep.subr.mxu0 0.0
      %3114 = vmatpush1.xpose.msra.mxu0 0.0
      %3115 = vmatprep.subr.mxu0 0.0
      %3116 = vmatpush1.xpose.msra.mxu0 0.0
      %3117 = vmatprep.subr.mxu0 0.0
      %3118 = vmatpush1.xpose.msra.mxu0 0.0
      %3119 = vmatprep.subr.mxu0 0.0
      %3120 = vmatpush1.xpose.msra.mxu0 0.0
      %3121 = vmatprep.subr.mxu0 0.0
      %3122 = vmatpush1.xpose.msra.mxu0 0.0
      %3123 = vmatprep.subr.mxu0 0.0
      %3124 = vmatpush1.xpose.msra.mxu0 0.0
      %3125 = vmatprep.subr.mxu0 0.0
      %3126 = vmatpush1.xpose.msra.mxu0 0.0
      %3127 = vmatprep.subr.mxu0 0.0
      %3128 = vmatpush1.xpose.msra.mxu0 0.0
      %3129 = vmatprep.subr.mxu0 0.0
      %3130 = vmatpush1.xpose.msra.mxu0 0.0
      %3131 = vmatprep.subr.mxu0 0.0
      %3132 = vmatpush1.xpose.msra.mxu0 0.0
      %3133 = vmatprep.subr.mxu0 0.0
      %3134 = vmatpush1.xpose.msra.mxu0 0.0
      %3135 = vmatprep.subr.mxu0 0.0
      %3136 = vmatpush1.xpose.msra.mxu0 0.0
      %3137 = vmatprep.subr.mxu0 0.0
      %3138 = vmatpush1.xpose.msra.mxu0 0.0
      %3139 = vmatprep.subr.mxu0 0.0
      %3140 = vmatpush1.xpose.msra.mxu0 0.0
      %3141 = vmatprep.subr.mxu0 0.0
      %3142 = vmatpush1.xpose.msra.mxu0 0.0
      %3143 = vmatprep.subr.mxu0 0.0
      %3144 = vmatpush1.xpose.msra.mxu0 0.0
      %3145 = vmatprep.subr.mxu0 0.0
      %3146 = vmatpush1.xpose.msra.mxu0 0.0
      %3147 = vmatprep.subr.mxu0 0.0
      %3148 = vmatpush1.xpose.msra.mxu0 0.0
      %3149 = vmatprep.subr.mxu0 0.0
      %3150 = vmatpush1.xpose.msra.mxu0 0.0
      %3151 = vmatprep.subr.mxu0 0.0
      %3152 = vmatpush1.xpose.msra.mxu0 0.0
      %3153 = vmatprep.subr.mxu0 0.0
      %3154 = vmatpush1.xpose.msra.mxu0 0.0
      %3155 = vmatprep.subr.mxu0 0.0
      %3156 = vmatpush1.xpose.msra.mxu0 0.0
      %3157 = vmatprep.subr.mxu0 0.0
      %3158 = vmatpush1.xpose.msra.mxu0 0.0
      %3159 = vmatprep.subr.mxu0 0.0
      %3160 = vmatpush1.xpose.msra.mxu0 0.0
      %3161 = vmatprep.mubr.f32.mxu0 0.0
      %3162 = vmatmul.mubr.f32.gmra.mrb[0].mxu0 %v3095
      %v3163 = vpop.f32.mrb[0].mxu0
      %v3164 = vadd.f32 0.0, %v3163
      %v3165 = vpop.f32.mrb[0].mxu0
      %3166 = vdwg.mxu0
      %v3167 = vmul.f32 %v3164, 0.35355338
      %v3168 = vadd.f32 %v3167, %v2533
      %v3169 = vsel %vm1808, %v3168, -inf
      %3170 = vmax.xlane.f32.xlu0 %v3169
      %v3171 = vpop.xlane.xlu0 %3170
      %v3172 = vsub.f32 %v3168, %v3171
      %v3173 = vmul.f32 %v3172, 1.442695
      %v3174 = vpow.pop %v3173
      %v3175 = vsel %vm1808, %v3174, 0.0
      %3176 = vadd.xlane.f32.xlu0 %v3175
      %v3177 = vpop.xlane.xlu0 %3176
      %v3178 = vrcp.pop %v3177
      %v3179 = vmul.f32 %v3174, %v3178
      %v3180 = vmul.f32 %v2765, %v2069
      %v3182 = vsel %vm1808, %v3179, 0
      %3184 = vmatprep.subr.mxu0 0.0
      %3185 = vmatpush1.msra.mxu0 %v3180
      %3186 = vmatprep.subr.mxu0 0.0
      %3187 = vmatpush1.msra.mxu0 0.0
      %3188 = vmatprep.subr.mxu0 0.0
      %3189 = vmatpush1.msra.mxu0 0.0
      %3190 = vmatprep.subr.mxu0 0.0
      %3191 = vmatpush1.msra.mxu0 0.0
      %3192 = vmatprep.subr.mxu0 0.0
      %3193 = vmatpush1.msra.mxu0 0.0
      %3194 = vmatprep.subr.mxu0 0.0
      %3195 = vmatpush1.msra.mxu0 0.0
      %3196 = vmatprep.subr.mxu0 0.0
      %3197 = vmatpush1.msra.mxu0 0.0
      %3198 = vmatprep.subr.mxu0 0.0
      %3199 = vmatpush1.msra.mxu0 0.0
      %3200 = vmatprep.subr.mxu0 0.0
      %3201 = vmatpush1.msra.mxu0 0.0
      %3202 = vmatprep.subr.mxu0 0.0
      %3203 = vmatpush1.msra.mxu0 0.0
      %3204 = vmatprep.subr.mxu0 0.0
      %3205 = vmatpush1.msra.mxu0 0.0
      %3206 = vmatprep.subr.mxu0 0.0
      %3207 = vmatpush1.msra.mxu0 0.0
      %3208 = vmatprep.subr.mxu0 0.0
      %3209 = vmatpush1.msra.mxu0 0.0
      %3210 = vmatprep.subr.mxu0 0.0
      %3211 = vmatpush1.msra.mxu0 0.0
      %3212 = vmatprep.subr.mxu0 0.0
      %3213 = vmatpush1.msra.mxu0 0.0
      %3214 = vmatprep.subr.mxu0 0.0
      %3215 = vmatpush1.msra.mxu0 0.0
      %3216 = vmatprep.subr.mxu0 0.0
      %3217 = vmatpush1.msra.mxu0 0.0
      %3218 = vmatprep.subr.mxu0 0.0
      %3219 = vmatpush1.msra.mxu0 0.0
      %3220 = vmatprep.subr.mxu0 0.0
      %3221 = vmatpush1.msra.mxu0 0.0
      %3222 = vmatprep.subr.mxu0 0.0
      %3223 = vmatpush1.msra.mxu0 0.0
      %3224 = vmatprep.subr.mxu0 0.0
      %3225 = vmatpush1.msra.mxu0 0.0
      %3226 = vmatprep.subr.mxu0 0.0
      %3227 = vmatpush1.msra.mxu0 0.0
      %3228 = vmatprep.subr.mxu0 0.0
      %3229 = vmatpush1.msra.mxu0 0.0
      %3230 = vmatprep.subr.mxu0 0.0
      %3231 = vmatpush1.msra.mxu0 0.0
      %3232 = vmatprep.subr.mxu0 0.0
      %3233 = vmatpush1.msra.mxu0 0.0
      %3234 = vmatprep.subr.mxu0 0.0
      %3235 = vmatpush1.msra.mxu0 0.0
      %3236 = vmatprep.subr.mxu0 0.0
      %3237 = vmatpush1.msra.mxu0 0.0
      %3238 = vmatprep.subr.mxu0 0.0
      %3239 = vmatpush1.msra.mxu0 0.0
      %3240 = vmatprep.subr.mxu0 0.0
      %3241 = vmatpush1.msra.mxu0 0.0
      %3242 = vmatprep.subr.mxu0 0.0
      %3243 = vmatpush1.msra.mxu0 0.0
      %3244 = vmatprep.subr.mxu0 0.0
      %3245 = vmatpush1.msra.mxu0 0.0
      %3246 = vmatprep.subr.mxu0 0.0
      %3247 = vmatpush1.msra.mxu0 0.0
      %3248 = vmatprep.mubr.f32.mxu0 0.0
      %3249 = vmatmul.mubr.f32.gmra.mrb[0].mxu0 %v3182
      %v3250 = vpop.f32.mrb[0].mxu0
      %v3251 = vadd.f32 0.0, %v3250
      %v3252 = vpop.f32.mrb[0].mxu0
      %3253 = vdwg.mxu0
      %v3254 = vadd.f32 %v3090, %v3251
      %v3255 = vmul.f32 %v2610, %v2239
      %v3257 = vsel %vm1496, %v3255, 0
      %3259 = vmatprep.subr.mxu0 0.0
      %3260 = vmatpush1.xpose.msra.mxu0 %v2773
      %3261 = vmatprep.subr.mxu0 0.0
      %3262 = vmatpush1.xpose.msra.mxu0 0.0
      %3263 = vmatprep.subr.mxu0 0.0
      %3264 = vmatpush1.xpose.msra.mxu0 0.0
      %3265 = vmatprep.subr.mxu0 0.0
      %3266 = vmatpush1.xpose.msra.mxu0 0.0
      %3267 = vmatprep.subr.mxu0 0.0
      %3268 = vmatpush1.xpose.msra.mxu0 0.0
      %3269 = vmatprep.subr.mxu0 0.0
      %3270 = vmatpush1.xpose.msra.mxu0 0.0
      %3271 = vmatprep.subr.mxu0 0.0
      %3272 = vmatpush1.xpose.msra.mxu0 0.0
      %3273 = vmatprep.subr.mxu0 0.0
      %3274 = vmatpush1.xpose.msra.mxu0 0.0
      %3275 = vmatprep.subr.mxu0 0.0
      %3276 = vmatpush1.xpose.msra.mxu0 0.0
      %3277 = vmatprep.subr.mxu0 0.0
      %3278 = vmatpush1.xpose.msra.mxu0 0.0
      %3279 = vmatprep.subr.mxu0 0.0
      %3280 = vmatpush1.xpose.msra.mxu0 0.0
      %3281 = vmatprep.subr.mxu0 0.0
      %3282 = vmatpush1.xpose.msra.mxu0 0.0
      %3283 = vmatprep.subr.mxu0 0.0
      %3284 = vmatpush1.xpose.msra.mxu0 0.0
      %3285 = vmatprep.subr.mxu0 0.0
      %3286 = vmatpush1.xpose.msra.mxu0 0.0
      %3287 = vmatprep.subr.mxu0 0.0
      %3288 = vmatpush1.xpose.msra.mxu0 0.0
      %3289 = vmatprep.subr.mxu0 0.0
      %3290 = vmatpush1.xpose.msra.mxu0 0.0
      %3291 = vmatprep.subr.mxu0 0.0
      %3292 = vmatpush1.xpose.msra.mxu0 0.0
      %3293 = vmatprep.subr.mxu0 0.0
      %3294 = vmatpush1.xpose.msra.mxu0 0.0
      %3295 = vmatprep.subr.mxu0 0.0
      %3296 = vmatpush1.xpose.msra.mxu0 0.0
      %3297 = vmatprep.subr.mxu0 0.0
      %3298 = vmatpush1.xpose.msra.mxu0 0.0
      %3299 = vmatprep.subr.mxu0 0.0
      %3300 = vmatpush1.xpose.msra.mxu0 0.0
      %3301 = vmatprep.subr.mxu0 0.0
      %3302 = vmatpush1.xpose.msra.mxu0 0.0
      %3303 = vmatprep.subr.mxu0 0.0
      %3304 = vmatpush1.xpose.msra.mxu0 0.0
      %3305 = vmatprep.subr.mxu0 0.0
      %3306 = vmatpush1.xpose.msra.mxu0 0.0
      %3307 = vmatprep.subr.mxu0 0.0
      %3308 = vmatpush1.xpose.msra.mxu0 0.0
      %3309 = vmatprep.subr.mxu0 0.0
      %3310 = vmatpush1.xpose.msra.mxu0 0.0
      %3311 = vmatprep.subr.mxu0 0.0
      %3312 = vmatpush1.xpose.msra.mxu0 0.0
      %3313 = vmatprep.subr.mxu0 0.0
      %3314 = vmatpush1.xpose.msra.mxu0 0.0
      %3315 = vmatprep.subr.mxu0 0.0
      %3316 = vmatpush1.xpose.msra.mxu0 0.0
      %3317 = vmatprep.subr.mxu0 0.0
      %3318 = vmatpush1.xpose.msra.mxu0 0.0
      %3319 = vmatprep.subr.mxu0 0.0
      %3320 = vmatpush1.xpose.msra.mxu0 0.0
      %3321 = vmatprep.subr.mxu0 0.0
      %3322 = vmatpush1.xpose.msra.mxu0 0.0
      %3323 = vmatprep.mubr.f32.mxu0 0.0
      %3324 = vmatmul.mubr.f32.gmra.mrb[0].mxu0 %v3257
      %v3325 = vpop.f32.mrb[0].mxu0
      %v3326 = vadd.f32 0.0, %v3325
      %v3327 = vpop.f32.mrb[0].mxu0
      %3328 = vdwg.mxu0
      %v3329 = vmul.f32 %v3326, 0.35355338
      %v3330 = vadd.f32 %v3329, %v2533
      %v3331 = vsel %vm1808, %v3330, -inf
      %3332 = vmax.xlane.f32.xlu0 %v3331
      %v3333 = vpop.xlane.xlu0 %3332
      %v3334 = vsub.f32 %v3330, %v3333
      %v3335 = vmul.f32 %v3334, 1.442695
      %v3336 = vpow.pop %v3335
      %v3337 = vsel %vm1808, %v3336, 0.0
      %3338 = vadd.xlane.f32.xlu0 %v3337
      %v3339 = vpop.xlane.xlu0 %3338
      %v3340 = vrcp.pop %v3339
      %v3341 = vmul.f32 %v3336, %v3340
      %v3342 = vmul.f32 %v2765, %v2239
      %v3344 = vsel %vm1808, %v3341, 0
      %3346 = vmatprep.subr.mxu0 0.0
      %3347 = vmatpush1.msra.mxu0 %v3342
      %3348 = vmatprep.subr.mxu0 0.0
      %3349 = vmatpush1.msra.mxu0 0.0
      %3350 = vmatprep.subr.mxu0 0.0
      %3351 = vmatpush1.msra.mxu0 0.0
      %3352 = vmatprep.subr.mxu0 0.0
      %3353 = vmatpush1.msra.mxu0 0.0
      %3354 = vmatprep.subr.mxu0 0.0
      %3355 = vmatpush1.msra.mxu0 0.0
      %3356 = vmatprep.subr.mxu0 0.0
      %3357 = vmatpush1.msra.mxu0 0.0
      %3358 = vmatprep.subr.mxu0 0.0
      %3359 = vmatpush1.msra.mxu0 0.0
      %3360 = vmatprep.subr.mxu0 0.0
      %3361 = vmatpush1.msra.mxu0 0.0
      %3362 = vmatprep.subr.mxu0 0.0
      %3363 = vmatpush1.msra.mxu0 0.0
      %3364 = vmatprep.subr.mxu0 0.0
      %3365 = vmatpush1.msra.mxu0 0.0
      %3366 = vmatprep.subr.mxu0 0.0
      %3367 = vmatpush1.msra.mxu0 0.0
      %3368 = vmatprep.subr.mxu0 0.0
      %3369 = vmatpush1.msra.mxu0 0.0
      %3370 = vmatprep.subr.mxu0 0.0
      %3371 = vmatpush1.msra.mxu0 0.0
      %3372 = vmatprep.subr.mxu0 0.0
      %3373 = vmatpush1.msra.mxu0 0.0
      %3374 = vmatprep.subr.mxu0 0.0
      %3375 = vmatpush1.msra.mxu0 0.0
      %3376 = vmatprep.subr.mxu0 0.0
      %3377 = vmatpush1.msra.mxu0 0.0
      %3378 = vmatprep.subr.mxu0 0.0
      %3379 = vmatpush1.msra.mxu0 0.0
      %3380 = vmatprep.subr.mxu0 0.0
      %3381 = vmatpush1.msra.mxu0 0.0
      %3382 = vmatprep.subr.mxu0 0.0
      %3383 = vmatpush1.msra.mxu0 0.0
      %3384 = vmatprep.subr.mxu0 0.0
      %3385 = vmatpush1.msra.mxu0 0.0
      %3386 = vmatprep.subr.mxu0 0.0
      %3387 = vmatpush1.msra.mxu0 0.0
      %3388 = vmatprep.subr.mxu0 0.0
      %3389 = vmatpush1.msra.mxu0 0.0
      %3390 = vmatprep.subr.mxu0 0.0
      %3391 = vmatpush1.msra.mxu0 0.0
      %3392 = vmatprep.subr.mxu0 0.0
      %3393 = vmatpush1.msra.mxu0 0.0
      %3394 = vmatprep.subr.mxu0 0.0
      %3395 = vmatpush1.msra.mxu0 0.0
      %3396 = vmatprep.subr.mxu0 0.0
      %3397 = vmatpush1.msra.mxu0 0.0
      %3398 = vmatprep.subr.mxu0 0.0
      %3399 = vmatpush1.msra.mxu0 0.0
      %3400 = vmatprep.subr.mxu0 0.0
      %3401 = vmatpush1.msra.mxu0 0.0
      %3402 = vmatprep.subr.mxu0 0.0
      %3403 = vmatpush1.msra.mxu0 0.0
      %3404 = vmatprep.subr.mxu0 0.0
      %3405 = vmatpush1.msra.mxu0 0.0
      %3406 = vmatprep.subr.mxu0 0.0
      %3407 = vmatpush1.msra.mxu0 0.0
      %3408 = vmatprep.subr.mxu0 0.0
      %3409 = vmatpush1.msra.mxu0 0.0
      %3410 = vmatprep.mubr.f32.mxu0 0.0
      %3411 = vmatmul.mubr.f32.gmra.mrb[0].mxu0 %v3344
      %v3412 = vpop.f32.mrb[0].mxu0
      %v3413 = vadd.f32 0.0, %v3412
      %v3414 = vpop.f32.mrb[0].mxu0
      %3415 = vdwg.mxu0
      %v3416 = vadd.f32 %v3254, %v3413
      %v3418 = vlaneseq
      %v3419 = vshrl.u32 %v3418, 7
      %v3420 = vsub.s32 0, %v3419
      %v3421 = vrot.slane %v2532, %v3420
      %v3424 = vsel %vm1496, %v3416, 0
      %3426 = vmatprep.subr.mxu0 0.0
      %3427 = vmatpush1.msra.mxu0 %v2528
      %3428 = vmatprep.subr.mxu0 0.0
      %3429 = vmatpush1.msra.mxu0 %v2529
      %3430 = vmatprep.subr.mxu0 0.0
      %3431 = vmatpush1.msra.mxu0 %v2530
      %3432 = vmatprep.subr.mxu0 0.0
      %3433 = vmatpush1.msra.mxu0 %v2531
      %3434 = vmatprep.subr.mxu0 0.0
      %3435 = vmatpush1.msra.mxu0 0.0
      %3436 = vmatprep.subr.mxu0 0.0
      %3437 = vmatpush1.msra.mxu0 0.0
      %3438 = vmatprep.subr.mxu0 0.0
      %3439 = vmatpush1.msra.mxu0 0.0
      %3440 = vmatprep.subr.mxu0 0.0
      %3441 = vmatpush1.msra.mxu0 0.0
      %3442 = vmatprep.subr.mxu0 0.0
      %3443 = vmatpush1.msra.mxu0 0.0
      %3444 = vmatprep.subr.mxu0 0.0
      %3445 = vmatpush1.msra.mxu0 0.0
      %3446 = vmatprep.subr.mxu0 0.0
      %3447 = vmatpush1.msra.mxu0 0.0
      %3448 = vmatprep.subr.mxu0 0.0
      %3449 = vmatpush1.msra.mxu0 0.0
      %3450 = vmatprep.subr.mxu0 0.0
      %3451 = vmatpush1.msra.mxu0 0.0
      %3452 = vmatprep.subr.mxu0 0.0
      %3453 = vmatpush1.msra.mxu0 0.0
      %3454 = vmatprep.subr.mxu0 0.0
      %3455 = vmatpush1.msra.mxu0 0.0
      %3456 = vmatprep.subr.mxu0 0.0
      %3457 = vmatpush1.msra.mxu0 0.0
      %3458 = vmatprep.subr.mxu0 0.0
      %3459 = vmatpush1.msra.mxu0 0.0
      %3460 = vmatprep.subr.mxu0 0.0
      %3461 = vmatpush1.msra.mxu0 0.0
      %3462 = vmatprep.subr.mxu0 0.0
      %3463 = vmatpush1.msra.mxu0 0.0
      %3464 = vmatprep.subr.mxu0 0.0
      %3465 = vmatpush1.msra.mxu0 0.0
      %3466 = vmatprep.subr.mxu0 0.0
      %3467 = vmatpush1.msra.mxu0 0.0
      %3468 = vmatprep.subr.mxu0 0.0
      %3469 = vmatpush1.msra.mxu0 0.0
      %3470 = vmatprep.subr.mxu0 0.0
      %3471 = vmatpush1.msra.mxu0 0.0
      %3472 = vmatprep.subr.mxu0 0.0
      %3473 = vmatpush1.msra.mxu0 0.0
      %3474 = vmatprep.subr.mxu0 0.0
      %3475 = vmatpush1.msra.mxu0 0.0
      %3476 = vmatprep.subr.mxu0 0.0
      %3477 = vmatpush1.msra.mxu0 0.0
      %3478 = vmatprep.subr.mxu0 0.0
      %3479 = vmatpush1.msra.mxu0 0.0
      %3480 = vmatprep.subr.mxu0 0.0
      %3481 = vmatpush1.msra.mxu0 0.0
      %3482 = vmatprep.subr.mxu0 0.0
      %3483 = vmatpush1.msra.mxu0 0.0
      %3484 = vmatprep.subr.mxu0 0.0
      %3485 = vmatpush1.msra.mxu0 0.0
      %3486 = vmatprep.subr.mxu0 0.0
      %3487 = vmatpush1.msra.mxu0 0.0
      %3488 = vmatprep.subr.mxu0 0.0
      %3489 = vmatpush1.msra.mxu0 0.0
      %3490 = vmatprep.mubr.f32.mxu0 0.0
      %3491 = vmatmul.mubr.f32.gmra.mrb[0].mxu0 %v3424
      %v3492 = vpop.f32.mrb[0].mxu0
      %v3493 = vadd.f32 %v3421, %v3492
      %v3494 = vpop.f32.mrb[0].mxu0
      %3495 = vdwg.mxu0
      %v3496 = vadd.f32 %v2512, %v3493
      %v3497 = vld [vmem:[%s1434] sm:$0x1]
      %v3498 = vld [vmem:[%s1437] sm:$0x1]
      %v3499 = vsel %vm1496, %v3496, 0.0
      %3500 = vadd.xlane.f32.xlu0 %v3499
      %v3501 = vpop.xlane.xlu0 %3500
      %v3502 = vmul.f32 %v3501, %v2488
      %v3503 = vsub.f32 %v3496, %v3502
      %v3504 = vmul.f32 %v3503, %v3503
      %v3505 = vsel %vm1496, %v3504, 0.0
      %3506 = vadd.xlane.f32.xlu0 %v3505
      %v3507 = vpop.xlane.xlu0 %3506
      %v3508 = vmul.f32 %v3507, %v2488
      %v3509 = vadd.f32 %v3508, 1e-05
      %v3510 = vrsqrt.pop %v3509
      %v3511 = vmul.f32 %v3503, %v3510
      %v3513 = vlaneseq
      %v3514 = vshrl.u32 %v3513, 7
      %v3515 = vsub.s32 0, %v3514
      %v3516 = vrot.slane %v3497, %v3515
      %v3518 = vmul.f32 %v3511, %v3516
      %v3520 = vlaneseq
      %v3521 = vshrl.u32 %v3520, 7
      %v3522 = vsub.s32 0, %v3521
      %v3523 = vrot.slane %v3498, %v3522
      %v3525 = vadd.f32 %v3518, %v3523
      %v3526 = vld [vmem:[%s1442] sm:$0xff]
      %v3527 = vld [vmem:[%s1442 + $0x8] sm:$0xff]
      %v3528 = vld [vmem:[%s1442 + $0x10] sm:$0xff]
      %v3529 = vld [vmem:[%s1442 + $0x18] sm:$0xff]
      %v3530 = vld [vmem:[%s1445] sm:$0x1]
      %v3532 = vlaneseq
      %v3533 = vshrl.u32 %v3532, 7
      %v3534 = vsub.s32 0, %v3533
      %v3535 = vrot.slane %v3530, %v3534
      %v3538 = vsel %vm1496, %v3525, 0
      %3540 = vmatprep.subr.mxu0 0.0
      %3541 = vmatpush1.msra.mxu0 %v3526
      %3542 = vmatprep.subr.mxu0 0.0
      %3543 = vmatpush1.msra.mxu0 %v3527
      %3544 = vmatprep.subr.mxu0 0.0
      %3545 = vmatpush1.msra.mxu0 %v3528
      %3546 = vmatprep.subr.mxu0 0.0
      %3547 = vmatpush1.msra.mxu0 %v3529
      %3548 = vmatprep.subr.mxu0 0.0
      %3549 = vmatpush1.msra.mxu0 0.0
      %3550 = vmatprep.subr.mxu0 0.0
      %3551 = vmatpush1.msra.mxu0 0.0
      %3552 = vmatprep.subr.mxu0 0.0
      %3553 = vmatpush1.msra.mxu0 0.0
      %3554 = vmatprep.subr.mxu0 0.0
      %3555 = vmatpush1.msra.mxu0 0.0
      %3556 = vmatprep.subr.mxu0 0.0
      %3557 = vmatpush1.msra.mxu0 0.0
      %3558 = vmatprep.subr.mxu0 0.0
      %3559 = vmatpush1.msra.mxu0 0.0
      %3560 = vmatprep.subr.mxu0 0.0
      %3561 = vmatpush1.msra.mxu0 0.0
      %3562 = vmatprep.subr.mxu0 0.0
      %3563 = vmatpush1.msra.mxu0 0.0
      %3564 = vmatprep.subr.mxu0 0.0
      %3565 = vmatpush1.msra.mxu0 0.0
      %3566 = vmatprep.subr.mxu0 0.0
      %3567 = vmatpush1.msra.mxu0 0.0
      %3568 = vmatprep.subr.mxu0 0.0
      %3569 = vmatpush1.msra.mxu0 0.0
      %3570 = vmatprep.subr.mxu0 0.0
      %3571 = vmatpush1.msra.mxu0 0.0
      %3572 = vmatprep.subr.mxu0 0.0
      %3573 = vmatpush1.msra.mxu0 0.0
      %3574 = vmatprep.subr.mxu0 0.0
      %3575 = vmatpush1.msra.mxu0 0.0
      %3576 = vmatprep.subr.mxu0 0.0
      %3577 = vmatpush1.msra.mxu0 0.0
      %3578 = vmatprep.subr.mxu0 0.0
      %3579 = vmatpush1.msra.mxu0 0.0
      %3580 = vmatprep.subr.mxu0 0.0
      %3581 = vmatpush1.msra.mxu0 0.0
      %3582 = vmatprep.subr.mxu0 0.0
      %3583 = vmatpush1.msra.mxu0 0.0
      %3584 = vmatprep.subr.mxu0 0.0
      %3585 = vmatpush1.msra.mxu0 0.0
      %3586 = vmatprep.subr.mxu0 0.0
      %3587 = vmatpush1.msra.mxu0 0.0
      %3588 = vmatprep.subr.mxu0 0.0
      %3589 = vmatpush1.msra.mxu0 0.0
      %3590 = vmatprep.subr.mxu0 0.0
      %3591 = vmatpush1.msra.mxu0 0.0
      %3592 = vmatprep.subr.mxu0 0.0
      %3593 = vmatpush1.msra.mxu0 0.0
      %3594 = vmatprep.subr.mxu0 0.0
      %3595 = vmatpush1.msra.mxu0 0.0
      %3596 = vmatprep.subr.mxu0 0.0
      %3597 = vmatpush1.msra.mxu0 0.0
      %3598 = vmatprep.subr.mxu0 0.0
      %3599 = vmatpush1.msra.mxu0 0.0
      %3600 = vmatprep.subr.mxu0 0.0
      %3601 = vmatpush1.msra.mxu0 0.0
      %3602 = vmatprep.subr.mxu0 0.0
      %3603 = vmatpush1.msra.mxu0 0.0
      %3604 = vmatprep.mubr.f32.mxu0 0.0
      %3605 = vmatmul.mubr.f32.gmra.mrb[0].mxu0 %v3538
      %v3606 = vpop.f32.mrb[0].mxu0
      %v3607 = vadd.f32 %v3535, %v3606
      %v3608 = vpop.f32.mrb[0].mxu0
      %3609 = vdwg.mxu0
      %v3610 = vmax.f32 %v3607, 0.0
      %v3611 = vld [vmem:[%s1450] sm:$0xff]
      %v3612 = vld [vmem:[%s1450 + $0x8] sm:$0xff]
      %v3613 = vld [vmem:[%s1450 + $0x10] sm:$0xff]
      %v3614 = vld [vmem:[%s1450 + $0x18] sm:$0xff]
      %v3615 = vld [vmem:[%s1450 + $0x20] sm:$0xff]
      %v3616 = vld [vmem:[%s1450 + $0x28] sm:$0xff]
      %v3617 = vld [vmem:[%s1450 + $0x30] sm:$0xff]
      %v3618 = vld [vmem:[%s1450 + $0x38] sm:$0xff]
      %v3619 = vld [vmem:[%s1453] sm:$0x1]
      %v3621 = vlaneseq
      %v3622 = vshrl.u32 %v3621, 7
      %v3623 = vsub.s32 0, %v3622
      %v3624 = vrot.slane %v3619, %v3623
      %vm3626 = vcmask 523264
      %v3628 = vsel %vm3626, %v3610, 0
      %3630 = vmatprep.subr.mxu0 0.0
      %3631 = vmatpush1.msra.mxu0 %v3611
      %3632 = vmatprep.subr.mxu0 0.0
      %3633 = vmatpush1.msra.mxu0 %v3612
      %3634 = vmatprep.subr.mxu0 0.0
      %3635 = vmatpush1.msra.mxu0 %v3613
      %3636 = vmatprep.subr.mxu0 0.0
      %3637 = vmatpush1.msra.mxu0 %v3614
      %3638 = vmatprep.subr.mxu0 0.0
      %3639 = vmatpush1.msra.mxu0 %v3615
      %3640 = vmatprep.subr.mxu0 0.0
      %3641 = vmatpush1.msra.mxu0 %v3616
      %3642 = vmatprep.subr.mxu0 0.0
      %3643 = vmatpush1.msra.mxu0 %v3617
      %3644 = vmatprep.subr.mxu0 0.0
      %3645 = vmatpush1.msra.mxu0 %v3618
      %3646 = vmatprep.subr.mxu0 0.0
      %3647 = vmatpush1.msra.mxu0 0.0
      %3648 = vmatprep.subr.mxu0 0.0
      %3649 = vmatpush1.msra.mxu0 0.0
      %3650 = vmatprep.subr.mxu0 0.0
      %3651 = vmatpush1.msra.mxu0 0.0
      %3652 = vmatprep.subr.mxu0 0.0
      %3653 = vmatpush1.msra.mxu0 0.0
      %3654 = vmatprep.subr.mxu0 0.0
      %3655 = vmatpush1.msra.mxu0 0.0
      %3656 = vmatprep.subr.mxu0 0.0
      %3657 = vmatpush1.msra.mxu0 0.0
      %3658 = vmatprep.subr.mxu0 0.0
      %3659 = vmatpush1.msra.mxu0 0.0
      %3660 = vmatprep.subr.mxu0 0.0
      %3661 = vmatpush1.msra.mxu0 0.0
      %3662 = vmatprep.subr.mxu0 0.0
      %3663 = vmatpush1.msra.mxu0 0.0
      %3664 = vmatprep.subr.mxu0 0.0
      %3665 = vmatpush1.msra.mxu0 0.0
      %3666 = vmatprep.subr.mxu0 0.0
      %3667 = vmatpush1.msra.mxu0 0.0
      %3668 = vmatprep.subr.mxu0 0.0
      %3669 = vmatpush1.msra.mxu0 0.0
      %3670 = vmatprep.subr.mxu0 0.0
      %3671 = vmatpush1.msra.mxu0 0.0
      %3672 = vmatprep.subr.mxu0 0.0
      %3673 = vmatpush1.msra.mxu0 0.0
      %3674 = vmatprep.subr.mxu0 0.0
      %3675 = vmatpush1.msra.mxu0 0.0
      %3676 = vmatprep.subr.mxu0 0.0
      %3677 = vmatpush1.msra.mxu0 0.0
      %3678 = vmatprep.subr.mxu0 0.0
      %3679 = vmatpush1.msra.mxu0 0.0
      %3680 = vmatprep.subr.mxu0 0.0
      %3681 = vmatpush1.msra.mxu0 0.0
      %3682 = vmatprep.subr.mxu0 0.0
      %3683 = vmatpush1.msra.mxu0 0.0
      %3684 = vmatprep.subr.mxu0 0.0
      %3685 = vmatpush1.msra.mxu0 0.0
      %3686 = vmatprep.subr.mxu0 0.0
      %3687 = vmatpush1.msra.mxu0 0.0
      %3688 = vmatprep.subr.mxu0 0.0
      %3689 = vmatpush1.msra.mxu0 0.0
      %3690 = vmatprep.subr.mxu0 0.0
      %3691 = vmatpush1.msra.mxu0 0.0
      %3692 = vmatprep.subr.mxu0 0.0
      %3693 = vmatpush1.msra.mxu0 0.0
      %3694 = vmatprep.mubr.f32.mxu0 0.0
      %3695 = vmatmul.mubr.f32.gmra.mrb[0].mxu0 %v3628
      %v3696 = vpop.f32.mrb[0].mxu0
      %v3697 = vadd.f32 %v3624, %v3696
      %v3698 = vpop.f32.mrb[0].mxu0
      %3699 = vdwg.mxu0
      %v3700 = vadd.f32 %v3525, %v3697
      %v3701 = vld [vmem:[%s1456] sm:$0x1]
      %v3702 = vld [vmem:[%s1459] sm:$0x1]
      %v3703 = vsel %vm1496, %v3700, 0.0
      %3704 = vadd.xlane.f32.xlu0 %v3703
      %v3705 = vpop.xlane.xlu0 %3704
      %v3706 = vmul.f32 %v3705, %v2488
      %v3707 = vsub.f32 %v3700, %v3706
      %v3708 = vmul.f32 %v3707, %v3707
      %v3709 = vsel %vm1496, %v3708, 0.0
      %3710 = vadd.xlane.f32.xlu0 %v3709
      %v3711 = vpop.xlane.xlu0 %3710
      %v3712 = vmul.f32 %v3711, %v2488
      %v3713 = vadd.f32 %v3712, 1e-05
      %v3714 = vrsqrt.pop %v3713
      %v3715 = vmul.f32 %v3707, %v3714
      %v3717 = vlaneseq
      %v3718 = vshrl.u32 %v3717, 7
      %v3719 = vsub.s32 0, %v3718
      %v3720 = vrot.slane %v3701, %v3719
      %v3722 = vmul.f32 %v3715, %v3720
      %v3724 = vlaneseq
      %v3725 = vshrl.u32 %v3724, 7
      %v3726 = vsub.s32 0, %v3725
      %v3727 = vrot.slane %v3702, %v3726
      %v3729 = vadd.f32 %v3722, %v3727
      %3730 = vst.msk [vmem:[#allocation2] sm:$0xff] %vm1496, %v3729
      %p3731 = scmp.eq.s32.totalorder %s82, 1
      // Predicated region
      $region165: #{seq2seq_transformer_forward.7} parent=159 // pred_check
        %p3732 = pneg %p3731
      $region166: #{seq2seq_transformer_forward.7} parent=159 // pred_check_branch
        %3734 = sbr.rel (%p3732) target = $region168
      $region167: #{seq2seq_transformer_forward.7} parent=159 // pred_region
        %v3735 = vld [vmem:[%s63] sm:$0x1]
        %v3736 = vld [vmem:[%s65] sm:$0x1]
        %v3737 = vsel %vm1496, %v3729, 0.0
        %3738 = vadd.xlane.f32.xlu0 %v3737
        %v3739 = vpop.xlane.xlu0 %3738
        %v3740 = vmul.f32 %v3739, %v2488
        %v3741 = vsub.f32 %v3729, %v3740
        %v3742 = vmul.f32 %v3741, %v3741
        %v3743 = vsel %vm1496, %v3742, 0.0
        %3744 = vadd.xlane.f32.xlu0 %v3743
        %v3745 = vpop.xlane.xlu0 %3744
        %v3746 = vmul.f32 %v3745, %v2488
        %v3747 = vadd.f32 %v3746, 1e-05
        %v3748 = vrsqrt.pop %v3747
        %v3749 = vmul.f32 %v3741, %v3748
        %v3751 = vlaneseq
        %v3752 = vshrl.u32 %v3751, 7
        %v3753 = vsub.s32 0, %v3752
        %v3754 = vrot.slane %v3735, %v3753
        %v3756 = vmul.f32 %v3749, %v3754
        %v3758 = vlaneseq
        %v3759 = vshrl.u32 %v3758, 7
        %v3760 = vsub.s32 0, %v3759
        %v3761 = vrot.slane %v3736, %v3760
        %v3763 = vadd.f32 %v3756, %v3761
        %v3764 = vld [vmem:[%s67] sm:$0xff]
        %v3765 = vld [vmem:[%s67 + $0x8] sm:$0xff]
        %v3766 = vld [vmem:[%s67 + $0x10] sm:$0xff]
        %v3767 = vld [vmem:[%s67 + $0x18] sm:$0xff]
        %v3768 = vld [vmem:[%s69] sm:$0x1]
        %v3770 = vlaneseq
        %v3771 = vshrl.u32 %v3770, 7
        %v3772 = vsub.s32 0, %v3771
        %v3773 = vrot.slane %v3768, %v3772
        %v3776 = vsel %vm1496, %v3763, 0
        %3778 = vmatprep.subr.mxu0 0.0
        %3779 = vmatpush1.msra.mxu0 %v3764
        %3780 = vmatprep.subr.mxu0 0.0
        %3781 = vmatpush1.msra.mxu0 %v3765
        %3782 = vmatprep.subr.mxu0 0.0
        %3783 = vmatpush1.msra.mxu0 %v3766
        %3784 = vmatprep.subr.mxu0 0.0
        %3785 = vmatpush1.msra.mxu0 %v3767
        %3786 = vmatprep.subr.mxu0 0.0
        %3787 = vmatpush1.msra.mxu0 0.0
        %3788 = vmatprep.subr.mxu0 0.0
        %3789 = vmatpush1.msra.mxu0 0.0
        %3790 = vmatprep.subr.mxu0 0.0
        %3791 = vmatpush1.msra.mxu0 0.0
        %3792 = vmatprep.subr.mxu0 0.0
        %3793 = vmatpush1.msra.mxu0 0.0
        %3794 = vmatprep.subr.mxu0 0.0
        %3795 = vmatpush1.msra.mxu0 0.0
        %3796 = vmatprep.subr.mxu0 0.0
        %3797 = vmatpush1.msra.mxu0 0.0
        %3798 = vmatprep.subr.mxu0 0.0
        %3799 = vmatpush1.msra.mxu0 0.0
        %3800 = vmatprep.subr.mxu0 0.0
        %3801 = vmatpush1.msra.mxu0 0.0
        %3802 = vmatprep.subr.mxu0 0.0
        %3803 = vmatpush1.msra.mxu0 0.0
        %3804 = vmatprep.subr.mxu0 0.0
        %3805 = vmatpush1.msra.mxu0 0.0
        %3806 = vmatprep.subr.mxu0 0.0
        %3807 = vmatpush1.msra.mxu0 0.0
        %3808 = vmatprep.subr.mxu0 0.0
        %3809 = vmatpush1.msra.mxu0 0.0
        %3810 = vmatprep.subr.mxu0 0.0
        %3811 = vmatpush1.msra.mxu0 0.0
        %3812 = vmatprep.subr.mxu0 0.0
        %3813 = vmatpush1.msra.mxu0 0.0
        %3814 = vmatprep.subr.mxu0 0.0
        %3815 = vmatpush1.msra.mxu0 0.0
        %3816 = vmatprep.subr.mxu0 0.0
        %3817 = vmatpush1.msra.mxu0 0.0
        %3818 = vmatprep.subr.mxu0 0.0
        %3819 = vmatpush1.msra.mxu0 0.0
        %3820 = vmatprep.subr.mxu0 0.0
        %3821 = vmatpush1.msra.mxu0 0.0
        %3822 = vmatprep.subr.mxu0 0.0
        %3823 = vmatpush1.msra.mxu0 0.0
        %3824 = vmatprep.subr.mxu0 0.0
        %3825 = vmatpush1.msra.mxu0 0.0
        %3826 = vmatprep.subr.mxu0 0.0
        %3827 = vmatpush1.msra.mxu0 0.0
        %3828 = vmatprep.subr.mxu0 0.0
        %3829 = vmatpush1.msra.mxu0 0.0
        %3830 = vmatprep.subr.mxu0 0.0
        %3831 = vmatpush1.msra.mxu0 0.0
        %3832 = vmatprep.subr.mxu0 0.0
        %3833 = vmatpush1.msra.mxu0 0.0
        %3834 = vmatprep.subr.mxu0 0.0
        %3835 = vmatpush1.msra.mxu0 0.0
        %3836 = vmatprep.subr.mxu0 0.0
        %3837 = vmatpush1.msra.mxu0 0.0
        %3838 = vmatprep.subr.mxu0 0.0
        %3839 = vmatpush1.msra.mxu0 0.0
        %3840 = vmatprep.subr.mxu0 0.0
        %3841 = vmatpush1.msra.mxu0 0.0
        %3842 = vmatprep.mubr.f32.mxu0 0.0
        %3843 = vmatmul.mubr.f32.gmra.mrb[0].mxu0 %v3776
        %v3844 = vpop.f32.mrb[0].mxu0
        %v3845 = vadd.f32 %v3773, %v3844
        %v3846 = vpop.f32.mrb[0].mxu0
        %3847 = vdwg.mxu0
        %vm3848 = vcmask 130048
        %3849 = vst.msk [vmem:[%s71] sm:$0xff] %vm3848, %v3845
      $region168: #{seq2seq_transformer_forward.7} parent=159 // pred_fallthru
        _
      // Predicated region
      $region169: #{seq2seq_transformer_forward.7} parent=159 // pred_check
        %p3850 = pneg %p960
      $region170: #{seq2seq_transformer_forward.7} parent=159 // pred_check_branch
        %3852 = sbr.rel (%p3850) target = $region172
      $region171: #{seq2seq_transformer_forward.7} parent=159 // pred_region
        _
      $region172: #{seq2seq_transformer_forward.7} parent=159 // pred_fallthru
        _
      // Predicated region
      $region173: #{seq2seq_transformer_forward.7} parent=159 // pred_check
        %p3853 = pneg %p960
      $region174: #{seq2seq_transformer_forward.7} parent=159 // pred_check_branch
        %3855 = sbr.rel (%p3853) target = $region176
      $region175: #{seq2seq_transformer_forward.7} parent=159 // pred_region
        _
      $region176: #{seq2seq_transformer_forward.7} parent=159 // pred_fallthru
        _
    $region160: #{seq2seq_transformer_forward.7} parent=5 // pred_fallthru
      _
    %p3856 = scmp.le.s32.totalorder 2, %s77
    // Predicated region
    $region177: #{seq2seq_transformer_forward.7} parent=5 // pred_check
      %p3857 = pneg %p3856
    $region178: #{seq2seq_transformer_forward.7} parent=5 // pred_check_branch
      %3859 = sbr.rel (%p3857) target = $region180
    $region179: #{seq2seq_transformer_forward.7} parent=5 // pred_region
      %s3860 = ssub.s32 %s77, 2
    $region180: #{seq2seq_transformer_forward.7} parent=5 // pred_fallthru
      _
  $region6: #{seq2seq_transformer_forward.7} parent=0 // loop_footer
    %s81 = sadd.s32 1, %s77
  $region7: #{seq2seq_transformer_forward.7} parent=0 // loop_footer_branch
    %76 = sbr.rel target = $region3
  $region8: #{seq2seq_transformer_forward.7} parent=0 // loop_exit
    _

// kernel: seq2seq_transformer_forward.6
$region0: #{seq2seq_transformer_forward.6}
  #allocation0 [shape = 'u32[]', space=smem, size = 0x4, offset = 0x4, fixed_abs, tag = 'smem constant byte address 0x4 - core index']
  #allocation1 [shape = 'u32[144,128]{1,0:T(1,128)}', space=vmem, size = 0x12000, scoped, tag = 'internal scratch']
  %s0 = inlined_call_operand.vmem [shape: f32[8,32], index: 0, kind: input, shape index: {}]
  %s1 = inlined_call_operand.vmem [shape: f32[8,8], index: 1, kind: input, shape index: {}]
  %s2 = inlined_call_operand.vmem [shape: f32[4,1,32], index: 2, kind: input, shape index: {}]
  %s3 = inlined_call_operand.vmem [shape: f32[2,32,32], index: 3, kind: input, shape index: {}]
  %s4 = inlined_call_operand.vmem [shape: f32[2,1,32], index: 4, kind: input, shape index: {}]
  %s5 = inlined_call_operand.vmem [shape: f32[2,32,32], index: 5, kind: input, shape index: {}]
  %s6 = inlined_call_operand.vmem [shape: f32[2,1,32], index: 6, kind: input, shape index: {}]
  %s7 = inlined_call_operand.vmem [shape: f32[2,32,32], index: 7, kind: input, shape index: {}]
  %s8 = inlined_call_operand.vmem [shape: f32[2,1,32], index: 8, kind: input, shape index: {}]
  %s9 = inlined_call_operand.vmem [shape: f32[2,32,32], index: 9, kind: input, shape index: {}]
  %s10 = inlined_call_operand.vmem [shape: f32[2,1,32], index: 10, kind: input, shape index: {}]
  %s11 = inlined_call_operand.vmem [shape: f32[2,1,32], index: 11, kind: input, shape index: {}]
  %s12 = inlined_call_operand.vmem [shape: f32[2,1,32], index: 12, kind: input, shape index: {}]
  %s13 = inlined_call_operand.vmem [shape: f32[2,32,64], index: 13, kind: input, shape index: {}]
  %s14 = inlined_call_operand.vmem [shape: f32[2,1,64], index: 14, kind: input, shape index: {}]
  %s15 = inlined_call_operand.vmem [shape: f32[2,64,32], index: 15, kind: input, shape index: {}]
  %s16 = inlined_call_operand.vmem [shape: f32[2,1,32], index: 16, kind: input, shape index: {}]
  %s17 = inlined_call_operand.vmem [shape: f32[2,1,32], index: 17, kind: input, shape index: {}]
  %s18 = inlined_call_operand.vmem [shape: f32[2,1,32], index: 18, kind: input, shape index: {}]
  %s19 = inlined_call_operand.vmem [shape: f32[1,32], index: 19, kind: input, shape index: {}]
  %s20 = inlined_call_operand.vmem [shape: f32[1,32], index: 20, kind: input, shape index: {}]
  %s21 = inlined_call_operand.vmem [shape: f32[8,32], index: 21, kind: output, shape index: {}]
  %s22 = sld [smem:[#allocation0]]
  $region129: #{seq2seq_transformer_forward.6} parent=0
    _
  %s24 = ssub.s32 1, %s22
  %s25 = scalar_select 0, %s24, %s22
  loop: start=0, step=1, limit=4
  $region2: #{seq2seq_transformer_forward.6} parent=0 // loop_pre_header
    _
  $region3: #{seq2seq_transformer_forward.6} parent=0 // loop_header
    %s27 = sphi 0, %s31
    %p28 = scmp.ge.s32.totalorder %s27, 4
    %s35 = sphi 0, %s35
    %s37 = sphi 0, %s35
    %s38 = sphi 0, %s37
    %s52 = sphi 0, %s38
    %s56 = sphi 0, %s56
    %s58 = sphi 0, %s56
    %s59 = sphi 0, %s58
    %s73 = sphi 0, %s59
    %s77 = sphi 0, %s77
    %s79 = sphi 0, %s77
    %s80 = sphi 0, %s79
    %s94 = sphi 0, %s80
    %s100 = sphi 0, %s102
    %s103 = sphi 0, %s100
    %s104 = sphi 0, %s103
    %s120 = sphi 0, %s104
    %s126 = sphi 0, %s128
    %s129 = sphi 0, %s126
    %s130 = sphi 0, %s129
    %s146 = sphi 0, %s130
    %s152 = sphi 0, %s154
    %s155 = sphi 0, %s152
    %s156 = sphi 0, %s155
    %s172 = sphi 0, %s156
    %s178 = sphi 0, %s180
    %s181 = sphi 0, %s178
    %s182 = sphi 0, %s181
    %s198 = sphi 0, %s182
    %s204 = sphi 0, %s206
    %s207 = sphi 0, %s204
    %s208 = sphi 0, %s207
    %s224 = sphi 0, %s208
    %s230 = sphi 0, %s232
    %s233 = sphi 0, %s230
    %s234 = sphi 0, %s233
    %s250 = sphi 0, %s234
    %s256 = sphi 0, %s258
    %s259 = sphi 0, %s256
    %s260 = sphi 0, %s259
    %s276 = sphi 0, %s260
    %s282 = sphi 0, %s284
    %s285 = sphi 0, %s282
    %s286 = sphi 0, %s285
    %s302 = sphi 0, %s286
    %s308 = sphi 0, %s310
    %s311 = sphi 0, %s308
    %s312 = sphi 0, %s311
    %s328 = sphi 0, %s312
    %s334 = sphi 0, %s336
    %s337 = sphi 0, %s334
    %s338 = sphi 0, %s337
    %s354 = sphi 0, %s338
    %s360 = sphi 0, %s362
    %s363 = sphi 0, %s360
    %s364 = sphi 0, %s363
    %s380 = sphi 0, %s364
    %s386 = sphi 0, %s388
    %s389 = sphi 0, %s386
    %s390 = sphi 0, %s389
    %s406 = sphi 0, %s390
    %s412 = sphi 0, %s414
    %s415 = sphi 0, %s412
    %s416 = sphi 0, %s415
    %s432 = sphi 0, %s416
    %s438 = sphi 0, %s440
    %s441 = sphi 0, %s438
    %s442 = sphi 0, %s441
    %s458 = sphi 0, %s442
    %s464 = sphi 0, %s466
    %s467 = sphi 0, %s464
    %s468 = sphi 0, %s467
    %s484 = sphi 0, %s468
    %s490 = sphi 0, %s492
    %s493 = sphi 0, %s490
    %s494 = sphi 0, %s493
    %s510 = sphi 0, %s494
    %s514 = sphi 0, %s514
    %s516 = sphi 0, %s514
    %s517 = sphi 0, %s516
    %s531 = sphi 0, %s517
    %s535 = sphi 0, %s535
    %s537 = sphi 0, %s535
    %s538 = sphi 0, %s537
    %s552 = sphi 0, %s538
    %s556 = sphi 0, %s556
    %s558 = sphi 0, %s556
    %s559 = sphi 0, %s558
    %s573 = sphi 0, %s559
  $region4: #{seq2seq_transformer_forward.6} parent=0 // loop_header_branch
    %30 = sbr.rel (%p28) target = $region8
  $region5: #{seq2seq_transformer_forward.6} parent=0 // loop_body
    %s32 = ssub.s32 %s27, 1
    %s33 = ssub.s32 %s27, 2
    %s34 = sadd.s32 %s27, 1
    %s36 = sadd.s32 %s35, 1
    %p39 = scmp.eq.s32.totalorder %s27, 1
    %p40 = scmp.ne.s32.totalorder %s35, %s37
    %p41 = scmp.eq.s32.totalorder %s27, 0
    %p42 = por %p40, %p41
    %p43 = scmp.ne.s32.totalorder %s35, %s37
    %p44 = scmp.eq.s32.totalorder %s32, 1
    %p45 = por %p43, %p44
    %p46 = scmp.ne.s32.totalorder %s37, %s38
    %p47 = scmp.eq.s32.totalorder %s32, 0
    %p48 = por %p46, %p47
    %p49 = scmp.ne.s32.totalorder %s37, %s38
    %p50 = scmp.eq.s32.totalorder %s33, 1
    %p51 = por %p49, %p50
    %p53 = scmp.ne.s32.totalorder %s38, %s52
    %p54 = scmp.eq.s32.totalorder %s33, 0
    %p55 = por %p53, %p54
    %s57 = sadd.s32 %s56, 1
    %p60 = scmp.eq.s32.totalorder %s27, 1
    %p61 = scmp.ne.s32.totalorder %s56, %s58
    %p62 = scmp.eq.s32.totalorder %s27, 0
    %p63 = por %p61, %p62
    %p64 = scmp.ne.s32.totalorder %s56, %s58
    %p65 = scmp.eq.s32.totalorder %s32, 1
    %p66 = por %p64, %p65
    %p67 = scmp.ne.s32.totalorder %s58, %s59
    %p68 = scmp.eq.s32.totalorder %s32, 0
    %p69 = por %p67, %p68
    %p70 = scmp.ne.s32.totalorder %s58, %s59
    %p71 = scmp.eq.s32.totalorder %s33, 1
    %p72 = por %p70, %p71
    %p74 = scmp.ne.s32.totalorder %s59, %s73
    %p75 = scmp.eq.s32.totalorder %s33, 0
    %p76 = por %p74, %p75
    %s78 = sadd.s32 %s77, 1
    %p81 = scmp.eq.s32.totalorder %s27, 1
    %p82 = scmp.ne.s32.totalorder %s77, %s79
    %p83 = scmp.eq.s32.totalorder %s27, 0
    %p84 = por %p82, %p83
    %p85 = scmp.ne.s32.totalorder %s77, %s79
    %p86 = scmp.eq.s32.totalorder %s32, 1
    %p87 = por %p85, %p86
    %p88 = scmp.ne.s32.totalorder %s79, %s80
    %p89 = scmp.eq.s32.totalorder %s32, 0
    %p90 = por %p88, %p89
    %p91 = scmp.ne.s32.totalorder %s79, %s80
    %p92 = scmp.eq.s32.totalorder %s33, 1
    %p93 = por %p91, %p92
    %p95 = scmp.ne.s32.totalorder %s80, %s94
    %p96 = scmp.eq.s32.totalorder %s33, 0
    %p97 = por %p95, %p96
    %s98 = ssub.s32 %s27, %s34
    %p99 = scmp.eq.s32.totalorder %s98, 0
    %s101 = sadd.s32 %s100, 1
    %s102 = scalar_select %p99, %s100, %s101
    %p105 = pneg %p99
    %p106 = scmp.eq.s32.totalorder %s27, 1
    %p107 = por %p105, %p106
    %p108 = scmp.ne.s32.totalorder %s100, %s103
    %p109 = scmp.eq.s32.totalorder %s27, 0
    %p110 = por %p108, %p109
    %p111 = scmp.ne.s32.totalorder %s100, %s103
    %p112 = scmp.eq.s32.totalorder %s32, 1
    %p113 = por %p111, %p112
    %p114 = scmp.ne.s32.totalorder %s103, %s104
    %p115 = scmp.eq.s32.totalorder %s32, 0
    %p116 = por %p114, %p115
    %p117 = scmp.ne.s32.totalorder %s103, %s104
    %p118 = scmp.eq.s32.totalorder %s33, 1
    %p119 = por %p117, %p118
    %p121 = scmp.ne.s32.totalorder %s104, %s120
    %p122 = scmp.eq.s32.totalorder %s33, 0
    %p123 = por %p121, %p122
    %s124 = ssub.s32 %s27, %s34
    %p125 = scmp.eq.s32.totalorder %s124, 0
    %s127 = sadd.s32 %s126, 1
    %s128 = scalar_select %p125, %s126, %s127
    %p131 = pneg %p125
    %p132 = scmp.eq.s32.totalorder %s27, 1
    %p133 = por %p131, %p132
    %p134 = scmp.ne.s32.totalorder %s126, %s129
    %p135 = scmp.eq.s32.totalorder %s27, 0
    %p136 = por %p134, %p135
    %p137 = scmp.ne.s32.totalorder %s126, %s129
    %p138 = scmp.eq.s32.totalorder %s32, 1
    %p139 = por %p137, %p138
    %p140 = scmp.ne.s32.totalorder %s129, %s130
    %p141 = scmp.eq.s32.totalorder %s32, 0
    %p142 = por %p140, %p141
    %p143 = scmp.ne.s32.totalorder %s129, %s130
    %p144 = scmp.eq.s32.totalorder %s33, 1
    %p145 = por %p143, %p144
    %p147 = scmp.ne.s32.totalorder %s130, %s146
    %p148 = scmp.eq.s32.totalorder %s33, 0
    %p149 = por %p147, %p148
    %s150 = ssub.s32 %s27, %s34
    %p151 = scmp.eq.s32.totalorder %s150, 0
    %s153 = sadd.s32 %s152, 1
    %s154 = scalar_select %p151, %s152, %s153
    %p157 = pneg %p151
    %p158 = scmp.eq.s32.totalorder %s27, 1
    %p159 = por %p157, %p158
    %p160 = scmp.ne.s32.totalorder %s152, %s155
    %p161 = scmp.eq.s32.totalorder %s27, 0
    %p162 = por %p160, %p161
    %p163 = scmp.ne.s32.totalorder %s152, %s155
    %p164 = scmp.eq.s32.totalorder %s32, 1
    %p165 = por %p163, %p164
    %p166 = scmp.ne.s32.totalorder %s155, %s156
    %p167 = scmp.eq.s32.totalorder %s32, 0
    %p168 = por %p166, %p167
    %p169 = scmp.ne.s32.totalorder %s155, %s156
    %p170 = scmp.eq.s32.totalorder %s33, 1
    %p171 = por %p169, %p170
    %p173 = scmp.ne.s32.totalorder %s156, %s172
    %p174 = scmp.eq.s32.totalorder %s33, 0
    %p175 = por %p173, %p174
    %s176 = ssub.s32 %s27, %s34
    %p177 = scmp.eq.s32.totalorder %s176, 0
    %s179 = sadd.s32 %s178, 1
    %s180 = scalar_select %p177, %s178, %s179
    %p183 = pneg %p177
    %p184 = scmp.eq.s32.totalorder %s27, 1
    %p185 = por %p183, %p184
    %p186 = scmp.ne.s32.totalorder %s178, %s181
    %p187 = scmp.eq.s32.totalorder %s27, 0
    %p188 = por %p186, %p187
    %p189 = scmp.ne.s32.totalorder %s178, %s181
    %p190 = scmp.eq.s32.totalorder %s32, 1
    %p191 = por %p189, %p190
    %p192 = scmp.ne.s32.totalorder %s181, %s182
    %p193 = scmp.eq.s32.totalorder %s32, 0
    %p194 = por %p192, %p193
    %p195 = scmp.ne.s32.totalorder %s181, %s182
    %p196 = scmp.eq.s32.totalorder %s33, 1
    %p197 = por %p195, %p196
    %p199 = scmp.ne.s32.totalorder %s182, %s198
    %p200 = scmp.eq.s32.totalorder %s33, 0
    %p201 = por %p199, %p200
    %s202 = ssub.s32 %s27, %s34
    %p203 = scmp.eq.s32.totalorder %s202, 0
    %s205 = sadd.s32 %s204, 1
    %s206 = scalar_select %p203, %s204, %s205
    %p209 = pneg %p203
    %p210 = scmp.eq.s32.totalorder %s27, 1
    %p211 = por %p209, %p210
    %p212 = scmp.ne.s32.totalorder %s204, %s207
    %p213 = scmp.eq.s32.totalorder %s27, 0
    %p214 = por %p212, %p213
    %p215 = scmp.ne.s32.totalorder %s204, %s207
    %p216 = scmp.eq.s32.totalorder %s32, 1
    %p217 = por %p215, %p216
    %p218 = scmp.ne.s32.totalorder %s207, %s208
    %p219 = scmp.eq.s32.totalorder %s32, 0
    %p220 = por %p218, %p219
    %p221 = scmp.ne.s32.totalorder %s207, %s208
    %p222 = scmp.eq.s32.totalorder %s33, 1
    %p223 = por %p221, %p222
    %p225 = scmp.ne.s32.totalorder %s208, %s224
    %p226 = scmp.eq.s32.totalorder %s33, 0
    %p227 = por %p225, %p226
    %s228 = ssub.s32 %s27, %s34
    %p229 = scmp.eq.s32.totalorder %s228, 0
    %s231 = sadd.s32 %s230, 1
    %s232 = scalar_select %p229, %s230, %s231
    %p235 = pneg %p229
    %p236 = scmp.eq.s32.totalorder %s27, 1
    %p237 = por %p235, %p236
    %p238 = scmp.ne.s32.totalorder %s230, %s233
    %p239 = scmp.eq.s32.totalorder %s27, 0
    %p240 = por %p238, %p239
    %p241 = scmp.ne.s32.totalorder %s230, %s233
    %p242 = scmp.eq.s32.totalorder %s32, 1
    %p243 = por %p241, %p242
    %p244 = scmp.ne.s32.totalorder %s233, %s234
    %p245 = scmp.eq.s32.totalorder %s32, 0
    %p246 = por %p244, %p245
    %p247 = scmp.ne.s32.totalorder %s233, %s234
    %p248 = scmp.eq.s32.totalorder %s33, 1
    %p249 = por %p247, %p248
    %p251 = scmp.ne.s32.totalorder %s234, %s250
    %p252 = scmp.eq.s32.totalorder %s33, 0
    %p253 = por %p251, %p252
    %s254 = ssub.s32 %s27, %s34
    %p255 = scmp.eq.s32.totalorder %s254, 0
    %s257 = sadd.s32 %s256, 1
    %s258 = scalar_select %p255, %s256, %s257
    %p261 = pneg %p255
    %p262 = scmp.eq.s32.totalorder %s27, 1
    %p263 = por %p261, %p262
    %p264 = scmp.ne.s32.totalorder %s256, %s259
    %p265 = scmp.eq.s32.totalorder %s27, 0
    %p266 = por %p264, %p265
    %p267 = scmp.ne.s32.totalorder %s256, %s259
    %p268 = scmp.eq.s32.totalorder %s32, 1
    %p269 = por %p267, %p268
    %p270 = scmp.ne.s32.totalorder %s259, %s260
    %p271 = scmp.eq.s32.totalorder %s32, 0
    %p272 = por %p270, %p271
    %p273 = scmp.ne.s32.totalorder %s259, %s260
    %p274 = scmp.eq.s32.totalorder %s33, 1
    %p275 = por %p273, %p274
    %p277 = scmp.ne.s32.totalorder %s260, %s276
    %p278 = scmp.eq.s32.totalorder %s33, 0
    %p279 = por %p277, %p278
    %s280 = ssub.s32 %s27, %s34
    %p281 = scmp.eq.s32.totalorder %s280, 0
    %s283 = sadd.s32 %s282, 1
    %s284 = scalar_select %p281, %s282, %s283
    %p287 = pneg %p281
    %p288 = scmp.eq.s32.totalorder %s27, 1
    %p289 = por %p287, %p288
    %p290 = scmp.ne.s32.totalorder %s282, %s285
    %p291 = scmp.eq.s32.totalorder %s27, 0
    %p292 = por %p290, %p291
    %p293 = scmp.ne.s32.totalorder %s282, %s285
    %p294 = scmp.eq.s32.totalorder %s32, 1
    %p295 = por %p293, %p294
    %p296 = scmp.ne.s32.totalorder %s285, %s286
    %p297 = scmp.eq.s32.totalorder %s32, 0
    %p298 = por %p296, %p297
    %p299 = scmp.ne.s32.totalorder %s285, %s286
    %p300 = scmp.eq.s32.totalorder %s33, 1
    %p301 = por %p299, %p300
    %p303 = scmp.ne.s32.totalorder %s286, %s302
    %p304 = scmp.eq.s32.totalorder %s33, 0
    %p305 = por %p303, %p304
    %s306 = ssub.s32 %s27, %s34
    %p307 = scmp.eq.s32.totalorder %s306, 0
    %s309 = sadd.s32 %s308, 1
    %s310 = scalar_select %p307, %s308, %s309
    %p313 = pneg %p307
    %p314 = scmp.eq.s32.totalorder %s27, 1
    %p315 = por %p313, %p314
    %p316 = scmp.ne.s32.totalorder %s308, %s311
    %p317 = scmp.eq.s32.totalorder %s27, 0
    %p318 = por %p316, %p317
    %p319 = scmp.ne.s32.totalorder %s308, %s311
    %p320 = scmp.eq.s32.totalorder %s32, 1
    %p321 = por %p319, %p320
    %p322 = scmp.ne.s32.totalorder %s311, %s312
    %p323 = scmp.eq.s32.totalorder %s32, 0
    %p324 = por %p322, %p323
    %p325 = scmp.ne.s32.totalorder %s311, %s312
    %p326 = scmp.eq.s32.totalorder %s33, 1
    %p327 = por %p325, %p326
    %p329 = scmp.ne.s32.totalorder %s312, %s328
    %p330 = scmp.eq.s32.totalorder %s33, 0
    %p331 = por %p329, %p330
    %s332 = ssub.s32 %s27, %s34
    %p333 = scmp.eq.s32.totalorder %s332, 0
    %s335 = sadd.s32 %s334, 1
    %s336 = scalar_select %p333, %s334, %s335
    %p339 = pneg %p333
    %p340 = scmp.eq.s32.totalorder %s27, 1
    %p341 = por %p339, %p340
    %p342 = scmp.ne.s32.totalorder %s334, %s337
    %p343 = scmp.eq.s32.totalorder %s27, 0
    %p344 = por %p342, %p343
    %p345 = scmp.ne.s32.totalorder %s334, %s337
    %p346 = scmp.eq.s32.totalorder %s32, 1
    %p347 = por %p345, %p346
    %p348 = scmp.ne.s32.totalorder %s337, %s338
    %p349 = scmp.eq.s32.totalorder %s32, 0
    %p350 = por %p348, %p349
    %p351 = scmp.ne.s32.totalorder %s337, %s338
    %p352 = scmp.eq.s32.totalorder %s33, 1
    %p353 = por %p351, %p352
    %p355 = scmp.ne.s32.totalorder %s338, %s354
    %p356 = scmp.eq.s32.totalorder %s33, 0
    %p357 = por %p355, %p356
    %s358 = ssub.s32 %s27, %s34
    %p359 = scmp.eq.s32.totalorder %s358, 0
    %s361 = sadd.s32 %s360, 1
    %s362 = scalar_select %p359, %s360, %s361
    %p365 = pneg %p359
    %p366 = scmp.eq.s32.totalorder %s27, 1
    %p367 = por %p365, %p366
    %p368 = scmp.ne.s32.totalorder %s360, %s363
    %p369 = scmp.eq.s32.totalorder %s27, 0
    %p370 = por %p368, %p369
    %p371 = scmp.ne.s32.totalorder %s360, %s363
    %p372 = scmp.eq.s32.totalorder %s32, 1
    %p373 = por %p371, %p372
    %p374 = scmp.ne.s32.totalorder %s363, %s364
    %p375 = scmp.eq.s32.totalorder %s32, 0
    %p376 = por %p374, %p375
    %p377 = scmp.ne.s32.totalorder %s363, %s364
    %p378 = scmp.eq.s32.totalorder %s33, 1
    %p379 = por %p377, %p378
    %p381 = scmp.ne.s32.totalorder %s364, %s380
    %p382 = scmp.eq.s32.totalorder %s33, 0
    %p383 = por %p381, %p382
    %s384 = ssub.s32 %s27, %s34
    %p385 = scmp.eq.s32.totalorder %s384, 0
    %s387 = sadd.s32 %s386, 1
    %s388 = scalar_select %p385, %s386, %s387
    %p391 = pneg %p385
    %p392 = scmp.eq.s32.totalorder %s27, 1
    %p393 = por %p391, %p392
    %p394 = scmp.ne.s32.totalorder %s386, %s389
    %p395 = scmp.eq.s32.totalorder %s27, 0
    %p396 = por %p394, %p395
    %p397 = scmp.ne.s32.totalorder %s386, %s389
    %p398 = scmp.eq.s32.totalorder %s32, 1
    %p399 = por %p397, %p398
    %p400 = scmp.ne.s32.totalorder %s389, %s390
    %p401 = scmp.eq.s32.totalorder %s32, 0
    %p402 = por %p400, %p401
    %p403 = scmp.ne.s32.totalorder %s389, %s390
    %p404 = scmp.eq.s32.totalorder %s33, 1
    %p405 = por %p403, %p404
    %p407 = scmp.ne.s32.totalorder %s390, %s406
    %p408 = scmp.eq.s32.totalorder %s33, 0
    %p409 = por %p407, %p408
    %s410 = ssub.s32 %s27, %s34
    %p411 = scmp.eq.s32.totalorder %s410, 0
    %s413 = sadd.s32 %s412, 1
    %s414 = scalar_select %p411, %s412, %s413
    %p417 = pneg %p411
    %p418 = scmp.eq.s32.totalorder %s27, 1
    %p419 = por %p417, %p418
    %p420 = scmp.ne.s32.totalorder %s412, %s415
    %p421 = scmp.eq.s32.totalorder %s27, 0
    %p422 = por %p420, %p421
    %p423 = scmp.ne.s32.totalorder %s412, %s415
    %p424 = scmp.eq.s32.totalorder %s32, 1
    %p425 = por %p423, %p424
    %p426 = scmp.ne.s32.totalorder %s415, %s416
    %p427 = scmp.eq.s32.totalorder %s32, 0
    %p428 = por %p426, %p427
    %p429 = scmp.ne.s32.totalorder %s415, %s416
    %p430 = scmp.eq.s32.totalorder %s33, 1
    %p431 = por %p429, %p430
    %p433 = scmp.ne.s32.totalorder %s416, %s432
    %p434 = scmp.eq.s32.totalorder %s33, 0
    %p435 = por %p433, %p434
    %s436 = ssub.s32 %s27, %s34
    %p437 = scmp.eq.s32.totalorder %s436, 0
    %s439 = sadd.s32 %s438, 1
    %s440 = scalar_select %p437, %s438, %s439
    %p443 = pneg %p437
    %p444 = scmp.eq.s32.totalorder %s27, 1
    %p445 = por %p443, %p444
    %p446 = scmp.ne.s32.totalorder %s438, %s441
    %p447 = scmp.eq.s32.totalorder %s27, 0
    %p448 = por %p446, %p447
    %p449 = scmp.ne.s32.totalorder %s438, %s441
    %p450 = scmp.eq.s32.totalorder %s32, 1
    %p451 = por %p449, %p450
    %p452 = scmp.ne.s32.totalorder %s441, %s442
    %p453 = scmp.eq.s32.totalorder %s32, 0
    %p454 = por %p452, %p453
    %p455 = scmp.ne.s32.totalorder %s441, %s442
    %p456 = scmp.eq.s32.totalorder %s33, 1
    %p457 = por %p455, %p456
    %p459 = scmp.ne.s32.totalorder %s442, %s458
    %p460 = scmp.eq.s32.totalorder %s33, 0
    %p461 = por %p459, %p460
    %s462 = ssub.s32 %s27, %s34
    %p463 = scmp.eq.s32.totalorder %s462, 0
    %s465 = sadd.s32 %s464, 1
    %s466 = scalar_select %p463, %s464, %s465
    %p469 = pneg %p463
    %p470 = scmp.eq.s32.totalorder %s27, 1
    %p471 = por %p469, %p470
    %p472 = scmp.ne.s32.totalorder %s464, %s467
    %p473 = scmp.eq.s32.totalorder %s27, 0
    %p474 = por %p472, %p473
    %p475 = scmp.ne.s32.totalorder %s464, %s467
    %p476 = scmp.eq.s32.totalorder %s32, 1
    %p477 = por %p475, %p476
    %p478 = scmp.ne.s32.totalorder %s467, %s468
    %p479 = scmp.eq.s32.totalorder %s32, 0
    %p480 = por %p478, %p479
    %p481 = scmp.ne.s32.totalorder %s467, %s468
    %p482 = scmp.eq.s32.totalorder %s33, 1
    %p483 = por %p481, %p482
    %p485 = scmp.ne.s32.totalorder %s468, %s484
    %p486 = scmp.eq.s32.totalorder %s33, 0
    %p487 = por %p485, %p486
    %s488 = ssub.s32 %s27, %s34
    %p489 = scmp.eq.s32.totalorder %s488, 0
    %s491 = sadd.s32 %s490, 1
    %s492 = scalar_select %p489, %s490, %s491
    %p495 = pneg %p489
    %p496 = scmp.eq.s32.totalorder %s27, 1
    %p497 = por %p495, %p496
    %p498 = scmp.ne.s32.totalorder %s490, %s493
    %p499 = scmp.eq.s32.totalorder %s27, 0
    %p500 = por %p498, %p499
    %p501 = scmp.ne.s32.totalorder %s490, %s493
    %p502 = scmp.eq.s32.totalorder %s32, 1
    %p503 = por %p501, %p502
    %p504 = scmp.ne.s32.totalorder %s493, %s494
    %p505 = scmp.eq.s32.totalorder %s32, 0
    %p506 = por %p504, %p505
    %p507 = scmp.ne.s32.totalorder %s493, %s494
    %p508 = scmp.eq.s32.totalorder %s33, 1
    %p509 = por %p507, %p508
    %p511 = scmp.ne.s32.totalorder %s494, %s510
    %p512 = scmp.eq.s32.totalorder %s33, 0
    %p513 = por %p511, %p512
    %s515 = sadd.s32 %s514, 1
    %p518 = scmp.eq.s32.totalorder %s27, 1
    %p519 = scmp.ne.s32.totalorder %s514, %s516
    %p520 = scmp.eq.s32.totalorder %s27, 0
    %p521 = por %p519, %p520
    %p522 = scmp.ne.s32.totalorder %s514, %s516
    %p523 = scmp.eq.s32.totalorder %s32, 1
    %p524 = por %p522, %p523
    %p525 = scmp.ne.s32.totalorder %s516, %s517
    %p526 = scmp.eq.s32.totalorder %s32, 0
    %p527 = por %p525, %p526
    %p528 = scmp.ne.s32.totalorder %s516, %s517
    %p529 = scmp.eq.s32.totalorder %s33, 1
    %p530 = por %p528, %p529
    %p532 = scmp.ne.s32.totalorder %s517, %s531
    %p533 = scmp.eq.s32.totalorder %s33, 0
    %p534 = por %p532, %p533
    %s536 = sadd.s32 %s535, 1
    %p539 = scmp.eq.s32.totalorder %s27, 1
    %p540 = scmp.ne.s32.totalorder %s535, %s537
    %p541 = scmp.eq.s32.totalorder %s27, 0
    %p542 = por %p540, %p541
    %p543 = scmp.ne.s32.totalorder %s535, %s537
    %p544 = scmp.eq.s32.totalorder %s32, 1
    %p545 = por %p543, %p544
    %p546 = scmp.ne.s32.totalorder %s537, %s538
    %p547 = scmp.eq.s32.totalorder %s32, 0
    %p548 = por %p546, %p547
    %p549 = scmp.ne.s32.totalorder %s537, %s538
    %p550 = scmp.eq.s32.totalorder %s33, 1
    %p551 = por %p549, %p550
    %p553 = scmp.ne.s32.totalorder %s538, %s552
    %p554 = scmp.eq.s32.totalorder %s33, 0
    %p555 = por %p553, %p554
    %s557 = sadd.s32 %s556, 1
    %p560 = scmp.eq.s32.totalorder %s27, 1
    %p561 = scmp.ne.s32.totalorder %s556, %s558
    %p562 = scmp.eq.s32.totalorder %s27, 0
    %p563 = por %p561, %p562
    %p564 = scmp.ne.s32.totalorder %s556, %s558
    %p565 = scmp.eq.s32.totalorder %s32, 1
    %p566 = por %p564, %p565
    %p567 = scmp.ne.s32.totalorder %s558, %s559
    %p568 = scmp.eq.s32.totalorder %s32, 0
    %p569 = por %p567, %p568
    %p570 = scmp.ne.s32.totalorder %s558, %s559
    %p571 = scmp.eq.s32.totalorder %s33, 1
    %p572 = por %p570, %p571
    %p574 = scmp.ne.s32.totalorder %s559, %s573
    %p575 = scmp.eq.s32.totalorder %s33, 0
    %p576 = por %p574, %p575
    %p577 = scmp.le.s32.totalorder 1, %s27
    %p578 = scmp.lt.s32.totalorder %s27, 3
    %p579 = pnand %p577, %p578
    %p580 = pneg %p579
    // Predicated region
    $region9: #{seq2seq_transformer_forward.6} parent=5 // pred_check
      _
    $region10: #{seq2seq_transformer_forward.6} parent=5 // pred_check_branch
      %582 = sbr.rel (%p579) target = $region12
    $region11: #{seq2seq_transformer_forward.6} parent=5 // pred_region
      %s583 = ssub.s32 %s27, 1
      // Predicated region
      $region13: #{seq2seq_transformer_forward.6} parent=11 // pred_check
        %p584 = pneg %p48
      $region14: #{seq2seq_transformer_forward.6} parent=11 // pred_check_branch
        %586 = sbr.rel (%p584) target = $region16
      $region15: #{seq2seq_transformer_forward.6} parent=11 // pred_region
        _
      $region16: #{seq2seq_transformer_forward.6} parent=11 // pred_fallthru
        _
      // Predicated region
      $region17: #{seq2seq_transformer_forward.6} parent=11 // pred_check
        %p587 = pneg %p69
      $region18: #{seq2seq_transformer_forward.6} parent=11 // pred_check_branch
        %589 = sbr.rel (%p587) target = $region20
      $region19: #{seq2seq_transformer_forward.6} parent=11 // pred_region
        _
      $region20: #{seq2seq_transformer_forward.6} parent=11 // pred_fallthru
        _
      // Predicated region
      $region21: #{seq2seq_transformer_forward.6} parent=11 // pred_check
        %p590 = pneg %p90
      $region22: #{seq2seq_transformer_forward.6} parent=11 // pred_check_branch
        %592 = sbr.rel (%p590) target = $region24
      $region23: #{seq2seq_transformer_forward.6} parent=11 // pred_region
        _
      $region24: #{seq2seq_transformer_forward.6} parent=11 // pred_fallthru
        _
      // Predicated region
      $region25: #{seq2seq_transformer_forward.6} parent=11 // pred_check
        %p593 = pneg %p527
      $region26: #{seq2seq_transformer_forward.6} parent=11 // pred_check_branch
        %595 = sbr.rel (%p593) target = $region28
      $region27: #{seq2seq_transformer_forward.6} parent=11 // pred_region
        _
      $region28: #{seq2seq_transformer_forward.6} parent=11 // pred_fallthru
        _
      // Predicated region
      $region29: #{seq2seq_transformer_forward.6} parent=11 // pred_check
        %p596 = pneg %p548
      $region30: #{seq2seq_transformer_forward.6} parent=11 // pred_check_branch
        %598 = sbr.rel (%p596) target = $region32
      $region31: #{seq2seq_transformer_forward.6} parent=11 // pred_region
        _
      $region32: #{seq2seq_transformer_forward.6} parent=11 // pred_fallthru
        _
    $region12: #{seq2seq_transformer_forward.6} parent=5 // pred_fallthru
      _
    %p599 = scmp.lt.s32.totalorder %s27, 2
    // Predicated region
    $region33: #{seq2seq_transformer_forward.6} parent=5 // pred_check
      %p600 = pneg %p599
    $region34: #{seq2seq_transformer_forward.6} parent=5 // pred_check_branch
      %602 = sbr.rel (%p600) target = $region36
    $region35: #{seq2seq_transformer_forward.6} parent=5 // pred_region
      // Predicated region
      $region37: #{seq2seq_transformer_forward.6} parent=35 // pred_check
        %p603 = pneg %p110
      $region38: #{seq2seq_transformer_forward.6} parent=35 // pred_check_branch
        %605 = sbr.rel (%p603) target = $region40
      $region39: #{seq2seq_transformer_forward.6} parent=35 // pred_region
        %p606 = scmp.lt.s32.totalorder %s27, 1
        %s607 = scalar_select %p606, %s27, 1
        %s608 = smul.addr %s607, 4
        %s609 = smul.addr %s608, 8
        %s610 = scalar_lea.vmem %s3, %s609
      $region40: #{seq2seq_transformer_forward.6} parent=35 // pred_fallthru
        _
      // Predicated region
      $region41: #{seq2seq_transformer_forward.6} parent=35 // pred_check
        %p611 = pneg %p136
      $region42: #{seq2seq_transformer_forward.6} parent=35 // pred_check_branch
        %613 = sbr.rel (%p611) target = $region44
      $region43: #{seq2seq_transformer_forward.6} parent=35 // pred_region
        %p614 = scmp.lt.s32.totalorder %s27, 1
        %s615 = scalar_select %p614, %s27, 1
        %s616 = scalar_lea.vmem %s4, %s615
      $region44: #{seq2seq_transformer_forward.6} parent=35 // pred_fallthru
        _
      // Predicated region
      $region45: #{seq2seq_transformer_forward.6} parent=35 // pred_check
        %p617 = pneg %p162
      $region46: #{seq2seq_transformer_forward.6} parent=35 // pred_check_branch
        %619 = sbr.rel (%p617) target = $region48
      $region47: #{seq2seq_transformer_forward.6} parent=35 // pred_region
        %p620 = scmp.lt.s32.totalorder %s27, 1
        %s621 = scalar_select %p620, %s27, 1
        %s622 = smul.addr %s621, 4
        %s623 = smul.addr %s622, 8
        %s624 = scalar_lea.vmem %s5, %s623
      $region48: #{seq2seq_transformer_forward.6} parent=35 // pred_fallthru
        _
      // Predicated region
      $region49: #{seq2seq_transformer_forward.6} parent=35 // pred_check
        %p625 = pneg %p188
      $region50: #{seq2seq_transformer_forward.6} parent=35 // pred_check_branch
        %627 = sbr.rel (%p625) target = $region52
      $region51: #{seq2seq_transformer_forward.6} parent=35 // pred_region
        %p628 = scmp.lt.s32.totalorder %s27, 1
        %s629 = scalar_select %p628, %s27, 1
        %s630 = scalar_lea.vmem %s6, %s629
      $region52: #{seq2seq_transformer_forward.6} parent=35 // pred_fallthru
        _
      // Predicated region
      $region53: #{seq2seq_transformer_forward.6} parent=35 // pred_check
        %p631 = pneg %p214
      $region54: #{seq2seq_transformer_forward.6} parent=35 // pred_check_branch
        %633 = sbr.rel (%p631) target = $region56
      $region55: #{seq2seq_transformer_forward.6} parent=35 // pred_region
        %p634 = scmp.lt.s32.totalorder %s27, 1
        %s635 = scalar_select %p634, %s27, 1
        %s636 = smul.addr %s635, 4
        %s637 = smul.addr %s636, 8
        %s638 = scalar_lea.vmem %s7, %s637
      $region56: #{seq2seq_transformer_forward.6} parent=35 // pred_fallthru
        _
      // Predicated region
      $region57: #{seq2seq_transformer_forward.6} parent=35 // pred_check
        %p639 = pneg %p240
      $region58: #{seq2seq_transformer_forward.6} parent=35 // pred_check_branch
        %641 = sbr.rel (%p639) target = $region60
      $region59: #{seq2seq_transformer_forward.6} parent=35 // pred_region
        %p642 = scmp.lt.s32.totalorder %s27, 1
        %s643 = scalar_select %p642, %s27, 1
        %s644 = scalar_lea.vmem %s8, %s643
      $region60: #{seq2seq_transformer_forward.6} parent=35 // pred_fallthru
        _
      // Predicated region
      $region61: #{seq2seq_transformer_forward.6} parent=35 // pred_check
        %p645 = pneg %p266
      $region62: #{seq2seq_transformer_forward.6} parent=35 // pred_check_branch
        %647 = sbr.rel (%p645) target = $region64
      $region63: #{seq2seq_transformer_forward.6} parent=35 // pred_region
        %p648 = scmp.lt.s32.totalorder %s27, 1
        %s649 = scalar_select %p648, %s27, 1
        %s650 = smul.addr %s649, 4
        %s651 = smul.addr %s650, 8
        %s652 = scalar_lea.vmem %s9, %s651
      $region64: #{seq2seq_transformer_forward.6} parent=35 // pred_fallthru
        _
      // Predicated region
      $region65: #{seq2seq_transformer_forward.6} parent=35 // pred_check
        %p653 = pneg %p292
      $region66: #{seq2seq_transformer_forward.6} parent=35 // pred_check_branch
        %655 = sbr.rel (%p653) target = $region68
      $region67: #{seq2seq_transformer_forward.6} parent=35 // pred_region
        %p656 = scmp.lt.s32.totalorder %s27, 1
        %s657 = scalar_select %p656, %s27, 1
        %s658 = scalar_lea.vmem %s10, %s657
      $region68: #{seq2seq_transformer_forward.6} parent=35 // pred_fallthru
        _
      // Predicated region
      $region69: #{seq2seq_transformer_forward.6} parent=35 // pred_check
        %p659 = pneg %p318
      $region70: #{seq2seq_transformer_forward.6} parent=35 // pred_check_branch
        %661 = sbr.rel (%p659) target = $region72
      $region71: #{seq2seq_transformer_forward.6} parent=35 // pred_region
        %p662 = scmp.lt.s32.totalorder %s27, 1
        %s663 = scalar_select %p662, %s27, 1
        %s664 = scalar_lea.vmem %s11, %s663
      $region72: #{seq2seq_transformer_forward.6} parent=35 // pred_fallthru
        _
      // Predicated region
      $region73: #{seq2seq_transformer_forward.6} parent=35 // pred_check
        %p665 = pneg %p344
      $region74: #{seq2seq_transformer_forward.6} parent=35 // pred_check_branch
        %667 = sbr.rel (%p665) target = $region76
      $region75: #{seq2seq_transformer_forward.6} parent=35 // pred_region
        %p668 = scmp.lt.s32.totalorder %s27, 1
        %s669 = scalar_select %p668, %s27, 1
        %s670 = scalar_lea.vmem %s12, %s669
      $region76: #{seq2seq_transformer_forward.6} parent=35 // pred_fallthru
        _
      // Predicated region
      $region77: #{seq2seq_transformer_forward.6} parent=35 // pred_check
        %p671 = pneg %p370
      $region78: #{seq2seq_transformer_forward.6} parent=35 // pred_check_branch
        %673 = sbr.rel (%p671) target = $region80
      $region79: #{seq2seq_transformer_forward.6} parent=35 // pred_region
        %p674 = scmp.lt.s32.totalorder %s27, 1
        %s675 = scalar_select %p674, %s27, 1
        %s676 = smul.addr %s675, 4
        %s677 = smul.addr %s676, 8
        %s678 = scalar_lea.vmem %s13, %s677
      $region80: #{seq2seq_transformer_forward.6} parent=35 // pred_fallthru
        _
      // Predicated region
      $region81: #{seq2seq_transformer_forward.6} parent=35 // pred_check
        %p679 = pneg %p396
      $region82: #{seq2seq_transformer_forward.6} parent=35 // pred_check_branch
        %681 = sbr.rel (%p679) target = $region84
      $region83: #{seq2seq_transformer_forward.6} parent=35 // pred_region
        %p682 = scmp.lt.s32.totalorder %s27, 1
        %s683 = scalar_select %p682, %s27, 1
        %s684 = scalar_lea.vmem %s14, %s683
      $region84: #{seq2seq_transformer_forward.6} parent=35 // pred_fallthru
        _
      // Predicated region
      $region85: #{seq2seq_transformer_forward.6} parent=35 // pred_check
        %p685 = pneg %p422
      $region86: #{seq2seq_transformer_forward.6} parent=35 // pred_check_branch
        %687 = sbr.rel (%p685) target = $region88
      $region87: #{seq2seq_transformer_forward.6} parent=35 // pred_region
        %p688 = scmp.lt.s32.totalorder %s27, 1
        %s689 = scalar_select %p688, %s27, 1
        %s690 = smul.addr %s689, 8
        %s691 = smul.addr %s690, 8
        %s692 = scalar_lea.vmem %s15, %s691
      $region88: #{seq2seq_transformer_forward.6} parent=35 // pred_fallthru
        _
      // Predicated region
      $region89: #{seq2seq_transformer_forward.6} parent=35 // pred_check
        %p693 = pneg %p448
      $region90: #{seq2seq_transformer_forward.6} parent=35 // pred_check_branch
        %695 = sbr.rel (%p693) target = $region92
      $region91: #{seq2seq_transformer_forward.6} parent=35 // pred_region
        %p696 = scmp.lt.s32.totalorder %s27, 1
        %s697 = scalar_select %p696, %s27, 1
        %s698 = scalar_lea.vmem %s16, %s697
      $region92: #{seq2seq_transformer_forward.6} parent=35 // pred_fallthru
        _
      // Predicated region
      $region93: #{seq2seq_transformer_forward.6} parent=35 // pred_check
        %p699 = pneg %p474
      $region94: #{seq2seq_transformer_forward.6} parent=35 // pred_check_branch
        %701 = sbr.rel (%p699) target = $region96
      $region95: #{seq2seq_transformer_forward.6} parent=35 // pred_region
        %p702 = scmp.lt.s32.totalorder %s27, 1
        %s703 = scalar_select %p702, %s27, 1
        %s704 = scalar_lea.vmem %s17, %s703
      $region96: #{seq2seq_transformer_forward.6} parent=35 // pred_fallthru
        _
      // Predicated region
      $region97: #{seq2seq_transformer_forward.6} parent=35 // pred_check
        %p705 = pneg %p500
      $region98: #{seq2seq_transformer_forward.6} parent=35 // pred_check_branch
        %707 = sbr.rel (%p705) target = $region100
      $region99: #{seq2seq_transformer_forward.6} parent=35 // pred_region
        %p708 = scmp.lt.s32.totalorder %s27, 1
        %s709 = scalar_select %p708, %s27, 1
        %s710 = scalar_lea.vmem %s18, %s709
      $region100: #{seq2seq_transformer_forward.6} parent=35 // pred_fallthru
        _
    $region36: #{seq2seq_transformer_forward.6} parent=5 // pred_fallthru
      _
    %p711 = scmp.le.s32.totalorder 1, %s27
    %p712 = scmp.lt.s32.totalorder %s27, 3
    %p713 = pnand %p711, %p712
    %p714 = pneg %p713
    // Predicated region
    $region101: #{seq2seq_transformer_forward.6} parent=5 // pred_check
      _
    $region102: #{seq2seq_transformer_forward.6} parent=5 // pred_check_branch
      %716 = sbr.rel (%p713) target = $region104
    $region103: #{seq2seq_transformer_forward.6} parent=5 // pred_region
      %s717 = ssub.s32 %s27, 1
      %p718 = pneg %p48
      %p719 = pneg %p45
      %p720 = pneg %p69
      %p721 = pneg %p66
      %p722 = pneg %p90
      %p723 = pneg %p87
      %p724 = scmp.lt.s32.totalorder %s32, 1
      %s725 = scalar_select %p724, %s32, 1
      %s726 = smul.addr %s725, 4
      %s727 = smul.addr %s726, 8
      %s728 = scalar_lea.vmem %s3, %s727
      %p729 = pneg %p116
      %p730 = pneg %p113
      %p731 = scmp.lt.s32.totalorder %s32, 1
      %s732 = scalar_select %p731, %s32, 1
      %s733 = scalar_lea.vmem %s4, %s732
      %p734 = pneg %p142
      %p735 = pneg %p139
      %p736 = scmp.lt.s32.totalorder %s32, 1
      %s737 = scalar_select %p736, %s32, 1
      %s738 = smul.addr %s737, 4
      %s739 = smul.addr %s738, 8
      %s740 = scalar_lea.vmem %s5, %s739
      %p741 = pneg %p168
      %p742 = pneg %p165
      %p743 = scmp.lt.s32.totalorder %s32, 1
      %s744 = scalar_select %p743, %s32, 1
      %s745 = scalar_lea.vmem %s6, %s744
      %p746 = pneg %p194
      %p747 = pneg %p191
      %p748 = scmp.lt.s32.totalorder %s32, 1
      %s749 = scalar_select %p748, %s32, 1
      %s750 = smul.addr %s749, 4
      %s751 = smul.addr %s750, 8
      %s752 = scalar_lea.vmem %s7, %s751
      %p753 = pneg %p220
      %p754 = pneg %p217
      %p755 = scmp.lt.s32.totalorder %s32, 1
      %s756 = scalar_select %p755, %s32, 1
      %s757 = scalar_lea.vmem %s8, %s756
      %p758 = pneg %p246
      %p759 = pneg %p243
      %p760 = scmp.lt.s32.totalorder %s32, 1
      %s761 = scalar_select %p760, %s32, 1
      %s762 = smul.addr %s761, 4
      %s763 = smul.addr %s762, 8
      %s764 = scalar_lea.vmem %s9, %s763
      %p765 = pneg %p272
      %p766 = pneg %p269
      %p767 = scmp.lt.s32.totalorder %s32, 1
      %s768 = scalar_select %p767, %s32, 1
      %s769 = scalar_lea.vmem %s10, %s768
      %p770 = pneg %p298
      %p771 = pneg %p295
      %p772 = scmp.lt.s32.totalorder %s32, 1
      %s773 = scalar_select %p772, %s32, 1
      %s774 = scalar_lea.vmem %s11, %s773
      %p775 = pneg %p324
      %p776 = pneg %p321
      %p777 = scmp.lt.s32.totalorder %s32, 1
      %s778 = scalar_select %p777, %s32, 1
      %s779 = scalar_lea.vmem %s12, %s778
      %p780 = pneg %p350
      %p781 = pneg %p347
      %p782 = scmp.lt.s32.totalorder %s32, 1
      %s783 = scalar_select %p782, %s32, 1
      %s784 = smul.addr %s783, 4
      %s785 = smul.addr %s784, 8
      %s786 = scalar_lea.vmem %s13, %s785
      %p787 = pneg %p376
      %p788 = pneg %p373
      %p789 = scmp.lt.s32.totalorder %s32, 1
      %s790 = scalar_select %p789, %s32, 1
      %s791 = scalar_lea.vmem %s14, %s790
      %p792 = pneg %p402
      %p793 = pneg %p399
      %p794 = scmp.lt.s32.totalorder %s32, 1
      %s795 = scalar_select %p794, %s32, 1
      %s796 = smul.addr %s795, 8
      %s797 = smul.addr %s796, 8
      %s798 = scalar_lea.vmem %s15, %s797
      %p799 = pneg %p428
      %p800 = pneg %p425
      %p801 = scmp.lt.s32.totalorder %s32, 1
      %s802 = scalar_select %p801, %s32, 1
      %s803 = scalar_lea.vmem %s16, %s802
      %p804 = pneg %p454
      %p805 = pneg %p451
      %p806 = scmp.lt.s32.totalorder %s32, 1
      %s807 = scalar_select %p806, %s32, 1
      %s808 = scalar_lea.vmem %s17, %s807
      %p809 = pneg %p480
      %p810 = pneg %p477
      %p811 = scmp.lt.s32.totalorder %s32, 1
      %s812 = scalar_select %p811, %s32, 1
      %s813 = scalar_lea.vmem %s18, %s812
      %p814 = pneg %p506
      %p815 = pneg %p503
      %p816 = pneg %p527
      %p817 = pneg %p524
      %p818 = pneg %p548
      %p819 = pneg %p545
      %p820 = pneg %p569
      %p821 = pneg %p566
      %p822 = scmp.lt.s32.totalorder %s32, 1
      %s823 = scalar_select %p822, %s32, 1
      %s824 = smul.addr %s823, 4
      %s825 = smul.addr %s824, 8
      %s826 = scalar_lea.vmem %s3, %s825
      %p827 = scmp.lt.s32.totalorder %s32, 1
      %s828 = scalar_select %p827, %s32, 1
      %s829 = scalar_lea.vmem %s4, %s828
      %p830 = scmp.lt.s32.totalorder %s32, 1
      %s831 = scalar_select %p830, %s32, 1
      %s832 = smul.addr %s831, 4
      %s833 = smul.addr %s832, 8
      %s834 = scalar_lea.vmem %s5, %s833
      %p835 = scmp.lt.s32.totalorder %s32, 1
      %s836 = scalar_select %p835, %s32, 1
      %s837 = scalar_lea.vmem %s6, %s836
      %p838 = scmp.lt.s32.totalorder %s32, 1
      %s839 = scalar_select %p838, %s32, 1
      %s840 = smul.addr %s839, 4
      %s841 = smul.addr %s840, 8
      %s842 = scalar_lea.vmem %s7, %s841
      %p843 = scmp.lt.s32.totalorder %s32, 1
      %s844 = scalar_select %p843, %s32, 1
      %s845 = scalar_lea.vmem %s8, %s844
      %p846 = scmp.lt.s32.totalorder %s32, 1
      %s847 = scalar_select %p846, %s32, 1
      %s848 = smul.addr %s847, 4
      %s849 = smul.addr %s848, 8
      %s850 = scalar_lea.vmem %s9, %s849
      %p851 = scmp.lt.s32.totalorder %s32, 1
      %s852 = scalar_select %p851, %s32, 1
      %s853 = scalar_lea.vmem %s10, %s852
      %p854 = scmp.lt.s32.totalorder %s32, 1
      %s855 = scalar_select %p854, %s32, 1
      %s856 = scalar_lea.vmem %s11, %s855
      %p857 = scmp.lt.s32.totalorder %s32, 1
      %s858 = scalar_select %p857, %s32, 1
      %s859 = scalar_lea.vmem %s12, %s858
      %p860 = scmp.lt.s32.totalorder %s32, 1
      %s861 = scalar_select %p860, %s32, 1
      %s862 = smul.addr %s861, 4
      %s863 = smul.addr %s862, 8
      %s864 = scalar_lea.vmem %s13, %s863
      %p865 = scmp.lt.s32.totalorder %s32, 1
      %s866 = scalar_select %p865, %s32, 1
      %s867 = scalar_lea.vmem %s14, %s866
      %p868 = scmp.lt.s32.totalorder %s32, 1
      %s869 = scalar_select %p868, %s32, 1
      %s870 = smul.addr %s869, 8
      %s871 = smul.addr %s870, 8
      %s872 = scalar_lea.vmem %s15, %s871
      %p873 = scmp.lt.s32.totalorder %s32, 1
      %s874 = scalar_select %p873, %s32, 1
      %s875 = scalar_lea.vmem %s16, %s874
      %p876 = scmp.lt.s32.totalorder %s32, 1
      %s877 = scalar_select %p876, %s32, 1
      %s878 = scalar_lea.vmem %s17, %s877
      %p879 = scmp.lt.s32.totalorder %s32, 1
      %s880 = scalar_select %p879, %s32, 1
      %s881 = scalar_lea.vmem %s18, %s880
      %p882 = scmp.eq.s32.totalorder %s32, 0
      // Predicated region
      $region105: #{seq2seq_transformer_forward.6} parent=103 // pred_check
        %p883 = pneg %p882
      $region106: #{seq2seq_transformer_forward.6} parent=103 // pred_check_branch
        %885 = sbr.rel (%p883) target = $region108
      $region107: #{seq2seq_transformer_forward.6} parent=103 // pred_region
        %v886 = vld [vmem:[%s0] sm:$0xff]
        %vm887 = vcmask 261120
        %888 = vst.msk [vmem:[%s21] sm:$0xff] %vm887, %v886
      $region108: #{seq2seq_transformer_forward.6} parent=103 // pred_fallthru
        _
      %v889 = vld [vmem:[%s21] sm:$0xff]
      %v890 = vld [vmem:[%s826] sm:$0xff]
      %v891 = vld [vmem:[%s826 + $0x8] sm:$0xff]
      %v892 = vld [vmem:[%s826 + $0x10] sm:$0xff]
      %v893 = vld [vmem:[%s826 + $0x18] sm:$0xff]
      %v894 = vld [vmem:[%s829] sm:$0x1]
      %v895 = vld [vmem:[%s834] sm:$0xff]
      %v896 = vld [vmem:[%s834 + $0x8] sm:$0xff]
      %v897 = vld [vmem:[%s834 + $0x10] sm:$0xff]
      %v898 = vld [vmem:[%s834 + $0x18] sm:$0xff]
      %v899 = vld [vmem:[%s837] sm:$0x1]
      %v900 = vld [vmem:[%s842] sm:$0xff]
      %v901 = vld [vmem:[%s842 + $0x8] sm:$0xff]
      %v902 = vld [vmem:[%s842 + $0x10] sm:$0xff]
      %v903 = vld [vmem:[%s842 + $0x18] sm:$0xff]
      %v904 = vld [vmem:[%s845] sm:$0x1]
      %v905 = vld [vmem:[%s850] sm:$0xff]
      %v906 = vld [vmem:[%s850 + $0x8] sm:$0xff]
      %v907 = vld [vmem:[%s850 + $0x10] sm:$0xff]
      %v908 = vld [vmem:[%s850 + $0x18] sm:$0xff]
      %v909 = vld [vmem:[%s853] sm:$0x1]
      %v910 = vld [vmem:[%s1] sm:$0xff]
      %v912 = vlaneseq
      %v913 = vshrl.u32 %v912, 7
      %v914 = vsub.s32 0, %v913
      %v915 = vrot.slane %v894, %v914
      %vm917 = vcmask 261120
      %v919 = vsel %vm917, %v889, 0
      %921 = vmatprep.subr.mxu0 0.0
      %922 = vmatpush1.msra.mxu0 %v890
      %923 = vmatprep.subr.mxu0 0.0
      %924 = vmatpush1.msra.mxu0 %v891
      %925 = vmatprep.subr.mxu0 0.0
      %926 = vmatpush1.msra.mxu0 %v892
      %927 = vmatprep.subr.mxu0 0.0
      %928 = vmatpush1.msra.mxu0 %v893
      %929 = vmatprep.subr.mxu0 0.0
      %930 = vmatpush1.msra.mxu0 0.0
      %931 = vmatprep.subr.mxu0 0.0
      %932 = vmatpush1.msra.mxu0 0.0
      %933 = vmatprep.subr.mxu0 0.0
      %934 = vmatpush1.msra.mxu0 0.0
      %935 = vmatprep.subr.mxu0 0.0
      %936 = vmatpush1.msra.mxu0 0.0
      %937 = vmatprep.subr.mxu0 0.0
      %938 = vmatpush1.msra.mxu0 0.0
      %939 = vmatprep.subr.mxu0 0.0
      %940 = vmatpush1.msra.mxu0 0.0
      %941 = vmatprep.subr.mxu0 0.0
      %942 = vmatpush1.msra.mxu0 0.0
      %943 = vmatprep.subr.mxu0 0.0
      %944 = vmatpush1.msra.mxu0 0.0
      %945 = vmatprep.subr.mxu0 0.0
      %946 = vmatpush1.msra.mxu0 0.0
      %947 = vmatprep.subr.mxu0 0.0
      %948 = vmatpush1.msra.mxu0 0.0
      %949 = vmatprep.subr.mxu0 0.0
      %950 = vmatpush1.msra.mxu0 0.0
      %951 = vmatprep.subr.mxu0 0.0
      %952 = vmatpush1.msra.mxu0 0.0
      %953 = vmatprep.subr.mxu0 0.0
      %954 = vmatpush1.msra.mxu0 0.0
      %955 = vmatprep.subr.mxu0 0.0
      %956 = vmatpush1.msra.mxu0 0.0
      %957 = vmatprep.subr.mxu0 0.0
      %958 = vmatpush1.msra.mxu0 0.0
      %959 = vmatprep.subr.mxu0 0.0
      %960 = vmatpush1.msra.mxu0 0.0
      %961 = vmatprep.subr.mxu0 0.0
      %962 = vmatpush1.msra.mxu0 0.0
      %963 = vmatprep.subr.mxu0 0.0
      %964 = vmatpush1.msra.mxu0 0.0
      %965 = vmatprep.subr.mxu0 0.0
      %966 = vmatpush1.msra.mxu0 0.0
      %967 = vmatprep.subr.mxu0 0.0
      %968 = vmatpush1.msra.mxu0 0.0
      %969 = vmatprep.subr.mxu0 0.0
      %970 = vmatpush1.msra.mxu0 0.0
      %971 = vmatprep.subr.mxu0 0.0
      %972 = vmatpush1.msra.mxu0 0.0
      %973 = vmatprep.subr.mxu0 0.0
      %974 = vmatpush1.msra.mxu0 0.0
      %975 = vmatprep.subr.mxu0 0.0
      %976 = vmatpush1.msra.mxu0 0.0
      %977 = vmatprep.subr.mxu0 0.0
      %978 = vmatpush1.msra.mxu0 0.0
      %979 = vmatprep.subr.mxu0 0.0
      %980 = vmatpush1.msra.mxu0 0.0
      %981 = vmatprep.subr.mxu0 0.0
      %982 = vmatpush1.msra.mxu0 0.0
      %983 = vmatprep.subr.mxu0 0.0
      %984 = vmatpush1.msra.mxu0 0.0
      %985 = vmatprep.mubr.f32.mxu0 0.0
      %986 = vmatmul.mubr.f32.gmra.mrb[0].mxu0 %v919
      %v987 = vpop.f32.mrb[0].mxu0
      %v988 = vadd.f32 %v915, %v987
      %v989 = vpop.f32.mrb[0].mxu0
      %990 = vdwg.mxu0
      %v992 = vlaneseq
      %v993 = vshrl.u32 %v992, 7
      %v994 = vsub.s32 0, %v993
      %v995 = vrot.slane %v899, %v994
      %997 = vmatprep.subr.mxu0 0.0
      %998 = vmatpush1.msra.mxu0 %v895
      %999 = vmatprep.subr.mxu0 0.0
      %1000 = vmatpush1.msra.mxu0 %v896
      %1001 = vmatprep.subr.mxu0 0.0
      %1002 = vmatpush1.msra.mxu0 %v897
      %1003 = vmatprep.subr.mxu0 0.0
      %1004 = vmatpush1.msra.mxu0 %v898
      %1005 = vmatprep.subr.mxu0 0.0
      %1006 = vmatpush1.msra.mxu0 0.0
      %1007 = vmatprep.subr.mxu0 0.0
      %1008 = vmatpush1.msra.mxu0 0.0
      %1009 = vmatprep.subr.mxu0 0.0
      %1010 = vmatpush1.msra.mxu0 0.0
      %1011 = vmatprep.subr.mxu0 0.0
      %1012 = vmatpush1.msra.mxu0 0.0
      %1013 = vmatprep.subr.mxu0 0.0
      %1014 = vmatpush1.msra.mxu0 0.0
      %1015 = vmatprep.subr.mxu0 0.0
      %1016 = vmatpush1.msra.mxu0 0.0
      %1017 = vmatprep.subr.mxu0 0.0
      %1018 = vmatpush1.msra.mxu0 0.0
      %1019 = vmatprep.subr.mxu0 0.0
      %1020 = vmatpush1.msra.mxu0 0.0
      %1021 = vmatprep.subr.mxu0 0.0
      %1022 = vmatpush1.msra.mxu0 0.0
      %1023 = vmatprep.subr.mxu0 0.0
      %1024 = vmatpush1.msra.mxu0 0.0
      %1025 = vmatprep.subr.mxu0 0.0
      %1026 = vmatpush1.msra.mxu0 0.0
      %1027 = vmatprep.subr.mxu0 0.0
      %1028 = vmatpush1.msra.mxu0 0.0
      %1029 = vmatprep.subr.mxu0 0.0
      %1030 = vmatpush1.msra.mxu0 0.0
      %1031 = vmatprep.subr.mxu0 0.0
      %1032 = vmatpush1.msra.mxu0 0.0
      %1033 = vmatprep.subr.mxu0 0.0
      %1034 = vmatpush1.msra.mxu0 0.0
      %1035 = vmatprep.subr.mxu0 0.0
      %1036 = vmatpush1.msra.mxu0 0.0
      %1037 = vmatprep.subr.mxu0 0.0
      %1038 = vmatpush1.msra.mxu0 0.0
      %1039 = vmatprep.subr.mxu0 0.0
      %1040 = vmatpush1.msra.mxu0 0.0
      %1041 = vmatprep.subr.mxu0 0.0
      %1042 = vmatpush1.msra.mxu0 0.0
      %1043 = vmatprep.subr.mxu0 0.0
      %1044 = vmatpush1.msra.mxu0 0.0
      %1045 = vmatprep.subr.mxu0 0.0
      %1046 = vmatpush1.msra.mxu0 0.0
      %1047 = vmatprep.subr.mxu0 0.0
      %1048 = vmatpush1.msra.mxu0 0.0
      %1049 = vmatprep.subr.mxu0 0.0
      %1050 = vmatpush1.msra.mxu0 0.0
      %1051 = vmatprep.subr.mxu0 0.0
      %1052 = vmatpush1.msra.mxu0 0.0
      %1053 = vmatprep.subr.mxu0 0.0
      %1054 = vmatpush1.msra.mxu0 0.0
      %1055 = vmatprep.subr.mxu0 0.0
      %1056 = vmatpush1.msra.mxu0 0.0
      %1057 = vmatprep.subr.mxu0 0.0
      %1058 = vmatpush1.msra.mxu0 0.0
      %1059 = vmatprep.subr.mxu0 0.0
      %1060 = vmatpush1.msra.mxu0 0.0
      %1061 = vmatprep.mubr.f32.mxu0 0.0
      %1062 = vmatmul.mubr.f32.gmra.mrb[0].mxu0 %v919
      %v1063 = vpop.f32.mrb[0].mxu0
      %v1064 = vadd.f32 %v995, %v1063
      %v1065 = vpop.f32.mrb[0].mxu0
      %1066 = vdwg.mxu0
      %v1068 = vlaneseq
      %v1069 = vshrl.u32 %v1068, 7
      %v1070 = vsub.s32 0, %v1069
      %v1071 = vrot.slane %v904, %v1070
      %1073 = vmatprep.subr.mxu0 0.0
      %1074 = vmatpush1.msra.mxu0 %v900
      %1075 = vmatprep.subr.mxu0 0.0
      %1076 = vmatpush1.msra.mxu0 %v901
      %1077 = vmatprep.subr.mxu0 0.0
      %1078 = vmatpush1.msra.mxu0 %v902
      %1079 = vmatprep.subr.mxu0 0.0
      %1080 = vmatpush1.msra.mxu0 %v903
      %1081 = vmatprep.subr.mxu0 0.0
      %1082 = vmatpush1.msra.mxu0 0.0
      %1083 = vmatprep.subr.mxu0 0.0
      %1084 = vmatpush1.msra.mxu0 0.0
      %1085 = vmatprep.subr.mxu0 0.0
      %1086 = vmatpush1.msra.mxu0 0.0
      %1087 = vmatprep.subr.mxu0 0.0
      %1088 = vmatpush1.msra.mxu0 0.0
      %1089 = vmatprep.subr.mxu0 0.0
      %1090 = vmatpush1.msra.mxu0 0.0
      %1091 = vmatprep.subr.mxu0 0.0
      %1092 = vmatpush1.msra.mxu0 0.0
      %1093 = vmatprep.subr.mxu0 0.0
      %1094 = vmatpush1.msra.mxu0 0.0
      %1095 = vmatprep.subr.mxu0 0.0
      %1096 = vmatpush1.msra.mxu0 0.0
      %1097 = vmatprep.subr.mxu0 0.0
      %1098 = vmatpush1.msra.mxu0 0.0
      %1099 = vmatprep.subr.mxu0 0.0
      %1100 = vmatpush1.msra.mxu0 0.0
      %1101 = vmatprep.subr.mxu0 0.0
      %1102 = vmatpush1.msra.mxu0 0.0
      %1103 = vmatprep.subr.mxu0 0.0
      %1104 = vmatpush1.msra.mxu0 0.0
      %1105 = vmatprep.subr.mxu0 0.0
      %1106 = vmatpush1.msra.mxu0 0.0
      %1107 = vmatprep.subr.mxu0 0.0
      %1108 = vmatpush1.msra.mxu0 0.0
      %1109 = vmatprep.subr.mxu0 0.0
      %1110 = vmatpush1.msra.mxu0 0.0
      %1111 = vmatprep.subr.mxu0 0.0
      %1112 = vmatpush1.msra.mxu0 0.0
      %1113 = vmatprep.subr.mxu0 0.0
      %1114 = vmatpush1.msra.mxu0 0.0
      %1115 = vmatprep.subr.mxu0 0.0
      %1116 = vmatpush1.msra.mxu0 0.0
      %1117 = vmatprep.subr.mxu0 0.0
      %1118 = vmatpush1.msra.mxu0 0.0
      %1119 = vmatprep.subr.mxu0 0.0
      %1120 = vmatpush1.msra.mxu0 0.0
      %1121 = vmatprep.subr.mxu0 0.0
      %1122 = vmatpush1.msra.mxu0 0.0
      %1123 = vmatprep.subr.mxu0 0.0
      %1124 = vmatpush1.msra.mxu0 0.0
      %1125 = vmatprep.subr.mxu0 0.0
      %1126 = vmatpush1.msra.mxu0 0.0
      %1127 = vmatprep.subr.mxu0 0.0
      %1128 = vmatpush1.msra.mxu0 0.0
      %1129 = vmatprep.subr.mxu0 0.0
      %1130 = vmatpush1.msra.mxu0 0.0
      %1131 = vmatprep.subr.mxu0 0.0
      %1132 = vmatpush1.msra.mxu0 0.0
      %1133 = vmatprep.subr.mxu0 0.0
      %1134 = vmatpush1.msra.mxu0 0.0
      %1135 = vmatprep.subr.mxu0 0.0
      %1136 = vmatpush1.msra.mxu0 0.0
      %1137 = vmatprep.mubr.f32.mxu0 0.0
      %1138 = vmatmul.mubr.f32.gmra.mrb[0].mxu0 %v919
      %v1139 = vpop.f32.mrb[0].mxu0
      %v1140 = vadd.f32 %v1071, %v1139
      %v1141 = vpop.f32.mrb[0].mxu0
      %1142 = vdwg.mxu0
      %v1143 = vld [vmem:[%s2] sm:$0x1]
      %v1145 = vlaneseq
      %v1146 = vshrl.u32 %v1145, 7
      %v1147 = vsub.s32 0, %v1146
      %v1148 = vrot.slane %v1143, %v1147
      %v1150 = vmul.f32 %v988, %v1148
      %v1152 = vsel %vm917, %v1150, 0
      %v1155 = vsel %vm917, %v1064, 0
      %1157 = vmatprep.subr.mxu0 0.0
      %1158 = vmatpush1.xpose.msra.mxu0 %v1155
      %1159 = vmatprep.subr.mxu0 0.0
      %1160 = vmatpush1.xpose.msra.mxu0 0.0
      %1161 = vmatprep.subr.mxu0 0.0
      %1162 = vmatpush1.xpose.msra.mxu0 0.0
      %1163 = vmatprep.subr.mxu0 0.0
      %1164 = vmatpush1.xpose.msra.mxu0 0.0
      %1165 = vmatprep.subr.mxu0 0.0
      %1166 = vmatpush1.xpose.msra.mxu0 0.0
      %1167 = vmatprep.subr.mxu0 0.0
      %1168 = vmatpush1.xpose.msra.mxu0 0.0
      %1169 = vmatprep.subr.mxu0 0.0
      %1170 = vmatpush1.xpose.msra.mxu0 0.0
      %1171 = vmatprep.subr.mxu0 0.0
      %1172 = vmatpush1.xpose.msra.mxu0 0.0
      %1173 = vmatprep.subr.mxu0 0.0
      %1174 = vmatpush1.xpose.msra.mxu0 0.0
      %1175 = vmatprep.subr.mxu0 0.0
      %1176 = vmatpush1.xpose.msra.mxu0 0.0
      %1177 = vmatprep.subr.mxu0 0.0
      %1178 = vmatpush1.xpose.msra.mxu0 0.0
      %1179 = vmatprep.subr.mxu0 0.0
      %1180 = vmatpush1.xpose.msra.mxu0 0.0
      %1181 = vmatprep.subr.mxu0 0.0
      %1182 = vmatpush1.xpose.msra.mxu0 0.0
      %1183 = vmatprep.subr.mxu0 0.0
      %1184 = vmatpush1.xpose.msra.mxu0 0.0
      %1185 = vmatprep.subr.mxu0 0.0
      %1186 = vmatpush1.xpose.msra.mxu0 0.0
      %1187 = vmatprep.subr.mxu0 0.0
      %1188 = vmatpush1.xpose.msra.mxu0 0.0
      %1189 = vmatprep.subr.mxu0 0.0
      %1190 = vmatpush1.xpose.msra.mxu0 0.0
      %1191 = vmatprep.subr.mxu0 0.0
      %1192 = vmatpush1.xpose.msra.mxu0 0.0
      %1193 = vmatprep.subr.mxu0 0.0
      %1194 = vmatpush1.xpose.msra.mxu0 0.0
      %1195 = vmatprep.subr.mxu0 0.0
      %1196 = vmatpush1.xpose.msra.mxu0 0.0
      %1197 = vmatprep.subr.mxu0 0.0
      %1198 = vmatpush1.xpose.msra.mxu0 0.0
      %1199 = vmatprep.subr.mxu0 0.0
      %1200 = vmatpush1.xpose.msra.mxu0 0.0
      %1201 = vmatprep.subr.mxu0 0.0
      %1202 = vmatpush1.xpose.msra.mxu0 0.0
      %1203 = vmatprep.subr.mxu0 0.0
      %1204 = vmatpush1.xpose.msra.mxu0 0.0
      %1205 = vmatprep.subr.mxu0 0.0
      %1206 = vmatpush1.xpose.msra.mxu0 0.0
      %1207 = vmatprep.subr.mxu0 0.0
      %1208 = vmatpush1.xpose.msra.mxu0 0.0
      %1209 = vmatprep.subr.mxu0 0.0
      %1210 = vmatpush1.xpose.msra.mxu0 0.0
      %1211 = vmatprep.subr.mxu0 0.0
      %1212 = vmatpush1.xpose.msra.mxu0 0.0
      %1213 = vmatprep.subr.mxu0 0.0
      %1214 = vmatpush1.xpose.msra.mxu0 0.0
      %1215 = vmatprep.subr.mxu0 0.0
      %1216 = vmatpush1.xpose.msra.mxu0 0.0
      %1217 = vmatprep.subr.mxu0 0.0
      %1218 = vmatpush1.xpose.msra.mxu0 0.0
      %1219 = vmatprep.subr.mxu0 0.0
      %1220 = vmatpush1.xpose.msra.mxu0 0.0
      %1221 = vmatprep.mubr.f32.mxu0 0.0
      %1222 = vmatmul.mubr.f32.gmra.mrb[0].mxu0 %v1152
      %v1223 = vpop.f32.mrb[0].mxu0
      %v1224 = vadd.f32 0.0, %v1223
      %v1225 = vpop.f32.mrb[0].mxu0
      %1226 = vdwg.mxu0
      %v1227 = vmul.f32 %v1224, 0.35355338
      %v1228 = vadd.f32 %v1227, %v910
      %vm1229 = vcmask 64512
      %v1230 = vsel %vm1229, %v1228, -inf
      %1231 = vmax.xlane.f32.xlu0 %v1230
      %v1232 = vpop.xlane.xlu0 %1231
      %v1233 = vsub.f32 %v1228, %v1232
      %v1234 = vmul.f32 %v1233, 1.442695
      %v1235 = vpow.pop %v1234
      %v1236 = vsel %vm1229, %v1235, 0.0
      %1237 = vadd.xlane.f32.xlu0 %v1236
      %v1238 = vpop.xlane.xlu0 %1237
      %v1239 = vrcp.pop %v1238
      %v1240 = vmul.f32 %v1235, %v1239
      %v1241 = vmul.f32 %v1140, %v1148
      %s1242 = scalar_lea.vmem %s2, 1
      %v1243 = vld [vmem:[%s1242] sm:$0x1]
      %v1245 = vlaneseq
      %v1246 = vshrl.u32 %v1245, 7
      %v1247 = vsub.s32 0, %v1246
      %v1248 = vrot.slane %v1243, %v1247
      %v1250 = vmul.f32 %v988, %v1248
      %v1252 = vsel %vm917, %v1250, 0
      %1254 = vmatprep.subr.mxu0 0.0
      %1255 = vmatpush1.xpose.msra.mxu0 %v1155
      %1256 = vmatprep.subr.mxu0 0.0
      %1257 = vmatpush1.xpose.msra.mxu0 0.0
      %1258 = vmatprep.subr.mxu0 0.0
      %1259 = vmatpush1.xpose.msra.mxu0 0.0
      %1260 = vmatprep.subr.mxu0 0.0
      %1261 = vmatpush1.xpose.msra.mxu0 0.0
      %1262 = vmatprep.subr.mxu0 0.0
      %1263 = vmatpush1.xpose.msra.mxu0 0.0
      %1264 = vmatprep.subr.mxu0 0.0
      %1265 = vmatpush1.xpose.msra.mxu0 0.0
      %1266 = vmatprep.subr.mxu0 0.0
      %1267 = vmatpush1.xpose.msra.mxu0 0.0
      %1268 = vmatprep.subr.mxu0 0.0
      %1269 = vmatpush1.xpose.msra.mxu0 0.0
      %1270 = vmatprep.subr.mxu0 0.0
      %1271 = vmatpush1.xpose.msra.mxu0 0.0
      %1272 = vmatprep.subr.mxu0 0.0
      %1273 = vmatpush1.xpose.msra.mxu0 0.0
      %1274 = vmatprep.subr.mxu0 0.0
      %1275 = vmatpush1.xpose.msra.mxu0 0.0
      %1276 = vmatprep.subr.mxu0 0.0
      %1277 = vmatpush1.xpose.msra.mxu0 0.0
      %1278 = vmatprep.subr.mxu0 0.0
      %1279 = vmatpush1.xpose.msra.mxu0 0.0
      %1280 = vmatprep.subr.mxu0 0.0
      %1281 = vmatpush1.xpose.msra.mxu0 0.0
      %1282 = vmatprep.subr.mxu0 0.0
      %1283 = vmatpush1.xpose.msra.mxu0 0.0
      %1284 = vmatprep.subr.mxu0 0.0
      %1285 = vmatpush1.xpose.msra.mxu0 0.0
      %1286 = vmatprep.subr.mxu0 0.0
      %1287 = vmatpush1.xpose.msra.mxu0 0.0
      %1288 = vmatprep.subr.mxu0 0.0
      %1289 = vmatpush1.xpose.msra.mxu0 0.0
      %1290 = vmatprep.subr.mxu0 0.0
      %1291 = vmatpush1.xpose.msra.mxu0 0.0
      %1292 = vmatprep.subr.mxu0 0.0
      %1293 = vmatpush1.xpose.msra.mxu0 0.0
      %1294 = vmatprep.subr.mxu0 0.0
      %1295 = vmatpush1.xpose.msra.mxu0 0.0
      %1296 = vmatprep.subr.mxu0 0.0
      %1297 = vmatpush1.xpose.msra.mxu0 0.0
      %1298 = vmatprep.subr.mxu0 0.0
      %1299 = vmatpush1.xpose.msra.mxu0 0.0
      %1300 = vmatprep.subr.mxu0 0.0
      %1301 = vmatpush1.xpose.msra.mxu0 0.0
      %1302 = vmatprep.subr.mxu0 0.0
      %1303 = vmatpush1.xpose.msra.mxu0 0.0
      %1304 = vmatprep.subr.mxu0 0.0
      %1305 = vmatpush1.xpose.msra.mxu0 0.0
      %1306 = vmatprep.subr.mxu0 0.0
      %1307 = vmatpush1.xpose.msra.mxu0 0.0
      %1308 = vmatprep.subr.mxu0 0.0
      %1309 = vmatpush1.xpose.msra.mxu0 0.0
      %1310 = vmatprep.subr.mxu0 0.0
      %1311 = vmatpush1.xpose.msra.mxu0 0.0
      %1312 = vmatprep.subr.mxu0 0.0
      %1313 = vmatpush1.xpose.msra.mxu0 0.0
      %1314 = vmatprep.subr.mxu0 0.0
      %1315 = vmatpush1.xpose.msra.mxu0 0.0
      %1316 = vmatprep.subr.mxu0 0.0
      %1317 = vmatpush1.xpose.msra.mxu0 0.0
      %1318 = vmatprep.mubr.f32.mxu0 0.0
      %1319 = vmatmul.mubr.f32.gmra.mrb[0].mxu0 %v1252
      %v1320 = vpop.f32.mrb[0].mxu0
      %v1321 = vadd.f32 0.0, %v1320
      %v1322 = vpop.f32.mrb[0].mxu0
      %1323 = vdwg.mxu0
      %v1324 = vmul.f32 %v1321, 0.35355338
      %v1325 = vadd.f32 %v1324, %v910
      %v1326 = vsel %vm1229, %v1325, -inf
      %1327 = vmax.xlane.f32.xlu0 %v1326
      %v1328 = vpop.xlane.xlu0 %1327
      %v1329 = vsub.f32 %v1325, %v1328
      %v1330 = vmul.f32 %v1329, 1.442695
      %v1331 = vpow.pop %v1330
      %v1332 = vsel %vm1229, %v1331, 0.0
      %1333 = vadd.xlane.f32.xlu0 %v1332
      %v1334 = vpop.xlane.xlu0 %1333
      %v1335 = vrcp.pop %v1334
      %v1336 = vmul.f32 %v1331, %v1335
      %v1337 = vmul.f32 %v1140, %v1248
      %v1339 = vsel %vm1229, %v1336, 0
      %1341 = vmatprep.subr.mxu0 0.0
      %1342 = vmatpush1.msra.mxu0 %v1337
      %1343 = vmatprep.subr.mxu0 0.0
      %1344 = vmatpush1.msra.mxu0 0.0
      %1345 = vmatprep.subr.mxu0 0.0
      %1346 = vmatpush1.msra.mxu0 0.0
      %1347 = vmatprep.subr.mxu0 0.0
      %1348 = vmatpush1.msra.mxu0 0.0
      %1349 = vmatprep.subr.mxu0 0.0
      %1350 = vmatpush1.msra.mxu0 0.0
      %1351 = vmatprep.subr.mxu0 0.0
      %1352 = vmatpush1.msra.mxu0 0.0
      %1353 = vmatprep.subr.mxu0 0.0
      %1354 = vmatpush1.msra.mxu0 0.0
      %1355 = vmatprep.subr.mxu0 0.0
      %1356 = vmatpush1.msra.mxu0 0.0
      %1357 = vmatprep.subr.mxu0 0.0
      %1358 = vmatpush1.msra.mxu0 0.0
      %1359 = vmatprep.subr.mxu0 0.0
      %1360 = vmatpush1.msra.mxu0 0.0
      %1361 = vmatprep.subr.mxu0 0.0
      %1362 = vmatpush1.msra.mxu0 0.0
      %1363 = vmatprep.subr.mxu0 0.0
      %1364 = vmatpush1.msra.mxu0 0.0
      %1365 = vmatprep.subr.mxu0 0.0
      %1366 = vmatpush1.msra.mxu0 0.0
      %1367 = vmatprep.subr.mxu0 0.0
      %1368 = vmatpush1.msra.mxu0 0.0
      %1369 = vmatprep.subr.mxu0 0.0
      %1370 = vmatpush1.msra.mxu0 0.0
      %1371 = vmatprep.subr.mxu0 0.0
      %1372 = vmatpush1.msra.mxu0 0.0
      %1373 = vmatprep.subr.mxu0 0.0
      %1374 = vmatpush1.msra.mxu0 0.0
      %1375 = vmatprep.subr.mxu0 0.0
      %1376 = vmatpush1.msra.mxu0 0.0
      %1377 = vmatprep.subr.mxu0 0.0
      %1378 = vmatpush1.msra.mxu0 0.0
      %1379 = vmatprep.subr.mxu0 0.0
      %1380 = vmatpush1.msra.mxu0 0.0
      %1381 = vmatprep.subr.mxu0 0.0
      %1382 = vmatpush1.msra.mxu0 0.0
      %1383 = vmatprep.subr.mxu0 0.0
      %1384 = vmatpush1.msra.mxu0 0.0
      %1385 = vmatprep.subr.mxu0 0.0
      %1386 = vmatpush1.msra.mxu0 0.0
      %1387 = vmatprep.subr.mxu0 0.0
      %1388 = vmatpush1.msra.mxu0 0.0
      %1389 = vmatprep.subr.mxu0 0.0
      %1390 = vmatpush1.msra.mxu0 0.0
      %1391 = vmatprep.subr.mxu0 0.0
      %1392 = vmatpush1.msra.mxu0 0.0
      %1393 = vmatprep.subr.mxu0 0.0
      %1394 = vmatpush1.msra.mxu0 0.0
      %1395 = vmatprep.subr.mxu0 0.0
      %1396 = vmatpush1.msra.mxu0 0.0
      %1397 = vmatprep.subr.mxu0 0.0
      %1398 = vmatpush1.msra.mxu0 0.0
      %1399 = vmatprep.subr.mxu0 0.0
      %1400 = vmatpush1.msra.mxu0 0.0
      %1401 = vmatprep.subr.mxu0 0.0
      %1402 = vmatpush1.msra.mxu0 0.0
      %1403 = vmatprep.subr.mxu0 0.0
      %1404 = vmatpush1.msra.mxu0 0.0
      %1405 = vmatprep.mubr.f32.mxu0 0.0
      %1406 = vmatmul.mubr.f32.gmra.mrb[0].mxu0 %v1339
      %v1407 = vpop.f32.mrb[0].mxu0
      %v1408 = vadd.f32 0.0, %v1407
      %v1409 = vpop.f32.mrb[0].mxu0
      %1410 = vdwg.mxu0
      %v1412 = vsel %vm1229, %v1240, 0
      %1414 = vmatprep.subr.mxu0 0.0
      %1415 = vmatpush1.msra.mxu0 %v1241
      %1416 = vmatprep.subr.mxu0 0.0
      %1417 = vmatpush1.msra.mxu0 0.0
      %1418 = vmatprep.subr.mxu0 0.0
      %1419 = vmatpush1.msra.mxu0 0.0
      %1420 = vmatprep.subr.mxu0 0.0
      %1421 = vmatpush1.msra.mxu0 0.0
      %1422 = vmatprep.subr.mxu0 0.0
      %1423 = vmatpush1.msra.mxu0 0.0
      %1424 = vmatprep.subr.mxu0 0.0
      %1425 = vmatpush1.msra.mxu0 0.0
      %1426 = vmatprep.subr.mxu0 0.0
      %1427 = vmatpush1.msra.mxu0 0.0
      %1428 = vmatprep.subr.mxu0 0.0
      %1429 = vmatpush1.msra.mxu0 0.0
      %1430 = vmatprep.subr.mxu0 0.0
      %1431 = vmatpush1.msra.mxu0 0.0
      %1432 = vmatprep.subr.mxu0 0.0
      %1433 = vmatpush1.msra.mxu0 0.0
      %1434 = vmatprep.subr.mxu0 0.0
      %1435 = vmatpush1.msra.mxu0 0.0
      %1436 = vmatprep.subr.mxu0 0.0
      %1437 = vmatpush1.msra.mxu0 0.0
      %1438 = vmatprep.subr.mxu0 0.0
      %1439 = vmatpush1.msra.mxu0 0.0
      %1440 = vmatprep.subr.mxu0 0.0
      %1441 = vmatpush1.msra.mxu0 0.0
      %1442 = vmatprep.subr.mxu0 0.0
      %1443 = vmatpush1.msra.mxu0 0.0
      %1444 = vmatprep.subr.mxu0 0.0
      %1445 = vmatpush1.msra.mxu0 0.0
      %1446 = vmatprep.subr.mxu0 0.0
      %1447 = vmatpush1.msra.mxu0 0.0
      %1448 = vmatprep.subr.mxu0 0.0
      %1449 = vmatpush1.msra.mxu0 0.0
      %1450 = vmatprep.subr.mxu0 0.0
      %1451 = vmatpush1.msra.mxu0 0.0
      %1452 = vmatprep.subr.mxu0 0.0
      %1453 = vmatpush1.msra.mxu0 0.0
      %1454 = vmatprep.subr.mxu0 0.0
      %1455 = vmatpush1.msra.mxu0 0.0
      %1456 = vmatprep.subr.mxu0 0.0
      %1457 = vmatpush1.msra.mxu0 0.0
      %1458 = vmatprep.subr.mxu0 0.0
      %1459 = vmatpush1.msra.mxu0 0.0
      %1460 = vmatprep.subr.mxu0 0.0
      %1461 = vmatpush1.msra.mxu0 0.0
      %1462 = vmatprep.subr.mxu0 0.0
      %1463 = vmatpush1.msra.mxu0 0.0
      %1464 = vmatprep.subr.mxu0 0.0
      %1465 = vmatpush1.msra.mxu0 0.0
      %1466 = vmatprep.subr.mxu0 0.0
      %1467 = vmatpush1.msra.mxu0 0.0
      %1468 = vmatprep.subr.mxu0 0.0
      %1469 = vmatpush1.msra.mxu0 0.0
      %1470 = vmatprep.subr.mxu0 0.0
      %1471 = vmatpush1.msra.mxu0 0.0
      %1472 = vmatprep.subr.mxu0 0.0
      %1473 = vmatpush1.msra.mxu0 0.0
      %1474 = vmatprep.subr.mxu0 0.0
      %1475 = vmatpush1.msra.mxu0 0.0
      %1476 = vmatprep.subr.mxu0 0.0
      %1477 = vmatpush1.msra.mxu0 0.0
      %1478 = vmatprep.mubr.f32.mxu0 0.0
      %1479 = vmatmul.mubr.f32.gmra.mrb[0].mxu0 %v1412
      %v1480 = vpop.f32.mrb[0].mxu0
      %v1481 = vadd.f32 %v1408, %v1480
      %v1482 = vpop.f32.mrb[0].mxu0
      %1483 = vdwg.mxu0
      %s1484 = scalar_lea.vmem %s2, 2
      %v1485 = vld [vmem:[%s1484] sm:$0x1]
      %v1487 = vlaneseq
      %v1488 = vshrl.u32 %v1487, 7
      %v1489 = vsub.s32 0, %v1488
      %v1490 = vrot.slane %v1485, %v1489
      %v1492 = vmul.f32 %v988, %v1490
      %v1494 = vsel %vm917, %v1492, 0
      %1496 = vmatprep.subr.mxu0 0.0
      %1497 = vmatpush1.xpose.msra.mxu0 %v1155
      %1498 = vmatprep.subr.mxu0 0.0
      %1499 = vmatpush1.xpose.msra.mxu0 0.0
      %1500 = vmatprep.subr.mxu0 0.0
      %1501 = vmatpush1.xpose.msra.mxu0 0.0
      %1502 = vmatprep.subr.mxu0 0.0
      %1503 = vmatpush1.xpose.msra.mxu0 0.0
      %1504 = vmatprep.subr.mxu0 0.0
      %1505 = vmatpush1.xpose.msra.mxu0 0.0
      %1506 = vmatprep.subr.mxu0 0.0
      %1507 = vmatpush1.xpose.msra.mxu0 0.0
      %1508 = vmatprep.subr.mxu0 0.0
      %1509 = vmatpush1.xpose.msra.mxu0 0.0
      %1510 = vmatprep.subr.mxu0 0.0
      %1511 = vmatpush1.xpose.msra.mxu0 0.0
      %1512 = vmatprep.subr.mxu0 0.0
      %1513 = vmatpush1.xpose.msra.mxu0 0.0
      %1514 = vmatprep.subr.mxu0 0.0
      %1515 = vmatpush1.xpose.msra.mxu0 0.0
      %1516 = vmatprep.subr.mxu0 0.0
      %1517 = vmatpush1.xpose.msra.mxu0 0.0
      %1518 = vmatprep.subr.mxu0 0.0
      %1519 = vmatpush1.xpose.msra.mxu0 0.0
      %1520 = vmatprep.subr.mxu0 0.0
      %1521 = vmatpush1.xpose.msra.mxu0 0.0
      %1522 = vmatprep.subr.mxu0 0.0
      %1523 = vmatpush1.xpose.msra.mxu0 0.0
      %1524 = vmatprep.subr.mxu0 0.0
      %1525 = vmatpush1.xpose.msra.mxu0 0.0
      %1526 = vmatprep.subr.mxu0 0.0
      %1527 = vmatpush1.xpose.msra.mxu0 0.0
      %1528 = vmatprep.subr.mxu0 0.0
      %1529 = vmatpush1.xpose.msra.mxu0 0.0
      %1530 = vmatprep.subr.mxu0 0.0
      %1531 = vmatpush1.xpose.msra.mxu0 0.0
      %1532 = vmatprep.subr.mxu0 0.0
      %1533 = vmatpush1.xpose.msra.mxu0 0.0
      %1534 = vmatprep.subr.mxu0 0.0
      %1535 = vmatpush1.xpose.msra.mxu0 0.0
      %1536 = vmatprep.subr.mxu0 0.0
      %1537 = vmatpush1.xpose.msra.mxu0 0.0
      %1538 = vmatprep.subr.mxu0 0.0
      %1539 = vmatpush1.xpose.msra.mxu0 0.0
      %1540 = vmatprep.subr.mxu0 0.0
      %1541 = vmatpush1.xpose.msra.mxu0 0.0
      %1542 = vmatprep.subr.mxu0 0.0
      %1543 = vmatpush1.xpose.msra.mxu0 0.0
      %1544 = vmatprep.subr.mxu0 0.0
      %1545 = vmatpush1.xpose.msra.mxu0 0.0
      %1546 = vmatprep.subr.mxu0 0.0
      %1547 = vmatpush1.xpose.msra.mxu0 0.0
      %1548 = vmatprep.subr.mxu0 0.0
      %1549 = vmatpush1.xpose.msra.mxu0 0.0
      %1550 = vmatprep.subr.mxu0 0.0
      %1551 = vmatpush1.xpose.msra.mxu0 0.0
      %1552 = vmatprep.subr.mxu0 0.0
      %1553 = vmatpush1.xpose.msra.mxu0 0.0
      %1554 = vmatprep.subr.mxu0 0.0
      %1555 = vmatpush1.xpose.msra.mxu0 0.0
      %1556 = vmatprep.subr.mxu0 0.0
      %1557 = vmatpush1.xpose.msra.mxu0 0.0
      %1558 = vmatprep.subr.mxu0 0.0
      %1559 = vmatpush1.xpose.msra.mxu0 0.0
      %1560 = vmatprep.mubr.f32.mxu0 0.0
      %1561 = vmatmul.mubr.f32.gmra.mrb[0].mxu0 %v1494
      %v1562 = vpop.f32.mrb[0].mxu0
      %v1563 = vadd.f32 0.0, %v1562
      %v1564 = vpop.f32.mrb[0].mxu0
      %1565 = vdwg.mxu0
      %v1566 = vmul.f32 %v1563, 0.35355338
      %v1567 = vadd.f32 %v1566, %v910
      %v1568 = vsel %vm1229, %v1567, -inf
      %1569 = vmax.xlane.f32.xlu0 %v1568
      %v1570 = vpop.xlane.xlu0 %1569
      %v1571 = vsub.f32 %v1567, %v1570
      %v1572 = vmul.f32 %v1571, 1.442695
      %v1573 = vpow.pop %v1572
      %v1574 = vsel %vm1229, %v1573, 0.0
      %1575 = vadd.xlane.f32.xlu0 %v1574
      %v1576 = vpop.xlane.xlu0 %1575
      %v1577 = vrcp.pop %v1576
      %v1578 = vmul.f32 %v1573, %v1577
      %v1579 = vmul.f32 %v1140, %v1490
      %v1581 = vsel %vm1229, %v1578, 0
      %1583 = vmatprep.subr.mxu0 0.0
      %1584 = vmatpush1.msra.mxu0 %v1579
      %1585 = vmatprep.subr.mxu0 0.0
      %1586 = vmatpush1.msra.mxu0 0.0
      %1587 = vmatprep.subr.mxu0 0.0
      %1588 = vmatpush1.msra.mxu0 0.0
      %1589 = vmatprep.subr.mxu0 0.0
      %1590 = vmatpush1.msra.mxu0 0.0
      %1591 = vmatprep.subr.mxu0 0.0
      %1592 = vmatpush1.msra.mxu0 0.0
      %1593 = vmatprep.subr.mxu0 0.0
      %1594 = vmatpush1.msra.mxu0 0.0
      %1595 = vmatprep.subr.mxu0 0.0
      %1596 = vmatpush1.msra.mxu0 0.0
      %1597 = vmatprep.subr.mxu0 0.0
      %1598 = vmatpush1.msra.mxu0 0.0
      %1599 = vmatprep.subr.mxu0 0.0
      %1600 = vmatpush1.msra.mxu0 0.0
      %1601 = vmatprep.subr.mxu0 0.0
      %1602 = vmatpush1.msra.mxu0 0.0
      %1603 = vmatprep.subr.mxu0 0.0
      %1604 = vmatpush1.msra.mxu0 0.0
      %1605 = vmatprep.subr.mxu0 0.0
      %1606 = vmatpush1.msra.mxu0 0.0
      %1607 = vmatprep.subr.mxu0 0.0
      %1608 = vmatpush1.msra.mxu0 0.0
      %1609 = vmatprep.subr.mxu0 0.0
      %1610 = vmatpush1.msra.mxu0 0.0
      %1611 = vmatprep.subr.mxu0 0.0
      %1612 = vmatpush1.msra.mxu0 0.0
      %1613 = vmatprep.subr.mxu0 0.0
      %1614 = vmatpush1.msra.mxu0 0.0
      %1615 = vmatprep.subr.mxu0 0.0
      %1616 = vmatpush1.msra.mxu0 0.0
      %1617 = vmatprep.subr.mxu0 0.0
      %1618 = vmatpush1.msra.mxu0 0.0
      %1619 = vmatprep.subr.mxu0 0.0
      %1620 = vmatpush1.msra.mxu0 0.0
      %1621 = vmatprep.subr.mxu0 0.0
      %1622 = vmatpush1.msra.mxu0 0.0
      %1623 = vmatprep.subr.mxu0 0.0
      %1624 = vmatpush1.msra.mxu0 0.0
      %1625 = vmatprep.subr.mxu0 0.0
      %1626 = vmatpush1.msra.mxu0 0.0
      %1627 = vmatprep.subr.mxu0 0.0
      %1628 = vmatpush1.msra.mxu0 0.0
      %1629 = vmatprep.subr.mxu0 0.0
      %1630 = vmatpush1.msra.mxu0 0.0
      %1631 = vmatprep.subr.mxu0 0.0
      %1632 = vmatpush1.msra.mxu0 0.0
      %1633 = vmatprep.subr.mxu0 0.0
      %1634 = vmatpush1.msra.mxu0 0.0
      %1635 = vmatprep.subr.mxu0 0.0
      %1636 = vmatpush1.msra.mxu0 0.0
      %1637 = vmatprep.subr.mxu0 0.0
      %1638 = vmatpush1.msra.mxu0 0.0
      %1639 = vmatprep.subr.mxu0 0.0
      %1640 = vmatpush1.msra.mxu0 0.0
      %1641 = vmatprep.subr.mxu0 0.0
      %1642 = vmatpush1.msra.mxu0 0.0
      %1643 = vmatprep.subr.mxu0 0.0
      %1644 = vmatpush1.msra.mxu0 0.0
      %1645 = vmatprep.subr.mxu0 0.0
      %1646 = vmatpush1.msra.mxu0 0.0
      %1647 = vmatprep.mubr.f32.mxu0 0.0
      %1648 = vmatmul.mubr.f32.gmra.mrb[0].mxu0 %v1581
      %v1649 = vpop.f32.mrb[0].mxu0
      %v1650 = vadd.f32 0.0, %v1649
      %v1651 = vpop.f32.mrb[0].mxu0
      %1652 = vdwg.mxu0
      %v1653 = vadd.f32 %v1481, %v1650
      %s1654 = scalar_lea.vmem %s2, 3
      %v1655 = vld [vmem:[%s1654] sm:$0x1]
      %v1657 = vlaneseq
      %v1658 = vshrl.u32 %v1657, 7
      %v1659 = vsub.s32 0, %v1658
      %v1660 = vrot.slane %v1655, %v1659
      %v1662 = vmul.f32 %v988, %v1660
      %v1664 = vsel %vm917, %v1662, 0
      %1666 = vmatprep.subr.mxu0 0.0
      %1667 = vmatpush1.xpose.msra.mxu0 %v1155
      %1668 = vmatprep.subr.mxu0 0.0
      %1669 = vmatpush1.xpose.msra.mxu0 0.0
      %1670 = vmatprep.subr.mxu0 0.0
      %1671 = vmatpush1.xpose.msra.mxu0 0.0
      %1672 = vmatprep.subr.mxu0 0.0
      %1673 = vmatpush1.xpose.msra.mxu0 0.0
      %1674 = vmatprep.subr.mxu0 0.0
      %1675 = vmatpush1.xpose.msra.mxu0 0.0
      %1676 = vmatprep.subr.mxu0 0.0
      %1677 = vmatpush1.xpose.msra.mxu0 0.0
      %1678 = vmatprep.subr.mxu0 0.0
      %1679 = vmatpush1.xpose.msra.mxu0 0.0
      %1680 = vmatprep.subr.mxu0 0.0
      %1681 = vmatpush1.xpose.msra.mxu0 0.0
      %1682 = vmatprep.subr.mxu0 0.0
      %1683 = vmatpush1.xpose.msra.mxu0 0.0
      %1684 = vmatprep.subr.mxu0 0.0
      %1685 = vmatpush1.xpose.msra.mxu0 0.0
      %1686 = vmatprep.subr.mxu0 0.0
      %1687 = vmatpush1.xpose.msra.mxu0 0.0
      %1688 = vmatprep.subr.mxu0 0.0
      %1689 = vmatpush1.xpose.msra.mxu0 0.0
      %1690 = vmatprep.subr.mxu0 0.0
      %1691 = vmatpush1.xpose.msra.mxu0 0.0
      %1692 = vmatprep.subr.mxu0 0.0
      %1693 = vmatpush1.xpose.msra.mxu0 0.0
      %1694 = vmatprep.subr.mxu0 0.0
      %1695 = vmatpush1.xpose.msra.mxu0 0.0
      %1696 = vmatprep.subr.mxu0 0.0
      %1697 = vmatpush1.xpose.msra.mxu0 0.0
      %1698 = vmatprep.subr.mxu0 0.0
      %1699 = vmatpush1.xpose.msra.mxu0 0.0
      %1700 = vmatprep.subr.mxu0 0.0
      %1701 = vmatpush1.xpose.msra.mxu0 0.0
      %1702 = vmatprep.subr.mxu0 0.0
      %1703 = vmatpush1.xpose.msra.mxu0 0.0
      %1704 = vmatprep.subr.mxu0 0.0
      %1705 = vmatpush1.xpose.msra.mxu0 0.0
      %1706 = vmatprep.subr.mxu0 0.0
      %1707 = vmatpush1.xpose.msra.mxu0 0.0
      %1708 = vmatprep.subr.mxu0 0.0
      %1709 = vmatpush1.xpose.msra.mxu0 0.0
      %1710 = vmatprep.subr.mxu0 0.0
      %1711 = vmatpush1.xpose.msra.mxu0 0.0
      %1712 = vmatprep.subr.mxu0 0.0
      %1713 = vmatpush1.xpose.msra.mxu0 0.0
      %1714 = vmatprep.subr.mxu0 0.0
      %1715 = vmatpush1.xpose.msra.mxu0 0.0
      %1716 = vmatprep.subr.mxu0 0.0
      %1717 = vmatpush1.xpose.msra.mxu0 0.0
      %1718 = vmatprep.subr.mxu0 0.0
      %1719 = vmatpush1.xpose.msra.mxu0 0.0
      %1720 = vmatprep.subr.mxu0 0.0
      %1721 = vmatpush1.xpose.msra.mxu0 0.0
      %1722 = vmatprep.subr.mxu0 0.0
      %1723 = vmatpush1.xpose.msra.mxu0 0.0
      %1724 = vmatprep.subr.mxu0 0.0
      %1725 = vmatpush1.xpose.msra.mxu0 0.0
      %1726 = vmatprep.subr.mxu0 0.0
      %1727 = vmatpush1.xpose.msra.mxu0 0.0
      %1728 = vmatprep.subr.mxu0 0.0
      %1729 = vmatpush1.xpose.msra.mxu0 0.0
      %1730 = vmatprep.mubr.f32.mxu0 0.0
      %1731 = vmatmul.mubr.f32.gmra.mrb[0].mxu0 %v1664
      %v1732 = vpop.f32.mrb[0].mxu0
      %v1733 = vadd.f32 0.0, %v1732
      %v1734 = vpop.f32.mrb[0].mxu0
      %1735 = vdwg.mxu0
      %v1736 = vmul.f32 %v1733, 0.35355338
      %v1737 = vadd.f32 %v1736, %v910
      %v1738 = vsel %vm1229, %v1737, -inf
      %1739 = vmax.xlane.f32.xlu0 %v1738
      %v1740 = vpop.xlane.xlu0 %1739
      %v1741 = vsub.f32 %v1737, %v1740
      %v1742 = vmul.f32 %v1741, 1.442695
      %v1743 = vpow.pop %v1742
      %v1744 = vsel %vm1229, %v1743, 0.0
      %1745 = vadd.xlane.f32.xlu0 %v1744
      %v1746 = vpop.xlane.xlu0 %1745
      %v1747 = vrcp.pop %v1746
      %v1748 = vmul.f32 %v1743, %v1747
      %v1749 = vmul.f32 %v1140, %v1660
      %v1751 = vsel %vm1229, %v1748, 0
      %1753 = vmatprep.subr.mxu0 0.0
      %1754 = vmatpush1.msra.mxu0 %v1749
      %1755 = vmatprep.subr.mxu0 0.0
      %1756 = vmatpush1.msra.mxu0 0.0
      %1757 = vmatprep.subr.mxu0 0.0
      %1758 = vmatpush1.msra.mxu0 0.0
      %1759 = vmatprep.subr.mxu0 0.0
      %1760 = vmatpush1.msra.mxu0 0.0
      %1761 = vmatprep.subr.mxu0 0.0
      %1762 = vmatpush1.msra.mxu0 0.0
      %1763 = vmatprep.subr.mxu0 0.0
      %1764 = vmatpush1.msra.mxu0 0.0
      %1765 = vmatprep.subr.mxu0 0.0
      %1766 = vmatpush1.msra.mxu0 0.0
      %1767 = vmatprep.subr.mxu0 0.0
      %1768 = vmatpush1.msra.mxu0 0.0
      %1769 = vmatprep.subr.mxu0 0.0
      %1770 = vmatpush1.msra.mxu0 0.0
      %1771 = vmatprep.subr.mxu0 0.0
      %1772 = vmatpush1.msra.mxu0 0.0
      %1773 = vmatprep.subr.mxu0 0.0
      %1774 = vmatpush1.msra.mxu0 0.0
      %1775 = vmatprep.subr.mxu0 0.0
      %1776 = vmatpush1.msra.mxu0 0.0
      %1777 = vmatprep.subr.mxu0 0.0
      %1778 = vmatpush1.msra.mxu0 0.0
      %1779 = vmatprep.subr.mxu0 0.0
      %1780 = vmatpush1.msra.mxu0 0.0
      %1781 = vmatprep.subr.mxu0 0.0
      %1782 = vmatpush1.msra.mxu0 0.0
      %1783 = vmatprep.subr.mxu0 0.0
      %1784 = vmatpush1.msra.mxu0 0.0
      %1785 = vmatprep.subr.mxu0 0.0
      %1786 = vmatpush1.msra.mxu0 0.0
      %1787 = vmatprep.subr.mxu0 0.0
      %1788 = vmatpush1.msra.mxu0 0.0
      %1789 = vmatprep.subr.mxu0 0.0
      %1790 = vmatpush1.msra.mxu0 0.0
      %1791 = vmatprep.subr.mxu0 0.0
      %1792 = vmatpush1.msra.mxu0 0.0
      %1793 = vmatprep.subr.mxu0 0.0
      %1794 = vmatpush1.msra.mxu0 0.0
      %1795 = vmatprep.subr.mxu0 0.0
      %1796 = vmatpush1.msra.mxu0 0.0
      %1797 = vmatprep.subr.mxu0 0.0
      %1798 = vmatpush1.msra.mxu0 0.0
      %1799 = vmatprep.subr.mxu0 0.0
      %1800 = vmatpush1.msra.mxu0 0.0
      %1801 = vmatprep.subr.mxu0 0.0
      %1802 = vmatpush1.msra.mxu0 0.0
      %1803 = vmatprep.subr.mxu0 0.0
      %1804 = vmatpush1.msra.mxu0 0.0
      %1805 = vmatprep.subr.mxu0 0.0
      %1806 = vmatpush1.msra.mxu0 0.0
      %1807 = vmatprep.subr.mxu0 0.0
      %1808 = vmatpush1.msra.mxu0 0.0
      %1809 = vmatprep.subr.mxu0 0.0
      %1810 = vmatpush1.msra.mxu0 0.0
      %1811 = vmatprep.subr.mxu0 0.0
      %1812 = vmatpush1.msra.mxu0 0.0
      %1813 = vmatprep.subr.mxu0 0.0
      %1814 = vmatpush1.msra.mxu0 0.0
      %1815 = vmatprep.subr.mxu0 0.0
      %1816 = vmatpush1.msra.mxu0 0.0
      %1817 = vmatprep.mubr.f32.mxu0 0.0
      %1818 = vmatmul.mubr.f32.gmra.mrb[0].mxu0 %v1751
      %v1819 = vpop.f32.mrb[0].mxu0
      %v1820 = vadd.f32 0.0, %v1819
      %v1821 = vpop.f32.mrb[0].mxu0
      %1822 = vdwg.mxu0
      %v1823 = vadd.f32 %v1653, %v1820
      %v1825 = vlaneseq
      %v1826 = vshrl.u32 %v1825, 7
      %v1827 = vsub.s32 0, %v1826
      %v1828 = vrot.slane %v909, %v1827
      %v1831 = vsel %vm917, %v1823, 0
      %1833 = vmatprep.subr.mxu0 0.0
      %1834 = vmatpush1.msra.mxu0 %v905
      %1835 = vmatprep.subr.mxu0 0.0
      %1836 = vmatpush1.msra.mxu0 %v906
      %1837 = vmatprep.subr.mxu0 0.0
      %1838 = vmatpush1.msra.mxu0 %v907
      %1839 = vmatprep.subr.mxu0 0.0
      %1840 = vmatpush1.msra.mxu0 %v908
      %1841 = vmatprep.subr.mxu0 0.0
      %1842 = vmatpush1.msra.mxu0 0.0
      %1843 = vmatprep.subr.mxu0 0.0
      %1844 = vmatpush1.msra.mxu0 0.0
      %1845 = vmatprep.subr.mxu0 0.0
      %1846 = vmatpush1.msra.mxu0 0.0
      %1847 = vmatprep.subr.mxu0 0.0
      %1848 = vmatpush1.msra.mxu0 0.0
      %1849 = vmatprep.subr.mxu0 0.0
      %1850 = vmatpush1.msra.mxu0 0.0
      %1851 = vmatprep.subr.mxu0 0.0
      %1852 = vmatpush1.msra.mxu0 0.0
      %1853 = vmatprep.subr.mxu0 0.0
      %1854 = vmatpush1.msra.mxu0 0.0
      %1855 = vmatprep.subr.mxu0 0.0
      %1856 = vmatpush1.msra.mxu0 0.0
      %1857 = vmatprep.subr.mxu0 0.0
      %1858 = vmatpush1.msra.mxu0 0.0
      %1859 = vmatprep.subr.mxu0 0.0
      %1860 = vmatpush1.msra.mxu0 0.0
      %1861 = vmatprep.subr.mxu0 0.0
      %1862 = vmatpush1.msra.mxu0 0.0
      %1863 = vmatprep.subr.mxu0 0.0
      %1864 = vmatpush1.msra.mxu0 0.0
      %1865 = vmatprep.subr.mxu0 0.0
      %1866 = vmatpush1.msra.mxu0 0.0
      %1867 = vmatprep.subr.mxu0 0.0
      %1868 = vmatpush1.msra.mxu0 0.0
      %1869 = vmatprep.subr.mxu0 0.0
      %1870 = vmatpush1.msra.mxu0 0.0
      %1871 = vmatprep.subr.mxu0 0.0
      %1872 = vmatpush1.msra.mxu0 0.0
      %1873 = vmatprep.subr.mxu0 0.0
      %1874 = vmatpush1.msra.mxu0 0.0
      %1875 = vmatprep.subr.mxu0 0.0
      %1876 = vmatpush1.msra.mxu0 0.0
      %1877 = vmatprep.subr.mxu0 0.0
      %1878 = vmatpush1.msra.mxu0 0.0
      %1879 = vmatprep.subr.mxu0 0.0
      %1880 = vmatpush1.msra.mxu0 0.0
      %1881 = vmatprep.subr.mxu0 0.0
      %1882 = vmatpush1.msra.mxu0 0.0
      %1883 = vmatprep.subr.mxu0 0.0
      %1884 = vmatpush1.msra.mxu0 0.0
      %1885 = vmatprep.subr.mxu0 0.0
      %1886 = vmatpush1.msra.mxu0 0.0
      %1887 = vmatprep.subr.mxu0 0.0
      %1888 = vmatpush1.msra.mxu0 0.0
      %1889 = vmatprep.subr.mxu0 0.0
      %1890 = vmatpush1.msra.mxu0 0.0
      %1891 = vmatprep.subr.mxu0 0.0
      %1892 = vmatpush1.msra.mxu0 0.0
      %1893 = vmatprep.subr.mxu0 0.0
      %1894 = vmatpush1.msra.mxu0 0.0
      %1895 = vmatprep.subr.mxu0 0.0
      %1896 = vmatpush1.msra.mxu0 0.0
      %1897 = vmatprep.mubr.f32.mxu0 0.0
      %1898 = vmatmul.mubr.f32.gmra.mrb[0].mxu0 %v1831
      %v1899 = vpop.f32.mrb[0].mxu0
      %v1900 = vadd.f32 %v1828, %v1899
      %v1901 = vpop.f32.mrb[0].mxu0
      %1902 = vdwg.mxu0
      %v1903 = vadd.f32 %v889, %v1900
      %v1904 = vld [vmem:[%s856] sm:$0x1]
      %v1905 = vld [vmem:[%s859] sm:$0x1]
      %v1906 = vsel %vm917, %v1903, 0.0
      %1907 = vadd.xlane.f32.xlu0 %v1906
      %v1908 = vpop.xlane.xlu0 %1907
      %v1909 = vrcp.pop 32.0
      %v1910 = vmul.f32 %v1908, %v1909
      %v1911 = vsub.f32 %v1903, %v1910
      %v1912 = vmul.f32 %v1911, %v1911
      %v1913 = vsel %vm917, %v1912, 0.0
      %1914 = vadd.xlane.f32.xlu0 %v1913
      %v1915 = vpop.xlane.xlu0 %1914
      %v1916 = vmul.f32 %v1915, %v1909
      %v1917 = vadd.f32 %v1916, 1e-05
      %v1918 = vrsqrt.pop %v1917
      %v1919 = vmul.f32 %v1911, %v1918
      %v1921 = vlaneseq
      %v1922 = vshrl.u32 %v1921, 7
      %v1923 = vsub.s32 0, %v1922
      %v1924 = vrot.slane %v1904, %v1923
      %v1926 = vmul.f32 %v1919, %v1924
      %v1928 = vlaneseq
      %v1929 = vshrl.u32 %v1928, 7
      %v1930 = vsub.s32 0, %v1929
      %v1931 = vrot.slane %v1905, %v1930
      %v1933 = vadd.f32 %v1926, %v1931
      %v1934 = vld [vmem:[%s864] sm:$0xff]
      %v1935 = vld [vmem:[%s864 + $0x8] sm:$0xff]
      %v1936 = vld [vmem:[%s864 + $0x10] sm:$0xff]
      %v1937 = vld [vmem:[%s864 + $0x18] sm:$0xff]
      %v1938 = vld [vmem:[%s867] sm:$0x1]
      %v1940 = vlaneseq
      %v1941 = vshrl.u32 %v1940, 7
      %v1942 = vsub.s32 0, %v1941
      %v1943 = vrot.slane %v1938, %v1942
      %v1946 = vsel %vm917, %v1933, 0
      %1948 = vmatprep.subr.mxu0 0.0
      %1949 = vmatpush1.msra.mxu0 %v1934
      %1950 = vmatprep.subr.mxu0 0.0
      %1951 = vmatpush1.msra.mxu0 %v1935
      %1952 = vmatprep.subr.mxu0 0.0
      %1953 = vmatpush1.msra.mxu0 %v1936
      %1954 = vmatprep.subr.mxu0 0.0
      %1955 = vmatpush1.msra.mxu0 %v1937
      %1956 = vmatprep.subr.mxu0 0.0
      %1957 = vmatpush1.msra.mxu0 0.0
      %1958 = vmatprep.subr.mxu0 0.0
      %1959 = vmatpush1.msra.mxu0 0.0
      %1960 = vmatprep.subr.mxu0 0.0
      %1961 = vmatpush1.msra.mxu0 0.0
      %1962 = vmatprep.subr.mxu0 0.0
      %1963 = vmatpush1.msra.mxu0 0.0
      %1964 = vmatprep.subr.mxu0 0.0
      %1965 = vmatpush1.msra.mxu0 0.0
      %1966 = vmatprep.subr.mxu0 0.0
      %1967 = vmatpush1.msra.mxu0 0.0
      %1968 = vmatprep.subr.mxu0 0.0
      %1969 = vmatpush1.msra.mxu0 0.0
      %1970 = vmatprep.subr.mxu0 0.0
      %1971 = vmatpush1.msra.mxu0 0.0
      %1972 = vmatprep.subr.mxu0 0.0
      %1973 = vmatpush1.msra.mxu0 0.0
      %1974 = vmatprep.subr.mxu0 0.0
      %1975 = vmatpush1.msra.mxu0 0.0
      %1976 = vmatprep.subr.mxu0 0.0
      %1977 = vmatpush1.msra.mxu0 0.0
      %1978 = vmatprep.subr.mxu0 0.0
      %1979 = vmatpush1.msra.mxu0 0.0
      %1980 = vmatprep.subr.mxu0 0.0
      %1981 = vmatpush1.msra.mxu0 0.0
      %1982 = vmatprep.subr.mxu0 0.0
      %1983 = vmatpush1.msra.mxu0 0.0
      %1984 = vmatprep.subr.mxu0 0.0
      %1985 = vmatpush1.msra.mxu0 0.0
      %1986 = vmatprep.subr.mxu0 0.0
      %1987 = vmatpush1.msra.mxu0 0.0
      %1988 = vmatprep.subr.mxu0 0.0
      %1989 = vmatpush1.msra.mxu0 0.0
      %1990 = vmatprep.subr.mxu0 0.0
      %1991 = vmatpush1.msra.mxu0 0.0
      %1992 = vmatprep.subr.mxu0 0.0
      %1993 = vmatpush1.msra.mxu0 0.0
      %1994 = vmatprep.subr.mxu0 0.0
      %1995 = vmatpush1.msra.mxu0 0.0
      %1996 = vmatprep.subr.mxu0 0.0
      %1997 = vmatpush1.msra.mxu0 0.0
      %1998 = vmatprep.subr.mxu0 0.0
      %1999 = vmatpush1.msra.mxu0 0.0
      %2000 = vmatprep.subr.mxu0 0.0
      %2001 = vmatpush1.msra.mxu0 0.0
      %2002 = vmatprep.subr.mxu0 0.0
      %2003 = vmatpush1.msra.mxu0 0.0
      %2004 = vmatprep.subr.mxu0 0.0
      %2005 = vmatpush1.msra.mxu0 0.0
      %2006 = vmatprep.subr.mxu0 0.0
      %2007 = vmatpush1.msra.mxu0 0.0
      %2008 = vmatprep.subr.mxu0 0.0
      %2009 = vmatpush1.msra.mxu0 0.0
      %2010 = vmatprep.subr.mxu0 0.0
      %2011 = vmatpush1.msra.mxu0 0.0
      %2012 = vmatprep.mubr.f32.mxu0 0.0
      %2013 = vmatmul.mubr.f32.gmra.mrb[0].mxu0 %v1946
      %v2014 = vpop.f32.mrb[0].mxu0
      %v2015 = vadd.f32 %v1943, %v2014
      %v2016 = vpop.f32.mrb[0].mxu0
      %2017 = vdwg.mxu0
      %v2018 = vmax.f32 %v2015, 0.0
      %v2019 = vld [vmem:[%s872] sm:$0xff]
      %v2020 = vld [vmem:[%s872 + $0x8] sm:$0xff]
      %v2021 = vld [vmem:[%s872 + $0x10] sm:$0xff]
      %v2022 = vld [vmem:[%s872 + $0x18] sm:$0xff]
      %v2023 = vld [vmem:[%s872 + $0x20] sm:$0xff]
      %v2024 = vld [vmem:[%s872 + $0x28] sm:$0xff]
      %v2025 = vld [vmem:[%s872 + $0x30] sm:$0xff]
      %v2026 = vld [vmem:[%s872 + $0x38] sm:$0xff]
      %v2027 = vld [vmem:[%s875] sm:$0x1]
      %v2029 = vlaneseq
      %v2030 = vshrl.u32 %v2029, 7
      %v2031 = vsub.s32 0, %v2030
      %v2032 = vrot.slane %v2027, %v2031
      %vm2034 = vcmask 523264
      %v2036 = vsel %vm2034, %v2018, 0
      %2038 = vmatprep.subr.mxu0 0.0
      %2039 = vmatpush1.msra.mxu0 %v2019
      %2040 = vmatprep.subr.mxu0 0.0
      %2041 = vmatpush1.msra.mxu0 %v2020
      %2042 = vmatprep.subr.mxu0 0.0
      %2043 = vmatpush1.msra.mxu0 %v2021
      %2044 = vmatprep.subr.mxu0 0.0
      %2045 = vmatpush1.msra.mxu0 %v2022
      %2046 = vmatprep.subr.mxu0 0.0
      %2047 = vmatpush1.msra.mxu0 %v2023
      %2048 = vmatprep.subr.mxu0 0.0
      %2049 = vmatpush1.msra.mxu0 %v2024
      %2050 = vmatprep.subr.mxu0 0.0
      %2051 = vmatpush1.msra.mxu0 %v2025
      %2052 = vmatprep.subr.mxu0 0.0
      %2053 = vmatpush1.msra.mxu0 %v2026
      %2054 = vmatprep.subr.mxu0 0.0
      %2055 = vmatpush1.msra.mxu0 0.0
      %2056 = vmatprep.subr.mxu0 0.0
      %2057 = vmatpush1.msra.mxu0 0.0
      %2058 = vmatprep.subr.mxu0 0.0
      %2059 = vmatpush1.msra.mxu0 0.0
      %2060 = vmatprep.subr.mxu0 0.0
      %2061 = vmatpush1.msra.mxu0 0.0
      %2062 = vmatprep.subr.mxu0 0.0
      %2063 = vmatpush1.msra.mxu0 0.0
      %2064 = vmatprep.subr.mxu0 0.0
      %2065 = vmatpush1.msra.mxu0 0.0
      %2066 = vmatprep.subr.mxu0 0.0
      %2067 = vmatpush1.msra.mxu0 0.0
      %2068 = vmatprep.subr.mxu0 0.0
      %2069 = vmatpush1.msra.mxu0 0.0
      %2070 = vmatprep.subr.mxu0 0.0
      %2071 = vmatpush1.msra.mxu0 0.0
      %2072 = vmatprep.subr.mxu0 0.0
      %2073 = vmatpush1.msra.mxu0 0.0
      %2074 = vmatprep.subr.mxu0 0.0
      %2075 = vmatpush1.msra.mxu0 0.0
      %2076 = vmatprep.subr.mxu0 0.0
      %2077 = vmatpush1.msra.mxu0 0.0
      %2078 = vmatprep.subr.mxu0 0.0
      %2079 = vmatpush1.msra.mxu0 0.0
      %2080 = vmatprep.subr.mxu0 0.0
      %2081 = vmatpush1.msra.mxu0 0.0
      %2082 = vmatprep.subr.mxu0 0.0
      %2083 = vmatpush1.msra.mxu0 0.0
      %2084 = vmatprep.subr.mxu0 0.0
      %2085 = vmatpush1.msra.mxu0 0.0
      %2086 = vmatprep.subr.mxu0 0.0
      %2087 = vmatpush1.msra.mxu0 0.0
      %2088 = vmatprep.subr.mxu0 0.0
      %2089 = vmatpush1.msra.mxu0 0.0
      %2090 = vmatprep.subr.mxu0 0.0
      %2091 = vmatpush1.msra.mxu0 0.0
      %2092 = vmatprep.subr.mxu0 0.0
      %2093 = vmatpush1.msra.mxu0 0.0
      %2094 = vmatprep.subr.mxu0 0.0
      %2095 = vmatpush1.msra.mxu0 0.0
      %2096 = vmatprep.subr.mxu0 0.0
      %2097 = vmatpush1.msra.mxu0 0.0
      %2098 = vmatprep.subr.mxu0 0.0
      %2099 = vmatpush1.msra.mxu0 0.0
      %2100 = vmatprep.subr.mxu0 0.0
      %2101 = vmatpush1.msra.mxu0 0.0
      %2102 = vmatprep.mubr.f32.mxu0 0.0
      %2103 = vmatmul.mubr.f32.gmra.mrb[0].mxu0 %v2036
      %v2104 = vpop.f32.mrb[0].mxu0
      %v2105 = vadd.f32 %v2032, %v2104
      %v2106 = vpop.f32.mrb[0].mxu0
      %2107 = vdwg.mxu0
      %v2108 = vadd.f32 %v1933, %v2105
      %v2109 = vld [vmem:[%s878] sm:$0x1]
      %v2110 = vld [vmem:[%s881] sm:$0x1]
      %v2111 = vsel %vm917, %v2108, 0.0
      %2112 = vadd.xlane.f32.xlu0 %v2111
      %v2113 = vpop.xlane.xlu0 %2112
      %v2114 = vmul.f32 %v2113, %v1909
      %v2115 = vsub.f32 %v2108, %v2114
      %v2116 = vmul.f32 %v2115, %v2115
      %v2117 = vsel %vm917, %v2116, 0.0
      %2118 = vadd.xlane.f32.xlu0 %v2117
      %v2119 = vpop.xlane.xlu0 %2118
      %v2120 = vmul.f32 %v2119, %v1909
      %v2121 = vadd.f32 %v2120, 1e-05
      %v2122 = vrsqrt.pop %v2121
      %v2123 = vmul.f32 %v2115, %v2122
      %v2125 = vlaneseq
      %v2126 = vshrl.u32 %v2125, 7
      %v2127 = vsub.s32 0, %v2126
      %v2128 = vrot.slane %v2109, %v2127
      %v2130 = vmul.f32 %v2123, %v2128
      %v2132 = vlaneseq
      %v2133 = vshrl.u32 %v2132, 7
      %v2134 = vsub.s32 0, %v2133
      %v2135 = vrot.slane %v2110, %v2134
      %v2137 = vadd.f32 %v2130, %v2135
      %p2138 = scmp.lt.s32.totalorder %s32, 1
      // Predicated region
      $region109: #{seq2seq_transformer_forward.6} parent=103 // pred_check
        %p2139 = pneg %p2138
      $region110: #{seq2seq_transformer_forward.6} parent=103 // pred_check_branch
        %2141 = sbr.rel (%p2139) target = $region112
      $region111: #{seq2seq_transformer_forward.6} parent=103 // pred_region
        %2142 = vst.msk [vmem:[%s21] sm:$0xff] %vm917, %v2137
      $region112: #{seq2seq_transformer_forward.6} parent=103 // pred_fallthru
        _
      %p2143 = scmp.eq.s32.totalorder %s32, 1
      // Predicated region
      $region113: #{seq2seq_transformer_forward.6} parent=103 // pred_check
        %p2144 = pneg %p2143
      $region114: #{seq2seq_transformer_forward.6} parent=103 // pred_check_branch
        %2146 = sbr.rel (%p2144) target = $region116
      $region115: #{seq2seq_transformer_forward.6} parent=103 // pred_region
        %v2147 = vld [vmem:[%s19] sm:$0x1]
        %v2148 = vld [vmem:[%s20] sm:$0x1]
        %v2149 = vsel %vm917, %v2137, 0.0
        %2150 = vadd.xlane.f32.xlu0 %v2149
        %v2151 = vpop.xlane.xlu0 %2150
        %v2152 = vmul.f32 %v2151, %v1909
        %v2153 = vsub.f32 %v2137, %v2152
        %v2154 = vmul.f32 %v2153, %v2153
        %v2155 = vsel %vm917, %v2154, 0.0
        %2156 = vadd.xlane.f32.xlu0 %v2155
        %v2157 = vpop.xlane.xlu0 %2156
        %v2158 = vmul.f32 %v2157, %v1909
        %v2159 = vadd.f32 %v2158, 1e-05
        %v2160 = vrsqrt.pop %v2159
        %v2161 = vmul.f32 %v2153, %v2160
        %v2163 = vlaneseq
        %v2164 = vshrl.u32 %v2163, 7
        %v2165 = vsub.s32 0, %v2164
        %v2166 = vrot.slane %v2147, %v2165
        %v2168 = vmul.f32 %v2161, %v2166
        %v2170 = vlaneseq
        %v2171 = vshrl.u32 %v2170, 7
        %v2172 = vsub.s32 0, %v2171
        %v2173 = vrot.slane %v2148, %v2172
        %v2175 = vadd.f32 %v2168, %v2173
        %2176 = vst.msk [vmem:[%s21] sm:$0xff] %vm917, %v2175
      $region116: #{seq2seq_transformer_forward.6} parent=103 // pred_fallthru
        _
      // Predicated region
      $region117: #{seq2seq_transformer_forward.6} parent=103 // pred_check
        %p2177 = pneg %p566
      $region118: #{seq2seq_transformer_forward.6} parent=103 // pred_check_branch
        %2179 = sbr.rel (%p2177) target = $region120
      $region119: #{seq2seq_transformer_forward.6} parent=103 // pred_region
        _
      $region120: #{seq2seq_transformer_forward.6} parent=103 // pred_fallthru
        _
      // Predicated region
      $region121: #{seq2seq_transformer_forward.6} parent=103 // pred_check
        %p2180 = pneg %p566
      $region122: #{seq2seq_transformer_forward.6} parent=103 // pred_check_branch
        %2182 = sbr.rel (%p2180) target = $region124
      $region123: #{seq2seq_transformer_forward.6} parent=103 // pred_region
        _
      $region124: #{seq2seq_transformer_forward.6} parent=103 // pred_fallthru
        _
    $region104: #{seq2seq_transformer_forward.6} parent=5 // pred_fallthru
      _
    %p2183 = scmp.le.s32.totalorder 2, %s27
    // Predicated region
    $region125: #{seq2seq_transformer_forward.6} parent=5 // pred_check
      %p2184 = pneg %p2183
    $region126: #{seq2seq_transformer_forward.6} parent=5 // pred_check_branch
      %2186 = sbr.rel (%p2184) target = $region128
    $region127: #{seq2seq_transformer_forward.6} parent=5 // pred_region
      %s2187 = ssub.s32 %s27, 2
    $region128: #{seq2seq_transformer_forward.6} parent=5 // pred_fallthru
      _
  $region6: #{seq2seq_transformer_forward.6} parent=0 // loop_footer
    %s31 = sadd.s32 1, %s27
  $region7: #{seq2seq_transformer_forward.6} parent=0 // loop_footer_branch
    %26 = sbr.rel target = $region3
  $region8: #{seq2seq_transformer_forward.6} parent=0 // loop_exit
    _

</llo_original>
